<compile_context>
chip_gen: v6e
topology: v6e:2x2x1
jax: 0.10.0
libtpu: 0.0.40
codegen_flags: <defaults>
</compile_context>

<pallas_src>
import functools

import jax
import jax.numpy as jnp
from jax.experimental import pallas as pl
from jax.experimental.pallas import tpu as pltpu


def _round_up(x, m):
    return ((x + m - 1) // m) * m


# ---------------------------------------------------------------------------
# Kernel 0: per-point MLP (runs once over N, not per M tile).
#   input  [n_tile, 8]  f32  (rel_xyz | normals | 0 | 0), voxelization hoisted
#   output [n_tile, C]  bf16 (MXU operand for the pooling matmul)
# ---------------------------------------------------------------------------
def _point_mlp_kernel(pts_ref, w1_ref, b1_ref, w2_ref, b2_ref, o_ref):
    h = jnp.dot(pts_ref[...].astype(jnp.bfloat16), w1_ref[...],
                preferred_element_type=jnp.float32) + b1_ref[...]
    h = jnp.maximum(h, 0.0)
    f = jnp.dot(h.astype(jnp.bfloat16), w2_ref[...],
                preferred_element_type=jnp.float32) + b2_ref[...]
    o_ref[...] = f.astype(o_ref.dtype)


def point_mlp(pts8, pc_params, *, n_tile):
    w1, b1, w2, b2 = pc_params                       # w1/w2 bf16, biases f32
    n_pad, in_f = pts8.shape
    c = w2.shape[1]
    grid = (n_pad // n_tile,)
    return pl.pallas_call(
        _point_mlp_kernel,
        out_shape=jax.ShapeDtypeStruct((n_pad, c), jnp.bfloat16),
        grid_spec=pltpu.PrefetchScalarGridSpec(
            num_scalar_prefetch=0,
            grid=grid,
            in_specs=[
                pl.BlockSpec((n_tile, in_f), lambda n: (n, 0)),   # points
                pl.BlockSpec(w1.shape, lambda n: (0, 0)),         # resident weights
                pl.BlockSpec(b1.shape, lambda n: (0, 0)),
                pl.BlockSpec(w2.shape, lambda n: (0, 0)),
                pl.BlockSpec(b2.shape, lambda n: (0, 0)),
            ],
            out_specs=pl.BlockSpec((n_tile, c), lambda n: (n, 0)),
        ),
        compiler_params=pltpu.CompilerParams(
            dimension_semantics=("parallel",),
            vmem_limit_bytes=32 * 1024 * 1024),
    )(pts8, w1, b1, w2, b2)


# ---------------------------------------------------------------------------
# Kernel A: fused sparse-voxel mean pooling + encoder (posterior mode) + decoder.
#   grid = (M tiles [parallel], N tiles [arbitrary / reduction])
#   o_ref doubles as the pooled-sum accumulator (resident across the N axis)
#   and is overwritten with the lane-dense decoded slab in the finalize branch.
# ---------------------------------------------------------------------------
def _pool_encdec_kernel(pkeys_ref, vkeys_ref, feats_ref,
                        we1_ref, be1_ref, we2_ref, be2_ref,
                        wd1_ref, bd1_ref, wd2_ref, bd2_ref,
                        o_ref, cnt_ref):
    n = pl.program_id(1)

    @pl.when(n == 0)
    def _():
        o_ref[...] = jnp.zeros_like(o_ref)
        cnt_ref[...] = jnp.zeros_like(cnt_ref)

    # pooling mask built once as bf16 (exact 0/1); reused for matmul + count
    a = (vkeys_ref[...] == pkeys_ref[...]).astype(jnp.bfloat16)   # [m_tile, n_tile]
    o_ref[...] += jnp.dot(a, feats_ref[...],
                          preferred_element_type=jnp.float32)
    cnt_ref[...] += jnp.sum(a, axis=-1, keepdims=True, dtype=jnp.float32)

    @pl.when(n == pl.num_programs(1) - 1)
    def _():
        # exact mean (runs once per M tile; empty voxels clamp to count 1 -> 0)
        pooled = o_ref[...] / jnp.maximum(cnt_ref[...], 1.0)
        # encoder -> moments = [mean | logvar]
        h = jnp.dot(pooled.astype(jnp.bfloat16), we1_ref[...],
                    preferred_element_type=jnp.float32) + be1_ref[...]
        h = jnp.maximum(h, 0.0)
        moments = jnp.dot(h.astype(jnp.bfloat16), we2_ref[...],
                          preferred_element_type=jnp.float32) + be2_ref[...]
        # decoder on posterior mode (= mean); wd1 is zero-padded over the
        # logvar rows so no lane slice is needed.
        d = jnp.dot(moments.astype(jnp.bfloat16), wd1_ref[...],
                    preferred_element_type=jnp.float32) + bd1_ref[...]
        d = jnp.maximum(d, 0.0)
        o_ref[...] = jnp.dot(d.astype(jnp.bfloat16), wd2_ref[...],
                             preferred_element_type=jnp.float32) + bd2_ref[...]


def pool_encode_decode(feats, pkeys, vkeys, enc_params, dec_params,
                       *, n_tile, m_tile):
    n_pad, c = feats.shape
    m_pad = vkeys.shape[0]
    we1, be1, we2, be2 = enc_params
    wd1, bd1, wd2, bd2 = dec_params
    latent = wd1.shape[0]
    sdf_w = wd2.shape[1]
    out_width = c                                    # o_ref doubles as pool accumulator
    assert 2 * latent == we2.shape[1] and sdf_w <= out_width

    # pad decoder weights once (wrapper-side, traced a single time)
    wd1_pad = jnp.pad(wd1, ((0, latent), (0, 0)))                 # logvar rows -> zeros
    wd2_pad = jnp.pad(wd2, ((0, 0), (0, out_width - sdf_w)))      # lane-dense output
    bd2_pad = jnp.pad(bd2, ((0, 0), (0, out_width - sdf_w)))

    def resident(arr):
        return pl.BlockSpec(arr.shape, lambda i, n: (0, 0))

    grid = (m_pad // m_tile, n_pad // n_tile)
    return pl.pallas_call(
        _pool_encdec_kernel,
        out_shape=jax.ShapeDtypeStruct((m_pad, out_width), jnp.float32),
        grid_spec=pltpu.PrefetchScalarGridSpec(
            num_scalar_prefetch=0,
            grid=grid,
            in_specs=[
                pl.BlockSpec((1, n_tile), lambda i, n: (0, n)),      # point keys
                pl.BlockSpec((m_tile, 1), lambda i, n: (i, 0)),      # voxel keys
                pl.BlockSpec((n_tile, c), lambda i, n: (n, 0)),      # point feats (bf16)
                resident(we1), resident(be1), resident(we2), resident(be2),
                resident(wd1_pad), resident(bd1), resident(wd2_pad),
                resident(bd2_pad),
            ],
            out_specs=pl.BlockSpec((m_tile, out_width), lambda i, n: (i, 0)),
            scratch_shapes=[pltpu.VMEM((m_tile, 1), jnp.float32)],
        ),
        compiler_params=pltpu.CompilerParams(
            dimension_semantics=("parallel", "arbitrary"),
            vmem_limit_bytes=32 * 1024 * 1024),
    )(pkeys, vkeys, feats, we1, be1, we2, be2, wd1_pad, bd1, wd2_pad, bd2_pad)


# ---------------------------------------------------------------------------
# Deterministic synthetic parameters (shapes implied by the VAE pipeline)
# ---------------------------------------------------------------------------
def init_params(key, in_feat=6, c=128, latent=32, dec_hidden=128, dec_out=8):
    ks = jax.random.split(key, 6)
    s = 0.02

    def lin(k, din, dout):
        return (s * jax.random.normal(k, (din, dout), jnp.float32)).astype(jnp.bfloat16)

    # layer-1 weight padded to 8 input features (rows 6,7 multiply zeros)
    w1 = jnp.pad(s * jax.random.normal(ks[0], (in_feat, c), jnp.float32),
                 ((0, 8 - in_feat), (0, 0))).astype(jnp.bfloat16)
    return {
        # local point-cloud encoder: (rel_xyz, normals) -> C
        "pc_enc": (w1, jnp.zeros((1, c), jnp.float32),
                   lin(ks[1], c, c), jnp.zeros((1, c), jnp.float32)),
        # sparse encoder: C -> (mean, logvar) = 2 * latent
        "enc": (lin(ks[2], c, c), jnp.zeros((1, c), jnp.float32),
                lin(ks[3], c, 2 * latent), jnp.zeros((1, 2 * latent), jnp.float32)),
        # decoder: latent -> per-voxel SDF at 8 corners
        "dec": (lin(ks[4], latent, dec_hidden), jnp.zeros((1, dec_hidden), jnp.float32),
                lin(ks[5], dec_hidden, dec_out), jnp.zeros((1, dec_out), jnp.float32)),
    }


# ---------------------------------------------------------------------------
# Forward pass (mirrors TripoSFVAEInference.forward)
# ---------------------------------------------------------------------------
@functools.partial(jax.jit, static_argnames=("resolution", "n_tile", "m_tile"))
def triposf_vae_forward(params, points_sample, sparse_voxel_coords,
                        resolution=16, n_tile=1024, m_tile=256):
    res = resolution
    n = points_sample.shape[0]
    m = sparse_voxel_coords.shape[0]
    n_pad = _round_up(n, n_tile)
    m_pad = _round_up(m, m_tile)

    # voxelization math hoisted out of the kernels (was lane-sparse VPU work)
    xyz = points_sample[:, :3]
    g = (xyz + 0.5) * res
    vox = jnp.clip(jnp.floor(g), 0.0, res - 1.0)
    rel = g - (vox + 0.5)                                  # coords relative to voxel center
    nrm = points_sample[:, 3:6]
    pts8 = jnp.concatenate([rel, nrm, jnp.zeros((n, 2), jnp.float32)], axis=-1)
    pts8 = jnp.pad(pts8, ((0, n_pad - n), (0, 0)))         # [N_pad, 8]

    # point -> voxel key (padded points get key -1: matches no sparse voxel)
    voxi = vox.astype(jnp.int32)
    pkeys = voxi[:, 0] * (res * res) + voxi[:, 1] * res + voxi[:, 2]
    pkeys = jnp.pad(pkeys, (0, n_pad - n), constant_values=-1).reshape(1, n_pad)

    svc = sparse_voxel_coords.astype(jnp.int32)
    vkeys = svc[:, 0] * (res * res) + svc[:, 1] * res + svc[:, 2]
    vkeys = jnp.pad(vkeys, (0, m_pad - m), constant_values=-2).reshape(m_pad, 1)

    # 1) per-point MLP runs once over N (not per M tile); feats stored bf16.
    feats = point_mlp(pts8, params["pc_enc"], n_tile=n_tile)

    # 2+3) fused sparse-voxel mean pooling + encoder (posterior mode) + decoder
    packed = pool_encode_decode(feats, pkeys, vkeys, params["enc"], params["dec"],
                                n_tile=n_tile, m_tile=m_tile)

    sdf_w = params["dec"][2].shape[1]
    sdf = packed[:m, :sdf_w]                               # decoded per-voxel field
    return sdf, sparse_voxel_coords


if __name__ == "__main__":
    N, M, RES = 2048, 512, 16
    LATENT, DEC_OUT = 32, 8

    key = jax.random.PRNGKey(0)
    k_pts, k_nrm, k_par = jax.random.split(key, 3)

    xyz = jax.random.uniform(k_pts, (N, 3), jnp.float32, minval=-0.5, maxval=0.5)
    nrm = jax.random.normal(k_nrm, (N, 3), jnp.float32)
    nrm = nrm / jnp.linalg.norm(nrm, axis=-1, keepdims=True)
    points_sample = jnp.concatenate([xyz, nrm], axis=-1)              # [N, 6]

    # sparse voxel coords: voxels occupied by the first M points
    occ = jnp.clip(jnp.floor((xyz + 0.5) * RES), 0, RES - 1).astype(jnp.int32)
    sparse_voxel_coords = occ[:M]                                     # [M, 3]

    params = init_params(k_par, c=128, latent=LATENT, dec_hidden=128, dec_out=DEC_OUT)

    sdf, coords = triposf_vae_forward(
        params, points_sample, sparse_voxel_coords, resolution=RES)
    jax.block_until_ready(sdf)

    assert sdf.shape == (M, DEC_OUT)
    assert coords.shape == (M, 3)
    print("KERNEL_OK")
</pallas_src>

<mosaic_0001>
module attributes {stable_mosaic.version = 11 : i64} {
  func.func @_point_mlp_kernel(%arg0: i32, %arg1: memref<1024x8xf32, #tpu.memory_space<vmem>>, %arg2: memref<8x128xbf16, #tpu.memory_space<vmem>>, %arg3: memref<1x128xf32, #tpu.memory_space<vmem>>, %arg4: memref<128x128xbf16, #tpu.memory_space<vmem>>, %arg5: memref<1x128xf32, #tpu.memory_space<vmem>>, %arg6: memref<1024x128xbf16, #tpu.memory_space<vmem>>) attributes {dimension_semantics = [#tpu.dimension_semantics<parallel>], iteration_bounds = array<i64: 2>, scalar_prefetch = 0 : i64, scratch_operands = 0 : i64, tpu.core_type = #tpu.core_type<tc>, window_params = [{transform_indices = @transform_0, window_bounds = array<i64: 1024, 8>}, {pipeline_mode = #tpu.pipeline_mode<synchronous>, transform_indices = @transform_1, window_bounds = array<i64: 8, 128>}, {pipeline_mode = #tpu.pipeline_mode<synchronous>, transform_indices = @transform_2, window_bounds = array<i64: 1, 128>}, {pipeline_mode = #tpu.pipeline_mode<synchronous>, transform_indices = @transform_3, window_bounds = array<i64: 128, 128>}, {pipeline_mode = #tpu.pipeline_mode<synchronous>, transform_indices = @transform_4, window_bounds = array<i64: 1, 128>}, {transform_indices = @transform_5, window_bounds = array<i64: 1024, 128>}]} {
    %c0 = arith.constant 0 : index
    %c0_0 = arith.constant 0 : index
    %0 = vector.load %arg1[%c0, %c0_0] : memref<1024x8xf32, #tpu.memory_space<vmem>>, vector<1024x8xf32>
    %1 = arith.truncf %0 : vector<1024x8xf32> to vector<1024x8xbf16>
    %c0_1 = arith.constant 0 : index
    %c0_2 = arith.constant 0 : index
    %2 = vector.load %arg2[%c0_1, %c0_2] : memref<8x128xbf16, #tpu.memory_space<vmem>>, vector<8x128xbf16>
    %cst = arith.constant dense<0.000000e+00> : vector<1024x128xf32>
    %3 = tpu.matmul %1, %2, %cst {dimension_numbers = #tpu.dot_dimension_numbers<[1], [0], [0], [1], [0, 0, 1, 1], [], []>} : vector<1024x8xbf16>, vector<8x128xbf16>, vector<1024x128xf32> -> vector<1024x128xf32>
    %c0_3 = arith.constant 0 : index
    %c0_4 = arith.constant 0 : index
    %4 = vector.load %arg3[%c0_3, %c0_4] : memref<1x128xf32, #tpu.memory_space<vmem>>, vector<1x128xf32>
    %5 = vector.broadcast %4 : vector<1x128xf32> to vector<1024x128xf32>
    %6 = arith.addf %3, %5 : vector<1024x128xf32>
    %cst_5 = arith.constant 0.000000e+00 : f32
    %7 = vector.broadcast %cst_5 : f32 to vector<1024x128xf32>
    %8 = arith.maximumf %6, %7 : vector<1024x128xf32>
    %9 = arith.truncf %8 : vector<1024x128xf32> to vector<1024x128xbf16>
    %c0_6 = arith.constant 0 : index
    %c0_7 = arith.constant 0 : index
    %10 = vector.load %arg4[%c0_6, %c0_7] : memref<128x128xbf16, #tpu.memory_space<vmem>>, vector<128x128xbf16>
    %cst_8 = arith.constant dense<0.000000e+00> : vector<1024x128xf32>
    %11 = tpu.matmul %9, %10, %cst_8 {dimension_numbers = #tpu.dot_dimension_numbers<[1], [0], [0], [1], [0, 0, 1, 1], [], []>} : vector<1024x128xbf16>, vector<128x128xbf16>, vector<1024x128xf32> -> vector<1024x128xf32>
    %c0_9 = arith.constant 0 : index
    %c0_10 = arith.constant 0 : index
    %12 = vector.load %arg5[%c0_9, %c0_10] : memref<1x128xf32, #tpu.memory_space<vmem>>, vector<1x128xf32>
    %13 = vector.broadcast %12 : vector<1x128xf32> to vector<1024x128xf32>
    %14 = arith.addf %11, %13 : vector<1024x128xf32>
    %15 = arith.truncf %14 : vector<1024x128xf32> to vector<1024x128xbf16>
    %c0_11 = arith.constant 0 : index
    %c0_12 = arith.constant 0 : index
    %16 = vector.load %arg6[%c0_11, %c0_12] : memref<1024x128xbf16, #tpu.memory_space<vmem>>, vector<1024x128xbf16>
    tpu.vector_store %arg6[%c0_11, %c0_12], %15 {strides = array<i32>} : memref<1024x128xbf16, #tpu.memory_space<vmem>>, vector<1024x128xbf16>,
    return
  }
  func.func @transform_0(%arg0: i32) -> (i32, i32) {
    %c0_i32 = arith.constant 0 : i32
    %c0_i32_0 = arith.constant 0 : i32
    return %arg0, %c0_i32 : i32, i32
  }
  func.func @transform_1(%arg0: i32) -> (i32, i32) {
    %c0_i32 = arith.constant 0 : i32
    %c0_i32_0 = arith.constant 0 : i32
    %c0_i32_1 = arith.constant 0 : i32
    return %c0_i32, %c0_i32_0 : i32, i32
  }
  func.func @transform_2(%arg0: i32) -> (i32, i32) {
    %c0_i32 = arith.constant 0 : i32
    %c0_i32_0 = arith.constant 0 : i32
    %c0_i32_1 = arith.constant 0 : i32
    return %c0_i32, %c0_i32_0 : i32, i32
  }
  func.func @transform_3(%arg0: i32) -> (i32, i32) {
    %c0_i32 = arith.constant 0 : i32
    %c0_i32_0 = arith.constant 0 : i32
    %c0_i32_1 = arith.constant 0 : i32
    return %c0_i32, %c0_i32_0 : i32, i32
  }
  func.func @transform_4(%arg0: i32) -> (i32, i32) {
    %c0_i32 = arith.constant 0 : i32
    %c0_i32_0 = arith.constant 0 : i32
    %c0_i32_1 = arith.constant 0 : i32
    return %c0_i32, %c0_i32_0 : i32, i32
  }
  func.func @transform_5(%arg0: i32) -> (i32, i32) {
    %c0_i32 = arith.constant 0 : i32
    %c0_i32_0 = arith.constant 0 : i32
    return %arg0, %c0_i32 : i32, i32
  }
}

module attributes {stable_mosaic.version = 11 : i64} {
  func.func @_pool_encdec_kernel(%arg0: i32, %arg1: i32, %arg2: memref<1x1024xi32, #tpu.memory_space<vmem>>, %arg3: memref<256x1xi32, #tpu.memory_space<vmem>>, %arg4: memref<1024x128xbf16, #tpu.memory_space<vmem>>, %arg5: memref<128x128xbf16, #tpu.memory_space<vmem>>, %arg6: memref<1x128xf32, #tpu.memory_space<vmem>>, %arg7: memref<128x64xbf16, #tpu.memory_space<vmem>>, %arg8: memref<1x64xf32, #tpu.memory_space<vmem>>, %arg9: memref<64x128xbf16, #tpu.memory_space<vmem>>, %arg10: memref<1x128xf32, #tpu.memory_space<vmem>>, %arg11: memref<128x128xbf16, #tpu.memory_space<vmem>>, %arg12: memref<1x128xf32, #tpu.memory_space<vmem>>, %arg13: memref<256x128xf32, #tpu.memory_space<vmem>>, %arg14: memref<256x1xf32, #tpu.memory_space<vmem>>) attributes {dimension_semantics = [#tpu.dimension_semantics<parallel>, #tpu.dimension_semantics<arbitrary>], iteration_bounds = array<i64: 2, 2>, scalar_prefetch = 0 : i64, scratch_operands = 1 : i64, tpu.core_type = #tpu.core_type<tc>, window_params = [{transform_indices = @transform_0, window_bounds = array<i64: 1, 1024>}, {transform_indices = @transform_1, window_bounds = array<i64: 256, 1>}, {transform_indices = @transform_2, window_bounds = array<i64: 1024, 128>}, {pipeline_mode = #tpu.pipeline_mode<synchronous>, transform_indices = @transform_3, window_bounds = array<i64: 128, 128>}, {pipeline_mode = #tpu.pipeline_mode<synchronous>, transform_indices = @transform_4, window_bounds = array<i64: 1, 128>}, {pipeline_mode = #tpu.pipeline_mode<synchronous>, transform_indices = @transform_5, window_bounds = array<i64: 128, 64>}, {pipeline_mode = #tpu.pipeline_mode<synchronous>, transform_indices = @transform_6, window_bounds = array<i64: 1, 64>}, {pipeline_mode = #tpu.pipeline_mode<synchronous>, transform_indices = @transform_7, window_bounds = array<i64: 64, 128>}, {pipeline_mode = #tpu.pipeline_mode<synchronous>, transform_indices = @transform_8, window_bounds = array<i64: 1, 128>}, {pipeline_mode = #tpu.pipeline_mode<synchronous>, transform_indices = @transform_9, window_bounds = array<i64: 128, 128>}, {pipeline_mode = #tpu.pipeline_mode<synchronous>, transform_indices = @transform_10, window_bounds = array<i64: 1, 128>}, {transform_indices = @transform_11, window_bounds = array<i64: 256, 128>}]} {
    %c0_i32 = arith.constant 0 : i32
    %0 = arith.cmpi eq, %arg1, %c0_i32 : i32
    %1 = arith.extui %0 : i1 to i32
    %c0_i32_0 = arith.constant 0 : i32
    %2 = arith.cmpi ne, %1, %c0_i32_0 : i32
    scf.if %2 {
      %cst_16 = arith.constant 0.000000e+00 : f32
      %25 = vector.broadcast %cst_16 : f32 to vector<256x128xf32>
      %c0_17 = arith.constant 0 : index
      %c0_18 = arith.constant 0 : index
      %26 = vector.load %arg13[%c0_17, %c0_18] : memref<256x128xf32, #tpu.memory_space<vmem>>, vector<256x128xf32>
      tpu.vector_store %arg13[%c0_17, %c0_18], %25 {strides = array<i32>} : memref<256x128xf32, #tpu.memory_space<vmem>>, vector<256x128xf32>,
      %cst_19 = arith.constant 0.000000e+00 : f32
      %27 = vector.broadcast %cst_19 : f32 to vector<256x1xf32>
      %c0_20 = arith.constant 0 : index
      %c0_21 = arith.constant 0 : index
      %28 = vector.load %arg14[%c0_20, %c0_21] : memref<256x1xf32, #tpu.memory_space<vmem>>, vector<256x1xf32>
      tpu.vector_store %arg14[%c0_20, %c0_21], %27 {strides = array<i32>} : memref<256x1xf32, #tpu.memory_space<vmem>>, vector<256x1xf32>,
    } else {
    }
    %c0 = arith.constant 0 : index
    %c0_1 = arith.constant 0 : index
    %3 = vector.load %arg3[%c0, %c0_1] : memref<256x1xi32, #tpu.memory_space<vmem>>, vector<256x1xi32>
    %c0_2 = arith.constant 0 : index
    %c0_3 = arith.constant 0 : index
    %4 = vector.load %arg2[%c0_2, %c0_3] : memref<1x1024xi32, #tpu.memory_space<vmem>>, vector<1x1024xi32>
    %5 = vector.broadcast %3 : vector<256x1xi32> to vector<256x1024xi32>
    %6 = vector.broadcast %4 : vector<1x1024xi32> to vector<256x1024xi32>
    %7 = arith.cmpi eq, %5, %6 : vector<256x1024xi32>
    %8 = arith.extui %7 : vector<256x1024xi1> to vector<256x1024xi32>
    %9 = arith.sitofp %8 : vector<256x1024xi32> to vector<256x1024xf32>
    %10 = arith.truncf %9 : vector<256x1024xf32> to vector<256x1024xbf16>
    %c0_4 = arith.constant 0 : index
    %c0_5 = arith.constant 0 : index
    %11 = vector.load %arg13[%c0_4, %c0_5] : memref<256x128xf32, #tpu.memory_space<vmem>>, vector<256x128xf32>
    %c0_6 = arith.constant 0 : index
    %c0_7 = arith.constant 0 : index
    %12 = vector.load %arg4[%c0_6, %c0_7] : memref<1024x128xbf16, #tpu.memory_space<vmem>>, vector<1024x128xbf16>
    %cst = arith.constant dense<0.000000e+00> : vector<256x128xf32>
    %13 = tpu.matmul %10, %12, %cst {dimension_numbers = #tpu.dot_dimension_numbers<[1], [0], [0], [1], [0, 0, 1, 1], [], []>} : vector<256x1024xbf16>, vector<1024x128xbf16>, vector<256x128xf32> -> vector<256x128xf32>
    %14 = arith.addf %11, %13 : vector<256x128xf32>
    %c0_8 = arith.constant 0 : index
    %c0_9 = arith.constant 0 : index
    %15 = vector.load %arg13[%c0_8, %c0_9] : memref<256x128xf32, #tpu.memory_space<vmem>>, vector<256x128xf32>
    tpu.vector_store %arg13[%c0_8, %c0_9], %14 {strides = array<i32>} : memref<256x128xf32, #tpu.memory_space<vmem>>, vector<256x128xf32>,
    %c0_10 = arith.constant 0 : index
    %c0_11 = arith.constant 0 : index
    %16 = vector.load %arg14[%c0_10, %c0_11] : memref<256x1xf32, #tpu.memory_space<vmem>>, vector<256x1xf32>
    %17 = arith.extf %10 : vector<256x1024xbf16> to vector<256x1024xf32>
    %cst_12 = arith.constant dense<0.000000e+00> : vector<256xf32>
    %18 = vector.multi_reduction <add>, %17, %cst_12 [1] : vector<256x1024xf32> to vector<256xf32>
    %19 = vector.shape_cast %18 : vector<256xf32> to vector<256x1xf32>
    %20 = arith.addf %16, %19 : vector<256x1xf32>
    %c0_13 = arith.constant 0 : index
    %c0_14 = arith.constant 0 : index
    %21 = vector.load %arg14[%c0_13, %c0_14] : memref<256x1xf32, #tpu.memory_space<vmem>>, vector<256x1xf32>
    tpu.vector_store %arg14[%c0_13, %c0_14], %20 {strides = array<i32>} : memref<256x1xf32, #tpu.memory_space<vmem>>, vector<256x1xf32>,
    %c1_i32 = arith.constant 1 : i32
    %22 = arith.cmpi eq, %arg1, %c1_i32 : i32
    %23 = arith.extui %22 : i1 to i32
    %c0_i32_15 = arith.constant 0 : i32
    %24 = arith.cmpi ne, %23, %c0_i32_15 : i32
    scf.if %24 {
      %c0_16 = arith.constant 0 : index
      %c0_17 = arith.constant 0 : index
      %25 = vector.load %arg13[%c0_16, %c0_17] : memref<256x128xf32, #tpu.memory_space<vmem>>, vector<256x128xf32>
      %c0_18 = arith.constant 0 : index
      %c0_19 = arith.constant 0 : index
      %26 = vector.load %arg14[%c0_18, %c0_19] : memref<256x1xf32, #tpu.memory_space<vmem>>, vector<256x1xf32>
      %cst_20 = arith.constant 1.000000e+00 : f32
      %27 = vector.broadcast %cst_20 : f32 to vector<256x1xf32>
      %28 = arith.maximumf %26, %27 : vector<256x1xf32>
      %29 = vector.broadcast %28 : vector<256x1xf32> to vector<256x128xf32>
      %30 = arith.divf %25, %29 : vector<256x128xf32>
      %31 = arith.truncf %30 : vector<256x128xf32> to vector<256x128xbf16>
      %c0_21 = arith.constant 0 : index
      %c0_22 = arith.constant 0 : index
      %32 = vector.load %arg5[%c0_21, %c0_22] : memref<128x128xbf16, #tpu.memory_space<vmem>>, vector<128x128xbf16>
      %cst_23 = arith.constant dense<0.000000e+00> : vector<256x128xf32>
      %33 = tpu.matmul %31, %32, %cst_23 {dimension_numbers = #tpu.dot_dimension_numbers<[1], [0], [0], [1], [0, 0, 1, 1], [], []>} : vector<256x128xbf16>, vector<128x128xbf16>, vector<256x128xf32> -> vector<256x128xf32>
      %c0_24 = arith.constant 0 : index
      %c0_25 = arith.constant 0 : index
      %34 = vector.load %arg6[%c0_24, %c0_25] : memref<1x128xf32, #tpu.memory_space<vmem>>, vector<1x128xf32>
      %35 = vector.broadcast %34 : vector<1x128xf32> to vector<256x128xf32>
      %36 = arith.addf %33, %35 : vector<256x128xf32>
      %cst_26 = arith.constant 0.000000e+00 : f32
      %37 = vector.broadcast %cst_26 : f32 to vector<256x128xf32>
      %38 = arith.maximumf %36, %37 : vector<256x128xf32>
      %39 = arith.truncf %38 : vector<256x128xf32> to vector<256x128xbf16>
      %c0_27 = arith.constant 0 : index
      %c0_28 = arith.constant 0 : index
      %40 = vector.load %arg7[%c0_27, %c0_28] : memref<128x64xbf16, #tpu.memory_space<vmem>>, vector<128x64xbf16>
      %cst_29 = arith.constant dense<0.000000e+00> : vector<256x64xf32>
      %41 = tpu.matmul %39, %40, %cst_29 {dimension_numbers = #tpu.dot_dimension_numbers<[1], [0], [0], [1], [0, 0, 1, 1], [], []>} : vector<256x128xbf16>, vector<128x64xbf16>, vector<256x64xf32> -> vector<256x64xf32>
      %c0_30 = arith.constant 0 : index
      %c0_31 = arith.constant 0 : index
      %42 = vector.load %arg8[%c0_30, %c0_31] : memref<1x64xf32, #tpu.memory_space<vmem>>, vector<1x64xf32>
      %43 = vector.broadcast %42 : vector<1x64xf32> to vector<256x64xf32>
      %44 = arith.addf %41, %43 : vector<256x64xf32>
      %45 = arith.truncf %44 : vector<256x64xf32> to vector<256x64xbf16>
      %c0_32 = arith.constant 0 : index
      %c0_33 = arith.constant 0 : index
      %46 = vector.load %arg9[%c0_32, %c0_33] : memref<64x128xbf16, #tpu.memory_space<vmem>>, vector<64x128xbf16>
      %cst_34 = arith.constant dense<0.000000e+00> : vector<256x128xf32>
      %47 = tpu.matmul %45, %46, %cst_34 {dimension_numbers = #tpu.dot_dimension_numbers<[1], [0], [0], [1], [0, 0, 1, 1], [], []>} : vector<256x64xbf16>, vector<64x128xbf16>, vector<256x128xf32> -> vector<256x128xf32>
      %c0_35 = arith.constant 0 : index
      %c0_36 = arith.constant 0 : index
      %48 = vector.load %arg10[%c0_35, %c0_36] : memref<1x128xf32, #tpu.memory_space<vmem>>, vector<1x128xf32>
      %49 = vector.broadcast %48 : vector<1x128xf32> to vector<256x128xf32>
      %50 = arith.addf %47, %49 : vector<256x128xf32>
      %cst_37 = arith.constant 0.000000e+00 : f32
      %51 = vector.broadcast %cst_37 : f32 to vector<256x128xf32>
      %52 = arith.maximumf %50, %51 : vector<256x128xf32>
      %53 = arith.truncf %52 : vector<256x128xf32> to vector<256x128xbf16>
      %c0_38 = arith.constant 0 : index
      %c0_39 = arith.constant 0 : index
      %54 = vector.load %arg11[%c0_38, %c0_39] : memref<128x128xbf16, #tpu.memory_space<vmem>>, vector<128x128xbf16>
      %cst_40 = arith.constant dense<0.000000e+00> : vector<256x128xf32>
      %55 = tpu.matmul %53, %54, %cst_40 {dimension_numbers = #tpu.dot_dimension_numbers<[1], [0], [0], [1], [0, 0, 1, 1], [], []>} : vector<256x128xbf16>, vector<128x128xbf16>, vector<256x128xf32> -> vector<256x128xf32>
      %c0_41 = arith.constant 0 : index
      %c0_42 = arith.constant 0 : index
      %56 = vector.load %arg12[%c0_41, %c0_42] : memref<1x128xf32, #tpu.memory_space<vmem>>, vector<1x128xf32>
      %57 = vector.broadcast %56 : vector<1x128xf32> to vector<256x128xf32>
      %58 = arith.addf %55, %57 : vector<256x128xf32>
      %c0_43 = arith.constant 0 : index
      %c0_44 = arith.constant 0 : index
      %59 = vector.load %arg13[%c0_43, %c0_44] : memref<256x128xf32, #tpu.memory_space<vmem>>, vector<256x128xf32>
      tpu.vector_store %arg13[%c0_43, %c0_44], %58 {strides = array<i32>} : memref<256x128xf32, #tpu.memory_space<vmem>>, vector<256x128xf32>,
    } else {
    }
    return
  }
  func.func @transform_0(%arg0: i32, %arg1: i32) -> (i32, i32) {
    %c0_i32 = arith.constant 0 : i32
    %c0_i32_0 = arith.constant 0 : i32
    return %c0_i32, %arg1 : i32, i32
  }
  func.func @transform_1(%arg0: i32, %arg1: i32) -> (i32, i32) {
    %c0_i32 = arith.constant 0 : i32
    %c0_i32_0 = arith.constant 0 : i32
    return %arg0, %c0_i32 : i32, i32
  }
  func.func @transform_2(%arg0: i32, %arg1: i32) -> (i32, i32) {
    %c0_i32 = arith.constant 0 : i32
    %c0_i32_0 = arith.constant 0 : i32
    return %arg1, %c0_i32 : i32, i32
  }
  func.func @transform_3(%arg0: i32, %arg1: i32) -> (i32, i32) {
    %c0_i32 = arith.constant 0 : i32
    %c0_i32_0 = arith.constant 0 : i32
    %c0_i32_1 = arith.constant 0 : i32
    return %c0_i32, %c0_i32_0 : i32, i32
  }
  func.func @transform_4(%arg0: i32, %arg1: i32) -> (i32, i32) {
    %c0_i32 = arith.constant 0 : i32
    %c0_i32_0 = arith.constant 0 : i32
    %c0_i32_1 = arith.constant 0 : i32
    return %c0_i32, %c0_i32_0 : i32, i32
  }
  func.func @transform_5(%arg0: i32, %arg1: i32) -> (i32, i32) {
    %c0_i32 = arith.constant 0 : i32
    %c0_i32_0 = arith.constant 0 : i32
    %c0_i32_1 = arith.constant 0 : i32
    return %c0_i32, %c0_i32_0 : i32, i32
  }
  func.func @transform_6(%arg0: i32, %arg1: i32) -> (i32, i32) {
    %c0_i32 = arith.constant 0 : i32
    %c0_i32_0 = arith.constant 0 : i32
    %c0_i32_1 = arith.constant 0 : i32
    return %c0_i32, %c0_i32_0 : i32, i32
  }
  func.func @transform_7(%arg0: i32, %arg1: i32) -> (i32, i32) {
    %c0_i32 = arith.constant 0 : i32
    %c0_i32_0 = arith.constant 0 : i32
    %c0_i32_1 = arith.constant 0 : i32
    return %c0_i32, %c0_i32_0 : i32, i32
  }
  func.func @transform_8(%arg0: i32, %arg1: i32) -> (i32, i32) {
    %c0_i32 = arith.constant 0 : i32
    %c0_i32_0 = arith.constant 0 : i32
    %c0_i32_1 = arith.constant 0 : i32
    return %c0_i32, %c0_i32_0 : i32, i32
  }
  func.func @transform_9(%arg0: i32, %arg1: i32) -> (i32, i32) {
    %c0_i32 = arith.constant 0 : i32
    %c0_i32_0 = arith.constant 0 : i32
    %c0_i32_1 = arith.constant 0 : i32
    return %c0_i32, %c0_i32_0 : i32, i32
  }
  func.func @transform_10(%arg0: i32, %arg1: i32) -> (i32, i32) {
    %c0_i32 = arith.constant 0 : i32
    %c0_i32_0 = arith.constant 0 : i32
    %c0_i32_1 = arith.constant 0 : i32
    return %c0_i32, %c0_i32_0 : i32, i32
  }
  func.func @transform_11(%arg0: i32, %arg1: i32) -> (i32, i32) {
    %c0_i32 = arith.constant 0 : i32
    %c0_i32_0 = arith.constant 0 : i32
    return %arg0, %c0_i32 : i32, i32
  }
}

</mosaic_0001>

<llo_original>
// kernel: triposf_vae_forward.2
$region0: #{triposf_vae_forward.2}
  #allocation0 [shape = 'u32[]', space=smem, size = 0x4, offset = 0x4, fixed_abs, tag = 'smem constant byte address 0x4 - core index']
  #allocation1 [shape = 'u32[144,128]{1,0:T(1,128)}', space=vmem, size = 0x12000, scoped, tag = 'internal scratch']
  %s0 = inlined_call_operand.vmem [shape: f32[2048,8], index: 0, kind: input, shape index: {}]
  %s1 = inlined_call_operand.vmem [shape: bf16[8,128], index: 1, kind: input, shape index: {}]
  %s2 = inlined_call_operand.vmem [shape: f32[1,128], index: 2, kind: input, shape index: {}]
  %s3 = inlined_call_operand.vmem [shape: bf16[128,128], index: 3, kind: input, shape index: {}]
  %s4 = inlined_call_operand.vmem [shape: f32[1,128], index: 4, kind: input, shape index: {}]
  %s5 = inlined_call_operand.vmem [shape: bf16[2048,128], index: 5, kind: output, shape index: {}]
  %s6 = sld [smem:[#allocation0]]
  $region53: #{triposf_vae_forward.2} parent=0
    _
  %s8 = ssub.s32 1, %s6
  %s9 = scalar_select 0, %s8, %s6
  loop: start=0, step=1, limit=4
  $region2: #{triposf_vae_forward.2} parent=0 // loop_pre_header
    _
  $region3: #{triposf_vae_forward.2} parent=0 // loop_header
    %s11 = sphi 0, %s15
    %p12 = scmp.ge.s32.totalorder %s11, 4
    %s21 = sphi 0, %s23
    %s24 = sphi 0, %s21
    %s25 = sphi 0, %s24
    %s41 = sphi 0, %s25
    %s45 = sphi 0, %s45
    %s47 = sphi 0, %s45
    %s48 = sphi 0, %s47
    %s62 = sphi 0, %s48
    %s66 = sphi 0, %s66
    %s68 = sphi 0, %s66
    %s69 = sphi 0, %s68
    %s83 = sphi 0, %s69
    %s87 = sphi 0, %s87
    %s89 = sphi 0, %s87
    %s90 = sphi 0, %s89
    %s104 = sphi 0, %s90
    %s108 = sphi 0, %s108
    %s110 = sphi 0, %s108
    %s111 = sphi 0, %s110
    %s125 = sphi 0, %s111
    %s131 = sphi 0, %s133
    %s134 = sphi 0, %s131
    %s135 = sphi 0, %s134
    %s151 = sphi 0, %s135
  $region4: #{triposf_vae_forward.2} parent=0 // loop_header_branch
    %14 = sbr.rel (%p12) target = $region8
  $region5: #{triposf_vae_forward.2} parent=0 // loop_body
    %s16 = ssub.s32 %s11, 1
    %s17 = ssub.s32 %s11, 2
    %s18 = sadd.s32 %s11, 1
    %s19 = ssub.s32 %s11, %s18
    %p20 = scmp.eq.s32.totalorder %s19, 0
    %s22 = sadd.s32 %s21, 1
    %s23 = scalar_select %p20, %s21, %s22
    %p26 = pneg %p20
    %p27 = scmp.eq.s32.totalorder %s11, 1
    %p28 = por %p26, %p27
    %p29 = scmp.ne.s32.totalorder %s21, %s24
    %p30 = scmp.eq.s32.totalorder %s11, 0
    %p31 = por %p29, %p30
    %p32 = scmp.ne.s32.totalorder %s21, %s24
    %p33 = scmp.eq.s32.totalorder %s16, 1
    %p34 = por %p32, %p33
    %p35 = scmp.ne.s32.totalorder %s24, %s25
    %p36 = scmp.eq.s32.totalorder %s16, 0
    %p37 = por %p35, %p36
    %p38 = scmp.ne.s32.totalorder %s24, %s25
    %p39 = scmp.eq.s32.totalorder %s17, 1
    %p40 = por %p38, %p39
    %p42 = scmp.ne.s32.totalorder %s25, %s41
    %p43 = scmp.eq.s32.totalorder %s17, 0
    %p44 = por %p42, %p43
    %s46 = sadd.s32 %s45, 1
    %p49 = scmp.eq.s32.totalorder %s11, 1
    %p50 = scmp.ne.s32.totalorder %s45, %s47
    %p51 = scmp.eq.s32.totalorder %s11, 0
    %p52 = por %p50, %p51
    %p53 = scmp.ne.s32.totalorder %s45, %s47
    %p54 = scmp.eq.s32.totalorder %s16, 1
    %p55 = por %p53, %p54
    %p56 = scmp.ne.s32.totalorder %s47, %s48
    %p57 = scmp.eq.s32.totalorder %s16, 0
    %p58 = por %p56, %p57
    %p59 = scmp.ne.s32.totalorder %s47, %s48
    %p60 = scmp.eq.s32.totalorder %s17, 1
    %p61 = por %p59, %p60
    %p63 = scmp.ne.s32.totalorder %s48, %s62
    %p64 = scmp.eq.s32.totalorder %s17, 0
    %p65 = por %p63, %p64
    %s67 = sadd.s32 %s66, 1
    %p70 = scmp.eq.s32.totalorder %s11, 1
    %p71 = scmp.ne.s32.totalorder %s66, %s68
    %p72 = scmp.eq.s32.totalorder %s11, 0
    %p73 = por %p71, %p72
    %p74 = scmp.ne.s32.totalorder %s66, %s68
    %p75 = scmp.eq.s32.totalorder %s16, 1
    %p76 = por %p74, %p75
    %p77 = scmp.ne.s32.totalorder %s68, %s69
    %p78 = scmp.eq.s32.totalorder %s16, 0
    %p79 = por %p77, %p78
    %p80 = scmp.ne.s32.totalorder %s68, %s69
    %p81 = scmp.eq.s32.totalorder %s17, 1
    %p82 = por %p80, %p81
    %p84 = scmp.ne.s32.totalorder %s69, %s83
    %p85 = scmp.eq.s32.totalorder %s17, 0
    %p86 = por %p84, %p85
    %s88 = sadd.s32 %s87, 1
    %p91 = scmp.eq.s32.totalorder %s11, 1
    %p92 = scmp.ne.s32.totalorder %s87, %s89
    %p93 = scmp.eq.s32.totalorder %s11, 0
    %p94 = por %p92, %p93
    %p95 = scmp.ne.s32.totalorder %s87, %s89
    %p96 = scmp.eq.s32.totalorder %s16, 1
    %p97 = por %p95, %p96
    %p98 = scmp.ne.s32.totalorder %s89, %s90
    %p99 = scmp.eq.s32.totalorder %s16, 0
    %p100 = por %p98, %p99
    %p101 = scmp.ne.s32.totalorder %s89, %s90
    %p102 = scmp.eq.s32.totalorder %s17, 1
    %p103 = por %p101, %p102
    %p105 = scmp.ne.s32.totalorder %s90, %s104
    %p106 = scmp.eq.s32.totalorder %s17, 0
    %p107 = por %p105, %p106
    %s109 = sadd.s32 %s108, 1
    %p112 = scmp.eq.s32.totalorder %s11, 1
    %p113 = scmp.ne.s32.totalorder %s108, %s110
    %p114 = scmp.eq.s32.totalorder %s11, 0
    %p115 = por %p113, %p114
    %p116 = scmp.ne.s32.totalorder %s108, %s110
    %p117 = scmp.eq.s32.totalorder %s16, 1
    %p118 = por %p116, %p117
    %p119 = scmp.ne.s32.totalorder %s110, %s111
    %p120 = scmp.eq.s32.totalorder %s16, 0
    %p121 = por %p119, %p120
    %p122 = scmp.ne.s32.totalorder %s110, %s111
    %p123 = scmp.eq.s32.totalorder %s17, 1
    %p124 = por %p122, %p123
    %p126 = scmp.ne.s32.totalorder %s111, %s125
    %p127 = scmp.eq.s32.totalorder %s17, 0
    %p128 = por %p126, %p127
    %s129 = ssub.s32 %s11, %s18
    %p130 = scmp.eq.s32.totalorder %s129, 0
    %s132 = sadd.s32 %s131, 1
    %s133 = scalar_select %p130, %s131, %s132
    %p136 = pneg %p130
    %p137 = scmp.eq.s32.totalorder %s11, 1
    %p138 = por %p136, %p137
    %p139 = scmp.ne.s32.totalorder %s131, %s134
    %p140 = scmp.eq.s32.totalorder %s11, 0
    %p141 = por %p139, %p140
    %p142 = scmp.ne.s32.totalorder %s131, %s134
    %p143 = scmp.eq.s32.totalorder %s16, 1
    %p144 = por %p142, %p143
    %p145 = scmp.ne.s32.totalorder %s134, %s135
    %p146 = scmp.eq.s32.totalorder %s16, 0
    %p147 = por %p145, %p146
    %p148 = scmp.ne.s32.totalorder %s134, %s135
    %p149 = scmp.eq.s32.totalorder %s17, 1
    %p150 = por %p148, %p149
    %p152 = scmp.ne.s32.totalorder %s135, %s151
    %p153 = scmp.eq.s32.totalorder %s17, 0
    %p154 = por %p152, %p153
    %p155 = scmp.le.s32.totalorder 1, %s11
    %p156 = scmp.lt.s32.totalorder %s11, 3
    %p157 = pnand %p155, %p156
    %p158 = pneg %p157
    // Predicated region
    $region9: #{triposf_vae_forward.2} parent=5 // pred_check
      _
    $region10: #{triposf_vae_forward.2} parent=5 // pred_check_branch
      %160 = sbr.rel (%p157) target = $region12
    $region11: #{triposf_vae_forward.2} parent=5 // pred_region
      %s161 = ssub.s32 %s11, 1
      // Predicated region
      $region13: #{triposf_vae_forward.2} parent=11 // pred_check
        %p162 = pneg %p58
      $region14: #{triposf_vae_forward.2} parent=11 // pred_check_branch
        %164 = sbr.rel (%p162) target = $region16
      $region15: #{triposf_vae_forward.2} parent=11 // pred_region
        _
      $region16: #{triposf_vae_forward.2} parent=11 // pred_fallthru
        _
      // Predicated region
      $region17: #{triposf_vae_forward.2} parent=11 // pred_check
        %p165 = pneg %p79
      $region18: #{triposf_vae_forward.2} parent=11 // pred_check_branch
        %167 = sbr.rel (%p165) target = $region20
      $region19: #{triposf_vae_forward.2} parent=11 // pred_region
        _
      $region20: #{triposf_vae_forward.2} parent=11 // pred_fallthru
        _
      // Predicated region
      $region21: #{triposf_vae_forward.2} parent=11 // pred_check
        %p168 = pneg %p100
      $region22: #{triposf_vae_forward.2} parent=11 // pred_check_branch
        %170 = sbr.rel (%p168) target = $region24
      $region23: #{triposf_vae_forward.2} parent=11 // pred_region
        _
      $region24: #{triposf_vae_forward.2} parent=11 // pred_fallthru
        _
      // Predicated region
      $region25: #{triposf_vae_forward.2} parent=11 // pred_check
        %p171 = pneg %p121
      $region26: #{triposf_vae_forward.2} parent=11 // pred_check_branch
        %173 = sbr.rel (%p171) target = $region28
      $region27: #{triposf_vae_forward.2} parent=11 // pred_region
        _
      $region28: #{triposf_vae_forward.2} parent=11 // pred_fallthru
        _
    $region12: #{triposf_vae_forward.2} parent=5 // pred_fallthru
      _
    %p174 = scmp.lt.s32.totalorder %s11, 2
    // Predicated region
    $region29: #{triposf_vae_forward.2} parent=5 // pred_check
      %p175 = pneg %p174
    $region30: #{triposf_vae_forward.2} parent=5 // pred_check_branch
      %177 = sbr.rel (%p175) target = $region32
    $region31: #{triposf_vae_forward.2} parent=5 // pred_region
      // Predicated region
      $region33: #{triposf_vae_forward.2} parent=31 // pred_check
        %p178 = pneg %p31
      $region34: #{triposf_vae_forward.2} parent=31 // pred_check_branch
        %180 = sbr.rel (%p178) target = $region36
      $region35: #{triposf_vae_forward.2} parent=31 // pred_region
        %s181 = smul.u32 128, %s11
        %p182 = scmp.lt.s32.totalorder %s181, 255
        %s183 = scalar_select %p182, %s181, 255
        %s184 = smul.addr %s183, 8
        %s185 = scalar_lea.vmem %s0, %s184
        %s186 = smul.u32 128, %s11
      $region36: #{triposf_vae_forward.2} parent=31 // pred_fallthru
        _
    $region32: #{triposf_vae_forward.2} parent=5 // pred_fallthru
      _
    %p187 = scmp.le.s32.totalorder 1, %s11
    %p188 = scmp.lt.s32.totalorder %s11, 3
    %p189 = pnand %p187, %p188
    %p190 = pneg %p189
    // Predicated region
    $region37: #{triposf_vae_forward.2} parent=5 // pred_check
      _
    $region38: #{triposf_vae_forward.2} parent=5 // pred_check_branch
      %192 = sbr.rel (%p189) target = $region40
    $region39: #{triposf_vae_forward.2} parent=5 // pred_region
      %s193 = ssub.s32 %s11, 1
      %s194 = smul.u32 128, %s16
      %p195 = scmp.lt.s32.totalorder %s194, 255
      %s196 = scalar_select %p195, %s194, 255
      %s197 = smul.addr %s196, 8
      %s198 = scalar_lea.vmem %s0, %s197
      %p199 = pneg %p37
      %p200 = pneg %p34
      %p201 = pneg %p58
      %p202 = pneg %p55
      %p203 = pneg %p79
      %p204 = pneg %p76
      %p205 = pneg %p100
      %p206 = pneg %p97
      %p207 = pneg %p121
      %p208 = pneg %p118
      %p209 = pneg %p147
      %p210 = pneg %p144
      %s211 = smul.u32 128, %s16
      %p212 = scmp.lt.s32.totalorder %s211, 255
      %s213 = scalar_select %p212, %s211, 255
      %s214 = smul.addr %s213, 4
      %s215 = scalar_lea.vmem %s5, %s214
      %s216 = smul.u32 128, %s16
      %p217 = scmp.lt.s32.totalorder %s216, 255
      %s218 = scalar_select %p217, %s216, 255
      %s219 = smul.addr %s218, 8
      %s220 = scalar_lea.vmem %s0, %s219
      %s221 = smul.u32 128, %s16
      %s222 = smul.u32 128, %s16
      %p223 = scmp.lt.s32.totalorder %s222, 255
      %s224 = scalar_select %p223, %s222, 255
      %s225 = smul.addr %s224, 4
      %s226 = scalar_lea.vmem %s5, %s225
      %s227 = smul.u32 128, %s16
      %v229 = vld [vmem:[%s220] sm:$0xff]
      %v230 = vld [vmem:[%s220 + $0x8] sm:$0xff]
      %v231 = vld [vmem:[%s220 + $0x10] sm:$0xff]
      %v232 = vld [vmem:[%s220 + $0x18] sm:$0xff]
      %v233 = vld [vmem:[%s220 + $0x20] sm:$0xff]
      %v234 = vld [vmem:[%s220 + $0x28] sm:$0xff]
      %v235 = vld [vmem:[%s220 + $0x30] sm:$0xff]
      %v236 = vld [vmem:[%s220 + $0x38] sm:$0xff]
      %v237 = vld [vmem:[%s220 + $0x40] sm:$0xff]
      %v238 = vld [vmem:[%s220 + $0x48] sm:$0xff]
      %v239 = vld [vmem:[%s220 + $0x50] sm:$0xff]
      %v240 = vld [vmem:[%s220 + $0x58] sm:$0xff]
      %v241 = vld [vmem:[%s220 + $0x60] sm:$0xff]
      %v242 = vld [vmem:[%s220 + $0x68] sm:$0xff]
      %v243 = vld [vmem:[%s220 + $0x70] sm:$0xff]
      %v244 = vld [vmem:[%s220 + $0x78] sm:$0xff]
      %v245 = vld [vmem:[%s220 + $0x80] sm:$0xff]
      %v246 = vld [vmem:[%s220 + $0x88] sm:$0xff]
      %v247 = vld [vmem:[%s220 + $0x90] sm:$0xff]
      %v248 = vld [vmem:[%s220 + $0x98] sm:$0xff]
      %v249 = vld [vmem:[%s220 + $0xa0] sm:$0xff]
      %v250 = vld [vmem:[%s220 + $0xa8] sm:$0xff]
      %v251 = vld [vmem:[%s220 + $0xb0] sm:$0xff]
      %v252 = vld [vmem:[%s220 + $0xb8] sm:$0xff]
      %v253 = vld [vmem:[%s220 + $0xc0] sm:$0xff]
      %v254 = vld [vmem:[%s220 + $0xc8] sm:$0xff]
      %v255 = vld [vmem:[%s220 + $0xd0] sm:$0xff]
      %v256 = vld [vmem:[%s220 + $0xd8] sm:$0xff]
      %v257 = vld [vmem:[%s220 + $0xe0] sm:$0xff]
      %v258 = vld [vmem:[%s220 + $0xe8] sm:$0xff]
      %v259 = vld [vmem:[%s220 + $0xf0] sm:$0xff]
      %v260 = vld [vmem:[%s220 + $0xf8] sm:$0xff]
      %v261 = vld [vmem:[%s220 + $0x100] sm:$0xff]
      %v262 = vld [vmem:[%s220 + $0x108] sm:$0xff]
      %v263 = vld [vmem:[%s220 + $0x110] sm:$0xff]
      %v264 = vld [vmem:[%s220 + $0x118] sm:$0xff]
      %v265 = vld [vmem:[%s220 + $0x120] sm:$0xff]
      %v266 = vld [vmem:[%s220 + $0x128] sm:$0xff]
      %v267 = vld [vmem:[%s220 + $0x130] sm:$0xff]
      %v268 = vld [vmem:[%s220 + $0x138] sm:$0xff]
      %v269 = vld [vmem:[%s220 + $0x140] sm:$0xff]
      %v270 = vld [vmem:[%s220 + $0x148] sm:$0xff]
      %v271 = vld [vmem:[%s220 + $0x150] sm:$0xff]
      %v272 = vld [vmem:[%s220 + $0x158] sm:$0xff]
      %v273 = vld [vmem:[%s220 + $0x160] sm:$0xff]
      %v274 = vld [vmem:[%s220 + $0x168] sm:$0xff]
      %v275 = vld [vmem:[%s220 + $0x170] sm:$0xff]
      %v276 = vld [vmem:[%s220 + $0x178] sm:$0xff]
      %v277 = vld [vmem:[%s220 + $0x180] sm:$0xff]
      %v278 = vld [vmem:[%s220 + $0x188] sm:$0xff]
      %v279 = vld [vmem:[%s220 + $0x190] sm:$0xff]
      %v280 = vld [vmem:[%s220 + $0x198] sm:$0xff]
      %v281 = vld [vmem:[%s220 + $0x1a0] sm:$0xff]
      %v282 = vld [vmem:[%s220 + $0x1a8] sm:$0xff]
      %v283 = vld [vmem:[%s220 + $0x1b0] sm:$0xff]
      %v284 = vld [vmem:[%s220 + $0x1b8] sm:$0xff]
      %v285 = vld [vmem:[%s220 + $0x1c0] sm:$0xff]
      %v286 = vld [vmem:[%s220 + $0x1c8] sm:$0xff]
      %v287 = vld [vmem:[%s220 + $0x1d0] sm:$0xff]
      %v288 = vld [vmem:[%s220 + $0x1d8] sm:$0xff]
      %v289 = vld [vmem:[%s220 + $0x1e0] sm:$0xff]
      %v290 = vld [vmem:[%s220 + $0x1e8] sm:$0xff]
      %v291 = vld [vmem:[%s220 + $0x1f0] sm:$0xff]
      %v292 = vld [vmem:[%s220 + $0x1f8] sm:$0xff]
      %v293 = vld [vmem:[%s220 + $0x200] sm:$0xff]
      %v294 = vld [vmem:[%s220 + $0x208] sm:$0xff]
      %v295 = vld [vmem:[%s220 + $0x210] sm:$0xff]
      %v296 = vld [vmem:[%s220 + $0x218] sm:$0xff]
      %v297 = vld [vmem:[%s220 + $0x220] sm:$0xff]
      %v298 = vld [vmem:[%s220 + $0x228] sm:$0xff]
      %v299 = vld [vmem:[%s220 + $0x230] sm:$0xff]
      %v300 = vld [vmem:[%s220 + $0x238] sm:$0xff]
      %v301 = vld [vmem:[%s220 + $0x240] sm:$0xff]
      %v302 = vld [vmem:[%s220 + $0x248] sm:$0xff]
      %v303 = vld [vmem:[%s220 + $0x250] sm:$0xff]
      %v304 = vld [vmem:[%s220 + $0x258] sm:$0xff]
      %v305 = vld [vmem:[%s220 + $0x260] sm:$0xff]
      %v306 = vld [vmem:[%s220 + $0x268] sm:$0xff]
      %v307 = vld [vmem:[%s220 + $0x270] sm:$0xff]
      %v308 = vld [vmem:[%s220 + $0x278] sm:$0xff]
      %v309 = vld [vmem:[%s220 + $0x280] sm:$0xff]
      %v310 = vld [vmem:[%s220 + $0x288] sm:$0xff]
      %v311 = vld [vmem:[%s220 + $0x290] sm:$0xff]
      %v312 = vld [vmem:[%s220 + $0x298] sm:$0xff]
      %v313 = vld [vmem:[%s220 + $0x2a0] sm:$0xff]
      %v314 = vld [vmem:[%s220 + $0x2a8] sm:$0xff]
      %v315 = vld [vmem:[%s220 + $0x2b0] sm:$0xff]
      %v316 = vld [vmem:[%s220 + $0x2b8] sm:$0xff]
      %v317 = vld [vmem:[%s220 + $0x2c0] sm:$0xff]
      %v318 = vld [vmem:[%s220 + $0x2c8] sm:$0xff]
      %v319 = vld [vmem:[%s220 + $0x2d0] sm:$0xff]
      %v320 = vld [vmem:[%s220 + $0x2d8] sm:$0xff]
      %v321 = vld [vmem:[%s220 + $0x2e0] sm:$0xff]
      %v322 = vld [vmem:[%s220 + $0x2e8] sm:$0xff]
      %v323 = vld [vmem:[%s220 + $0x2f0] sm:$0xff]
      %v324 = vld [vmem:[%s220 + $0x2f8] sm:$0xff]
      %v325 = vld [vmem:[%s220 + $0x300] sm:$0xff]
      %v326 = vld [vmem:[%s220 + $0x308] sm:$0xff]
      %v327 = vld [vmem:[%s220 + $0x310] sm:$0xff]
      %v328 = vld [vmem:[%s220 + $0x318] sm:$0xff]
      %v329 = vld [vmem:[%s220 + $0x320] sm:$0xff]
      %v330 = vld [vmem:[%s220 + $0x328] sm:$0xff]
      %v331 = vld [vmem:[%s220 + $0x330] sm:$0xff]
      %v332 = vld [vmem:[%s220 + $0x338] sm:$0xff]
      %v333 = vld [vmem:[%s220 + $0x340] sm:$0xff]
      %v334 = vld [vmem:[%s220 + $0x348] sm:$0xff]
      %v335 = vld [vmem:[%s220 + $0x350] sm:$0xff]
      %v336 = vld [vmem:[%s220 + $0x358] sm:$0xff]
      %v337 = vld [vmem:[%s220 + $0x360] sm:$0xff]
      %v338 = vld [vmem:[%s220 + $0x368] sm:$0xff]
      %v339 = vld [vmem:[%s220 + $0x370] sm:$0xff]
      %v340 = vld [vmem:[%s220 + $0x378] sm:$0xff]
      %v341 = vld [vmem:[%s220 + $0x380] sm:$0xff]
      %v342 = vld [vmem:[%s220 + $0x388] sm:$0xff]
      %v343 = vld [vmem:[%s220 + $0x390] sm:$0xff]
      %v344 = vld [vmem:[%s220 + $0x398] sm:$0xff]
      %v345 = vld [vmem:[%s220 + $0x3a0] sm:$0xff]
      %v346 = vld [vmem:[%s220 + $0x3a8] sm:$0xff]
      %v347 = vld [vmem:[%s220 + $0x3b0] sm:$0xff]
      %v348 = vld [vmem:[%s220 + $0x3b8] sm:$0xff]
      %v349 = vld [vmem:[%s220 + $0x3c0] sm:$0xff]
      %v350 = vld [vmem:[%s220 + $0x3c8] sm:$0xff]
      %v351 = vld [vmem:[%s220 + $0x3d0] sm:$0xff]
      %v352 = vld [vmem:[%s220 + $0x3d8] sm:$0xff]
      %v353 = vld [vmem:[%s220 + $0x3e0] sm:$0xff]
      %v354 = vld [vmem:[%s220 + $0x3e8] sm:$0xff]
      %v355 = vld [vmem:[%s220 + $0x3f0] sm:$0xff]
      %v356 = vld [vmem:[%s220 + $0x3f8] sm:$0xff]
      %v357 = vpack.c.bf16 %v230, %v229
      %v358 = vpack.c.bf16 %v232, %v231
      %v359 = vpack.c.bf16 %v234, %v233
      %v360 = vpack.c.bf16 %v236, %v235
      %v361 = vpack.c.bf16 %v238, %v237
      %v362 = vpack.c.bf16 %v240, %v239
      %v363 = vpack.c.bf16 %v242, %v241
      %v364 = vpack.c.bf16 %v244, %v243
      %v365 = vpack.c.bf16 %v246, %v245
      %v366 = vpack.c.bf16 %v248, %v247
      %v367 = vpack.c.bf16 %v250, %v249
      %v368 = vpack.c.bf16 %v252, %v251
      %v369 = vpack.c.bf16 %v254, %v253
      %v370 = vpack.c.bf16 %v256, %v255
      %v371 = vpack.c.bf16 %v258, %v257
      %v372 = vpack.c.bf16 %v260, %v259
      %v373 = vpack.c.bf16 %v262, %v261
      %v374 = vpack.c.bf16 %v264, %v263
      %v375 = vpack.c.bf16 %v266, %v265
      %v376 = vpack.c.bf16 %v268, %v267
      %v377 = vpack.c.bf16 %v270, %v269
      %v378 = vpack.c.bf16 %v272, %v271
      %v379 = vpack.c.bf16 %v274, %v273
      %v380 = vpack.c.bf16 %v276, %v275
      %v381 = vpack.c.bf16 %v278, %v277
      %v382 = vpack.c.bf16 %v280, %v279
      %v383 = vpack.c.bf16 %v282, %v281
      %v384 = vpack.c.bf16 %v284, %v283
      %v385 = vpack.c.bf16 %v286, %v285
      %v386 = vpack.c.bf16 %v288, %v287
      %v387 = vpack.c.bf16 %v290, %v289
      %v388 = vpack.c.bf16 %v292, %v291
      %v389 = vpack.c.bf16 %v294, %v293
      %v390 = vpack.c.bf16 %v296, %v295
      %v391 = vpack.c.bf16 %v298, %v297
      %v392 = vpack.c.bf16 %v300, %v299
      %v393 = vpack.c.bf16 %v302, %v301
      %v394 = vpack.c.bf16 %v304, %v303
      %v395 = vpack.c.bf16 %v306, %v305
      %v396 = vpack.c.bf16 %v308, %v307
      %v397 = vpack.c.bf16 %v310, %v309
      %v398 = vpack.c.bf16 %v312, %v311
      %v399 = vpack.c.bf16 %v314, %v313
      %v400 = vpack.c.bf16 %v316, %v315
      %v401 = vpack.c.bf16 %v318, %v317
      %v402 = vpack.c.bf16 %v320, %v319
      %v403 = vpack.c.bf16 %v322, %v321
      %v404 = vpack.c.bf16 %v324, %v323
      %v405 = vpack.c.bf16 %v326, %v325
      %v406 = vpack.c.bf16 %v328, %v327
      %v407 = vpack.c.bf16 %v330, %v329
      %v408 = vpack.c.bf16 %v332, %v331
      %v409 = vpack.c.bf16 %v334, %v333
      %v410 = vpack.c.bf16 %v336, %v335
      %v411 = vpack.c.bf16 %v338, %v337
      %v412 = vpack.c.bf16 %v340, %v339
      %v413 = vpack.c.bf16 %v342, %v341
      %v414 = vpack.c.bf16 %v344, %v343
      %v415 = vpack.c.bf16 %v346, %v345
      %v416 = vpack.c.bf16 %v348, %v347
      %v417 = vpack.c.bf16 %v350, %v349
      %v418 = vpack.c.bf16 %v352, %v351
      %v419 = vpack.c.bf16 %v354, %v353
      %v420 = vpack.c.bf16 %v356, %v355
      %v421 = vld [vmem:[%s1] sm:$0xf]
      %v422 = vld [vmem:[%s2] sm:$0x1]
      %v424 = vlaneseq
      %v425 = vshrl.u32 %v424, 7
      %v426 = vsub.s32 0, %v425
      %v427 = vrot.slane %v422, %v426
      %vm429 = vcmask 64512
      %v431 = vsel %vm429, %v357, 0
      %v434 = vsel %vm429, %v358, 0
      %v437 = vsel %vm429, %v359, 0
      %v440 = vsel %vm429, %v360, 0
      %v443 = vsel %vm429, %v361, 0
      %v446 = vsel %vm429, %v362, 0
      %v449 = vsel %vm429, %v363, 0
      %v452 = vsel %vm429, %v364, 0
      %v455 = vsel %vm429, %v365, 0
      %v458 = vsel %vm429, %v366, 0
      %v461 = vsel %vm429, %v367, 0
      %v464 = vsel %vm429, %v368, 0
      %v467 = vsel %vm429, %v369, 0
      %v470 = vsel %vm429, %v370, 0
      %v473 = vsel %vm429, %v371, 0
      %v476 = vsel %vm429, %v372, 0
      %v479 = vsel %vm429, %v373, 0
      %v482 = vsel %vm429, %v374, 0
      %v485 = vsel %vm429, %v375, 0
      %v488 = vsel %vm429, %v376, 0
      %v491 = vsel %vm429, %v377, 0
      %v494 = vsel %vm429, %v378, 0
      %v497 = vsel %vm429, %v379, 0
      %v500 = vsel %vm429, %v380, 0
      %v503 = vsel %vm429, %v381, 0
      %v506 = vsel %vm429, %v382, 0
      %v509 = vsel %vm429, %v383, 0
      %v512 = vsel %vm429, %v384, 0
      %v515 = vsel %vm429, %v385, 0
      %v518 = vsel %vm429, %v386, 0
      %v521 = vsel %vm429, %v387, 0
      %v524 = vsel %vm429, %v388, 0
      %v527 = vsel %vm429, %v389, 0
      %v530 = vsel %vm429, %v390, 0
      %v533 = vsel %vm429, %v391, 0
      %v536 = vsel %vm429, %v392, 0
      %v539 = vsel %vm429, %v393, 0
      %v542 = vsel %vm429, %v394, 0
      %v545 = vsel %vm429, %v395, 0
      %v548 = vsel %vm429, %v396, 0
      %v551 = vsel %vm429, %v397, 0
      %v554 = vsel %vm429, %v398, 0
      %v557 = vsel %vm429, %v399, 0
      %v560 = vsel %vm429, %v400, 0
      %v563 = vsel %vm429, %v401, 0
      %v566 = vsel %vm429, %v402, 0
      %v569 = vsel %vm429, %v403, 0
      %v572 = vsel %vm429, %v404, 0
      %v575 = vsel %vm429, %v405, 0
      %v578 = vsel %vm429, %v406, 0
      %v581 = vsel %vm429, %v407, 0
      %v584 = vsel %vm429, %v408, 0
      %v587 = vsel %vm429, %v409, 0
      %v590 = vsel %vm429, %v410, 0
      %v593 = vsel %vm429, %v411, 0
      %v596 = vsel %vm429, %v412, 0
      %v599 = vsel %vm429, %v413, 0
      %v602 = vsel %vm429, %v414, 0
      %v605 = vsel %vm429, %v415, 0
      %v608 = vsel %vm429, %v416, 0
      %v611 = vsel %vm429, %v417, 0
      %v614 = vsel %vm429, %v418, 0
      %v617 = vsel %vm429, %v419, 0
      %v620 = vsel %vm429, %v420, 0
      %vm622 = vcmask 1043456
      %v624 = vsel %vm622, %v421, 0
      %626 = vmatprep.subr.bf16.mxu0 0
      %627 = vmatpush1.bf16.msra.mxu0 0
      %628 = vmatprep.subr.bf16.mxu0 0
      %629 = vmatpush1.bf16.msra.mxu0 0
      %630 = vmatprep.subr.bf16.mxu0 0
      %631 = vmatpush1.bf16.msra.mxu0 0
      %632 = vmatprep.subr.bf16.mxu0 0
      %633 = vmatpush1.bf16.msra.mxu0 0
      %634 = vmatprep.subr.bf16.mxu0 0
      %635 = vmatpush1.bf16.msra.mxu0 0
      %636 = vmatprep.subr.bf16.mxu0 0
      %637 = vmatpush1.bf16.msra.mxu0 0
      %638 = vmatprep.subr.bf16.mxu0 0
      %639 = vmatpush1.bf16.msra.mxu0 0
      %640 = vmatprep.subr.bf16.mxu0 0
      %641 = vmatpush1.bf16.msra.mxu0 %v624
      %642 = vmatprep.subr.bf16.mxu0 0
      %643 = vmatpush2.bf16.msra.mxu0 0
      %644 = vmatprep.subr.bf16.mxu0 0
      %645 = vmatpush2.bf16.msra.mxu0 0
      %646 = vmatprep.subr.bf16.mxu0 0
      %647 = vmatpush2.bf16.msra.mxu0 0
      %648 = vmatprep.subr.bf16.mxu0 0
      %649 = vmatpush2.bf16.msra.mxu0 0
      %650 = vmatprep.subr.bf16.mxu0 0
      %651 = vmatpush2.bf16.msra.mxu0 0
      %652 = vmatprep.subr.bf16.mxu0 0
      %653 = vmatpush2.bf16.msra.mxu0 0
      %654 = vmatprep.subr.bf16.mxu0 0
      %655 = vmatpush2.bf16.msra.mxu0 0
      %656 = vmatprep.subr.bf16.mxu0 0
      %657 = vmatpush2.bf16.msra.mxu0 0
      %658 = vmatprep.mubr.bf16.mxu0 0
      %659 = vmatmul.mubr.bf16.gmra.mxu0 %v431
      %v660 = vpop.f32.mrf.mxu0
      %v661 = vadd.f32 %v427, %v660
      %v662 = vpop.f32.mrf.mxu0
      %v663 = vpop.f32.mrf.mxu0
      %v664 = vadd.f32 %v427, %v663
      %v665 = vpop.f32.mrf.mxu0
      %666 = vmatprep.mubr.bf16.mxu0 0
      %667 = vmatmul.mubr.bf16.gmra.mxu0 %v434
      %v668 = vpop.f32.mrf.mxu0
      %v669 = vadd.f32 %v427, %v668
      %v670 = vpop.f32.mrf.mxu0
      %v671 = vpop.f32.mrf.mxu0
      %v672 = vadd.f32 %v427, %v671
      %v673 = vpop.f32.mrf.mxu0
      %674 = vmatprep.mubr.bf16.mxu0 0
      %675 = vmatmul.mubr.bf16.gmra.mxu0 %v437
      %v676 = vpop.f32.mrf.mxu0
      %v677 = vadd.f32 %v427, %v676
      %v678 = vpop.f32.mrf.mxu0
      %v679 = vpop.f32.mrf.mxu0
      %v680 = vadd.f32 %v427, %v679
      %v681 = vpop.f32.mrf.mxu0
      %682 = vmatprep.mubr.bf16.mxu0 0
      %683 = vmatmul.mubr.bf16.gmra.mxu0 %v440
      %v684 = vpop.f32.mrf.mxu0
      %v685 = vadd.f32 %v427, %v684
      %v686 = vpop.f32.mrf.mxu0
      %v687 = vpop.f32.mrf.mxu0
      %v688 = vadd.f32 %v427, %v687
      %v689 = vpop.f32.mrf.mxu0
      %690 = vmatprep.mubr.bf16.mxu0 0
      %691 = vmatmul.mubr.bf16.gmra.mxu0 %v443
      %v692 = vpop.f32.mrf.mxu0
      %v693 = vadd.f32 %v427, %v692
      %v694 = vpop.f32.mrf.mxu0
      %v695 = vpop.f32.mrf.mxu0
      %v696 = vadd.f32 %v427, %v695
      %v697 = vpop.f32.mrf.mxu0
      %698 = vmatprep.mubr.bf16.mxu0 0
      %699 = vmatmul.mubr.bf16.gmra.mxu0 %v446
      %v700 = vpop.f32.mrf.mxu0
      %v701 = vadd.f32 %v427, %v700
      %v702 = vpop.f32.mrf.mxu0
      %v703 = vpop.f32.mrf.mxu0
      %v704 = vadd.f32 %v427, %v703
      %v705 = vpop.f32.mrf.mxu0
      %706 = vmatprep.mubr.bf16.mxu0 0
      %707 = vmatmul.mubr.bf16.gmra.mxu0 %v449
      %v708 = vpop.f32.mrf.mxu0
      %v709 = vadd.f32 %v427, %v708
      %v710 = vpop.f32.mrf.mxu0
      %v711 = vpop.f32.mrf.mxu0
      %v712 = vadd.f32 %v427, %v711
      %v713 = vpop.f32.mrf.mxu0
      %714 = vmatprep.mubr.bf16.mxu0 0
      %715 = vmatmul.mubr.bf16.gmra.mxu0 %v452
      %v716 = vpop.f32.mrf.mxu0
      %v717 = vadd.f32 %v427, %v716
      %v718 = vpop.f32.mrf.mxu0
      %v719 = vpop.f32.mrf.mxu0
      %v720 = vadd.f32 %v427, %v719
      %v721 = vpop.f32.mrf.mxu0
      %722 = vmatprep.mubr.bf16.mxu0 0
      %723 = vmatmul.mubr.bf16.gmra.mxu0 %v455
      %v724 = vpop.f32.mrf.mxu0
      %v725 = vadd.f32 %v427, %v724
      %v726 = vpop.f32.mrf.mxu0
      %v727 = vpop.f32.mrf.mxu0
      %v728 = vadd.f32 %v427, %v727
      %v729 = vpop.f32.mrf.mxu0
      %730 = vmatprep.mubr.bf16.mxu0 0
      %731 = vmatmul.mubr.bf16.gmra.mxu0 %v458
      %v732 = vpop.f32.mrf.mxu0
      %v733 = vadd.f32 %v427, %v732
      %v734 = vpop.f32.mrf.mxu0
      %v735 = vpop.f32.mrf.mxu0
      %v736 = vadd.f32 %v427, %v735
      %v737 = vpop.f32.mrf.mxu0
      %738 = vmatprep.mubr.bf16.mxu0 0
      %739 = vmatmul.mubr.bf16.gmra.mxu0 %v461
      %v740 = vpop.f32.mrf.mxu0
      %v741 = vadd.f32 %v427, %v740
      %v742 = vpop.f32.mrf.mxu0
      %v743 = vpop.f32.mrf.mxu0
      %v744 = vadd.f32 %v427, %v743
      %v745 = vpop.f32.mrf.mxu0
      %746 = vmatprep.mubr.bf16.mxu0 0
      %747 = vmatmul.mubr.bf16.gmra.mxu0 %v464
      %v748 = vpop.f32.mrf.mxu0
      %v749 = vadd.f32 %v427, %v748
      %v750 = vpop.f32.mrf.mxu0
      %v751 = vpop.f32.mrf.mxu0
      %v752 = vadd.f32 %v427, %v751
      %v753 = vpop.f32.mrf.mxu0
      %754 = vmatprep.mubr.bf16.mxu0 0
      %755 = vmatmul.mubr.bf16.gmra.mxu0 %v467
      %v756 = vpop.f32.mrf.mxu0
      %v757 = vadd.f32 %v427, %v756
      %v758 = vpop.f32.mrf.mxu0
      %v759 = vpop.f32.mrf.mxu0
      %v760 = vadd.f32 %v427, %v759
      %v761 = vpop.f32.mrf.mxu0
      %762 = vmatprep.mubr.bf16.mxu0 0
      %763 = vmatmul.mubr.bf16.gmra.mxu0 %v470
      %v764 = vpop.f32.mrf.mxu0
      %v765 = vadd.f32 %v427, %v764
      %v766 = vpop.f32.mrf.mxu0
      %v767 = vpop.f32.mrf.mxu0
      %v768 = vadd.f32 %v427, %v767
      %v769 = vpop.f32.mrf.mxu0
      %770 = vmatprep.mubr.bf16.mxu0 0
      %771 = vmatmul.mubr.bf16.gmra.mxu0 %v473
      %v772 = vpop.f32.mrf.mxu0
      %v773 = vadd.f32 %v427, %v772
      %v774 = vpop.f32.mrf.mxu0
      %v775 = vpop.f32.mrf.mxu0
      %v776 = vadd.f32 %v427, %v775
      %v777 = vpop.f32.mrf.mxu0
      %778 = vmatprep.mubr.bf16.mxu0 0
      %779 = vmatmul.mubr.bf16.gmra.mxu0 %v476
      %v780 = vpop.f32.mrf.mxu0
      %v781 = vadd.f32 %v427, %v780
      %v782 = vpop.f32.mrf.mxu0
      %v783 = vpop.f32.mrf.mxu0
      %v784 = vadd.f32 %v427, %v783
      %v785 = vpop.f32.mrf.mxu0
      %786 = vmatprep.mubr.bf16.mxu0 0
      %787 = vmatmul.mubr.bf16.gmra.mxu0 %v479
      %v788 = vpop.f32.mrf.mxu0
      %v789 = vadd.f32 %v427, %v788
      %v790 = vpop.f32.mrf.mxu0
      %v791 = vpop.f32.mrf.mxu0
      %v792 = vadd.f32 %v427, %v791
      %v793 = vpop.f32.mrf.mxu0
      %794 = vmatprep.mubr.bf16.mxu0 0
      %795 = vmatmul.mubr.bf16.gmra.mxu0 %v482
      %v796 = vpop.f32.mrf.mxu0
      %v797 = vadd.f32 %v427, %v796
      %v798 = vpop.f32.mrf.mxu0
      %v799 = vpop.f32.mrf.mxu0
      %v800 = vadd.f32 %v427, %v799
      %v801 = vpop.f32.mrf.mxu0
      %802 = vmatprep.mubr.bf16.mxu0 0
      %803 = vmatmul.mubr.bf16.gmra.mxu0 %v485
      %v804 = vpop.f32.mrf.mxu0
      %v805 = vadd.f32 %v427, %v804
      %v806 = vpop.f32.mrf.mxu0
      %v807 = vpop.f32.mrf.mxu0
      %v808 = vadd.f32 %v427, %v807
      %v809 = vpop.f32.mrf.mxu0
      %810 = vmatprep.mubr.bf16.mxu0 0
      %811 = vmatmul.mubr.bf16.gmra.mxu0 %v488
      %v812 = vpop.f32.mrf.mxu0
      %v813 = vadd.f32 %v427, %v812
      %v814 = vpop.f32.mrf.mxu0
      %v815 = vpop.f32.mrf.mxu0
      %v816 = vadd.f32 %v427, %v815
      %v817 = vpop.f32.mrf.mxu0
      %818 = vmatprep.mubr.bf16.mxu0 0
      %819 = vmatmul.mubr.bf16.gmra.mxu0 %v491
      %v820 = vpop.f32.mrf.mxu0
      %v821 = vadd.f32 %v427, %v820
      %v822 = vpop.f32.mrf.mxu0
      %v823 = vpop.f32.mrf.mxu0
      %v824 = vadd.f32 %v427, %v823
      %v825 = vpop.f32.mrf.mxu0
      %826 = vmatprep.mubr.bf16.mxu0 0
      %827 = vmatmul.mubr.bf16.gmra.mxu0 %v494
      %v828 = vpop.f32.mrf.mxu0
      %v829 = vadd.f32 %v427, %v828
      %v830 = vpop.f32.mrf.mxu0
      %v831 = vpop.f32.mrf.mxu0
      %v832 = vadd.f32 %v427, %v831
      %v833 = vpop.f32.mrf.mxu0
      %834 = vmatprep.mubr.bf16.mxu0 0
      %835 = vmatmul.mubr.bf16.gmra.mxu0 %v497
      %v836 = vpop.f32.mrf.mxu0
      %v837 = vadd.f32 %v427, %v836
      %v838 = vpop.f32.mrf.mxu0
      %v839 = vpop.f32.mrf.mxu0
      %v840 = vadd.f32 %v427, %v839
      %v841 = vpop.f32.mrf.mxu0
      %842 = vmatprep.mubr.bf16.mxu0 0
      %843 = vmatmul.mubr.bf16.gmra.mxu0 %v500
      %v844 = vpop.f32.mrf.mxu0
      %v845 = vadd.f32 %v427, %v844
      %v846 = vpop.f32.mrf.mxu0
      %v847 = vpop.f32.mrf.mxu0
      %v848 = vadd.f32 %v427, %v847
      %v849 = vpop.f32.mrf.mxu0
      %850 = vmatprep.mubr.bf16.mxu0 0
      %851 = vmatmul.mubr.bf16.gmra.mxu0 %v503
      %v852 = vpop.f32.mrf.mxu0
      %v853 = vadd.f32 %v427, %v852
      %v854 = vpop.f32.mrf.mxu0
      %v855 = vpop.f32.mrf.mxu0
      %v856 = vadd.f32 %v427, %v855
      %v857 = vpop.f32.mrf.mxu0
      %858 = vmatprep.mubr.bf16.mxu0 0
      %859 = vmatmul.mubr.bf16.gmra.mxu0 %v506
      %v860 = vpop.f32.mrf.mxu0
      %v861 = vadd.f32 %v427, %v860
      %v862 = vpop.f32.mrf.mxu0
      %v863 = vpop.f32.mrf.mxu0
      %v864 = vadd.f32 %v427, %v863
      %v865 = vpop.f32.mrf.mxu0
      %866 = vmatprep.mubr.bf16.mxu0 0
      %867 = vmatmul.mubr.bf16.gmra.mxu0 %v509
      %v868 = vpop.f32.mrf.mxu0
      %v869 = vadd.f32 %v427, %v868
      %v870 = vpop.f32.mrf.mxu0
      %v871 = vpop.f32.mrf.mxu0
      %v872 = vadd.f32 %v427, %v871
      %v873 = vpop.f32.mrf.mxu0
      %874 = vmatprep.mubr.bf16.mxu0 0
      %875 = vmatmul.mubr.bf16.gmra.mxu0 %v512
      %v876 = vpop.f32.mrf.mxu0
      %v877 = vadd.f32 %v427, %v876
      %v878 = vpop.f32.mrf.mxu0
      %v879 = vpop.f32.mrf.mxu0
      %v880 = vadd.f32 %v427, %v879
      %v881 = vpop.f32.mrf.mxu0
      %882 = vmatprep.mubr.bf16.mxu0 0
      %883 = vmatmul.mubr.bf16.gmra.mxu0 %v515
      %v884 = vpop.f32.mrf.mxu0
      %v885 = vadd.f32 %v427, %v884
      %v886 = vpop.f32.mrf.mxu0
      %v887 = vpop.f32.mrf.mxu0
      %v888 = vadd.f32 %v427, %v887
      %v889 = vpop.f32.mrf.mxu0
      %890 = vmatprep.mubr.bf16.mxu0 0
      %891 = vmatmul.mubr.bf16.gmra.mxu0 %v518
      %v892 = vpop.f32.mrf.mxu0
      %v893 = vadd.f32 %v427, %v892
      %v894 = vpop.f32.mrf.mxu0
      %v895 = vpop.f32.mrf.mxu0
      %v896 = vadd.f32 %v427, %v895
      %v897 = vpop.f32.mrf.mxu0
      %898 = vmatprep.mubr.bf16.mxu0 0
      %899 = vmatmul.mubr.bf16.gmra.mxu0 %v521
      %v900 = vpop.f32.mrf.mxu0
      %v901 = vadd.f32 %v427, %v900
      %v902 = vpop.f32.mrf.mxu0
      %v903 = vpop.f32.mrf.mxu0
      %v904 = vadd.f32 %v427, %v903
      %v905 = vpop.f32.mrf.mxu0
      %906 = vmatprep.mubr.bf16.mxu0 0
      %907 = vmatmul.mubr.bf16.gmra.mxu0 %v524
      %v908 = vpop.f32.mrf.mxu0
      %v909 = vadd.f32 %v427, %v908
      %v910 = vpop.f32.mrf.mxu0
      %v911 = vpop.f32.mrf.mxu0
      %v912 = vadd.f32 %v427, %v911
      %v913 = vpop.f32.mrf.mxu0
      %914 = vmatprep.mubr.bf16.mxu0 0
      %915 = vmatmul.mubr.bf16.gmra.mxu0 %v527
      %v916 = vpop.f32.mrf.mxu0
      %v917 = vadd.f32 %v427, %v916
      %v918 = vpop.f32.mrf.mxu0
      %v919 = vpop.f32.mrf.mxu0
      %v920 = vadd.f32 %v427, %v919
      %v921 = vpop.f32.mrf.mxu0
      %922 = vmatprep.mubr.bf16.mxu0 0
      %923 = vmatmul.mubr.bf16.gmra.mxu0 %v530
      %v924 = vpop.f32.mrf.mxu0
      %v925 = vadd.f32 %v427, %v924
      %v926 = vpop.f32.mrf.mxu0
      %v927 = vpop.f32.mrf.mxu0
      %v928 = vadd.f32 %v427, %v927
      %v929 = vpop.f32.mrf.mxu0
      %930 = vmatprep.mubr.bf16.mxu0 0
      %931 = vmatmul.mubr.bf16.gmra.mxu0 %v533
      %v932 = vpop.f32.mrf.mxu0
      %v933 = vadd.f32 %v427, %v932
      %v934 = vpop.f32.mrf.mxu0
      %v935 = vpop.f32.mrf.mxu0
      %v936 = vadd.f32 %v427, %v935
      %v937 = vpop.f32.mrf.mxu0
      %938 = vmatprep.mubr.bf16.mxu0 0
      %939 = vmatmul.mubr.bf16.gmra.mxu0 %v536
      %v940 = vpop.f32.mrf.mxu0
      %v941 = vadd.f32 %v427, %v940
      %v942 = vpop.f32.mrf.mxu0
      %v943 = vpop.f32.mrf.mxu0
      %v944 = vadd.f32 %v427, %v943
      %v945 = vpop.f32.mrf.mxu0
      %946 = vmatprep.mubr.bf16.mxu0 0
      %947 = vmatmul.mubr.bf16.gmra.mxu0 %v539
      %v948 = vpop.f32.mrf.mxu0
      %v949 = vadd.f32 %v427, %v948
      %v950 = vpop.f32.mrf.mxu0
      %v951 = vpop.f32.mrf.mxu0
      %v952 = vadd.f32 %v427, %v951
      %v953 = vpop.f32.mrf.mxu0
      %954 = vmatprep.mubr.bf16.mxu0 0
      %955 = vmatmul.mubr.bf16.gmra.mxu0 %v542
      %v956 = vpop.f32.mrf.mxu0
      %v957 = vadd.f32 %v427, %v956
      %v958 = vpop.f32.mrf.mxu0
      %v959 = vpop.f32.mrf.mxu0
      %v960 = vadd.f32 %v427, %v959
      %v961 = vpop.f32.mrf.mxu0
      %962 = vmatprep.mubr.bf16.mxu0 0
      %963 = vmatmul.mubr.bf16.gmra.mxu0 %v545
      %v964 = vpop.f32.mrf.mxu0
      %v965 = vadd.f32 %v427, %v964
      %v966 = vpop.f32.mrf.mxu0
      %v967 = vpop.f32.mrf.mxu0
      %v968 = vadd.f32 %v427, %v967
      %v969 = vpop.f32.mrf.mxu0
      %970 = vmatprep.mubr.bf16.mxu0 0
      %971 = vmatmul.mubr.bf16.gmra.mxu0 %v548
      %v972 = vpop.f32.mrf.mxu0
      %v973 = vadd.f32 %v427, %v972
      %v974 = vpop.f32.mrf.mxu0
      %v975 = vpop.f32.mrf.mxu0
      %v976 = vadd.f32 %v427, %v975
      %v977 = vpop.f32.mrf.mxu0
      %978 = vmatprep.mubr.bf16.mxu0 0
      %979 = vmatmul.mubr.bf16.gmra.mxu0 %v551
      %v980 = vpop.f32.mrf.mxu0
      %v981 = vadd.f32 %v427, %v980
      %v982 = vpop.f32.mrf.mxu0
      %v983 = vpop.f32.mrf.mxu0
      %v984 = vadd.f32 %v427, %v983
      %v985 = vpop.f32.mrf.mxu0
      %986 = vmatprep.mubr.bf16.mxu0 0
      %987 = vmatmul.mubr.bf16.gmra.mxu0 %v554
      %v988 = vpop.f32.mrf.mxu0
      %v989 = vadd.f32 %v427, %v988
      %v990 = vpop.f32.mrf.mxu0
      %v991 = vpop.f32.mrf.mxu0
      %v992 = vadd.f32 %v427, %v991
      %v993 = vpop.f32.mrf.mxu0
      %994 = vmatprep.mubr.bf16.mxu0 0
      %995 = vmatmul.mubr.bf16.gmra.mxu0 %v557
      %v996 = vpop.f32.mrf.mxu0
      %v997 = vadd.f32 %v427, %v996
      %v998 = vpop.f32.mrf.mxu0
      %v999 = vpop.f32.mrf.mxu0
      %v1000 = vadd.f32 %v427, %v999
      %v1001 = vpop.f32.mrf.mxu0
      %1002 = vmatprep.mubr.bf16.mxu0 0
      %1003 = vmatmul.mubr.bf16.gmra.mxu0 %v560
      %v1004 = vpop.f32.mrf.mxu0
      %v1005 = vadd.f32 %v427, %v1004
      %v1006 = vpop.f32.mrf.mxu0
      %v1007 = vpop.f32.mrf.mxu0
      %v1008 = vadd.f32 %v427, %v1007
      %v1009 = vpop.f32.mrf.mxu0
      %1010 = vmatprep.mubr.bf16.mxu0 0
      %1011 = vmatmul.mubr.bf16.gmra.mxu0 %v563
      %v1012 = vpop.f32.mrf.mxu0
      %v1013 = vadd.f32 %v427, %v1012
      %v1014 = vpop.f32.mrf.mxu0
      %v1015 = vpop.f32.mrf.mxu0
      %v1016 = vadd.f32 %v427, %v1015
      %v1017 = vpop.f32.mrf.mxu0
      %1018 = vmatprep.mubr.bf16.mxu0 0
      %1019 = vmatmul.mubr.bf16.gmra.mxu0 %v566
      %v1020 = vpop.f32.mrf.mxu0
      %v1021 = vadd.f32 %v427, %v1020
      %v1022 = vpop.f32.mrf.mxu0
      %v1023 = vpop.f32.mrf.mxu0
      %v1024 = vadd.f32 %v427, %v1023
      %v1025 = vpop.f32.mrf.mxu0
      %1026 = vmatprep.mubr.bf16.mxu0 0
      %1027 = vmatmul.mubr.bf16.gmra.mxu0 %v569
      %v1028 = vpop.f32.mrf.mxu0
      %v1029 = vadd.f32 %v427, %v1028
      %v1030 = vpop.f32.mrf.mxu0
      %v1031 = vpop.f32.mrf.mxu0
      %v1032 = vadd.f32 %v427, %v1031
      %v1033 = vpop.f32.mrf.mxu0
      %1034 = vmatprep.mubr.bf16.mxu0 0
      %1035 = vmatmul.mubr.bf16.gmra.mxu0 %v572
      %v1036 = vpop.f32.mrf.mxu0
      %v1037 = vadd.f32 %v427, %v1036
      %v1038 = vpop.f32.mrf.mxu0
      %v1039 = vpop.f32.mrf.mxu0
      %v1040 = vadd.f32 %v427, %v1039
      %v1041 = vpop.f32.mrf.mxu0
      %1042 = vmatprep.mubr.bf16.mxu0 0
      %1043 = vmatmul.mubr.bf16.gmra.mxu0 %v575
      %v1044 = vpop.f32.mrf.mxu0
      %v1045 = vadd.f32 %v427, %v1044
      %v1046 = vpop.f32.mrf.mxu0
      %v1047 = vpop.f32.mrf.mxu0
      %v1048 = vadd.f32 %v427, %v1047
      %v1049 = vpop.f32.mrf.mxu0
      %1050 = vmatprep.mubr.bf16.mxu0 0
      %1051 = vmatmul.mubr.bf16.gmra.mxu0 %v578
      %v1052 = vpop.f32.mrf.mxu0
      %v1053 = vadd.f32 %v427, %v1052
      %v1054 = vpop.f32.mrf.mxu0
      %v1055 = vpop.f32.mrf.mxu0
      %v1056 = vadd.f32 %v427, %v1055
      %v1057 = vpop.f32.mrf.mxu0
      %1058 = vmatprep.mubr.bf16.mxu0 0
      %1059 = vmatmul.mubr.bf16.gmra.mxu0 %v581
      %v1060 = vpop.f32.mrf.mxu0
      %v1061 = vadd.f32 %v427, %v1060
      %v1062 = vpop.f32.mrf.mxu0
      %v1063 = vpop.f32.mrf.mxu0
      %v1064 = vadd.f32 %v427, %v1063
      %v1065 = vpop.f32.mrf.mxu0
      %1066 = vmatprep.mubr.bf16.mxu0 0
      %1067 = vmatmul.mubr.bf16.gmra.mxu0 %v584
      %v1068 = vpop.f32.mrf.mxu0
      %v1069 = vadd.f32 %v427, %v1068
      %v1070 = vpop.f32.mrf.mxu0
      %v1071 = vpop.f32.mrf.mxu0
      %v1072 = vadd.f32 %v427, %v1071
      %v1073 = vpop.f32.mrf.mxu0
      %1074 = vmatprep.mubr.bf16.mxu0 0
      %1075 = vmatmul.mubr.bf16.gmra.mxu0 %v587
      %v1076 = vpop.f32.mrf.mxu0
      %v1077 = vadd.f32 %v427, %v1076
      %v1078 = vpop.f32.mrf.mxu0
      %v1079 = vpop.f32.mrf.mxu0
      %v1080 = vadd.f32 %v427, %v1079
      %v1081 = vpop.f32.mrf.mxu0
      %1082 = vmatprep.mubr.bf16.mxu0 0
      %1083 = vmatmul.mubr.bf16.gmra.mxu0 %v590
      %v1084 = vpop.f32.mrf.mxu0
      %v1085 = vadd.f32 %v427, %v1084
      %v1086 = vpop.f32.mrf.mxu0
      %v1087 = vpop.f32.mrf.mxu0
      %v1088 = vadd.f32 %v427, %v1087
      %v1089 = vpop.f32.mrf.mxu0
      %1090 = vmatprep.mubr.bf16.mxu0 0
      %1091 = vmatmul.mubr.bf16.gmra.mxu0 %v593
      %v1092 = vpop.f32.mrf.mxu0
      %v1093 = vadd.f32 %v427, %v1092
      %v1094 = vpop.f32.mrf.mxu0
      %v1095 = vpop.f32.mrf.mxu0
      %v1096 = vadd.f32 %v427, %v1095
      %v1097 = vpop.f32.mrf.mxu0
      %1098 = vmatprep.mubr.bf16.mxu0 0
      %1099 = vmatmul.mubr.bf16.gmra.mxu0 %v596
      %v1100 = vpop.f32.mrf.mxu0
      %v1101 = vadd.f32 %v427, %v1100
      %v1102 = vpop.f32.mrf.mxu0
      %v1103 = vpop.f32.mrf.mxu0
      %v1104 = vadd.f32 %v427, %v1103
      %v1105 = vpop.f32.mrf.mxu0
      %1106 = vmatprep.mubr.bf16.mxu0 0
      %1107 = vmatmul.mubr.bf16.gmra.mxu0 %v599
      %v1108 = vpop.f32.mrf.mxu0
      %v1109 = vadd.f32 %v427, %v1108
      %v1110 = vpop.f32.mrf.mxu0
      %v1111 = vpop.f32.mrf.mxu0
      %v1112 = vadd.f32 %v427, %v1111
      %v1113 = vpop.f32.mrf.mxu0
      %1114 = vmatprep.mubr.bf16.mxu0 0
      %1115 = vmatmul.mubr.bf16.gmra.mxu0 %v602
      %v1116 = vpop.f32.mrf.mxu0
      %v1117 = vadd.f32 %v427, %v1116
      %v1118 = vpop.f32.mrf.mxu0
      %v1119 = vpop.f32.mrf.mxu0
      %v1120 = vadd.f32 %v427, %v1119
      %v1121 = vpop.f32.mrf.mxu0
      %1122 = vmatprep.mubr.bf16.mxu0 0
      %1123 = vmatmul.mubr.bf16.gmra.mxu0 %v605
      %v1124 = vpop.f32.mrf.mxu0
      %v1125 = vadd.f32 %v427, %v1124
      %v1126 = vpop.f32.mrf.mxu0
      %v1127 = vpop.f32.mrf.mxu0
      %v1128 = vadd.f32 %v427, %v1127
      %v1129 = vpop.f32.mrf.mxu0
      %1130 = vmatprep.mubr.bf16.mxu0 0
      %1131 = vmatmul.mubr.bf16.gmra.mxu0 %v608
      %v1132 = vpop.f32.mrf.mxu0
      %v1133 = vadd.f32 %v427, %v1132
      %v1134 = vpop.f32.mrf.mxu0
      %v1135 = vpop.f32.mrf.mxu0
      %v1136 = vadd.f32 %v427, %v1135
      %v1137 = vpop.f32.mrf.mxu0
      %1138 = vmatprep.mubr.bf16.mxu0 0
      %1139 = vmatmul.mubr.bf16.gmra.mxu0 %v611
      %v1140 = vpop.f32.mrf.mxu0
      %v1141 = vadd.f32 %v427, %v1140
      %v1142 = vpop.f32.mrf.mxu0
      %v1143 = vpop.f32.mrf.mxu0
      %v1144 = vadd.f32 %v427, %v1143
      %v1145 = vpop.f32.mrf.mxu0
      %1146 = vmatprep.mubr.bf16.mxu0 0
      %1147 = vmatmul.mubr.bf16.gmra.mxu0 %v614
      %v1148 = vpop.f32.mrf.mxu0
      %v1149 = vadd.f32 %v427, %v1148
      %v1150 = vpop.f32.mrf.mxu0
      %v1151 = vpop.f32.mrf.mxu0
      %v1152 = vadd.f32 %v427, %v1151
      %v1153 = vpop.f32.mrf.mxu0
      %1154 = vmatprep.mubr.bf16.mxu0 0
      %1155 = vmatmul.mubr.bf16.gmra.mxu0 %v617
      %v1156 = vpop.f32.mrf.mxu0
      %v1157 = vadd.f32 %v427, %v1156
      %v1158 = vpop.f32.mrf.mxu0
      %v1159 = vpop.f32.mrf.mxu0
      %v1160 = vadd.f32 %v427, %v1159
      %v1161 = vpop.f32.mrf.mxu0
      %1162 = vmatprep.mubr.bf16.mxu0 0
      %1163 = vmatmul.mubr.bf16.gmra.mxu0 %v620
      %v1164 = vpop.f32.mrf.mxu0
      %v1165 = vadd.f32 %v427, %v1164
      %v1166 = vpop.f32.mrf.mxu0
      %v1167 = vpop.f32.mrf.mxu0
      %v1168 = vadd.f32 %v427, %v1167
      %v1169 = vpop.f32.mrf.mxu0
      %1170 = vdwg.mxu0
      %v1171 = vmax.f32 %v661, 0.0
      %v1172 = vmax.f32 %v664, 0.0
      %v1173 = vmax.f32 %v669, 0.0
      %v1174 = vmax.f32 %v672, 0.0
      %v1175 = vmax.f32 %v677, 0.0
      %v1176 = vmax.f32 %v680, 0.0
      %v1177 = vmax.f32 %v685, 0.0
      %v1178 = vmax.f32 %v688, 0.0
      %v1179 = vmax.f32 %v693, 0.0
      %v1180 = vmax.f32 %v696, 0.0
      %v1181 = vmax.f32 %v701, 0.0
      %v1182 = vmax.f32 %v704, 0.0
      %v1183 = vmax.f32 %v709, 0.0
      %v1184 = vmax.f32 %v712, 0.0
      %v1185 = vmax.f32 %v717, 0.0
      %v1186 = vmax.f32 %v720, 0.0
      %v1187 = vmax.f32 %v725, 0.0
      %v1188 = vmax.f32 %v728, 0.0
      %v1189 = vmax.f32 %v733, 0.0
      %v1190 = vmax.f32 %v736, 0.0
      %v1191 = vmax.f32 %v741, 0.0
      %v1192 = vmax.f32 %v744, 0.0
      %v1193 = vmax.f32 %v749, 0.0
      %v1194 = vmax.f32 %v752, 0.0
      %v1195 = vmax.f32 %v757, 0.0
      %v1196 = vmax.f32 %v760, 0.0
      %v1197 = vmax.f32 %v765, 0.0
      %v1198 = vmax.f32 %v768, 0.0
      %v1199 = vmax.f32 %v773, 0.0
      %v1200 = vmax.f32 %v776, 0.0
      %v1201 = vmax.f32 %v781, 0.0
      %v1202 = vmax.f32 %v784, 0.0
      %v1203 = vmax.f32 %v789, 0.0
      %v1204 = vmax.f32 %v792, 0.0
      %v1205 = vmax.f32 %v797, 0.0
      %v1206 = vmax.f32 %v800, 0.0
      %v1207 = vmax.f32 %v805, 0.0
      %v1208 = vmax.f32 %v808, 0.0
      %v1209 = vmax.f32 %v813, 0.0
      %v1210 = vmax.f32 %v816, 0.0
      %v1211 = vmax.f32 %v821, 0.0
      %v1212 = vmax.f32 %v824, 0.0
      %v1213 = vmax.f32 %v829, 0.0
      %v1214 = vmax.f32 %v832, 0.0
      %v1215 = vmax.f32 %v837, 0.0
      %v1216 = vmax.f32 %v840, 0.0
      %v1217 = vmax.f32 %v845, 0.0
      %v1218 = vmax.f32 %v848, 0.0
      %v1219 = vmax.f32 %v853, 0.0
      %v1220 = vmax.f32 %v856, 0.0
      %v1221 = vmax.f32 %v861, 0.0
      %v1222 = vmax.f32 %v864, 0.0
      %v1223 = vmax.f32 %v869, 0.0
      %v1224 = vmax.f32 %v872, 0.0
      %v1225 = vmax.f32 %v877, 0.0
      %v1226 = vmax.f32 %v880, 0.0
      %v1227 = vmax.f32 %v885, 0.0
      %v1228 = vmax.f32 %v888, 0.0
      %v1229 = vmax.f32 %v893, 0.0
      %v1230 = vmax.f32 %v896, 0.0
      %v1231 = vmax.f32 %v901, 0.0
      %v1232 = vmax.f32 %v904, 0.0
      %v1233 = vmax.f32 %v909, 0.0
      %v1234 = vmax.f32 %v912, 0.0
      %v1235 = vmax.f32 %v917, 0.0
      %v1236 = vmax.f32 %v920, 0.0
      %v1237 = vmax.f32 %v925, 0.0
      %v1238 = vmax.f32 %v928, 0.0
      %v1239 = vmax.f32 %v933, 0.0
      %v1240 = vmax.f32 %v936, 0.0
      %v1241 = vmax.f32 %v941, 0.0
      %v1242 = vmax.f32 %v944, 0.0
      %v1243 = vmax.f32 %v949, 0.0
      %v1244 = vmax.f32 %v952, 0.0
      %v1245 = vmax.f32 %v957, 0.0
      %v1246 = vmax.f32 %v960, 0.0
      %v1247 = vmax.f32 %v965, 0.0
      %v1248 = vmax.f32 %v968, 0.0
      %v1249 = vmax.f32 %v973, 0.0
      %v1250 = vmax.f32 %v976, 0.0
      %v1251 = vmax.f32 %v981, 0.0
      %v1252 = vmax.f32 %v984, 0.0
      %v1253 = vmax.f32 %v989, 0.0
      %v1254 = vmax.f32 %v992, 0.0
      %v1255 = vmax.f32 %v997, 0.0
      %v1256 = vmax.f32 %v1000, 0.0
      %v1257 = vmax.f32 %v1005, 0.0
      %v1258 = vmax.f32 %v1008, 0.0
      %v1259 = vmax.f32 %v1013, 0.0
      %v1260 = vmax.f32 %v1016, 0.0
      %v1261 = vmax.f32 %v1021, 0.0
      %v1262 = vmax.f32 %v1024, 0.0
      %v1263 = vmax.f32 %v1029, 0.0
      %v1264 = vmax.f32 %v1032, 0.0
      %v1265 = vmax.f32 %v1037, 0.0
      %v1266 = vmax.f32 %v1040, 0.0
      %v1267 = vmax.f32 %v1045, 0.0
      %v1268 = vmax.f32 %v1048, 0.0
      %v1269 = vmax.f32 %v1053, 0.0
      %v1270 = vmax.f32 %v1056, 0.0
      %v1271 = vmax.f32 %v1061, 0.0
      %v1272 = vmax.f32 %v1064, 0.0
      %v1273 = vmax.f32 %v1069, 0.0
      %v1274 = vmax.f32 %v1072, 0.0
      %v1275 = vmax.f32 %v1077, 0.0
      %v1276 = vmax.f32 %v1080, 0.0
      %v1277 = vmax.f32 %v1085, 0.0
      %v1278 = vmax.f32 %v1088, 0.0
      %v1279 = vmax.f32 %v1093, 0.0
      %v1280 = vmax.f32 %v1096, 0.0
      %v1281 = vmax.f32 %v1101, 0.0
      %v1282 = vmax.f32 %v1104, 0.0
      %v1283 = vmax.f32 %v1109, 0.0
      %v1284 = vmax.f32 %v1112, 0.0
      %v1285 = vmax.f32 %v1117, 0.0
      %v1286 = vmax.f32 %v1120, 0.0
      %v1287 = vmax.f32 %v1125, 0.0
      %v1288 = vmax.f32 %v1128, 0.0
      %v1289 = vmax.f32 %v1133, 0.0
      %v1290 = vmax.f32 %v1136, 0.0
      %v1291 = vmax.f32 %v1141, 0.0
      %v1292 = vmax.f32 %v1144, 0.0
      %v1293 = vmax.f32 %v1149, 0.0
      %v1294 = vmax.f32 %v1152, 0.0
      %v1295 = vmax.f32 %v1157, 0.0
      %v1296 = vmax.f32 %v1160, 0.0
      %v1297 = vmax.f32 %v1165, 0.0
      %v1298 = vmax.f32 %v1168, 0.0
      %v1299 = vpack.c.bf16 %v1172, %v1171
      %v1300 = vpack.c.bf16 %v1174, %v1173
      %v1301 = vpack.c.bf16 %v1176, %v1175
      %v1302 = vpack.c.bf16 %v1178, %v1177
      %v1303 = vpack.c.bf16 %v1180, %v1179
      %v1304 = vpack.c.bf16 %v1182, %v1181
      %v1305 = vpack.c.bf16 %v1184, %v1183
      %v1306 = vpack.c.bf16 %v1186, %v1185
      %v1307 = vpack.c.bf16 %v1188, %v1187
      %v1308 = vpack.c.bf16 %v1190, %v1189
      %v1309 = vpack.c.bf16 %v1192, %v1191
      %v1310 = vpack.c.bf16 %v1194, %v1193
      %v1311 = vpack.c.bf16 %v1196, %v1195
      %v1312 = vpack.c.bf16 %v1198, %v1197
      %v1313 = vpack.c.bf16 %v1200, %v1199
      %v1314 = vpack.c.bf16 %v1202, %v1201
      %v1315 = vpack.c.bf16 %v1204, %v1203
      %v1316 = vpack.c.bf16 %v1206, %v1205
      %v1317 = vpack.c.bf16 %v1208, %v1207
      %v1318 = vpack.c.bf16 %v1210, %v1209
      %v1319 = vpack.c.bf16 %v1212, %v1211
      %v1320 = vpack.c.bf16 %v1214, %v1213
      %v1321 = vpack.c.bf16 %v1216, %v1215
      %v1322 = vpack.c.bf16 %v1218, %v1217
      %v1323 = vpack.c.bf16 %v1220, %v1219
      %v1324 = vpack.c.bf16 %v1222, %v1221
      %v1325 = vpack.c.bf16 %v1224, %v1223
      %v1326 = vpack.c.bf16 %v1226, %v1225
      %v1327 = vpack.c.bf16 %v1228, %v1227
      %v1328 = vpack.c.bf16 %v1230, %v1229
      %v1329 = vpack.c.bf16 %v1232, %v1231
      %v1330 = vpack.c.bf16 %v1234, %v1233
      %v1331 = vpack.c.bf16 %v1236, %v1235
      %v1332 = vpack.c.bf16 %v1238, %v1237
      %v1333 = vpack.c.bf16 %v1240, %v1239
      %v1334 = vpack.c.bf16 %v1242, %v1241
      %v1335 = vpack.c.bf16 %v1244, %v1243
      %v1336 = vpack.c.bf16 %v1246, %v1245
      %v1337 = vpack.c.bf16 %v1248, %v1247
      %v1338 = vpack.c.bf16 %v1250, %v1249
      %v1339 = vpack.c.bf16 %v1252, %v1251
      %v1340 = vpack.c.bf16 %v1254, %v1253
      %v1341 = vpack.c.bf16 %v1256, %v1255
      %v1342 = vpack.c.bf16 %v1258, %v1257
      %v1343 = vpack.c.bf16 %v1260, %v1259
      %v1344 = vpack.c.bf16 %v1262, %v1261
      %v1345 = vpack.c.bf16 %v1264, %v1263
      %v1346 = vpack.c.bf16 %v1266, %v1265
      %v1347 = vpack.c.bf16 %v1268, %v1267
      %v1348 = vpack.c.bf16 %v1270, %v1269
      %v1349 = vpack.c.bf16 %v1272, %v1271
      %v1350 = vpack.c.bf16 %v1274, %v1273
      %v1351 = vpack.c.bf16 %v1276, %v1275
      %v1352 = vpack.c.bf16 %v1278, %v1277
      %v1353 = vpack.c.bf16 %v1280, %v1279
      %v1354 = vpack.c.bf16 %v1282, %v1281
      %v1355 = vpack.c.bf16 %v1284, %v1283
      %v1356 = vpack.c.bf16 %v1286, %v1285
      %v1357 = vpack.c.bf16 %v1288, %v1287
      %v1358 = vpack.c.bf16 %v1290, %v1289
      %v1359 = vpack.c.bf16 %v1292, %v1291
      %v1360 = vpack.c.bf16 %v1294, %v1293
      %v1361 = vpack.c.bf16 %v1296, %v1295
      %v1362 = vpack.c.bf16 %v1298, %v1297
      %v1363 = vld [vmem:[%s3] sm:$0xf]
      %v1364 = vld [vmem:[%s3 + $0x4] sm:$0xf]
      %v1365 = vld [vmem:[%s3 + $0x8] sm:$0xf]
      %v1366 = vld [vmem:[%s3 + $0xc] sm:$0xf]
      %v1367 = vld [vmem:[%s3 + $0x10] sm:$0xf]
      %v1368 = vld [vmem:[%s3 + $0x14] sm:$0xf]
      %v1369 = vld [vmem:[%s3 + $0x18] sm:$0xf]
      %v1370 = vld [vmem:[%s3 + $0x1c] sm:$0xf]
      %v1371 = vld [vmem:[%s3 + $0x20] sm:$0xf]
      %v1372 = vld [vmem:[%s3 + $0x24] sm:$0xf]
      %v1373 = vld [vmem:[%s3 + $0x28] sm:$0xf]
      %v1374 = vld [vmem:[%s3 + $0x2c] sm:$0xf]
      %v1375 = vld [vmem:[%s3 + $0x30] sm:$0xf]
      %v1376 = vld [vmem:[%s3 + $0x34] sm:$0xf]
      %v1377 = vld [vmem:[%s3 + $0x38] sm:$0xf]
      %v1378 = vld [vmem:[%s3 + $0x3c] sm:$0xf]
      %v1379 = vld [vmem:[%s4] sm:$0x1]
      %v1381 = vlaneseq
      %v1382 = vshrl.u32 %v1381, 7
      %v1383 = vsub.s32 0, %v1382
      %v1384 = vrot.slane %v1379, %v1383
      %v1402 = vunpack.c.l.b16 %v1363
      %v1403 = vunpack.c.l.b16 %v1364
      %v1404 = vunpack.c.l.b16 %v1365
      %v1405 = vunpack.c.l.b16 %v1366
      %v1406 = vunpack.c.l.b16 %v1367
      %v1407 = vunpack.c.l.b16 %v1368
      %v1408 = vunpack.c.l.b16 %v1369
      %v1409 = vunpack.c.l.b16 %v1370
      %v1410 = vunpack.c.l.b16 %v1371
      %v1411 = vunpack.c.l.b16 %v1372
      %v1412 = vunpack.c.l.b16 %v1373
      %v1413 = vunpack.c.l.b16 %v1374
      %v1414 = vunpack.c.l.b16 %v1375
      %v1415 = vunpack.c.l.b16 %v1376
      %v1416 = vunpack.c.l.b16 %v1377
      %v1417 = vunpack.c.l.b16 %v1378
      %v1418 = vpack.c.b16 %v1403, %v1402
      %v1419 = vpack.c.b16 %v1405, %v1404
      %v1420 = vpack.c.b16 %v1407, %v1406
      %v1421 = vpack.c.b16 %v1409, %v1408
      %v1422 = vpack.c.b16 %v1411, %v1410
      %v1423 = vpack.c.b16 %v1413, %v1412
      %v1424 = vpack.c.b16 %v1415, %v1414
      %v1425 = vpack.c.b16 %v1417, %v1416
      %1434 = vmatprep.subr.bf16.mxu0 0
      %1435 = vmatpush1.bf16.msra.mxu0 %v1425
      %1436 = vmatprep.subr.bf16.mxu0 0
      %1437 = vmatpush1.bf16.msra.mxu0 %v1424
      %1438 = vmatprep.subr.bf16.mxu0 0
      %1439 = vmatpush1.bf16.msra.mxu0 %v1423
      %1440 = vmatprep.subr.bf16.mxu0 0
      %1441 = vmatpush1.bf16.msra.mxu0 %v1422
      %1442 = vmatprep.subr.bf16.mxu0 0
      %1443 = vmatpush1.bf16.msra.mxu0 %v1421
      %1444 = vmatprep.subr.bf16.mxu0 0
      %1445 = vmatpush1.bf16.msra.mxu0 %v1420
      %1446 = vmatprep.subr.bf16.mxu0 0
      %1447 = vmatpush1.bf16.msra.mxu0 %v1419
      %1448 = vmatprep.subr.bf16.mxu0 0
      %1449 = vmatpush1.bf16.msra.mxu0 %v1418
      %1450 = vmatprep.subr.bf16.mxu0 0
      %1451 = vmatpush2.bf16.msra.mxu0 0
      %1452 = vmatprep.subr.bf16.mxu0 0
      %1453 = vmatpush2.bf16.msra.mxu0 0
      %1454 = vmatprep.subr.bf16.mxu0 0
      %1455 = vmatpush2.bf16.msra.mxu0 0
      %1456 = vmatprep.subr.bf16.mxu0 0
      %1457 = vmatpush2.bf16.msra.mxu0 0
      %1458 = vmatprep.subr.bf16.mxu0 0
      %1459 = vmatpush2.bf16.msra.mxu0 0
      %1460 = vmatprep.subr.bf16.mxu0 0
      %1461 = vmatpush2.bf16.msra.mxu0 0
      %1462 = vmatprep.subr.bf16.mxu0 0
      %1463 = vmatpush2.bf16.msra.mxu0 0
      %1464 = vmatprep.subr.bf16.mxu0 0
      %1465 = vmatpush2.bf16.msra.mxu0 0
      %1466 = vmatprep.mubr.bf16.mxu0 0
      %1467 = vmatmul.mubr.bf16.gmra.mxu0 %v1299
      %v1468 = vpop.f32.mrf.mxu0
      %v1469 = vadd.f32 %v1384, %v1468
      %v1470 = vpop.f32.mrf.mxu0
      %v1471 = vpop.f32.mrf.mxu0
      %v1472 = vadd.f32 %v1384, %v1471
      %v1473 = vpop.f32.mrf.mxu0
      %1474 = vmatprep.mubr.bf16.mxu0 0
      %1475 = vmatmul.mubr.bf16.gmra.mxu0 %v1300
      %v1476 = vpop.f32.mrf.mxu0
      %v1477 = vadd.f32 %v1384, %v1476
      %v1478 = vpop.f32.mrf.mxu0
      %v1479 = vpop.f32.mrf.mxu0
      %v1480 = vadd.f32 %v1384, %v1479
      %v1481 = vpop.f32.mrf.mxu0
      %1482 = vmatprep.mubr.bf16.mxu0 0
      %1483 = vmatmul.mubr.bf16.gmra.mxu0 %v1301
      %v1484 = vpop.f32.mrf.mxu0
      %v1485 = vadd.f32 %v1384, %v1484
      %v1486 = vpop.f32.mrf.mxu0
      %v1487 = vpop.f32.mrf.mxu0
      %v1488 = vadd.f32 %v1384, %v1487
      %v1489 = vpop.f32.mrf.mxu0
      %1490 = vmatprep.mubr.bf16.mxu0 0
      %1491 = vmatmul.mubr.bf16.gmra.mxu0 %v1302
      %v1492 = vpop.f32.mrf.mxu0
      %v1493 = vadd.f32 %v1384, %v1492
      %v1494 = vpop.f32.mrf.mxu0
      %v1495 = vpop.f32.mrf.mxu0
      %v1496 = vadd.f32 %v1384, %v1495
      %v1497 = vpop.f32.mrf.mxu0
      %1498 = vmatprep.mubr.bf16.mxu0 0
      %1499 = vmatmul.mubr.bf16.gmra.mxu0 %v1303
      %v1500 = vpop.f32.mrf.mxu0
      %v1501 = vadd.f32 %v1384, %v1500
      %v1502 = vpop.f32.mrf.mxu0
      %v1503 = vpop.f32.mrf.mxu0
      %v1504 = vadd.f32 %v1384, %v1503
      %v1505 = vpop.f32.mrf.mxu0
      %1506 = vmatprep.mubr.bf16.mxu0 0
      %1507 = vmatmul.mubr.bf16.gmra.mxu0 %v1304
      %v1508 = vpop.f32.mrf.mxu0
      %v1509 = vadd.f32 %v1384, %v1508
      %v1510 = vpop.f32.mrf.mxu0
      %v1511 = vpop.f32.mrf.mxu0
      %v1512 = vadd.f32 %v1384, %v1511
      %v1513 = vpop.f32.mrf.mxu0
      %1514 = vmatprep.mubr.bf16.mxu0 0
      %1515 = vmatmul.mubr.bf16.gmra.mxu0 %v1305
      %v1516 = vpop.f32.mrf.mxu0
      %v1517 = vadd.f32 %v1384, %v1516
      %v1518 = vpop.f32.mrf.mxu0
      %v1519 = vpop.f32.mrf.mxu0
      %v1520 = vadd.f32 %v1384, %v1519
      %v1521 = vpop.f32.mrf.mxu0
      %1522 = vmatprep.mubr.bf16.mxu0 0
      %1523 = vmatmul.mubr.bf16.gmra.mxu0 %v1306
      %v1524 = vpop.f32.mrf.mxu0
      %v1525 = vadd.f32 %v1384, %v1524
      %v1526 = vpop.f32.mrf.mxu0
      %v1527 = vpop.f32.mrf.mxu0
      %v1528 = vadd.f32 %v1384, %v1527
      %v1529 = vpop.f32.mrf.mxu0
      %1530 = vmatprep.mubr.bf16.mxu0 0
      %1531 = vmatmul.mubr.bf16.gmra.mxu0 %v1307
      %v1532 = vpop.f32.mrf.mxu0
      %v1533 = vadd.f32 %v1384, %v1532
      %v1534 = vpop.f32.mrf.mxu0
      %v1535 = vpop.f32.mrf.mxu0
      %v1536 = vadd.f32 %v1384, %v1535
      %v1537 = vpop.f32.mrf.mxu0
      %1538 = vmatprep.mubr.bf16.mxu0 0
      %1539 = vmatmul.mubr.bf16.gmra.mxu0 %v1308
      %v1540 = vpop.f32.mrf.mxu0
      %v1541 = vadd.f32 %v1384, %v1540
      %v1542 = vpop.f32.mrf.mxu0
      %v1543 = vpop.f32.mrf.mxu0
      %v1544 = vadd.f32 %v1384, %v1543
      %v1545 = vpop.f32.mrf.mxu0
      %1546 = vmatprep.mubr.bf16.mxu0 0
      %1547 = vmatmul.mubr.bf16.gmra.mxu0 %v1309
      %v1548 = vpop.f32.mrf.mxu0
      %v1549 = vadd.f32 %v1384, %v1548
      %v1550 = vpop.f32.mrf.mxu0
      %v1551 = vpop.f32.mrf.mxu0
      %v1552 = vadd.f32 %v1384, %v1551
      %v1553 = vpop.f32.mrf.mxu0
      %1554 = vmatprep.mubr.bf16.mxu0 0
      %1555 = vmatmul.mubr.bf16.gmra.mxu0 %v1310
      %v1556 = vpop.f32.mrf.mxu0
      %v1557 = vadd.f32 %v1384, %v1556
      %v1558 = vpop.f32.mrf.mxu0
      %v1559 = vpop.f32.mrf.mxu0
      %v1560 = vadd.f32 %v1384, %v1559
      %v1561 = vpop.f32.mrf.mxu0
      %1562 = vmatprep.mubr.bf16.mxu0 0
      %1563 = vmatmul.mubr.bf16.gmra.mxu0 %v1311
      %v1564 = vpop.f32.mrf.mxu0
      %v1565 = vadd.f32 %v1384, %v1564
      %v1566 = vpop.f32.mrf.mxu0
      %v1567 = vpop.f32.mrf.mxu0
      %v1568 = vadd.f32 %v1384, %v1567
      %v1569 = vpop.f32.mrf.mxu0
      %1570 = vmatprep.mubr.bf16.mxu0 0
      %1571 = vmatmul.mubr.bf16.gmra.mxu0 %v1312
      %v1572 = vpop.f32.mrf.mxu0
      %v1573 = vadd.f32 %v1384, %v1572
      %v1574 = vpop.f32.mrf.mxu0
      %v1575 = vpop.f32.mrf.mxu0
      %v1576 = vadd.f32 %v1384, %v1575
      %v1577 = vpop.f32.mrf.mxu0
      %1578 = vmatprep.mubr.bf16.mxu0 0
      %1579 = vmatmul.mubr.bf16.gmra.mxu0 %v1313
      %v1580 = vpop.f32.mrf.mxu0
      %v1581 = vadd.f32 %v1384, %v1580
      %v1582 = vpop.f32.mrf.mxu0
      %v1583 = vpop.f32.mrf.mxu0
      %v1584 = vadd.f32 %v1384, %v1583
      %v1585 = vpop.f32.mrf.mxu0
      %1586 = vmatprep.mubr.bf16.mxu0 0
      %1587 = vmatmul.mubr.bf16.gmra.mxu0 %v1314
      %v1588 = vpop.f32.mrf.mxu0
      %v1589 = vadd.f32 %v1384, %v1588
      %v1590 = vpop.f32.mrf.mxu0
      %v1591 = vpop.f32.mrf.mxu0
      %v1592 = vadd.f32 %v1384, %v1591
      %v1593 = vpop.f32.mrf.mxu0
      %1594 = vmatprep.mubr.bf16.mxu0 0
      %1595 = vmatmul.mubr.bf16.gmra.mxu0 %v1315
      %v1596 = vpop.f32.mrf.mxu0
      %v1597 = vadd.f32 %v1384, %v1596
      %v1598 = vpop.f32.mrf.mxu0
      %v1599 = vpop.f32.mrf.mxu0
      %v1600 = vadd.f32 %v1384, %v1599
      %v1601 = vpop.f32.mrf.mxu0
      %1602 = vmatprep.mubr.bf16.mxu0 0
      %1603 = vmatmul.mubr.bf16.gmra.mxu0 %v1316
      %v1604 = vpop.f32.mrf.mxu0
      %v1605 = vadd.f32 %v1384, %v1604
      %v1606 = vpop.f32.mrf.mxu0
      %v1607 = vpop.f32.mrf.mxu0
      %v1608 = vadd.f32 %v1384, %v1607
      %v1609 = vpop.f32.mrf.mxu0
      %1610 = vmatprep.mubr.bf16.mxu0 0
      %1611 = vmatmul.mubr.bf16.gmra.mxu0 %v1317
      %v1612 = vpop.f32.mrf.mxu0
      %v1613 = vadd.f32 %v1384, %v1612
      %v1614 = vpop.f32.mrf.mxu0
      %v1615 = vpop.f32.mrf.mxu0
      %v1616 = vadd.f32 %v1384, %v1615
      %v1617 = vpop.f32.mrf.mxu0
      %1618 = vmatprep.mubr.bf16.mxu0 0
      %1619 = vmatmul.mubr.bf16.gmra.mxu0 %v1318
      %v1620 = vpop.f32.mrf.mxu0
      %v1621 = vadd.f32 %v1384, %v1620
      %v1622 = vpop.f32.mrf.mxu0
      %v1623 = vpop.f32.mrf.mxu0
      %v1624 = vadd.f32 %v1384, %v1623
      %v1625 = vpop.f32.mrf.mxu0
      %1626 = vmatprep.mubr.bf16.mxu0 0
      %1627 = vmatmul.mubr.bf16.gmra.mxu0 %v1319
      %v1628 = vpop.f32.mrf.mxu0
      %v1629 = vadd.f32 %v1384, %v1628
      %v1630 = vpop.f32.mrf.mxu0
      %v1631 = vpop.f32.mrf.mxu0
      %v1632 = vadd.f32 %v1384, %v1631
      %v1633 = vpop.f32.mrf.mxu0
      %1634 = vmatprep.mubr.bf16.mxu0 0
      %1635 = vmatmul.mubr.bf16.gmra.mxu0 %v1320
      %v1636 = vpop.f32.mrf.mxu0
      %v1637 = vadd.f32 %v1384, %v1636
      %v1638 = vpop.f32.mrf.mxu0
      %v1639 = vpop.f32.mrf.mxu0
      %v1640 = vadd.f32 %v1384, %v1639
      %v1641 = vpop.f32.mrf.mxu0
      %1642 = vmatprep.mubr.bf16.mxu0 0
      %1643 = vmatmul.mubr.bf16.gmra.mxu0 %v1321
      %v1644 = vpop.f32.mrf.mxu0
      %v1645 = vadd.f32 %v1384, %v1644
      %v1646 = vpop.f32.mrf.mxu0
      %v1647 = vpop.f32.mrf.mxu0
      %v1648 = vadd.f32 %v1384, %v1647
      %v1649 = vpop.f32.mrf.mxu0
      %1650 = vmatprep.mubr.bf16.mxu0 0
      %1651 = vmatmul.mubr.bf16.gmra.mxu0 %v1322
      %v1652 = vpop.f32.mrf.mxu0
      %v1653 = vadd.f32 %v1384, %v1652
      %v1654 = vpop.f32.mrf.mxu0
      %v1655 = vpop.f32.mrf.mxu0
      %v1656 = vadd.f32 %v1384, %v1655
      %v1657 = vpop.f32.mrf.mxu0
      %1658 = vmatprep.mubr.bf16.mxu0 0
      %1659 = vmatmul.mubr.bf16.gmra.mxu0 %v1323
      %v1660 = vpop.f32.mrf.mxu0
      %v1661 = vadd.f32 %v1384, %v1660
      %v1662 = vpop.f32.mrf.mxu0
      %v1663 = vpop.f32.mrf.mxu0
      %v1664 = vadd.f32 %v1384, %v1663
      %v1665 = vpop.f32.mrf.mxu0
      %1666 = vmatprep.mubr.bf16.mxu0 0
      %1667 = vmatmul.mubr.bf16.gmra.mxu0 %v1324
      %v1668 = vpop.f32.mrf.mxu0
      %v1669 = vadd.f32 %v1384, %v1668
      %v1670 = vpop.f32.mrf.mxu0
      %v1671 = vpop.f32.mrf.mxu0
      %v1672 = vadd.f32 %v1384, %v1671
      %v1673 = vpop.f32.mrf.mxu0
      %1674 = vmatprep.mubr.bf16.mxu0 0
      %1675 = vmatmul.mubr.bf16.gmra.mxu0 %v1325
      %v1676 = vpop.f32.mrf.mxu0
      %v1677 = vadd.f32 %v1384, %v1676
      %v1678 = vpop.f32.mrf.mxu0
      %v1679 = vpop.f32.mrf.mxu0
      %v1680 = vadd.f32 %v1384, %v1679
      %v1681 = vpop.f32.mrf.mxu0
      %1682 = vmatprep.mubr.bf16.mxu0 0
      %1683 = vmatmul.mubr.bf16.gmra.mxu0 %v1326
      %v1684 = vpop.f32.mrf.mxu0
      %v1685 = vadd.f32 %v1384, %v1684
      %v1686 = vpop.f32.mrf.mxu0
      %v1687 = vpop.f32.mrf.mxu0
      %v1688 = vadd.f32 %v1384, %v1687
      %v1689 = vpop.f32.mrf.mxu0
      %1690 = vmatprep.mubr.bf16.mxu0 0
      %1691 = vmatmul.mubr.bf16.gmra.mxu0 %v1327
      %v1692 = vpop.f32.mrf.mxu0
      %v1693 = vadd.f32 %v1384, %v1692
      %v1694 = vpop.f32.mrf.mxu0
      %v1695 = vpop.f32.mrf.mxu0
      %v1696 = vadd.f32 %v1384, %v1695
      %v1697 = vpop.f32.mrf.mxu0
      %1698 = vmatprep.mubr.bf16.mxu0 0
      %1699 = vmatmul.mubr.bf16.gmra.mxu0 %v1328
      %v1700 = vpop.f32.mrf.mxu0
      %v1701 = vadd.f32 %v1384, %v1700
      %v1702 = vpop.f32.mrf.mxu0
      %v1703 = vpop.f32.mrf.mxu0
      %v1704 = vadd.f32 %v1384, %v1703
      %v1705 = vpop.f32.mrf.mxu0
      %1706 = vmatprep.mubr.bf16.mxu0 0
      %1707 = vmatmul.mubr.bf16.gmra.mxu0 %v1329
      %v1708 = vpop.f32.mrf.mxu0
      %v1709 = vadd.f32 %v1384, %v1708
      %v1710 = vpop.f32.mrf.mxu0
      %v1711 = vpop.f32.mrf.mxu0
      %v1712 = vadd.f32 %v1384, %v1711
      %v1713 = vpop.f32.mrf.mxu0
      %1714 = vmatprep.mubr.bf16.mxu0 0
      %1715 = vmatmul.mubr.bf16.gmra.mxu0 %v1330
      %v1716 = vpop.f32.mrf.mxu0
      %v1717 = vadd.f32 %v1384, %v1716
      %v1718 = vpop.f32.mrf.mxu0
      %v1719 = vpop.f32.mrf.mxu0
      %v1720 = vadd.f32 %v1384, %v1719
      %v1721 = vpop.f32.mrf.mxu0
      %1722 = vmatprep.mubr.bf16.mxu0 0
      %1723 = vmatmul.mubr.bf16.gmra.mxu0 %v1331
      %v1724 = vpop.f32.mrf.mxu0
      %v1725 = vadd.f32 %v1384, %v1724
      %v1726 = vpop.f32.mrf.mxu0
      %v1727 = vpop.f32.mrf.mxu0
      %v1728 = vadd.f32 %v1384, %v1727
      %v1729 = vpop.f32.mrf.mxu0
      %1730 = vmatprep.mubr.bf16.mxu0 0
      %1731 = vmatmul.mubr.bf16.gmra.mxu0 %v1332
      %v1732 = vpop.f32.mrf.mxu0
      %v1733 = vadd.f32 %v1384, %v1732
      %v1734 = vpop.f32.mrf.mxu0
      %v1735 = vpop.f32.mrf.mxu0
      %v1736 = vadd.f32 %v1384, %v1735
      %v1737 = vpop.f32.mrf.mxu0
      %1738 = vmatprep.mubr.bf16.mxu0 0
      %1739 = vmatmul.mubr.bf16.gmra.mxu0 %v1333
      %v1740 = vpop.f32.mrf.mxu0
      %v1741 = vadd.f32 %v1384, %v1740
      %v1742 = vpop.f32.mrf.mxu0
      %v1743 = vpop.f32.mrf.mxu0
      %v1744 = vadd.f32 %v1384, %v1743
      %v1745 = vpop.f32.mrf.mxu0
      %1746 = vmatprep.mubr.bf16.mxu0 0
      %1747 = vmatmul.mubr.bf16.gmra.mxu0 %v1334
      %v1748 = vpop.f32.mrf.mxu0
      %v1749 = vadd.f32 %v1384, %v1748
      %v1750 = vpop.f32.mrf.mxu0
      %v1751 = vpop.f32.mrf.mxu0
      %v1752 = vadd.f32 %v1384, %v1751
      %v1753 = vpop.f32.mrf.mxu0
      %1754 = vmatprep.mubr.bf16.mxu0 0
      %1755 = vmatmul.mubr.bf16.gmra.mxu0 %v1335
      %v1756 = vpop.f32.mrf.mxu0
      %v1757 = vadd.f32 %v1384, %v1756
      %v1758 = vpop.f32.mrf.mxu0
      %v1759 = vpop.f32.mrf.mxu0
      %v1760 = vadd.f32 %v1384, %v1759
      %v1761 = vpop.f32.mrf.mxu0
      %1762 = vmatprep.mubr.bf16.mxu0 0
      %1763 = vmatmul.mubr.bf16.gmra.mxu0 %v1336
      %v1764 = vpop.f32.mrf.mxu0
      %v1765 = vadd.f32 %v1384, %v1764
      %v1766 = vpop.f32.mrf.mxu0
      %v1767 = vpop.f32.mrf.mxu0
      %v1768 = vadd.f32 %v1384, %v1767
      %v1769 = vpop.f32.mrf.mxu0
      %1770 = vmatprep.mubr.bf16.mxu0 0
      %1771 = vmatmul.mubr.bf16.gmra.mxu0 %v1337
      %v1772 = vpop.f32.mrf.mxu0
      %v1773 = vadd.f32 %v1384, %v1772
      %v1774 = vpop.f32.mrf.mxu0
      %v1775 = vpop.f32.mrf.mxu0
      %v1776 = vadd.f32 %v1384, %v1775
      %v1777 = vpop.f32.mrf.mxu0
      %1778 = vmatprep.mubr.bf16.mxu0 0
      %1779 = vmatmul.mubr.bf16.gmra.mxu0 %v1338
      %v1780 = vpop.f32.mrf.mxu0
      %v1781 = vadd.f32 %v1384, %v1780
      %v1782 = vpop.f32.mrf.mxu0
      %v1783 = vpop.f32.mrf.mxu0
      %v1784 = vadd.f32 %v1384, %v1783
      %v1785 = vpop.f32.mrf.mxu0
      %1786 = vmatprep.mubr.bf16.mxu0 0
      %1787 = vmatmul.mubr.bf16.gmra.mxu0 %v1339
      %v1788 = vpop.f32.mrf.mxu0
      %v1789 = vadd.f32 %v1384, %v1788
      %v1790 = vpop.f32.mrf.mxu0
      %v1791 = vpop.f32.mrf.mxu0
      %v1792 = vadd.f32 %v1384, %v1791
      %v1793 = vpop.f32.mrf.mxu0
      %1794 = vmatprep.mubr.bf16.mxu0 0
      %1795 = vmatmul.mubr.bf16.gmra.mxu0 %v1340
      %v1796 = vpop.f32.mrf.mxu0
      %v1797 = vadd.f32 %v1384, %v1796
      %v1798 = vpop.f32.mrf.mxu0
      %v1799 = vpop.f32.mrf.mxu0
      %v1800 = vadd.f32 %v1384, %v1799
      %v1801 = vpop.f32.mrf.mxu0
      %1802 = vmatprep.mubr.bf16.mxu0 0
      %1803 = vmatmul.mubr.bf16.gmra.mxu0 %v1341
      %v1804 = vpop.f32.mrf.mxu0
      %v1805 = vadd.f32 %v1384, %v1804
      %v1806 = vpop.f32.mrf.mxu0
      %v1807 = vpop.f32.mrf.mxu0
      %v1808 = vadd.f32 %v1384, %v1807
      %v1809 = vpop.f32.mrf.mxu0
      %1810 = vmatprep.mubr.bf16.mxu0 0
      %1811 = vmatmul.mubr.bf16.gmra.mxu0 %v1342
      %v1812 = vpop.f32.mrf.mxu0
      %v1813 = vadd.f32 %v1384, %v1812
      %v1814 = vpop.f32.mrf.mxu0
      %v1815 = vpop.f32.mrf.mxu0
      %v1816 = vadd.f32 %v1384, %v1815
      %v1817 = vpop.f32.mrf.mxu0
      %1818 = vmatprep.mubr.bf16.mxu0 0
      %1819 = vmatmul.mubr.bf16.gmra.mxu0 %v1343
      %v1820 = vpop.f32.mrf.mxu0
      %v1821 = vadd.f32 %v1384, %v1820
      %v1822 = vpop.f32.mrf.mxu0
      %v1823 = vpop.f32.mrf.mxu0
      %v1824 = vadd.f32 %v1384, %v1823
      %v1825 = vpop.f32.mrf.mxu0
      %1826 = vmatprep.mubr.bf16.mxu0 0
      %1827 = vmatmul.mubr.bf16.gmra.mxu0 %v1344
      %v1828 = vpop.f32.mrf.mxu0
      %v1829 = vadd.f32 %v1384, %v1828
      %v1830 = vpop.f32.mrf.mxu0
      %v1831 = vpop.f32.mrf.mxu0
      %v1832 = vadd.f32 %v1384, %v1831
      %v1833 = vpop.f32.mrf.mxu0
      %1834 = vmatprep.mubr.bf16.mxu0 0
      %1835 = vmatmul.mubr.bf16.gmra.mxu0 %v1345
      %v1836 = vpop.f32.mrf.mxu0
      %v1837 = vadd.f32 %v1384, %v1836
      %v1838 = vpop.f32.mrf.mxu0
      %v1839 = vpop.f32.mrf.mxu0
      %v1840 = vadd.f32 %v1384, %v1839
      %v1841 = vpop.f32.mrf.mxu0
      %1842 = vmatprep.mubr.bf16.mxu0 0
      %1843 = vmatmul.mubr.bf16.gmra.mxu0 %v1346
      %v1844 = vpop.f32.mrf.mxu0
      %v1845 = vadd.f32 %v1384, %v1844
      %v1846 = vpop.f32.mrf.mxu0
      %v1847 = vpop.f32.mrf.mxu0
      %v1848 = vadd.f32 %v1384, %v1847
      %v1849 = vpop.f32.mrf.mxu0
      %1850 = vmatprep.mubr.bf16.mxu0 0
      %1851 = vmatmul.mubr.bf16.gmra.mxu0 %v1347
      %v1852 = vpop.f32.mrf.mxu0
      %v1853 = vadd.f32 %v1384, %v1852
      %v1854 = vpop.f32.mrf.mxu0
      %v1855 = vpop.f32.mrf.mxu0
      %v1856 = vadd.f32 %v1384, %v1855
      %v1857 = vpop.f32.mrf.mxu0
      %1858 = vmatprep.mubr.bf16.mxu0 0
      %1859 = vmatmul.mubr.bf16.gmra.mxu0 %v1348
      %v1860 = vpop.f32.mrf.mxu0
      %v1861 = vadd.f32 %v1384, %v1860
      %v1862 = vpop.f32.mrf.mxu0
      %v1863 = vpop.f32.mrf.mxu0
      %v1864 = vadd.f32 %v1384, %v1863
      %v1865 = vpop.f32.mrf.mxu0
      %1866 = vmatprep.mubr.bf16.mxu0 0
      %1867 = vmatmul.mubr.bf16.gmra.mxu0 %v1349
      %v1868 = vpop.f32.mrf.mxu0
      %v1869 = vadd.f32 %v1384, %v1868
      %v1870 = vpop.f32.mrf.mxu0
      %v1871 = vpop.f32.mrf.mxu0
      %v1872 = vadd.f32 %v1384, %v1871
      %v1873 = vpop.f32.mrf.mxu0
      %1874 = vmatprep.mubr.bf16.mxu0 0
      %1875 = vmatmul.mubr.bf16.gmra.mxu0 %v1350
      %v1876 = vpop.f32.mrf.mxu0
      %v1877 = vadd.f32 %v1384, %v1876
      %v1878 = vpop.f32.mrf.mxu0
      %v1879 = vpop.f32.mrf.mxu0
      %v1880 = vadd.f32 %v1384, %v1879
      %v1881 = vpop.f32.mrf.mxu0
      %1882 = vmatprep.mubr.bf16.mxu0 0
      %1883 = vmatmul.mubr.bf16.gmra.mxu0 %v1351
      %v1884 = vpop.f32.mrf.mxu0
      %v1885 = vadd.f32 %v1384, %v1884
      %v1886 = vpop.f32.mrf.mxu0
      %v1887 = vpop.f32.mrf.mxu0
      %v1888 = vadd.f32 %v1384, %v1887
      %v1889 = vpop.f32.mrf.mxu0
      %1890 = vmatprep.mubr.bf16.mxu0 0
      %1891 = vmatmul.mubr.bf16.gmra.mxu0 %v1352
      %v1892 = vpop.f32.mrf.mxu0
      %v1893 = vadd.f32 %v1384, %v1892
      %v1894 = vpop.f32.mrf.mxu0
      %v1895 = vpop.f32.mrf.mxu0
      %v1896 = vadd.f32 %v1384, %v1895
      %v1897 = vpop.f32.mrf.mxu0
      %1898 = vmatprep.mubr.bf16.mxu0 0
      %1899 = vmatmul.mubr.bf16.gmra.mxu0 %v1353
      %v1900 = vpop.f32.mrf.mxu0
      %v1901 = vadd.f32 %v1384, %v1900
      %v1902 = vpop.f32.mrf.mxu0
      %v1903 = vpop.f32.mrf.mxu0
      %v1904 = vadd.f32 %v1384, %v1903
      %v1905 = vpop.f32.mrf.mxu0
      %1906 = vmatprep.mubr.bf16.mxu0 0
      %1907 = vmatmul.mubr.bf16.gmra.mxu0 %v1354
      %v1908 = vpop.f32.mrf.mxu0
      %v1909 = vadd.f32 %v1384, %v1908
      %v1910 = vpop.f32.mrf.mxu0
      %v1911 = vpop.f32.mrf.mxu0
      %v1912 = vadd.f32 %v1384, %v1911
      %v1913 = vpop.f32.mrf.mxu0
      %1914 = vmatprep.mubr.bf16.mxu0 0
      %1915 = vmatmul.mubr.bf16.gmra.mxu0 %v1355
      %v1916 = vpop.f32.mrf.mxu0
      %v1917 = vadd.f32 %v1384, %v1916
      %v1918 = vpop.f32.mrf.mxu0
      %v1919 = vpop.f32.mrf.mxu0
      %v1920 = vadd.f32 %v1384, %v1919
      %v1921 = vpop.f32.mrf.mxu0
      %1922 = vmatprep.mubr.bf16.mxu0 0
      %1923 = vmatmul.mubr.bf16.gmra.mxu0 %v1356
      %v1924 = vpop.f32.mrf.mxu0
      %v1925 = vadd.f32 %v1384, %v1924
      %v1926 = vpop.f32.mrf.mxu0
      %v1927 = vpop.f32.mrf.mxu0
      %v1928 = vadd.f32 %v1384, %v1927
      %v1929 = vpop.f32.mrf.mxu0
      %1930 = vmatprep.mubr.bf16.mxu0 0
      %1931 = vmatmul.mubr.bf16.gmra.mxu0 %v1357
      %v1932 = vpop.f32.mrf.mxu0
      %v1933 = vadd.f32 %v1384, %v1932
      %v1934 = vpop.f32.mrf.mxu0
      %v1935 = vpop.f32.mrf.mxu0
      %v1936 = vadd.f32 %v1384, %v1935
      %v1937 = vpop.f32.mrf.mxu0
      %1938 = vmatprep.mubr.bf16.mxu0 0
      %1939 = vmatmul.mubr.bf16.gmra.mxu0 %v1358
      %v1940 = vpop.f32.mrf.mxu0
      %v1941 = vadd.f32 %v1384, %v1940
      %v1942 = vpop.f32.mrf.mxu0
      %v1943 = vpop.f32.mrf.mxu0
      %v1944 = vadd.f32 %v1384, %v1943
      %v1945 = vpop.f32.mrf.mxu0
      %1946 = vmatprep.mubr.bf16.mxu0 0
      %1947 = vmatmul.mubr.bf16.gmra.mxu0 %v1359
      %v1948 = vpop.f32.mrf.mxu0
      %v1949 = vadd.f32 %v1384, %v1948
      %v1950 = vpop.f32.mrf.mxu0
      %v1951 = vpop.f32.mrf.mxu0
      %v1952 = vadd.f32 %v1384, %v1951
      %v1953 = vpop.f32.mrf.mxu0
      %1954 = vmatprep.mubr.bf16.mxu0 0
      %1955 = vmatmul.mubr.bf16.gmra.mxu0 %v1360
      %v1956 = vpop.f32.mrf.mxu0
      %v1957 = vadd.f32 %v1384, %v1956
      %v1958 = vpop.f32.mrf.mxu0
      %v1959 = vpop.f32.mrf.mxu0
      %v1960 = vadd.f32 %v1384, %v1959
      %v1961 = vpop.f32.mrf.mxu0
      %1962 = vmatprep.mubr.bf16.mxu0 0
      %1963 = vmatmul.mubr.bf16.gmra.mxu0 %v1361
      %v1964 = vpop.f32.mrf.mxu0
      %v1965 = vadd.f32 %v1384, %v1964
      %v1966 = vpop.f32.mrf.mxu0
      %v1967 = vpop.f32.mrf.mxu0
      %v1968 = vadd.f32 %v1384, %v1967
      %v1969 = vpop.f32.mrf.mxu0
      %1970 = vmatprep.mubr.bf16.mxu0 0
      %1971 = vmatmul.mubr.bf16.gmra.mxu0 %v1362
      %v1972 = vpop.f32.mrf.mxu0
      %v1973 = vadd.f32 %v1384, %v1972
      %v1974 = vpop.f32.mrf.mxu0
      %v1975 = vpop.f32.mrf.mxu0
      %v1976 = vadd.f32 %v1384, %v1975
      %v1977 = vpop.f32.mrf.mxu0
      %1978 = vdwg.mxu0
      %v1979 = vpack.c.bf16 %v1472, %v1469
      %v1980 = vpack.c.bf16 %v1480, %v1477
      %v1981 = vpack.c.bf16 %v1488, %v1485
      %v1982 = vpack.c.bf16 %v1496, %v1493
      %v1983 = vpack.c.bf16 %v1504, %v1501
      %v1984 = vpack.c.bf16 %v1512, %v1509
      %v1985 = vpack.c.bf16 %v1520, %v1517
      %v1986 = vpack.c.bf16 %v1528, %v1525
      %v1987 = vpack.c.bf16 %v1536, %v1533
      %v1988 = vpack.c.bf16 %v1544, %v1541
      %v1989 = vpack.c.bf16 %v1552, %v1549
      %v1990 = vpack.c.bf16 %v1560, %v1557
      %v1991 = vpack.c.bf16 %v1568, %v1565
      %v1992 = vpack.c.bf16 %v1576, %v1573
      %v1993 = vpack.c.bf16 %v1584, %v1581
      %v1994 = vpack.c.bf16 %v1592, %v1589
      %v1995 = vpack.c.bf16 %v1600, %v1597
      %v1996 = vpack.c.bf16 %v1608, %v1605
      %v1997 = vpack.c.bf16 %v1616, %v1613
      %v1998 = vpack.c.bf16 %v1624, %v1621
      %v1999 = vpack.c.bf16 %v1632, %v1629
      %v2000 = vpack.c.bf16 %v1640, %v1637
      %v2001 = vpack.c.bf16 %v1648, %v1645
      %v2002 = vpack.c.bf16 %v1656, %v1653
      %v2003 = vpack.c.bf16 %v1664, %v1661
      %v2004 = vpack.c.bf16 %v1672, %v1669
      %v2005 = vpack.c.bf16 %v1680, %v1677
      %v2006 = vpack.c.bf16 %v1688, %v1685
      %v2007 = vpack.c.bf16 %v1696, %v1693
      %v2008 = vpack.c.bf16 %v1704, %v1701
      %v2009 = vpack.c.bf16 %v1712, %v1709
      %v2010 = vpack.c.bf16 %v1720, %v1717
      %v2011 = vpack.c.bf16 %v1728, %v1725
      %v2012 = vpack.c.bf16 %v1736, %v1733
      %v2013 = vpack.c.bf16 %v1744, %v1741
      %v2014 = vpack.c.bf16 %v1752, %v1749
      %v2015 = vpack.c.bf16 %v1760, %v1757
      %v2016 = vpack.c.bf16 %v1768, %v1765
      %v2017 = vpack.c.bf16 %v1776, %v1773
      %v2018 = vpack.c.bf16 %v1784, %v1781
      %v2019 = vpack.c.bf16 %v1792, %v1789
      %v2020 = vpack.c.bf16 %v1800, %v1797
      %v2021 = vpack.c.bf16 %v1808, %v1805
      %v2022 = vpack.c.bf16 %v1816, %v1813
      %v2023 = vpack.c.bf16 %v1824, %v1821
      %v2024 = vpack.c.bf16 %v1832, %v1829
      %v2025 = vpack.c.bf16 %v1840, %v1837
      %v2026 = vpack.c.bf16 %v1848, %v1845
      %v2027 = vpack.c.bf16 %v1856, %v1853
      %v2028 = vpack.c.bf16 %v1864, %v1861
      %v2029 = vpack.c.bf16 %v1872, %v1869
      %v2030 = vpack.c.bf16 %v1880, %v1877
      %v2031 = vpack.c.bf16 %v1888, %v1885
      %v2032 = vpack.c.bf16 %v1896, %v1893
      %v2033 = vpack.c.bf16 %v1904, %v1901
      %v2034 = vpack.c.bf16 %v1912, %v1909
      %v2035 = vpack.c.bf16 %v1920, %v1917
      %v2036 = vpack.c.bf16 %v1928, %v1925
      %v2037 = vpack.c.bf16 %v1936, %v1933
      %v2038 = vpack.c.bf16 %v1944, %v1941
      %v2039 = vpack.c.bf16 %v1952, %v1949
      %v2040 = vpack.c.bf16 %v1960, %v1957
      %v2041 = vpack.c.bf16 %v1968, %v1965
      %v2042 = vpack.c.bf16 %v1976, %v1973
      %v2107 = vunpack.c.l.b16 %v1979
      %v2108 = vunpack.c.h.b16 %v1979
      %v2109 = vunpack.c.l.b16 %v1980
      %v2110 = vunpack.c.h.b16 %v1980
      %v2111 = vunpack.c.l.b16 %v1981
      %v2112 = vunpack.c.h.b16 %v1981
      %v2113 = vunpack.c.l.b16 %v1982
      %v2114 = vunpack.c.h.b16 %v1982
      %v2115 = vunpack.c.l.b16 %v1983
      %v2116 = vunpack.c.h.b16 %v1983
      %v2117 = vunpack.c.l.b16 %v1984
      %v2118 = vunpack.c.h.b16 %v1984
      %v2119 = vunpack.c.l.b16 %v1985
      %v2120 = vunpack.c.h.b16 %v1985
      %v2121 = vunpack.c.l.b16 %v1986
      %v2122 = vunpack.c.h.b16 %v1986
      %v2123 = vunpack.c.l.b16 %v1987
      %v2124 = vunpack.c.h.b16 %v1987
      %v2125 = vunpack.c.l.b16 %v1988
      %v2126 = vunpack.c.h.b16 %v1988
      %v2127 = vunpack.c.l.b16 %v1989
      %v2128 = vunpack.c.h.b16 %v1989
      %v2129 = vunpack.c.l.b16 %v1990
      %v2130 = vunpack.c.h.b16 %v1990
      %v2131 = vunpack.c.l.b16 %v1991
      %v2132 = vunpack.c.h.b16 %v1991
      %v2133 = vunpack.c.l.b16 %v1992
      %v2134 = vunpack.c.h.b16 %v1992
      %v2135 = vunpack.c.l.b16 %v1993
      %v2136 = vunpack.c.h.b16 %v1993
      %v2137 = vunpack.c.l.b16 %v1994
      %v2138 = vunpack.c.h.b16 %v1994
      %v2139 = vunpack.c.l.b16 %v1995
      %v2140 = vunpack.c.h.b16 %v1995
      %v2141 = vunpack.c.l.b16 %v1996
      %v2142 = vunpack.c.h.b16 %v1996
      %v2143 = vunpack.c.l.b16 %v1997
      %v2144 = vunpack.c.h.b16 %v1997
      %v2145 = vunpack.c.l.b16 %v1998
      %v2146 = vunpack.c.h.b16 %v1998
      %v2147 = vunpack.c.l.b16 %v1999
      %v2148 = vunpack.c.h.b16 %v1999
      %v2149 = vunpack.c.l.b16 %v2000
      %v2150 = vunpack.c.h.b16 %v2000
      %v2151 = vunpack.c.l.b16 %v2001
      %v2152 = vunpack.c.h.b16 %v2001
      %v2153 = vunpack.c.l.b16 %v2002
      %v2154 = vunpack.c.h.b16 %v2002
      %v2155 = vunpack.c.l.b16 %v2003
      %v2156 = vunpack.c.h.b16 %v2003
      %v2157 = vunpack.c.l.b16 %v2004
      %v2158 = vunpack.c.h.b16 %v2004
      %v2159 = vunpack.c.l.b16 %v2005
      %v2160 = vunpack.c.h.b16 %v2005
      %v2161 = vunpack.c.l.b16 %v2006
      %v2162 = vunpack.c.h.b16 %v2006
      %v2163 = vunpack.c.l.b16 %v2007
      %v2164 = vunpack.c.h.b16 %v2007
      %v2165 = vunpack.c.l.b16 %v2008
      %v2166 = vunpack.c.h.b16 %v2008
      %v2167 = vunpack.c.l.b16 %v2009
      %v2168 = vunpack.c.h.b16 %v2009
      %v2169 = vunpack.c.l.b16 %v2010
      %v2170 = vunpack.c.h.b16 %v2010
      %v2171 = vunpack.c.l.b16 %v2011
      %v2172 = vunpack.c.h.b16 %v2011
      %v2173 = vunpack.c.l.b16 %v2012
      %v2174 = vunpack.c.h.b16 %v2012
      %v2175 = vunpack.c.l.b16 %v2013
      %v2176 = vunpack.c.h.b16 %v2013
      %v2177 = vunpack.c.l.b16 %v2014
      %v2178 = vunpack.c.h.b16 %v2014
      %v2179 = vunpack.c.l.b16 %v2015
      %v2180 = vunpack.c.h.b16 %v2015
      %v2181 = vunpack.c.l.b16 %v2016
      %v2182 = vunpack.c.h.b16 %v2016
      %v2183 = vunpack.c.l.b16 %v2017
      %v2184 = vunpack.c.h.b16 %v2017
      %v2185 = vunpack.c.l.b16 %v2018
      %v2186 = vunpack.c.h.b16 %v2018
      %v2187 = vunpack.c.l.b16 %v2019
      %v2188 = vunpack.c.h.b16 %v2019
      %v2189 = vunpack.c.l.b16 %v2020
      %v2190 = vunpack.c.h.b16 %v2020
      %v2191 = vunpack.c.l.b16 %v2021
      %v2192 = vunpack.c.h.b16 %v2021
      %v2193 = vunpack.c.l.b16 %v2022
      %v2194 = vunpack.c.h.b16 %v2022
      %v2195 = vunpack.c.l.b16 %v2023
      %v2196 = vunpack.c.h.b16 %v2023
      %v2197 = vunpack.c.l.b16 %v2024
      %v2198 = vunpack.c.h.b16 %v2024
      %v2199 = vunpack.c.l.b16 %v2025
      %v2200 = vunpack.c.h.b16 %v2025
      %v2201 = vunpack.c.l.b16 %v2026
      %v2202 = vunpack.c.h.b16 %v2026
      %v2203 = vunpack.c.l.b16 %v2027
      %v2204 = vunpack.c.h.b16 %v2027
      %v2205 = vunpack.c.l.b16 %v2028
      %v2206 = vunpack.c.h.b16 %v2028
      %v2207 = vunpack.c.l.b16 %v2029
      %v2208 = vunpack.c.h.b16 %v2029
      %v2209 = vunpack.c.l.b16 %v2030
      %v2210 = vunpack.c.h.b16 %v2030
      %v2211 = vunpack.c.l.b16 %v2031
      %v2212 = vunpack.c.h.b16 %v2031
      %v2213 = vunpack.c.l.b16 %v2032
      %v2214 = vunpack.c.h.b16 %v2032
      %v2215 = vunpack.c.l.b16 %v2033
      %v2216 = vunpack.c.h.b16 %v2033
      %v2217 = vunpack.c.l.b16 %v2034
      %v2218 = vunpack.c.h.b16 %v2034
      %v2219 = vunpack.c.l.b16 %v2035
      %v2220 = vunpack.c.h.b16 %v2035
      %v2221 = vunpack.c.l.b16 %v2036
      %v2222 = vunpack.c.h.b16 %v2036
      %v2223 = vunpack.c.l.b16 %v2037
      %v2224 = vunpack.c.h.b16 %v2037
      %v2225 = vunpack.c.l.b16 %v2038
      %v2226 = vunpack.c.h.b16 %v2038
      %v2227 = vunpack.c.l.b16 %v2039
      %v2228 = vunpack.c.h.b16 %v2039
      %v2229 = vunpack.c.l.b16 %v2040
      %v2230 = vunpack.c.h.b16 %v2040
      %v2231 = vunpack.c.l.b16 %v2041
      %v2232 = vunpack.c.h.b16 %v2041
      %v2233 = vunpack.c.l.b16 %v2042
      %v2234 = vunpack.c.h.b16 %v2042
      %v2235 = vpack.c.b16 %v2107, %v2107
      %v2236 = vpack.c.b16 %v2108, %v2108
      %v2237 = vpack.c.b16 %v2109, %v2109
      %v2238 = vpack.c.b16 %v2110, %v2110
      %v2239 = vpack.c.b16 %v2111, %v2111
      %v2240 = vpack.c.b16 %v2112, %v2112
      %v2241 = vpack.c.b16 %v2113, %v2113
      %v2242 = vpack.c.b16 %v2114, %v2114
      %v2243 = vpack.c.b16 %v2115, %v2115
      %v2244 = vpack.c.b16 %v2116, %v2116
      %v2245 = vpack.c.b16 %v2117, %v2117
      %v2246 = vpack.c.b16 %v2118, %v2118
      %v2247 = vpack.c.b16 %v2119, %v2119
      %v2248 = vpack.c.b16 %v2120, %v2120
      %v2249 = vpack.c.b16 %v2121, %v2121
      %v2250 = vpack.c.b16 %v2122, %v2122
      %v2251 = vpack.c.b16 %v2123, %v2123
      %v2252 = vpack.c.b16 %v2124, %v2124
      %v2253 = vpack.c.b16 %v2125, %v2125
      %v2254 = vpack.c.b16 %v2126, %v2126
      %v2255 = vpack.c.b16 %v2127, %v2127
      %v2256 = vpack.c.b16 %v2128, %v2128
      %v2257 = vpack.c.b16 %v2129, %v2129
      %v2258 = vpack.c.b16 %v2130, %v2130
      %v2259 = vpack.c.b16 %v2131, %v2131
      %v2260 = vpack.c.b16 %v2132, %v2132
      %v2261 = vpack.c.b16 %v2133, %v2133
      %v2262 = vpack.c.b16 %v2134, %v2134
      %v2263 = vpack.c.b16 %v2135, %v2135
      %v2264 = vpack.c.b16 %v2136, %v2136
      %v2265 = vpack.c.b16 %v2137, %v2137
      %v2266 = vpack.c.b16 %v2138, %v2138
      %v2267 = vpack.c.b16 %v2139, %v2139
      %v2268 = vpack.c.b16 %v2140, %v2140
      %v2269 = vpack.c.b16 %v2141, %v2141
      %v2270 = vpack.c.b16 %v2142, %v2142
      %v2271 = vpack.c.b16 %v2143, %v2143
      %v2272 = vpack.c.b16 %v2144, %v2144
      %v2273 = vpack.c.b16 %v2145, %v2145
      %v2274 = vpack.c.b16 %v2146, %v2146
      %v2275 = vpack.c.b16 %v2147, %v2147
      %v2276 = vpack.c.b16 %v2148, %v2148
      %v2277 = vpack.c.b16 %v2149, %v2149
      %v2278 = vpack.c.b16 %v2150, %v2150
      %v2279 = vpack.c.b16 %v2151, %v2151
      %v2280 = vpack.c.b16 %v2152, %v2152
      %v2281 = vpack.c.b16 %v2153, %v2153
      %v2282 = vpack.c.b16 %v2154, %v2154
      %v2283 = vpack.c.b16 %v2155, %v2155
      %v2284 = vpack.c.b16 %v2156, %v2156
      %v2285 = vpack.c.b16 %v2157, %v2157
      %v2286 = vpack.c.b16 %v2158, %v2158
      %v2287 = vpack.c.b16 %v2159, %v2159
      %v2288 = vpack.c.b16 %v2160, %v2160
      %v2289 = vpack.c.b16 %v2161, %v2161
      %v2290 = vpack.c.b16 %v2162, %v2162
      %v2291 = vpack.c.b16 %v2163, %v2163
      %v2292 = vpack.c.b16 %v2164, %v2164
      %v2293 = vpack.c.b16 %v2165, %v2165
      %v2294 = vpack.c.b16 %v2166, %v2166
      %v2295 = vpack.c.b16 %v2167, %v2167
      %v2296 = vpack.c.b16 %v2168, %v2168
      %v2297 = vpack.c.b16 %v2169, %v2169
      %v2298 = vpack.c.b16 %v2170, %v2170
      %v2299 = vpack.c.b16 %v2171, %v2171
      %v2300 = vpack.c.b16 %v2172, %v2172
      %v2301 = vpack.c.b16 %v2173, %v2173
      %v2302 = vpack.c.b16 %v2174, %v2174
      %v2303 = vpack.c.b16 %v2175, %v2175
      %v2304 = vpack.c.b16 %v2176, %v2176
      %v2305 = vpack.c.b16 %v2177, %v2177
      %v2306 = vpack.c.b16 %v2178, %v2178
      %v2307 = vpack.c.b16 %v2179, %v2179
      %v2308 = vpack.c.b16 %v2180, %v2180
      %v2309 = vpack.c.b16 %v2181, %v2181
      %v2310 = vpack.c.b16 %v2182, %v2182
      %v2311 = vpack.c.b16 %v2183, %v2183
      %v2312 = vpack.c.b16 %v2184, %v2184
      %v2313 = vpack.c.b16 %v2185, %v2185
      %v2314 = vpack.c.b16 %v2186, %v2186
      %v2315 = vpack.c.b16 %v2187, %v2187
      %v2316 = vpack.c.b16 %v2188, %v2188
      %v2317 = vpack.c.b16 %v2189, %v2189
      %v2318 = vpack.c.b16 %v2190, %v2190
      %v2319 = vpack.c.b16 %v2191, %v2191
      %v2320 = vpack.c.b16 %v2192, %v2192
      %v2321 = vpack.c.b16 %v2193, %v2193
      %v2322 = vpack.c.b16 %v2194, %v2194
      %v2323 = vpack.c.b16 %v2195, %v2195
      %v2324 = vpack.c.b16 %v2196, %v2196
      %v2325 = vpack.c.b16 %v2197, %v2197
      %v2326 = vpack.c.b16 %v2198, %v2198
      %v2327 = vpack.c.b16 %v2199, %v2199
      %v2328 = vpack.c.b16 %v2200, %v2200
      %v2329 = vpack.c.b16 %v2201, %v2201
      %v2330 = vpack.c.b16 %v2202, %v2202
      %v2331 = vpack.c.b16 %v2203, %v2203
      %v2332 = vpack.c.b16 %v2204, %v2204
      %v2333 = vpack.c.b16 %v2205, %v2205
      %v2334 = vpack.c.b16 %v2206, %v2206
      %v2335 = vpack.c.b16 %v2207, %v2207
      %v2336 = vpack.c.b16 %v2208, %v2208
      %v2337 = vpack.c.b16 %v2209, %v2209
      %v2338 = vpack.c.b16 %v2210, %v2210
      %v2339 = vpack.c.b16 %v2211, %v2211
      %v2340 = vpack.c.b16 %v2212, %v2212
      %v2341 = vpack.c.b16 %v2213, %v2213
      %v2342 = vpack.c.b16 %v2214, %v2214
      %v2343 = vpack.c.b16 %v2215, %v2215
      %v2344 = vpack.c.b16 %v2216, %v2216
      %v2345 = vpack.c.b16 %v2217, %v2217
      %v2346 = vpack.c.b16 %v2218, %v2218
      %v2347 = vpack.c.b16 %v2219, %v2219
      %v2348 = vpack.c.b16 %v2220, %v2220
      %v2349 = vpack.c.b16 %v2221, %v2221
      %v2350 = vpack.c.b16 %v2222, %v2222
      %v2351 = vpack.c.b16 %v2223, %v2223
      %v2352 = vpack.c.b16 %v2224, %v2224
      %v2353 = vpack.c.b16 %v2225, %v2225
      %v2354 = vpack.c.b16 %v2226, %v2226
      %v2355 = vpack.c.b16 %v2227, %v2227
      %v2356 = vpack.c.b16 %v2228, %v2228
      %v2357 = vpack.c.b16 %v2229, %v2229
      %v2358 = vpack.c.b16 %v2230, %v2230
      %v2359 = vpack.c.b16 %v2231, %v2231
      %v2360 = vpack.c.b16 %v2232, %v2232
      %v2361 = vpack.c.b16 %v2233, %v2233
      %v2362 = vpack.c.b16 %v2234, %v2234
      %2491 = vst [vmem:[%s226] sm:$0xf] %v2235
      %2492 = vst [vmem:[%s226 + $0x4] sm:$0xf] %v2236
      %2493 = vst [vmem:[%s226 + $0x8] sm:$0xf] %v2237
      %2494 = vst [vmem:[%s226 + $0xc] sm:$0xf] %v2238
      %2495 = vst [vmem:[%s226 + $0x10] sm:$0xf] %v2239
      %2496 = vst [vmem:[%s226 + $0x14] sm:$0xf] %v2240
      %2497 = vst [vmem:[%s226 + $0x18] sm:$0xf] %v2241
      %2498 = vst [vmem:[%s226 + $0x1c] sm:$0xf] %v2242
      %2499 = vst [vmem:[%s226 + $0x20] sm:$0xf] %v2243
      %2500 = vst [vmem:[%s226 + $0x24] sm:$0xf] %v2244
      %2501 = vst [vmem:[%s226 + $0x28] sm:$0xf] %v2245
      %2502 = vst [vmem:[%s226 + $0x2c] sm:$0xf] %v2246
      %2503 = vst [vmem:[%s226 + $0x30] sm:$0xf] %v2247
      %2504 = vst [vmem:[%s226 + $0x34] sm:$0xf] %v2248
      %2505 = vst [vmem:[%s226 + $0x38] sm:$0xf] %v2249
      %2506 = vst [vmem:[%s226 + $0x3c] sm:$0xf] %v2250
      %2507 = vst [vmem:[%s226 + $0x40] sm:$0xf] %v2251
      %2508 = vst [vmem:[%s226 + $0x44] sm:$0xf] %v2252
      %2509 = vst [vmem:[%s226 + $0x48] sm:$0xf] %v2253
      %2510 = vst [vmem:[%s226 + $0x4c] sm:$0xf] %v2254
      %2511 = vst [vmem:[%s226 + $0x50] sm:$0xf] %v2255
      %2512 = vst [vmem:[%s226 + $0x54] sm:$0xf] %v2256
      %2513 = vst [vmem:[%s226 + $0x58] sm:$0xf] %v2257
      %2514 = vst [vmem:[%s226 + $0x5c] sm:$0xf] %v2258
      %2515 = vst [vmem:[%s226 + $0x60] sm:$0xf] %v2259
      %2516 = vst [vmem:[%s226 + $0x64] sm:$0xf] %v2260
      %2517 = vst [vmem:[%s226 + $0x68] sm:$0xf] %v2261
      %2518 = vst [vmem:[%s226 + $0x6c] sm:$0xf] %v2262
      %2519 = vst [vmem:[%s226 + $0x70] sm:$0xf] %v2263
      %2520 = vst [vmem:[%s226 + $0x74] sm:$0xf] %v2264
      %2521 = vst [vmem:[%s226 + $0x78] sm:$0xf] %v2265
      %2522 = vst [vmem:[%s226 + $0x7c] sm:$0xf] %v2266
      %2523 = vst [vmem:[%s226 + $0x80] sm:$0xf] %v2267
      %2524 = vst [vmem:[%s226 + $0x84] sm:$0xf] %v2268
      %2525 = vst [vmem:[%s226 + $0x88] sm:$0xf] %v2269
      %2526 = vst [vmem:[%s226 + $0x8c] sm:$0xf] %v2270
      %2527 = vst [vmem:[%s226 + $0x90] sm:$0xf] %v2271
      %2528 = vst [vmem:[%s226 + $0x94] sm:$0xf] %v2272
      %2529 = vst [vmem:[%s226 + $0x98] sm:$0xf] %v2273
      %2530 = vst [vmem:[%s226 + $0x9c] sm:$0xf] %v2274
      %2531 = vst [vmem:[%s226 + $0xa0] sm:$0xf] %v2275
      %2532 = vst [vmem:[%s226 + $0xa4] sm:$0xf] %v2276
      %2533 = vst [vmem:[%s226 + $0xa8] sm:$0xf] %v2277
      %2534 = vst [vmem:[%s226 + $0xac] sm:$0xf] %v2278
      %2535 = vst [vmem:[%s226 + $0xb0] sm:$0xf] %v2279
      %2536 = vst [vmem:[%s226 + $0xb4] sm:$0xf] %v2280
      %2537 = vst [vmem:[%s226 + $0xb8] sm:$0xf] %v2281
      %2538 = vst [vmem:[%s226 + $0xbc] sm:$0xf] %v2282
      %2539 = vst [vmem:[%s226 + $0xc0] sm:$0xf] %v2283
      %2540 = vst [vmem:[%s226 + $0xc4] sm:$0xf] %v2284
      %2541 = vst [vmem:[%s226 + $0xc8] sm:$0xf] %v2285
      %2542 = vst [vmem:[%s226 + $0xcc] sm:$0xf] %v2286
      %2543 = vst [vmem:[%s226 + $0xd0] sm:$0xf] %v2287
      %2544 = vst [vmem:[%s226 + $0xd4] sm:$0xf] %v2288
      %2545 = vst [vmem:[%s226 + $0xd8] sm:$0xf] %v2289
      %2546 = vst [vmem:[%s226 + $0xdc] sm:$0xf] %v2290
      %2547 = vst [vmem:[%s226 + $0xe0] sm:$0xf] %v2291
      %2548 = vst [vmem:[%s226 + $0xe4] sm:$0xf] %v2292
      %2549 = vst [vmem:[%s226 + $0xe8] sm:$0xf] %v2293
      %2550 = vst [vmem:[%s226 + $0xec] sm:$0xf] %v2294
      %2551 = vst [vmem:[%s226 + $0xf0] sm:$0xf] %v2295
      %2552 = vst [vmem:[%s226 + $0xf4] sm:$0xf] %v2296
      %2553 = vst [vmem:[%s226 + $0xf8] sm:$0xf] %v2297
      %2554 = vst [vmem:[%s226 + $0xfc] sm:$0xf] %v2298
      %2555 = vst [vmem:[%s226 + $0x100] sm:$0xf] %v2299
      %2556 = vst [vmem:[%s226 + $0x104] sm:$0xf] %v2300
      %2557 = vst [vmem:[%s226 + $0x108] sm:$0xf] %v2301
      %2558 = vst [vmem:[%s226 + $0x10c] sm:$0xf] %v2302
      %2559 = vst [vmem:[%s226 + $0x110] sm:$0xf] %v2303
      %2560 = vst [vmem:[%s226 + $0x114] sm:$0xf] %v2304
      %2561 = vst [vmem:[%s226 + $0x118] sm:$0xf] %v2305
      %2562 = vst [vmem:[%s226 + $0x11c] sm:$0xf] %v2306
      %2563 = vst [vmem:[%s226 + $0x120] sm:$0xf] %v2307
      %2564 = vst [vmem:[%s226 + $0x124] sm:$0xf] %v2308
      %2565 = vst [vmem:[%s226 + $0x128] sm:$0xf] %v2309
      %2566 = vst [vmem:[%s226 + $0x12c] sm:$0xf] %v2310
      %2567 = vst [vmem:[%s226 + $0x130] sm:$0xf] %v2311
      %2568 = vst [vmem:[%s226 + $0x134] sm:$0xf] %v2312
      %2569 = vst [vmem:[%s226 + $0x138] sm:$0xf] %v2313
      %2570 = vst [vmem:[%s226 + $0x13c] sm:$0xf] %v2314
      %2571 = vst [vmem:[%s226 + $0x140] sm:$0xf] %v2315
      %2572 = vst [vmem:[%s226 + $0x144] sm:$0xf] %v2316
      %2573 = vst [vmem:[%s226 + $0x148] sm:$0xf] %v2317
      %2574 = vst [vmem:[%s226 + $0x14c] sm:$0xf] %v2318
      %2575 = vst [vmem:[%s226 + $0x150] sm:$0xf] %v2319
      %2576 = vst [vmem:[%s226 + $0x154] sm:$0xf] %v2320
      %2577 = vst [vmem:[%s226 + $0x158] sm:$0xf] %v2321
      %2578 = vst [vmem:[%s226 + $0x15c] sm:$0xf] %v2322
      %2579 = vst [vmem:[%s226 + $0x160] sm:$0xf] %v2323
      %2580 = vst [vmem:[%s226 + $0x164] sm:$0xf] %v2324
      %2581 = vst [vmem:[%s226 + $0x168] sm:$0xf] %v2325
      %2582 = vst [vmem:[%s226 + $0x16c] sm:$0xf] %v2326
      %2583 = vst [vmem:[%s226 + $0x170] sm:$0xf] %v2327
      %2584 = vst [vmem:[%s226 + $0x174] sm:$0xf] %v2328
      %2585 = vst [vmem:[%s226 + $0x178] sm:$0xf] %v2329
      %2586 = vst [vmem:[%s226 + $0x17c] sm:$0xf] %v2330
      %2587 = vst [vmem:[%s226 + $0x180] sm:$0xf] %v2331
      %2588 = vst [vmem:[%s226 + $0x184] sm:$0xf] %v2332
      %2589 = vst [vmem:[%s226 + $0x188] sm:$0xf] %v2333
      %2590 = vst [vmem:[%s226 + $0x18c] sm:$0xf] %v2334
      %2591 = vst [vmem:[%s226 + $0x190] sm:$0xf] %v2335
      %2592 = vst [vmem:[%s226 + $0x194] sm:$0xf] %v2336
      %2593 = vst [vmem:[%s226 + $0x198] sm:$0xf] %v2337
      %2594 = vst [vmem:[%s226 + $0x19c] sm:$0xf] %v2338
      %2595 = vst [vmem:[%s226 + $0x1a0] sm:$0xf] %v2339
      %2596 = vst [vmem:[%s226 + $0x1a4] sm:$0xf] %v2340
      %2597 = vst [vmem:[%s226 + $0x1a8] sm:$0xf] %v2341
      %2598 = vst [vmem:[%s226 + $0x1ac] sm:$0xf] %v2342
      %2599 = vst [vmem:[%s226 + $0x1b0] sm:$0xf] %v2343
      %2600 = vst [vmem:[%s226 + $0x1b4] sm:$0xf] %v2344
      %2601 = vst [vmem:[%s226 + $0x1b8] sm:$0xf] %v2345
      %2602 = vst [vmem:[%s226 + $0x1bc] sm:$0xf] %v2346
      %2603 = vst [vmem:[%s226 + $0x1c0] sm:$0xf] %v2347
      %2604 = vst [vmem:[%s226 + $0x1c4] sm:$0xf] %v2348
      %2605 = vst [vmem:[%s226 + $0x1c8] sm:$0xf] %v2349
      %2606 = vst [vmem:[%s226 + $0x1cc] sm:$0xf] %v2350
      %2607 = vst [vmem:[%s226 + $0x1d0] sm:$0xf] %v2351
      %2608 = vst [vmem:[%s226 + $0x1d4] sm:$0xf] %v2352
      %2609 = vst [vmem:[%s226 + $0x1d8] sm:$0xf] %v2353
      %2610 = vst [vmem:[%s226 + $0x1dc] sm:$0xf] %v2354
      %2611 = vst [vmem:[%s226 + $0x1e0] sm:$0xf] %v2355
      %2612 = vst [vmem:[%s226 + $0x1e4] sm:$0xf] %v2356
      %2613 = vst [vmem:[%s226 + $0x1e8] sm:$0xf] %v2357
      %2614 = vst [vmem:[%s226 + $0x1ec] sm:$0xf] %v2358
      %2615 = vst [vmem:[%s226 + $0x1f0] sm:$0xf] %v2359
      %2616 = vst [vmem:[%s226 + $0x1f4] sm:$0xf] %v2360
      %2617 = vst [vmem:[%s226 + $0x1f8] sm:$0xf] %v2361
      %2618 = vst [vmem:[%s226 + $0x1fc] sm:$0xf] %v2362
      %s2619 = smul.u32 128, %s16
      %p2620 = scmp.lt.s32.totalorder %s2619, 255
      %s2621 = scalar_select %p2620, %s2619, 255
      %s2622 = smul.addr %s2621, 4
      %s2623 = scalar_lea.vmem %s5, %s2622
      // Predicated region
      $region41: #{triposf_vae_forward.2} parent=39 // pred_check
        %p2624 = pneg %p144
      $region42: #{triposf_vae_forward.2} parent=39 // pred_check_branch
        %2626 = sbr.rel (%p2624) target = $region44
      $region43: #{triposf_vae_forward.2} parent=39 // pred_region
        %s2627 = smul.u32 128, %s16
      $region44: #{triposf_vae_forward.2} parent=39 // pred_fallthru
        _
    $region40: #{triposf_vae_forward.2} parent=5 // pred_fallthru
      _
    %p2628 = scmp.le.s32.totalorder 2, %s11
    // Predicated region
    $region45: #{triposf_vae_forward.2} parent=5 // pred_check
      %p2629 = pneg %p2628
    $region46: #{triposf_vae_forward.2} parent=5 // pred_check_branch
      %2631 = sbr.rel (%p2629) target = $region48
    $region47: #{triposf_vae_forward.2} parent=5 // pred_region
      %s2632 = ssub.s32 %s11, 2
      // Predicated region
      $region49: #{triposf_vae_forward.2} parent=47 // pred_check
        %p2633 = pneg %p150
      $region50: #{triposf_vae_forward.2} parent=47 // pred_check_branch
        %2635 = sbr.rel (%p2633) target = $region52
      $region51: #{triposf_vae_forward.2} parent=47 // pred_region
        %s2636 = smul.u32 128, %s17
        %p2637 = scmp.lt.s32.totalorder %s2636, 255
        %s2638 = scalar_select %p2637, %s2636, 255
        %s2639 = smul.addr %s2638, 4
        %s2640 = scalar_lea.vmem %s5, %s2639
      $region52: #{triposf_vae_forward.2} parent=47 // pred_fallthru
        _
    $region48: #{triposf_vae_forward.2} parent=5 // pred_fallthru
      _
  $region6: #{triposf_vae_forward.2} parent=0 // loop_footer
    %s15 = sadd.s32 1, %s11
  $region7: #{triposf_vae_forward.2} parent=0 // loop_footer_branch
    %10 = sbr.rel target = $region3
  $region8: #{triposf_vae_forward.2} parent=0 // loop_exit
    _

// kernel: triposf_vae_forward.3
$region0: #{triposf_vae_forward.3}
  #allocation0 [shape = 'u32[]', space=smem, size = 0x4, offset = 0x4, fixed_abs, tag = 'smem constant byte address 0x4 - core index']
  #allocation1 [shape = 'u32[144,128]{1,0:T(1,128)}', space=vmem, size = 0x12000, scoped, tag = 'internal scratch']
  #allocation2 [shape = 'f32[256,1]{1,0:T(8,128)}', space=vmem, size = 0x20000, scoped, tag = 'scratch operand']
  %s0 = inlined_call_operand.vmem [shape: s32[1,2048], index: 0, kind: input, shape index: {}]
  %s1 = inlined_call_operand.vmem [shape: s32[512,1], index: 1, kind: input, shape index: {}]
  %s2 = inlined_call_operand.vmem [shape: bf16[2048,128], index: 2, kind: input, shape index: {}]
  %s3 = inlined_call_operand.vmem [shape: bf16[128,128], index: 3, kind: input, shape index: {}]
  %s4 = inlined_call_operand.vmem [shape: f32[1,128], index: 4, kind: input, shape index: {}]
  %s5 = inlined_call_operand.vmem [shape: bf16[128,64], index: 5, kind: input, shape index: {}]
  %s6 = inlined_call_operand.vmem [shape: f32[1,64], index: 6, kind: input, shape index: {}]
  %s7 = inlined_call_operand.vmem [shape: bf16[64,128], index: 7, kind: input, shape index: {}]
  %s8 = inlined_call_operand.vmem [shape: f32[1,128], index: 8, kind: input, shape index: {}]
  %s9 = inlined_call_operand.vmem [shape: bf16[128,128], index: 9, kind: input, shape index: {}]
  %s10 = inlined_call_operand.vmem [shape: f32[1,128], index: 10, kind: input, shape index: {}]
  %s11 = inlined_call_operand.vmem [shape: f32[512,128], index: 11, kind: output, shape index: {}]
  %s12 = sld [smem:[#allocation0]]
  $region85: #{triposf_vae_forward.3} parent=0
    _
  %s14 = ssub.s32 1, %s12
  %s15 = scalar_select 0, %s14, %s12
  loop: start=0, step=1, limit=6
  $region2: #{triposf_vae_forward.3} parent=0 // loop_pre_header
    _
  $region3: #{triposf_vae_forward.3} parent=0 // loop_header
    %s17 = sphi 0, %s21
    %p18 = scmp.ge.s32.totalorder %s17, 6
    %s24 = sphi 0, %s36
    %s25 = sphi 0, %s32
    %s26 = sphi 0, %s24
    %s27 = sphi 0, %s25
    %s28 = sphi 0, %s26
    %s29 = sphi 0, %s27
    %s39 = sphi 0, %s41
    %s42 = sphi 0, %s39
    %s43 = sphi 0, %s42
    %s59 = sphi 0, %s43
    %s65 = sphi 0, %s67
    %s68 = sphi 0, %s65
    %s69 = sphi 0, %s68
    %s85 = sphi 0, %s69
    %s91 = sphi 0, %s93
    %s94 = sphi 0, %s91
    %s95 = sphi 0, %s94
    %s111 = sphi 0, %s95
    %s115 = sphi 0, %s115
    %s117 = sphi 0, %s115
    %s118 = sphi 0, %s117
    %s132 = sphi 0, %s118
    %s136 = sphi 0, %s136
    %s138 = sphi 0, %s136
    %s139 = sphi 0, %s138
    %s153 = sphi 0, %s139
    %s157 = sphi 0, %s157
    %s159 = sphi 0, %s157
    %s160 = sphi 0, %s159
    %s174 = sphi 0, %s160
    %s178 = sphi 0, %s178
    %s180 = sphi 0, %s178
    %s181 = sphi 0, %s180
    %s195 = sphi 0, %s181
    %s199 = sphi 0, %s199
    %s201 = sphi 0, %s199
    %s202 = sphi 0, %s201
    %s216 = sphi 0, %s202
    %s220 = sphi 0, %s220
    %s222 = sphi 0, %s220
    %s223 = sphi 0, %s222
    %s237 = sphi 0, %s223
    %s241 = sphi 0, %s241
    %s243 = sphi 0, %s241
    %s244 = sphi 0, %s243
    %s258 = sphi 0, %s244
    %s262 = sphi 0, %s262
    %s264 = sphi 0, %s262
    %s265 = sphi 0, %s264
    %s279 = sphi 0, %s265
    %s285 = sphi 0, %s287
    %s288 = sphi 0, %s285
    %s289 = sphi 0, %s288
    %s305 = sphi 0, %s289
  $region4: #{triposf_vae_forward.3} parent=0 // loop_header_branch
    %20 = sbr.rel (%p18) target = $region8
  $region5: #{triposf_vae_forward.3} parent=0 // loop_body
    %s22 = ssub.s32 %s17, 1
    %s23 = ssub.s32 %s17, 2
    %s30 = sadd.s32 1, %s25
    %p31 = scmp.ge.s32.totalorder %s30, 2
    %s32 = scalar_select %p31, 0, %s30
    %s33 = sadd.s32 1, %s24
    %s34 = scalar_select %p31, %s33, %s24
    %p35 = scmp.ge.s32.totalorder %s34, 2
    %s36 = scalar_select %p35, 0, %s34
    %s37 = ssub.s32 %s25, %s32
    %p38 = scmp.eq.s32.totalorder %s37, 0
    %s40 = sadd.s32 %s39, 1
    %s41 = scalar_select %p38, %s39, %s40
    %p44 = pneg %p38
    %p45 = scmp.eq.s32.totalorder %s17, 3
    %p46 = por %p44, %p45
    %p47 = scmp.ne.s32.totalorder %s39, %s42
    %p48 = scmp.eq.s32.totalorder %s17, 0
    %p49 = por %p47, %p48
    %p50 = scmp.ne.s32.totalorder %s39, %s42
    %p51 = scmp.eq.s32.totalorder %s22, 3
    %p52 = por %p50, %p51
    %p53 = scmp.ne.s32.totalorder %s42, %s43
    %p54 = scmp.eq.s32.totalorder %s22, 0
    %p55 = por %p53, %p54
    %p56 = scmp.ne.s32.totalorder %s42, %s43
    %p57 = scmp.eq.s32.totalorder %s23, 3
    %p58 = por %p56, %p57
    %p60 = scmp.ne.s32.totalorder %s43, %s59
    %p61 = scmp.eq.s32.totalorder %s23, 0
    %p62 = por %p60, %p61
    %s63 = ssub.s32 %s24, %s36
    %p64 = scmp.eq.s32.totalorder %s63, 0
    %s66 = sadd.s32 %s65, 1
    %s67 = scalar_select %p64, %s65, %s66
    %p70 = pneg %p64
    %p71 = scmp.eq.s32.totalorder %s17, 3
    %p72 = por %p70, %p71
    %p73 = scmp.ne.s32.totalorder %s65, %s68
    %p74 = scmp.eq.s32.totalorder %s17, 0
    %p75 = por %p73, %p74
    %p76 = scmp.ne.s32.totalorder %s65, %s68
    %p77 = scmp.eq.s32.totalorder %s22, 3
    %p78 = por %p76, %p77
    %p79 = scmp.ne.s32.totalorder %s68, %s69
    %p80 = scmp.eq.s32.totalorder %s22, 0
    %p81 = por %p79, %p80
    %p82 = scmp.ne.s32.totalorder %s68, %s69
    %p83 = scmp.eq.s32.totalorder %s23, 3
    %p84 = por %p82, %p83
    %p86 = scmp.ne.s32.totalorder %s69, %s85
    %p87 = scmp.eq.s32.totalorder %s23, 0
    %p88 = por %p86, %p87
    %s89 = ssub.s32 %s25, %s32
    %p90 = scmp.eq.s32.totalorder %s89, 0
    %s92 = sadd.s32 %s91, 1
    %s93 = scalar_select %p90, %s91, %s92
    %p96 = pneg %p90
    %p97 = scmp.eq.s32.totalorder %s17, 3
    %p98 = por %p96, %p97
    %p99 = scmp.ne.s32.totalorder %s91, %s94
    %p100 = scmp.eq.s32.totalorder %s17, 0
    %p101 = por %p99, %p100
    %p102 = scmp.ne.s32.totalorder %s91, %s94
    %p103 = scmp.eq.s32.totalorder %s22, 3
    %p104 = por %p102, %p103
    %p105 = scmp.ne.s32.totalorder %s94, %s95
    %p106 = scmp.eq.s32.totalorder %s22, 0
    %p107 = por %p105, %p106
    %p108 = scmp.ne.s32.totalorder %s94, %s95
    %p109 = scmp.eq.s32.totalorder %s23, 3
    %p110 = por %p108, %p109
    %p112 = scmp.ne.s32.totalorder %s95, %s111
    %p113 = scmp.eq.s32.totalorder %s23, 0
    %p114 = por %p112, %p113
    %s116 = sadd.s32 %s115, 1
    %p119 = scmp.eq.s32.totalorder %s17, 3
    %p120 = scmp.ne.s32.totalorder %s115, %s117
    %p121 = scmp.eq.s32.totalorder %s17, 0
    %p122 = por %p120, %p121
    %p123 = scmp.ne.s32.totalorder %s115, %s117
    %p124 = scmp.eq.s32.totalorder %s22, 3
    %p125 = por %p123, %p124
    %p126 = scmp.ne.s32.totalorder %s117, %s118
    %p127 = scmp.eq.s32.totalorder %s22, 0
    %p128 = por %p126, %p127
    %p129 = scmp.ne.s32.totalorder %s117, %s118
    %p130 = scmp.eq.s32.totalorder %s23, 3
    %p131 = por %p129, %p130
    %p133 = scmp.ne.s32.totalorder %s118, %s132
    %p134 = scmp.eq.s32.totalorder %s23, 0
    %p135 = por %p133, %p134
    %s137 = sadd.s32 %s136, 1
    %p140 = scmp.eq.s32.totalorder %s17, 3
    %p141 = scmp.ne.s32.totalorder %s136, %s138
    %p142 = scmp.eq.s32.totalorder %s17, 0
    %p143 = por %p141, %p142
    %p144 = scmp.ne.s32.totalorder %s136, %s138
    %p145 = scmp.eq.s32.totalorder %s22, 3
    %p146 = por %p144, %p145
    %p147 = scmp.ne.s32.totalorder %s138, %s139
    %p148 = scmp.eq.s32.totalorder %s22, 0
    %p149 = por %p147, %p148
    %p150 = scmp.ne.s32.totalorder %s138, %s139
    %p151 = scmp.eq.s32.totalorder %s23, 3
    %p152 = por %p150, %p151
    %p154 = scmp.ne.s32.totalorder %s139, %s153
    %p155 = scmp.eq.s32.totalorder %s23, 0
    %p156 = por %p154, %p155
    %s158 = sadd.s32 %s157, 1
    %p161 = scmp.eq.s32.totalorder %s17, 3
    %p162 = scmp.ne.s32.totalorder %s157, %s159
    %p163 = scmp.eq.s32.totalorder %s17, 0
    %p164 = por %p162, %p163
    %p165 = scmp.ne.s32.totalorder %s157, %s159
    %p166 = scmp.eq.s32.totalorder %s22, 3
    %p167 = por %p165, %p166
    %p168 = scmp.ne.s32.totalorder %s159, %s160
    %p169 = scmp.eq.s32.totalorder %s22, 0
    %p170 = por %p168, %p169
    %p171 = scmp.ne.s32.totalorder %s159, %s160
    %p172 = scmp.eq.s32.totalorder %s23, 3
    %p173 = por %p171, %p172
    %p175 = scmp.ne.s32.totalorder %s160, %s174
    %p176 = scmp.eq.s32.totalorder %s23, 0
    %p177 = por %p175, %p176
    %s179 = sadd.s32 %s178, 1
    %p182 = scmp.eq.s32.totalorder %s17, 3
    %p183 = scmp.ne.s32.totalorder %s178, %s180
    %p184 = scmp.eq.s32.totalorder %s17, 0
    %p185 = por %p183, %p184
    %p186 = scmp.ne.s32.totalorder %s178, %s180
    %p187 = scmp.eq.s32.totalorder %s22, 3
    %p188 = por %p186, %p187
    %p189 = scmp.ne.s32.totalorder %s180, %s181
    %p190 = scmp.eq.s32.totalorder %s22, 0
    %p191 = por %p189, %p190
    %p192 = scmp.ne.s32.totalorder %s180, %s181
    %p193 = scmp.eq.s32.totalorder %s23, 3
    %p194 = por %p192, %p193
    %p196 = scmp.ne.s32.totalorder %s181, %s195
    %p197 = scmp.eq.s32.totalorder %s23, 0
    %p198 = por %p196, %p197
    %s200 = sadd.s32 %s199, 1
    %p203 = scmp.eq.s32.totalorder %s17, 3
    %p204 = scmp.ne.s32.totalorder %s199, %s201
    %p205 = scmp.eq.s32.totalorder %s17, 0
    %p206 = por %p204, %p205
    %p207 = scmp.ne.s32.totalorder %s199, %s201
    %p208 = scmp.eq.s32.totalorder %s22, 3
    %p209 = por %p207, %p208
    %p210 = scmp.ne.s32.totalorder %s201, %s202
    %p211 = scmp.eq.s32.totalorder %s22, 0
    %p212 = por %p210, %p211
    %p213 = scmp.ne.s32.totalorder %s201, %s202
    %p214 = scmp.eq.s32.totalorder %s23, 3
    %p215 = por %p213, %p214
    %p217 = scmp.ne.s32.totalorder %s202, %s216
    %p218 = scmp.eq.s32.totalorder %s23, 0
    %p219 = por %p217, %p218
    %s221 = sadd.s32 %s220, 1
    %p224 = scmp.eq.s32.totalorder %s17, 3
    %p225 = scmp.ne.s32.totalorder %s220, %s222
    %p226 = scmp.eq.s32.totalorder %s17, 0
    %p227 = por %p225, %p226
    %p228 = scmp.ne.s32.totalorder %s220, %s222
    %p229 = scmp.eq.s32.totalorder %s22, 3
    %p230 = por %p228, %p229
    %p231 = scmp.ne.s32.totalorder %s222, %s223
    %p232 = scmp.eq.s32.totalorder %s22, 0
    %p233 = por %p231, %p232
    %p234 = scmp.ne.s32.totalorder %s222, %s223
    %p235 = scmp.eq.s32.totalorder %s23, 3
    %p236 = por %p234, %p235
    %p238 = scmp.ne.s32.totalorder %s223, %s237
    %p239 = scmp.eq.s32.totalorder %s23, 0
    %p240 = por %p238, %p239
    %s242 = sadd.s32 %s241, 1
    %p245 = scmp.eq.s32.totalorder %s17, 3
    %p246 = scmp.ne.s32.totalorder %s241, %s243
    %p247 = scmp.eq.s32.totalorder %s17, 0
    %p248 = por %p246, %p247
    %p249 = scmp.ne.s32.totalorder %s241, %s243
    %p250 = scmp.eq.s32.totalorder %s22, 3
    %p251 = por %p249, %p250
    %p252 = scmp.ne.s32.totalorder %s243, %s244
    %p253 = scmp.eq.s32.totalorder %s22, 0
    %p254 = por %p252, %p253
    %p255 = scmp.ne.s32.totalorder %s243, %s244
    %p256 = scmp.eq.s32.totalorder %s23, 3
    %p257 = por %p255, %p256
    %p259 = scmp.ne.s32.totalorder %s244, %s258
    %p260 = scmp.eq.s32.totalorder %s23, 0
    %p261 = por %p259, %p260
    %s263 = sadd.s32 %s262, 1
    %p266 = scmp.eq.s32.totalorder %s17, 3
    %p267 = scmp.ne.s32.totalorder %s262, %s264
    %p268 = scmp.eq.s32.totalorder %s17, 0
    %p269 = por %p267, %p268
    %p270 = scmp.ne.s32.totalorder %s262, %s264
    %p271 = scmp.eq.s32.totalorder %s22, 3
    %p272 = por %p270, %p271
    %p273 = scmp.ne.s32.totalorder %s264, %s265
    %p274 = scmp.eq.s32.totalorder %s22, 0
    %p275 = por %p273, %p274
    %p276 = scmp.ne.s32.totalorder %s264, %s265
    %p277 = scmp.eq.s32.totalorder %s23, 3
    %p278 = por %p276, %p277
    %p280 = scmp.ne.s32.totalorder %s265, %s279
    %p281 = scmp.eq.s32.totalorder %s23, 0
    %p282 = por %p280, %p281
    %s283 = ssub.s32 %s24, %s36
    %p284 = scmp.eq.s32.totalorder %s283, 0
    %s286 = sadd.s32 %s285, 1
    %s287 = scalar_select %p284, %s285, %s286
    %p290 = pneg %p284
    %p291 = scmp.eq.s32.totalorder %s17, 3
    %p292 = por %p290, %p291
    %p293 = scmp.ne.s32.totalorder %s285, %s288
    %p294 = scmp.eq.s32.totalorder %s17, 0
    %p295 = por %p293, %p294
    %p296 = scmp.ne.s32.totalorder %s285, %s288
    %p297 = scmp.eq.s32.totalorder %s22, 3
    %p298 = por %p296, %p297
    %p299 = scmp.ne.s32.totalorder %s288, %s289
    %p300 = scmp.eq.s32.totalorder %s22, 0
    %p301 = por %p299, %p300
    %p302 = scmp.ne.s32.totalorder %s288, %s289
    %p303 = scmp.eq.s32.totalorder %s23, 3
    %p304 = por %p302, %p303
    %p306 = scmp.ne.s32.totalorder %s289, %s305
    %p307 = scmp.eq.s32.totalorder %s23, 0
    %p308 = por %p306, %p307
    %p309 = scmp.le.s32.totalorder 1, %s17
    %p310 = scmp.lt.s32.totalorder %s17, 5
    %p311 = pnand %p309, %p310
    %p312 = pneg %p311
    // Predicated region
    $region9: #{triposf_vae_forward.3} parent=5 // pred_check
      _
    $region10: #{triposf_vae_forward.3} parent=5 // pred_check_branch
      %314 = sbr.rel (%p311) target = $region12
    $region11: #{triposf_vae_forward.3} parent=5 // pred_region
      %s315 = ssub.s32 %s17, 1
      // Predicated region
      $region13: #{triposf_vae_forward.3} parent=11 // pred_check
        %p316 = pneg %p128
      $region14: #{triposf_vae_forward.3} parent=11 // pred_check_branch
        %318 = sbr.rel (%p316) target = $region16
      $region15: #{triposf_vae_forward.3} parent=11 // pred_region
        _
      $region16: #{triposf_vae_forward.3} parent=11 // pred_fallthru
        _
      // Predicated region
      $region17: #{triposf_vae_forward.3} parent=11 // pred_check
        %p319 = pneg %p149
      $region18: #{triposf_vae_forward.3} parent=11 // pred_check_branch
        %321 = sbr.rel (%p319) target = $region20
      $region19: #{triposf_vae_forward.3} parent=11 // pred_region
        _
      $region20: #{triposf_vae_forward.3} parent=11 // pred_fallthru
        _
      // Predicated region
      $region21: #{triposf_vae_forward.3} parent=11 // pred_check
        %p322 = pneg %p170
      $region22: #{triposf_vae_forward.3} parent=11 // pred_check_branch
        %324 = sbr.rel (%p322) target = $region24
      $region23: #{triposf_vae_forward.3} parent=11 // pred_region
        _
      $region24: #{triposf_vae_forward.3} parent=11 // pred_fallthru
        _
      // Predicated region
      $region25: #{triposf_vae_forward.3} parent=11 // pred_check
        %p325 = pneg %p191
      $region26: #{triposf_vae_forward.3} parent=11 // pred_check_branch
        %327 = sbr.rel (%p325) target = $region28
      $region27: #{triposf_vae_forward.3} parent=11 // pred_region
        _
      $region28: #{triposf_vae_forward.3} parent=11 // pred_fallthru
        _
      // Predicated region
      $region29: #{triposf_vae_forward.3} parent=11 // pred_check
        %p328 = pneg %p212
      $region30: #{triposf_vae_forward.3} parent=11 // pred_check_branch
        %330 = sbr.rel (%p328) target = $region32
      $region31: #{triposf_vae_forward.3} parent=11 // pred_region
        _
      $region32: #{triposf_vae_forward.3} parent=11 // pred_fallthru
        _
      // Predicated region
      $region33: #{triposf_vae_forward.3} parent=11 // pred_check
        %p331 = pneg %p233
      $region34: #{triposf_vae_forward.3} parent=11 // pred_check_branch
        %333 = sbr.rel (%p331) target = $region36
      $region35: #{triposf_vae_forward.3} parent=11 // pred_region
        _
      $region36: #{triposf_vae_forward.3} parent=11 // pred_fallthru
        _
      // Predicated region
      $region37: #{triposf_vae_forward.3} parent=11 // pred_check
        %p334 = pneg %p254
      $region38: #{triposf_vae_forward.3} parent=11 // pred_check_branch
        %336 = sbr.rel (%p334) target = $region40
      $region39: #{triposf_vae_forward.3} parent=11 // pred_region
        _
      $region40: #{triposf_vae_forward.3} parent=11 // pred_fallthru
        _
      // Predicated region
      $region41: #{triposf_vae_forward.3} parent=11 // pred_check
        %p337 = pneg %p275
      $region42: #{triposf_vae_forward.3} parent=11 // pred_check_branch
        %339 = sbr.rel (%p337) target = $region44
      $region43: #{triposf_vae_forward.3} parent=11 // pred_region
        _
      $region44: #{triposf_vae_forward.3} parent=11 // pred_fallthru
        _
    $region12: #{triposf_vae_forward.3} parent=5 // pred_fallthru
      _
    %p340 = scmp.lt.s32.totalorder %s17, 4
    // Predicated region
    $region45: #{triposf_vae_forward.3} parent=5 // pred_check
      %p341 = pneg %p340
    $region46: #{triposf_vae_forward.3} parent=5 // pred_check_branch
      %343 = sbr.rel (%p341) target = $region48
    $region47: #{triposf_vae_forward.3} parent=5 // pred_region
      // Predicated region
      $region49: #{triposf_vae_forward.3} parent=47 // pred_check
        %p344 = pneg %p49
      $region50: #{triposf_vae_forward.3} parent=47 // pred_check_branch
        %346 = sbr.rel (%p344) target = $region52
      $region51: #{triposf_vae_forward.3} parent=47 // pred_region
        %s347 = smul.u32 8, %s25
        %p348 = scmp.lt.s32.totalorder %s347, 15
        %s349 = scalar_select %p348, %s347, 15
        %s350 = scalar_lea.vmem %s0, %s349
        %s351 = smul.u32 8, %s25
      $region52: #{triposf_vae_forward.3} parent=47 // pred_fallthru
        _
      // Predicated region
      $region53: #{triposf_vae_forward.3} parent=47 // pred_check
        %p352 = pneg %p75
      $region54: #{triposf_vae_forward.3} parent=47 // pred_check_branch
        %354 = sbr.rel (%p352) target = $region56
      $region55: #{triposf_vae_forward.3} parent=47 // pred_region
        %s355 = smul.u32 32, %s24
        %p356 = scmp.lt.s32.totalorder %s355, 63
        %s357 = scalar_select %p356, %s355, 63
        %s358 = smul.addr %s357, 8
        %s359 = scalar_lea.vmem %s1, %s358
        %s360 = smul.u32 32, %s24
      $region56: #{triposf_vae_forward.3} parent=47 // pred_fallthru
        _
      // Predicated region
      $region57: #{triposf_vae_forward.3} parent=47 // pred_check
        %p361 = pneg %p101
      $region58: #{triposf_vae_forward.3} parent=47 // pred_check_branch
        %363 = sbr.rel (%p361) target = $region60
      $region59: #{triposf_vae_forward.3} parent=47 // pred_region
        %s364 = smul.u32 128, %s25
        %p365 = scmp.lt.s32.totalorder %s364, 255
        %s366 = scalar_select %p365, %s364, 255
        %s367 = smul.addr %s366, 4
        %s368 = scalar_lea.vmem %s2, %s367
        %s369 = smul.u32 128, %s25
      $region60: #{triposf_vae_forward.3} parent=47 // pred_fallthru
        _
    $region48: #{triposf_vae_forward.3} parent=5 // pred_fallthru
      _
    %p370 = scmp.le.s32.totalorder 1, %s17
    %p371 = scmp.lt.s32.totalorder %s17, 5
    %p372 = pnand %p370, %p371
    %p373 = pneg %p372
    // Predicated region
    $region61: #{triposf_vae_forward.3} parent=5 // pred_check
      _
    $region62: #{triposf_vae_forward.3} parent=5 // pred_check_branch
      %375 = sbr.rel (%p372) target = $region64
    $region63: #{triposf_vae_forward.3} parent=5 // pred_region
      %s376 = ssub.s32 %s17, 1
      %s377 = smul.u32 8, %s27
      %p378 = scmp.lt.s32.totalorder %s377, 15
      %s379 = scalar_select %p378, %s377, 15
      %s380 = scalar_lea.vmem %s0, %s379
      %p381 = pneg %p55
      %p382 = pneg %p52
      %s383 = smul.u32 32, %s26
      %p384 = scmp.lt.s32.totalorder %s383, 63
      %s385 = scalar_select %p384, %s383, 63
      %s386 = smul.addr %s385, 8
      %s387 = scalar_lea.vmem %s1, %s386
      %p388 = pneg %p81
      %p389 = pneg %p78
      %s390 = smul.u32 128, %s27
      %p391 = scmp.lt.s32.totalorder %s390, 255
      %s392 = scalar_select %p391, %s390, 255
      %s393 = smul.addr %s392, 4
      %s394 = scalar_lea.vmem %s2, %s393
      %p395 = pneg %p107
      %p396 = pneg %p104
      %p397 = pneg %p128
      %p398 = pneg %p125
      %p399 = pneg %p149
      %p400 = pneg %p146
      %p401 = pneg %p170
      %p402 = pneg %p167
      %p403 = pneg %p191
      %p404 = pneg %p188
      %p405 = pneg %p212
      %p406 = pneg %p209
      %p407 = pneg %p233
      %p408 = pneg %p230
      %p409 = pneg %p254
      %p410 = pneg %p251
      %p411 = pneg %p275
      %p412 = pneg %p272
      %p413 = pneg %p301
      %p414 = pneg %p298
      %s415 = smul.u32 32, %s26
      %p416 = scmp.lt.s32.totalorder %s415, 63
      %s417 = scalar_select %p416, %s415, 63
      %s418 = smul.addr %s417, 8
      %s419 = scalar_lea.vmem %s11, %s418
      %s420 = smul.u32 8, %s27
      %p421 = scmp.lt.s32.totalorder %s420, 15
      %s422 = scalar_select %p421, %s420, 15
      %s423 = scalar_lea.vmem %s0, %s422
      %s424 = smul.u32 8, %s27
      %s425 = smul.u32 32, %s26
      %p426 = scmp.lt.s32.totalorder %s425, 63
      %s427 = scalar_select %p426, %s425, 63
      %s428 = smul.addr %s427, 8
      %s429 = scalar_lea.vmem %s1, %s428
      %s430 = smul.u32 32, %s26
      %s431 = smul.u32 128, %s27
      %p432 = scmp.lt.s32.totalorder %s431, 255
      %s433 = scalar_select %p432, %s431, 255
      %s434 = smul.addr %s433, 4
      %s435 = scalar_lea.vmem %s2, %s434
      %s436 = smul.u32 128, %s27
      %s437 = smul.u32 32, %s26
      %p438 = scmp.lt.s32.totalorder %s437, 63
      %s439 = scalar_select %p438, %s437, 63
      %s440 = smul.addr %s439, 8
      %s441 = scalar_lea.vmem %s11, %s440
      %s442 = smul.u32 32, %s26
      %p444 = scmp.eq.s32.totalorder %s27, 0
      // Predicated region
      $region65: #{triposf_vae_forward.3} parent=63 // pred_check
        %p445 = pneg %p444
      $region66: #{triposf_vae_forward.3} parent=63 // pred_check_branch
        %447 = sbr.rel (%p445) target = $region68
      $region67: #{triposf_vae_forward.3} parent=63 // pred_region
        %448 = vst [vmem:[%s441] sm:$0xff] 0.0
        %449 = vst [vmem:[%s441 + $0x8] sm:$0xff] 0.0
        %450 = vst [vmem:[%s441 + $0x10] sm:$0xff] 0.0
        %451 = vst [vmem:[%s441 + $0x18] sm:$0xff] 0.0
        %452 = vst [vmem:[%s441 + $0x20] sm:$0xff] 0.0
        %453 = vst [vmem:[%s441 + $0x28] sm:$0xff] 0.0
        %454 = vst [vmem:[%s441 + $0x30] sm:$0xff] 0.0
        %455 = vst [vmem:[%s441 + $0x38] sm:$0xff] 0.0
        %456 = vst [vmem:[%s441 + $0x40] sm:$0xff] 0.0
        %457 = vst [vmem:[%s441 + $0x48] sm:$0xff] 0.0
        %458 = vst [vmem:[%s441 + $0x50] sm:$0xff] 0.0
        %459 = vst [vmem:[%s441 + $0x58] sm:$0xff] 0.0
        %460 = vst [vmem:[%s441 + $0x60] sm:$0xff] 0.0
        %461 = vst [vmem:[%s441 + $0x68] sm:$0xff] 0.0
        %462 = vst [vmem:[%s441 + $0x70] sm:$0xff] 0.0
        %463 = vst [vmem:[%s441 + $0x78] sm:$0xff] 0.0
        %464 = vst [vmem:[%s441 + $0x80] sm:$0xff] 0.0
        %465 = vst [vmem:[%s441 + $0x88] sm:$0xff] 0.0
        %466 = vst [vmem:[%s441 + $0x90] sm:$0xff] 0.0
        %467 = vst [vmem:[%s441 + $0x98] sm:$0xff] 0.0
        %468 = vst [vmem:[%s441 + $0xa0] sm:$0xff] 0.0
        %469 = vst [vmem:[%s441 + $0xa8] sm:$0xff] 0.0
        %470 = vst [vmem:[%s441 + $0xb0] sm:$0xff] 0.0
        %471 = vst [vmem:[%s441 + $0xb8] sm:$0xff] 0.0
        %472 = vst [vmem:[%s441 + $0xc0] sm:$0xff] 0.0
        %473 = vst [vmem:[%s441 + $0xc8] sm:$0xff] 0.0
        %474 = vst [vmem:[%s441 + $0xd0] sm:$0xff] 0.0
        %475 = vst [vmem:[%s441 + $0xd8] sm:$0xff] 0.0
        %476 = vst [vmem:[%s441 + $0xe0] sm:$0xff] 0.0
        %477 = vst [vmem:[%s441 + $0xe8] sm:$0xff] 0.0
        %478 = vst [vmem:[%s441 + $0xf0] sm:$0xff] 0.0
        %479 = vst [vmem:[%s441 + $0xf8] sm:$0xff] 0.0
        %vm480 = vcmask 7168
        %481 = vst.msk [vmem:[#allocation2] sm:$0xff] %vm480, 0.0
        %482 = vst.msk [vmem:[#allocation2 + $0x8] sm:$0xff] %vm480, 0.0
        %483 = vst.msk [vmem:[#allocation2 + $0x10] sm:$0xff] %vm480, 0.0
        %484 = vst.msk [vmem:[#allocation2 + $0x18] sm:$0xff] %vm480, 0.0
        %485 = vst.msk [vmem:[#allocation2 + $0x20] sm:$0xff] %vm480, 0.0
        %486 = vst.msk [vmem:[#allocation2 + $0x28] sm:$0xff] %vm480, 0.0
        %487 = vst.msk [vmem:[#allocation2 + $0x30] sm:$0xff] %vm480, 0.0
        %488 = vst.msk [vmem:[#allocation2 + $0x38] sm:$0xff] %vm480, 0.0
        %489 = vst.msk [vmem:[#allocation2 + $0x40] sm:$0xff] %vm480, 0.0
        %490 = vst.msk [vmem:[#allocation2 + $0x48] sm:$0xff] %vm480, 0.0
        %491 = vst.msk [vmem:[#allocation2 + $0x50] sm:$0xff] %vm480, 0.0
        %492 = vst.msk [vmem:[#allocation2 + $0x58] sm:$0xff] %vm480, 0.0
        %493 = vst.msk [vmem:[#allocation2 + $0x60] sm:$0xff] %vm480, 0.0
        %494 = vst.msk [vmem:[#allocation2 + $0x68] sm:$0xff] %vm480, 0.0
        %495 = vst.msk [vmem:[#allocation2 + $0x70] sm:$0xff] %vm480, 0.0
        %496 = vst.msk [vmem:[#allocation2 + $0x78] sm:$0xff] %vm480, 0.0
        %497 = vst.msk [vmem:[#allocation2 + $0x80] sm:$0xff] %vm480, 0.0
        %498 = vst.msk [vmem:[#allocation2 + $0x88] sm:$0xff] %vm480, 0.0
        %499 = vst.msk [vmem:[#allocation2 + $0x90] sm:$0xff] %vm480, 0.0
        %500 = vst.msk [vmem:[#allocation2 + $0x98] sm:$0xff] %vm480, 0.0
        %501 = vst.msk [vmem:[#allocation2 + $0xa0] sm:$0xff] %vm480, 0.0
        %502 = vst.msk [vmem:[#allocation2 + $0xa8] sm:$0xff] %vm480, 0.0
        %503 = vst.msk [vmem:[#allocation2 + $0xb0] sm:$0xff] %vm480, 0.0
        %504 = vst.msk [vmem:[#allocation2 + $0xb8] sm:$0xff] %vm480, 0.0
        %505 = vst.msk [vmem:[#allocation2 + $0xc0] sm:$0xff] %vm480, 0.0
        %506 = vst.msk [vmem:[#allocation2 + $0xc8] sm:$0xff] %vm480, 0.0
        %507 = vst.msk [vmem:[#allocation2 + $0xd0] sm:$0xff] %vm480, 0.0
        %508 = vst.msk [vmem:[#allocation2 + $0xd8] sm:$0xff] %vm480, 0.0
        %509 = vst.msk [vmem:[#allocation2 + $0xe0] sm:$0xff] %vm480, 0.0
        %510 = vst.msk [vmem:[#allocation2 + $0xe8] sm:$0xff] %vm480, 0.0
        %511 = vst.msk [vmem:[#allocation2 + $0xf0] sm:$0xff] %vm480, 0.0
        %512 = vst.msk [vmem:[#allocation2 + $0xf8] sm:$0xff] %vm480, 0.0
      $region68: #{triposf_vae_forward.3} parent=63 // pred_fallthru
        _
      %v513 = vld [vmem:[%s429] sm:$0xff]
      %v514 = vld [vmem:[%s429 + $0x8] sm:$0xff]
      %v515 = vld [vmem:[%s429 + $0x10] sm:$0xff]
      %v516 = vld [vmem:[%s429 + $0x18] sm:$0xff]
      %v517 = vld [vmem:[%s429 + $0x20] sm:$0xff]
      %v518 = vld [vmem:[%s429 + $0x28] sm:$0xff]
      %v519 = vld [vmem:[%s429 + $0x30] sm:$0xff]
      %v520 = vld [vmem:[%s429 + $0x38] sm:$0xff]
      %v521 = vld [vmem:[%s429 + $0x40] sm:$0xff]
      %v522 = vld [vmem:[%s429 + $0x48] sm:$0xff]
      %v523 = vld [vmem:[%s429 + $0x50] sm:$0xff]
      %v524 = vld [vmem:[%s429 + $0x58] sm:$0xff]
      %v525 = vld [vmem:[%s429 + $0x60] sm:$0xff]
      %v526 = vld [vmem:[%s429 + $0x68] sm:$0xff]
      %v527 = vld [vmem:[%s429 + $0x70] sm:$0xff]
      %v528 = vld [vmem:[%s429 + $0x78] sm:$0xff]
      %v529 = vld [vmem:[%s429 + $0x80] sm:$0xff]
      %v530 = vld [vmem:[%s429 + $0x88] sm:$0xff]
      %v531 = vld [vmem:[%s429 + $0x90] sm:$0xff]
      %v532 = vld [vmem:[%s429 + $0x98] sm:$0xff]
      %v533 = vld [vmem:[%s429 + $0xa0] sm:$0xff]
      %v534 = vld [vmem:[%s429 + $0xa8] sm:$0xff]
      %v535 = vld [vmem:[%s429 + $0xb0] sm:$0xff]
      %v536 = vld [vmem:[%s429 + $0xb8] sm:$0xff]
      %v537 = vld [vmem:[%s429 + $0xc0] sm:$0xff]
      %v538 = vld [vmem:[%s429 + $0xc8] sm:$0xff]
      %v539 = vld [vmem:[%s429 + $0xd0] sm:$0xff]
      %v540 = vld [vmem:[%s429 + $0xd8] sm:$0xff]
      %v541 = vld [vmem:[%s429 + $0xe0] sm:$0xff]
      %v542 = vld [vmem:[%s429 + $0xe8] sm:$0xff]
      %v543 = vld [vmem:[%s429 + $0xf0] sm:$0xff]
      %v544 = vld [vmem:[%s429 + $0xf8] sm:$0xff]
      %v545 = vld [vmem:[%s423] sm:$0xff]
      %546 = vset.pattern.permute.xlu0 0
      %547 = vperm.xlu0 %546, %v513
      %v548 = vpop.permute.xlu0 %547
      %549 = vset.pattern.permute.xlu0 0
      %550 = vperm.xlu0 %549, %v514
      %v551 = vpop.permute.xlu0 %550
      %552 = vset.pattern.permute.xlu0 0
      %553 = vperm.xlu0 %552, %v515
      %v554 = vpop.permute.xlu0 %553
      %555 = vset.pattern.permute.xlu0 0
      %556 = vperm.xlu0 %555, %v516
      %v557 = vpop.permute.xlu0 %556
      %558 = vset.pattern.permute.xlu0 0
      %559 = vperm.xlu0 %558, %v517
      %v560 = vpop.permute.xlu0 %559
      %561 = vset.pattern.permute.xlu0 0
      %562 = vperm.xlu0 %561, %v518
      %v563 = vpop.permute.xlu0 %562
      %564 = vset.pattern.permute.xlu0 0
      %565 = vperm.xlu0 %564, %v519
      %v566 = vpop.permute.xlu0 %565
      %567 = vset.pattern.permute.xlu0 0
      %568 = vperm.xlu0 %567, %v520
      %v569 = vpop.permute.xlu0 %568
      %570 = vset.pattern.permute.xlu0 0
      %571 = vperm.xlu0 %570, %v521
      %v572 = vpop.permute.xlu0 %571
      %573 = vset.pattern.permute.xlu0 0
      %574 = vperm.xlu0 %573, %v522
      %v575 = vpop.permute.xlu0 %574
      %576 = vset.pattern.permute.xlu0 0
      %577 = vperm.xlu0 %576, %v523
      %v578 = vpop.permute.xlu0 %577
      %579 = vset.pattern.permute.xlu0 0
      %580 = vperm.xlu0 %579, %v524
      %v581 = vpop.permute.xlu0 %580
      %582 = vset.pattern.permute.xlu0 0
      %583 = vperm.xlu0 %582, %v525
      %v584 = vpop.permute.xlu0 %583
      %585 = vset.pattern.permute.xlu0 0
      %586 = vperm.xlu0 %585, %v526
      %v587 = vpop.permute.xlu0 %586
      %588 = vset.pattern.permute.xlu0 0
      %589 = vperm.xlu0 %588, %v527
      %v590 = vpop.permute.xlu0 %589
      %591 = vset.pattern.permute.xlu0 0
      %592 = vperm.xlu0 %591, %v528
      %v593 = vpop.permute.xlu0 %592
      %594 = vset.pattern.permute.xlu0 0
      %595 = vperm.xlu0 %594, %v529
      %v596 = vpop.permute.xlu0 %595
      %597 = vset.pattern.permute.xlu0 0
      %598 = vperm.xlu0 %597, %v530
      %v599 = vpop.permute.xlu0 %598
      %600 = vset.pattern.permute.xlu0 0
      %601 = vperm.xlu0 %600, %v531
      %v602 = vpop.permute.xlu0 %601
      %603 = vset.pattern.permute.xlu0 0
      %604 = vperm.xlu0 %603, %v532
      %v605 = vpop.permute.xlu0 %604
      %606 = vset.pattern.permute.xlu0 0
      %607 = vperm.xlu0 %606, %v533
      %v608 = vpop.permute.xlu0 %607
      %609 = vset.pattern.permute.xlu0 0
      %610 = vperm.xlu0 %609, %v534
      %v611 = vpop.permute.xlu0 %610
      %612 = vset.pattern.permute.xlu0 0
      %613 = vperm.xlu0 %612, %v535
      %v614 = vpop.permute.xlu0 %613
      %615 = vset.pattern.permute.xlu0 0
      %616 = vperm.xlu0 %615, %v536
      %v617 = vpop.permute.xlu0 %616
      %618 = vset.pattern.permute.xlu0 0
      %619 = vperm.xlu0 %618, %v537
      %v620 = vpop.permute.xlu0 %619
      %621 = vset.pattern.permute.xlu0 0
      %622 = vperm.xlu0 %621, %v538
      %v623 = vpop.permute.xlu0 %622
      %624 = vset.pattern.permute.xlu0 0
      %625 = vperm.xlu0 %624, %v539
      %v626 = vpop.permute.xlu0 %625
      %627 = vset.pattern.permute.xlu0 0
      %628 = vperm.xlu0 %627, %v540
      %v629 = vpop.permute.xlu0 %628
      %630 = vset.pattern.permute.xlu0 0
      %631 = vperm.xlu0 %630, %v541
      %v632 = vpop.permute.xlu0 %631
      %633 = vset.pattern.permute.xlu0 0
      %634 = vperm.xlu0 %633, %v542
      %v635 = vpop.permute.xlu0 %634
      %636 = vset.pattern.permute.xlu0 0
      %637 = vperm.xlu0 %636, %v543
      %v638 = vpop.permute.xlu0 %637
      %639 = vset.pattern.permute.xlu0 0
      %640 = vperm.xlu0 %639, %v544
      %v641 = vpop.permute.xlu0 %640
      %v642 = vlaneseq
      %v643 = vshrl.u32 %v642, 7
      %v644 = vsub.s32 0, %v643
      %v645 = vrot.slane %v545, %v644
      %v646 = vlaneseq
      %v647 = vshrl.u32 %v646, 7
      %v648 = vsub.s32 1, %v647
      %v649 = vrot.slane %v545, %v648
      %v650 = vlaneseq
      %v651 = vshrl.u32 %v650, 7
      %v652 = vsub.s32 2, %v651
      %v653 = vrot.slane %v545, %v652
      %v654 = vlaneseq
      %v655 = vshrl.u32 %v654, 7
      %v656 = vsub.s32 3, %v655
      %v657 = vrot.slane %v545, %v656
      %v658 = vlaneseq
      %v659 = vshrl.u32 %v658, 7
      %v660 = vsub.s32 4, %v659
      %v661 = vrot.slane %v545, %v660
      %v662 = vlaneseq
      %v663 = vshrl.u32 %v662, 7
      %v664 = vsub.s32 5, %v663
      %v665 = vrot.slane %v545, %v664
      %v666 = vlaneseq
      %v667 = vshrl.u32 %v666, 7
      %v668 = vsub.s32 6, %v667
      %v669 = vrot.slane %v545, %v668
      %v670 = vlaneseq
      %v671 = vshrl.u32 %v670, 7
      %v672 = vsub.s32 7, %v671
      %v673 = vrot.slane %v545, %v672
      %vm674 = vcmp.eq.s32.totalorder %v548, %v645
      %vm675 = vcmp.eq.s32.totalorder %v548, %v649
      %vm676 = vcmp.eq.s32.totalorder %v548, %v653
      %vm677 = vcmp.eq.s32.totalorder %v548, %v657
      %vm678 = vcmp.eq.s32.totalorder %v548, %v661
      %vm679 = vcmp.eq.s32.totalorder %v548, %v665
      %vm680 = vcmp.eq.s32.totalorder %v548, %v669
      %vm681 = vcmp.eq.s32.totalorder %v548, %v673
      %vm682 = vcmp.eq.s32.totalorder %v551, %v645
      %vm683 = vcmp.eq.s32.totalorder %v551, %v649
      %vm684 = vcmp.eq.s32.totalorder %v551, %v653
      %vm685 = vcmp.eq.s32.totalorder %v551, %v657
      %vm686 = vcmp.eq.s32.totalorder %v551, %v661
      %vm687 = vcmp.eq.s32.totalorder %v551, %v665
      %vm688 = vcmp.eq.s32.totalorder %v551, %v669
      %vm689 = vcmp.eq.s32.totalorder %v551, %v673
      %vm690 = vcmp.eq.s32.totalorder %v554, %v645
      %vm691 = vcmp.eq.s32.totalorder %v554, %v649
      %vm692 = vcmp.eq.s32.totalorder %v554, %v653
      %vm693 = vcmp.eq.s32.totalorder %v554, %v657
      %vm694 = vcmp.eq.s32.totalorder %v554, %v661
      %vm695 = vcmp.eq.s32.totalorder %v554, %v665
      %vm696 = vcmp.eq.s32.totalorder %v554, %v669
      %vm697 = vcmp.eq.s32.totalorder %v554, %v673
      %vm698 = vcmp.eq.s32.totalorder %v557, %v645
      %vm699 = vcmp.eq.s32.totalorder %v557, %v649
      %vm700 = vcmp.eq.s32.totalorder %v557, %v653
      %vm701 = vcmp.eq.s32.totalorder %v557, %v657
      %vm702 = vcmp.eq.s32.totalorder %v557, %v661
      %vm703 = vcmp.eq.s32.totalorder %v557, %v665
      %vm704 = vcmp.eq.s32.totalorder %v557, %v669
      %vm705 = vcmp.eq.s32.totalorder %v557, %v673
      %vm706 = vcmp.eq.s32.totalorder %v560, %v645
      %vm707 = vcmp.eq.s32.totalorder %v560, %v649
      %vm708 = vcmp.eq.s32.totalorder %v560, %v653
      %vm709 = vcmp.eq.s32.totalorder %v560, %v657
      %vm710 = vcmp.eq.s32.totalorder %v560, %v661
      %vm711 = vcmp.eq.s32.totalorder %v560, %v665
      %vm712 = vcmp.eq.s32.totalorder %v560, %v669
      %vm713 = vcmp.eq.s32.totalorder %v560, %v673
      %vm714 = vcmp.eq.s32.totalorder %v563, %v645
      %vm715 = vcmp.eq.s32.totalorder %v563, %v649
      %vm716 = vcmp.eq.s32.totalorder %v563, %v653
      %vm717 = vcmp.eq.s32.totalorder %v563, %v657
      %vm718 = vcmp.eq.s32.totalorder %v563, %v661
      %vm719 = vcmp.eq.s32.totalorder %v563, %v665
      %vm720 = vcmp.eq.s32.totalorder %v563, %v669
      %vm721 = vcmp.eq.s32.totalorder %v563, %v673
      %vm722 = vcmp.eq.s32.totalorder %v566, %v645
      %vm723 = vcmp.eq.s32.totalorder %v566, %v649
      %vm724 = vcmp.eq.s32.totalorder %v566, %v653
      %vm725 = vcmp.eq.s32.totalorder %v566, %v657
      %vm726 = vcmp.eq.s32.totalorder %v566, %v661
      %vm727 = vcmp.eq.s32.totalorder %v566, %v665
      %vm728 = vcmp.eq.s32.totalorder %v566, %v669
      %vm729 = vcmp.eq.s32.totalorder %v566, %v673
      %vm730 = vcmp.eq.s32.totalorder %v569, %v645
      %vm731 = vcmp.eq.s32.totalorder %v569, %v649
      %vm732 = vcmp.eq.s32.totalorder %v569, %v653
      %vm733 = vcmp.eq.s32.totalorder %v569, %v657
      %vm734 = vcmp.eq.s32.totalorder %v569, %v661
      %vm735 = vcmp.eq.s32.totalorder %v569, %v665
      %vm736 = vcmp.eq.s32.totalorder %v569, %v669
      %vm737 = vcmp.eq.s32.totalorder %v569, %v673
      %vm738 = vcmp.eq.s32.totalorder %v572, %v645
      %vm739 = vcmp.eq.s32.totalorder %v572, %v649
      %vm740 = vcmp.eq.s32.totalorder %v572, %v653
      %vm741 = vcmp.eq.s32.totalorder %v572, %v657
      %vm742 = vcmp.eq.s32.totalorder %v572, %v661
      %vm743 = vcmp.eq.s32.totalorder %v572, %v665
      %vm744 = vcmp.eq.s32.totalorder %v572, %v669
      %vm745 = vcmp.eq.s32.totalorder %v572, %v673
      %vm746 = vcmp.eq.s32.totalorder %v575, %v645
      %vm747 = vcmp.eq.s32.totalorder %v575, %v649
      %vm748 = vcmp.eq.s32.totalorder %v575, %v653
      %vm749 = vcmp.eq.s32.totalorder %v575, %v657
      %vm750 = vcmp.eq.s32.totalorder %v575, %v661
      %vm751 = vcmp.eq.s32.totalorder %v575, %v665
      %vm752 = vcmp.eq.s32.totalorder %v575, %v669
      %vm753 = vcmp.eq.s32.totalorder %v575, %v673
      %vm754 = vcmp.eq.s32.totalorder %v578, %v645
      %vm755 = vcmp.eq.s32.totalorder %v578, %v649
      %vm756 = vcmp.eq.s32.totalorder %v578, %v653
      %vm757 = vcmp.eq.s32.totalorder %v578, %v657
      %vm758 = vcmp.eq.s32.totalorder %v578, %v661
      %vm759 = vcmp.eq.s32.totalorder %v578, %v665
      %vm760 = vcmp.eq.s32.totalorder %v578, %v669
      %vm761 = vcmp.eq.s32.totalorder %v578, %v673
      %vm762 = vcmp.eq.s32.totalorder %v581, %v645
      %vm763 = vcmp.eq.s32.totalorder %v581, %v649
      %vm764 = vcmp.eq.s32.totalorder %v581, %v653
      %vm765 = vcmp.eq.s32.totalorder %v581, %v657
      %vm766 = vcmp.eq.s32.totalorder %v581, %v661
      %vm767 = vcmp.eq.s32.totalorder %v581, %v665
      %vm768 = vcmp.eq.s32.totalorder %v581, %v669
      %vm769 = vcmp.eq.s32.totalorder %v581, %v673
      %vm770 = vcmp.eq.s32.totalorder %v584, %v645
      %vm771 = vcmp.eq.s32.totalorder %v584, %v649
      %vm772 = vcmp.eq.s32.totalorder %v584, %v653
      %vm773 = vcmp.eq.s32.totalorder %v584, %v657
      %vm774 = vcmp.eq.s32.totalorder %v584, %v661
      %vm775 = vcmp.eq.s32.totalorder %v584, %v665
      %vm776 = vcmp.eq.s32.totalorder %v584, %v669
      %vm777 = vcmp.eq.s32.totalorder %v584, %v673
      %vm778 = vcmp.eq.s32.totalorder %v587, %v645
      %vm779 = vcmp.eq.s32.totalorder %v587, %v649
      %vm780 = vcmp.eq.s32.totalorder %v587, %v653
      %vm781 = vcmp.eq.s32.totalorder %v587, %v657
      %vm782 = vcmp.eq.s32.totalorder %v587, %v661
      %vm783 = vcmp.eq.s32.totalorder %v587, %v665
      %vm784 = vcmp.eq.s32.totalorder %v587, %v669
      %vm785 = vcmp.eq.s32.totalorder %v587, %v673
      %vm786 = vcmp.eq.s32.totalorder %v590, %v645
      %vm787 = vcmp.eq.s32.totalorder %v590, %v649
      %vm788 = vcmp.eq.s32.totalorder %v590, %v653
      %vm789 = vcmp.eq.s32.totalorder %v590, %v657
      %vm790 = vcmp.eq.s32.totalorder %v590, %v661
      %vm791 = vcmp.eq.s32.totalorder %v590, %v665
      %vm792 = vcmp.eq.s32.totalorder %v590, %v669
      %vm793 = vcmp.eq.s32.totalorder %v590, %v673
      %vm794 = vcmp.eq.s32.totalorder %v593, %v645
      %vm795 = vcmp.eq.s32.totalorder %v593, %v649
      %vm796 = vcmp.eq.s32.totalorder %v593, %v653
      %vm797 = vcmp.eq.s32.totalorder %v593, %v657
      %vm798 = vcmp.eq.s32.totalorder %v593, %v661
      %vm799 = vcmp.eq.s32.totalorder %v593, %v665
      %vm800 = vcmp.eq.s32.totalorder %v593, %v669
      %vm801 = vcmp.eq.s32.totalorder %v593, %v673
      %vm802 = vcmp.eq.s32.totalorder %v596, %v645
      %vm803 = vcmp.eq.s32.totalorder %v596, %v649
      %vm804 = vcmp.eq.s32.totalorder %v596, %v653
      %vm805 = vcmp.eq.s32.totalorder %v596, %v657
      %vm806 = vcmp.eq.s32.totalorder %v596, %v661
      %vm807 = vcmp.eq.s32.totalorder %v596, %v665
      %vm808 = vcmp.eq.s32.totalorder %v596, %v669
      %vm809 = vcmp.eq.s32.totalorder %v596, %v673
      %vm810 = vcmp.eq.s32.totalorder %v599, %v645
      %vm811 = vcmp.eq.s32.totalorder %v599, %v649
      %vm812 = vcmp.eq.s32.totalorder %v599, %v653
      %vm813 = vcmp.eq.s32.totalorder %v599, %v657
      %vm814 = vcmp.eq.s32.totalorder %v599, %v661
      %vm815 = vcmp.eq.s32.totalorder %v599, %v665
      %vm816 = vcmp.eq.s32.totalorder %v599, %v669
      %vm817 = vcmp.eq.s32.totalorder %v599, %v673
      %vm818 = vcmp.eq.s32.totalorder %v602, %v645
      %vm819 = vcmp.eq.s32.totalorder %v602, %v649
      %vm820 = vcmp.eq.s32.totalorder %v602, %v653
      %vm821 = vcmp.eq.s32.totalorder %v602, %v657
      %vm822 = vcmp.eq.s32.totalorder %v602, %v661
      %vm823 = vcmp.eq.s32.totalorder %v602, %v665
      %vm824 = vcmp.eq.s32.totalorder %v602, %v669
      %vm825 = vcmp.eq.s32.totalorder %v602, %v673
      %vm826 = vcmp.eq.s32.totalorder %v605, %v645
      %vm827 = vcmp.eq.s32.totalorder %v605, %v649
      %vm828 = vcmp.eq.s32.totalorder %v605, %v653
      %vm829 = vcmp.eq.s32.totalorder %v605, %v657
      %vm830 = vcmp.eq.s32.totalorder %v605, %v661
      %vm831 = vcmp.eq.s32.totalorder %v605, %v665
      %vm832 = vcmp.eq.s32.totalorder %v605, %v669
      %vm833 = vcmp.eq.s32.totalorder %v605, %v673
      %vm834 = vcmp.eq.s32.totalorder %v608, %v645
      %vm835 = vcmp.eq.s32.totalorder %v608, %v649
      %vm836 = vcmp.eq.s32.totalorder %v608, %v653
      %vm837 = vcmp.eq.s32.totalorder %v608, %v657
      %vm838 = vcmp.eq.s32.totalorder %v608, %v661
      %vm839 = vcmp.eq.s32.totalorder %v608, %v665
      %vm840 = vcmp.eq.s32.totalorder %v608, %v669
      %vm841 = vcmp.eq.s32.totalorder %v608, %v673
      %vm842 = vcmp.eq.s32.totalorder %v611, %v645
      %vm843 = vcmp.eq.s32.totalorder %v611, %v649
      %vm844 = vcmp.eq.s32.totalorder %v611, %v653
      %vm845 = vcmp.eq.s32.totalorder %v611, %v657
      %vm846 = vcmp.eq.s32.totalorder %v611, %v661
      %vm847 = vcmp.eq.s32.totalorder %v611, %v665
      %vm848 = vcmp.eq.s32.totalorder %v611, %v669
      %vm849 = vcmp.eq.s32.totalorder %v611, %v673
      %vm850 = vcmp.eq.s32.totalorder %v614, %v645
      %vm851 = vcmp.eq.s32.totalorder %v614, %v649
      %vm852 = vcmp.eq.s32.totalorder %v614, %v653
      %vm853 = vcmp.eq.s32.totalorder %v614, %v657
      %vm854 = vcmp.eq.s32.totalorder %v614, %v661
      %vm855 = vcmp.eq.s32.totalorder %v614, %v665
      %vm856 = vcmp.eq.s32.totalorder %v614, %v669
      %vm857 = vcmp.eq.s32.totalorder %v614, %v673
      %vm858 = vcmp.eq.s32.totalorder %v617, %v645
      %vm859 = vcmp.eq.s32.totalorder %v617, %v649
      %vm860 = vcmp.eq.s32.totalorder %v617, %v653
      %vm861 = vcmp.eq.s32.totalorder %v617, %v657
      %vm862 = vcmp.eq.s32.totalorder %v617, %v661
      %vm863 = vcmp.eq.s32.totalorder %v617, %v665
      %vm864 = vcmp.eq.s32.totalorder %v617, %v669
      %vm865 = vcmp.eq.s32.totalorder %v617, %v673
      %vm866 = vcmp.eq.s32.totalorder %v620, %v645
      %vm867 = vcmp.eq.s32.totalorder %v620, %v649
      %vm868 = vcmp.eq.s32.totalorder %v620, %v653
      %vm869 = vcmp.eq.s32.totalorder %v620, %v657
      %vm870 = vcmp.eq.s32.totalorder %v620, %v661
      %vm871 = vcmp.eq.s32.totalorder %v620, %v665
      %vm872 = vcmp.eq.s32.totalorder %v620, %v669
      %vm873 = vcmp.eq.s32.totalorder %v620, %v673
      %vm874 = vcmp.eq.s32.totalorder %v623, %v645
      %vm875 = vcmp.eq.s32.totalorder %v623, %v649
      %vm876 = vcmp.eq.s32.totalorder %v623, %v653
      %vm877 = vcmp.eq.s32.totalorder %v623, %v657
      %vm878 = vcmp.eq.s32.totalorder %v623, %v661
      %vm879 = vcmp.eq.s32.totalorder %v623, %v665
      %vm880 = vcmp.eq.s32.totalorder %v623, %v669
      %vm881 = vcmp.eq.s32.totalorder %v623, %v673
      %vm882 = vcmp.eq.s32.totalorder %v626, %v645
      %vm883 = vcmp.eq.s32.totalorder %v626, %v649
      %vm884 = vcmp.eq.s32.totalorder %v626, %v653
      %vm885 = vcmp.eq.s32.totalorder %v626, %v657
      %vm886 = vcmp.eq.s32.totalorder %v626, %v661
      %vm887 = vcmp.eq.s32.totalorder %v626, %v665
      %vm888 = vcmp.eq.s32.totalorder %v626, %v669
      %vm889 = vcmp.eq.s32.totalorder %v626, %v673
      %vm890 = vcmp.eq.s32.totalorder %v629, %v645
      %vm891 = vcmp.eq.s32.totalorder %v629, %v649
      %vm892 = vcmp.eq.s32.totalorder %v629, %v653
      %vm893 = vcmp.eq.s32.totalorder %v629, %v657
      %vm894 = vcmp.eq.s32.totalorder %v629, %v661
      %vm895 = vcmp.eq.s32.totalorder %v629, %v665
      %vm896 = vcmp.eq.s32.totalorder %v629, %v669
      %vm897 = vcmp.eq.s32.totalorder %v629, %v673
      %vm898 = vcmp.eq.s32.totalorder %v632, %v645
      %vm899 = vcmp.eq.s32.totalorder %v632, %v649
      %vm900 = vcmp.eq.s32.totalorder %v632, %v653
      %vm901 = vcmp.eq.s32.totalorder %v632, %v657
      %vm902 = vcmp.eq.s32.totalorder %v632, %v661
      %vm903 = vcmp.eq.s32.totalorder %v632, %v665
      %vm904 = vcmp.eq.s32.totalorder %v632, %v669
      %vm905 = vcmp.eq.s32.totalorder %v632, %v673
      %vm906 = vcmp.eq.s32.totalorder %v635, %v645
      %vm907 = vcmp.eq.s32.totalorder %v635, %v649
      %vm908 = vcmp.eq.s32.totalorder %v635, %v653
      %vm909 = vcmp.eq.s32.totalorder %v635, %v657
      %vm910 = vcmp.eq.s32.totalorder %v635, %v661
      %vm911 = vcmp.eq.s32.totalorder %v635, %v665
      %vm912 = vcmp.eq.s32.totalorder %v635, %v669
      %vm913 = vcmp.eq.s32.totalorder %v635, %v673
      %vm914 = vcmp.eq.s32.totalorder %v638, %v645
      %vm915 = vcmp.eq.s32.totalorder %v638, %v649
      %vm916 = vcmp.eq.s32.totalorder %v638, %v653
      %vm917 = vcmp.eq.s32.totalorder %v638, %v657
      %vm918 = vcmp.eq.s32.totalorder %v638, %v661
      %vm919 = vcmp.eq.s32.totalorder %v638, %v665
      %vm920 = vcmp.eq.s32.totalorder %v638, %v669
      %vm921 = vcmp.eq.s32.totalorder %v638, %v673
      %vm922 = vcmp.eq.s32.totalorder %v641, %v645
      %vm923 = vcmp.eq.s32.totalorder %v641, %v649
      %vm924 = vcmp.eq.s32.totalorder %v641, %v653
      %vm925 = vcmp.eq.s32.totalorder %v641, %v657
      %vm926 = vcmp.eq.s32.totalorder %v641, %v661
      %vm927 = vcmp.eq.s32.totalorder %v641, %v665
      %vm928 = vcmp.eq.s32.totalorder %v641, %v669
      %vm929 = vcmp.eq.s32.totalorder %v641, %v673
      %v930 = vsel %vm674, 1, 0
      %v931 = vsel %vm675, 1, 0
      %v932 = vsel %vm676, 1, 0
      %v933 = vsel %vm677, 1, 0
      %v934 = vsel %vm678, 1, 0
      %v935 = vsel %vm679, 1, 0
      %v936 = vsel %vm680, 1, 0
      %v937 = vsel %vm681, 1, 0
      %v938 = vsel %vm682, 1, 0
      %v939 = vsel %vm683, 1, 0
      %v940 = vsel %vm684, 1, 0
      %v941 = vsel %vm685, 1, 0
      %v942 = vsel %vm686, 1, 0
      %v943 = vsel %vm687, 1, 0
      %v944 = vsel %vm688, 1, 0
      %v945 = vsel %vm689, 1, 0
      %v946 = vsel %vm690, 1, 0
      %v947 = vsel %vm691, 1, 0
      %v948 = vsel %vm692, 1, 0
      %v949 = vsel %vm693, 1, 0
      %v950 = vsel %vm694, 1, 0
      %v951 = vsel %vm695, 1, 0
      %v952 = vsel %vm696, 1, 0
      %v953 = vsel %vm697, 1, 0
      %v954 = vsel %vm698, 1, 0
      %v955 = vsel %vm699, 1, 0
      %v956 = vsel %vm700, 1, 0
      %v957 = vsel %vm701, 1, 0
      %v958 = vsel %vm702, 1, 0
      %v959 = vsel %vm703, 1, 0
      %v960 = vsel %vm704, 1, 0
      %v961 = vsel %vm705, 1, 0
      %v962 = vsel %vm706, 1, 0
      %v963 = vsel %vm707, 1, 0
      %v964 = vsel %vm708, 1, 0
      %v965 = vsel %vm709, 1, 0
      %v966 = vsel %vm710, 1, 0
      %v967 = vsel %vm711, 1, 0
      %v968 = vsel %vm712, 1, 0
      %v969 = vsel %vm713, 1, 0
      %v970 = vsel %vm714, 1, 0
      %v971 = vsel %vm715, 1, 0
      %v972 = vsel %vm716, 1, 0
      %v973 = vsel %vm717, 1, 0
      %v974 = vsel %vm718, 1, 0
      %v975 = vsel %vm719, 1, 0
      %v976 = vsel %vm720, 1, 0
      %v977 = vsel %vm721, 1, 0
      %v978 = vsel %vm722, 1, 0
      %v979 = vsel %vm723, 1, 0
      %v980 = vsel %vm724, 1, 0
      %v981 = vsel %vm725, 1, 0
      %v982 = vsel %vm726, 1, 0
      %v983 = vsel %vm727, 1, 0
      %v984 = vsel %vm728, 1, 0
      %v985 = vsel %vm729, 1, 0
      %v986 = vsel %vm730, 1, 0
      %v987 = vsel %vm731, 1, 0
      %v988 = vsel %vm732, 1, 0
      %v989 = vsel %vm733, 1, 0
      %v990 = vsel %vm734, 1, 0
      %v991 = vsel %vm735, 1, 0
      %v992 = vsel %vm736, 1, 0
      %v993 = vsel %vm737, 1, 0
      %v994 = vsel %vm738, 1, 0
      %v995 = vsel %vm739, 1, 0
      %v996 = vsel %vm740, 1, 0
      %v997 = vsel %vm741, 1, 0
      %v998 = vsel %vm742, 1, 0
      %v999 = vsel %vm743, 1, 0
      %v1000 = vsel %vm744, 1, 0
      %v1001 = vsel %vm745, 1, 0
      %v1002 = vsel %vm746, 1, 0
      %v1003 = vsel %vm747, 1, 0
      %v1004 = vsel %vm748, 1, 0
      %v1005 = vsel %vm749, 1, 0
      %v1006 = vsel %vm750, 1, 0
      %v1007 = vsel %vm751, 1, 0
      %v1008 = vsel %vm752, 1, 0
      %v1009 = vsel %vm753, 1, 0
      %v1010 = vsel %vm754, 1, 0
      %v1011 = vsel %vm755, 1, 0
      %v1012 = vsel %vm756, 1, 0
      %v1013 = vsel %vm757, 1, 0
      %v1014 = vsel %vm758, 1, 0
      %v1015 = vsel %vm759, 1, 0
      %v1016 = vsel %vm760, 1, 0
      %v1017 = vsel %vm761, 1, 0
      %v1018 = vsel %vm762, 1, 0
      %v1019 = vsel %vm763, 1, 0
      %v1020 = vsel %vm764, 1, 0
      %v1021 = vsel %vm765, 1, 0
      %v1022 = vsel %vm766, 1, 0
      %v1023 = vsel %vm767, 1, 0
      %v1024 = vsel %vm768, 1, 0
      %v1025 = vsel %vm769, 1, 0
      %v1026 = vsel %vm770, 1, 0
      %v1027 = vsel %vm771, 1, 0
      %v1028 = vsel %vm772, 1, 0
      %v1029 = vsel %vm773, 1, 0
      %v1030 = vsel %vm774, 1, 0
      %v1031 = vsel %vm775, 1, 0
      %v1032 = vsel %vm776, 1, 0
      %v1033 = vsel %vm777, 1, 0
      %v1034 = vsel %vm778, 1, 0
      %v1035 = vsel %vm779, 1, 0
      %v1036 = vsel %vm780, 1, 0
      %v1037 = vsel %vm781, 1, 0
      %v1038 = vsel %vm782, 1, 0
      %v1039 = vsel %vm783, 1, 0
      %v1040 = vsel %vm784, 1, 0
      %v1041 = vsel %vm785, 1, 0
      %v1042 = vsel %vm786, 1, 0
      %v1043 = vsel %vm787, 1, 0
      %v1044 = vsel %vm788, 1, 0
      %v1045 = vsel %vm789, 1, 0
      %v1046 = vsel %vm790, 1, 0
      %v1047 = vsel %vm791, 1, 0
      %v1048 = vsel %vm792, 1, 0
      %v1049 = vsel %vm793, 1, 0
      %v1050 = vsel %vm794, 1, 0
      %v1051 = vsel %vm795, 1, 0
      %v1052 = vsel %vm796, 1, 0
      %v1053 = vsel %vm797, 1, 0
      %v1054 = vsel %vm798, 1, 0
      %v1055 = vsel %vm799, 1, 0
      %v1056 = vsel %vm800, 1, 0
      %v1057 = vsel %vm801, 1, 0
      %v1058 = vsel %vm802, 1, 0
      %v1059 = vsel %vm803, 1, 0
      %v1060 = vsel %vm804, 1, 0
      %v1061 = vsel %vm805, 1, 0
      %v1062 = vsel %vm806, 1, 0
      %v1063 = vsel %vm807, 1, 0
      %v1064 = vsel %vm808, 1, 0
      %v1065 = vsel %vm809, 1, 0
      %v1066 = vsel %vm810, 1, 0
      %v1067 = vsel %vm811, 1, 0
      %v1068 = vsel %vm812, 1, 0
      %v1069 = vsel %vm813, 1, 0
      %v1070 = vsel %vm814, 1, 0
      %v1071 = vsel %vm815, 1, 0
      %v1072 = vsel %vm816, 1, 0
      %v1073 = vsel %vm817, 1, 0
      %v1074 = vsel %vm818, 1, 0
      %v1075 = vsel %vm819, 1, 0
      %v1076 = vsel %vm820, 1, 0
      %v1077 = vsel %vm821, 1, 0
      %v1078 = vsel %vm822, 1, 0
      %v1079 = vsel %vm823, 1, 0
      %v1080 = vsel %vm824, 1, 0
      %v1081 = vsel %vm825, 1, 0
      %v1082 = vsel %vm826, 1, 0
      %v1083 = vsel %vm827, 1, 0
      %v1084 = vsel %vm828, 1, 0
      %v1085 = vsel %vm829, 1, 0
      %v1086 = vsel %vm830, 1, 0
      %v1087 = vsel %vm831, 1, 0
      %v1088 = vsel %vm832, 1, 0
      %v1089 = vsel %vm833, 1, 0
      %v1090 = vsel %vm834, 1, 0
      %v1091 = vsel %vm835, 1, 0
      %v1092 = vsel %vm836, 1, 0
      %v1093 = vsel %vm837, 1, 0
      %v1094 = vsel %vm838, 1, 0
      %v1095 = vsel %vm839, 1, 0
      %v1096 = vsel %vm840, 1, 0
      %v1097 = vsel %vm841, 1, 0
      %v1098 = vsel %vm842, 1, 0
      %v1099 = vsel %vm843, 1, 0
      %v1100 = vsel %vm844, 1, 0
      %v1101 = vsel %vm845, 1, 0
      %v1102 = vsel %vm846, 1, 0
      %v1103 = vsel %vm847, 1, 0
      %v1104 = vsel %vm848, 1, 0
      %v1105 = vsel %vm849, 1, 0
      %v1106 = vsel %vm850, 1, 0
      %v1107 = vsel %vm851, 1, 0
      %v1108 = vsel %vm852, 1, 0
      %v1109 = vsel %vm853, 1, 0
      %v1110 = vsel %vm854, 1, 0
      %v1111 = vsel %vm855, 1, 0
      %v1112 = vsel %vm856, 1, 0
      %v1113 = vsel %vm857, 1, 0
      %v1114 = vsel %vm858, 1, 0
      %v1115 = vsel %vm859, 1, 0
      %v1116 = vsel %vm860, 1, 0
      %v1117 = vsel %vm861, 1, 0
      %v1118 = vsel %vm862, 1, 0
      %v1119 = vsel %vm863, 1, 0
      %v1120 = vsel %vm864, 1, 0
      %v1121 = vsel %vm865, 1, 0
      %v1122 = vsel %vm866, 1, 0
      %v1123 = vsel %vm867, 1, 0
      %v1124 = vsel %vm868, 1, 0
      %v1125 = vsel %vm869, 1, 0
      %v1126 = vsel %vm870, 1, 0
      %v1127 = vsel %vm871, 1, 0
      %v1128 = vsel %vm872, 1, 0
      %v1129 = vsel %vm873, 1, 0
      %v1130 = vsel %vm874, 1, 0
      %v1131 = vsel %vm875, 1, 0
      %v1132 = vsel %vm876, 1, 0
      %v1133 = vsel %vm877, 1, 0
      %v1134 = vsel %vm878, 1, 0
      %v1135 = vsel %vm879, 1, 0
      %v1136 = vsel %vm880, 1, 0
      %v1137 = vsel %vm881, 1, 0
      %v1138 = vsel %vm882, 1, 0
      %v1139 = vsel %vm883, 1, 0
      %v1140 = vsel %vm884, 1, 0
      %v1141 = vsel %vm885, 1, 0
      %v1142 = vsel %vm886, 1, 0
      %v1143 = vsel %vm887, 1, 0
      %v1144 = vsel %vm888, 1, 0
      %v1145 = vsel %vm889, 1, 0
      %v1146 = vsel %vm890, 1, 0
      %v1147 = vsel %vm891, 1, 0
      %v1148 = vsel %vm892, 1, 0
      %v1149 = vsel %vm893, 1, 0
      %v1150 = vsel %vm894, 1, 0
      %v1151 = vsel %vm895, 1, 0
      %v1152 = vsel %vm896, 1, 0
      %v1153 = vsel %vm897, 1, 0
      %v1154 = vsel %vm898, 1, 0
      %v1155 = vsel %vm899, 1, 0
      %v1156 = vsel %vm900, 1, 0
      %v1157 = vsel %vm901, 1, 0
      %v1158 = vsel %vm902, 1, 0
      %v1159 = vsel %vm903, 1, 0
      %v1160 = vsel %vm904, 1, 0
      %v1161 = vsel %vm905, 1, 0
      %v1162 = vsel %vm906, 1, 0
      %v1163 = vsel %vm907, 1, 0
      %v1164 = vsel %vm908, 1, 0
      %v1165 = vsel %vm909, 1, 0
      %v1166 = vsel %vm910, 1, 0
      %v1167 = vsel %vm911, 1, 0
      %v1168 = vsel %vm912, 1, 0
      %v1169 = vsel %vm913, 1, 0
      %v1170 = vsel %vm914, 1, 0
      %v1171 = vsel %vm915, 1, 0
      %v1172 = vsel %vm916, 1, 0
      %v1173 = vsel %vm917, 1, 0
      %v1174 = vsel %vm918, 1, 0
      %v1175 = vsel %vm919, 1, 0
      %v1176 = vsel %vm920, 1, 0
      %v1177 = vsel %vm921, 1, 0
      %v1178 = vsel %vm922, 1, 0
      %v1179 = vsel %vm923, 1, 0
      %v1180 = vsel %vm924, 1, 0
      %v1181 = vsel %vm925, 1, 0
      %v1182 = vsel %vm926, 1, 0
      %v1183 = vsel %vm927, 1, 0
      %v1184 = vsel %vm928, 1, 0
      %v1185 = vsel %vm929, 1, 0
      %v1186 = vcvt.s32.f32 %v930
      %v1187 = vcvt.s32.f32 %v931
      %v1188 = vcvt.s32.f32 %v932
      %v1189 = vcvt.s32.f32 %v933
      %v1190 = vcvt.s32.f32 %v934
      %v1191 = vcvt.s32.f32 %v935
      %v1192 = vcvt.s32.f32 %v936
      %v1193 = vcvt.s32.f32 %v937
      %v1194 = vcvt.s32.f32 %v938
      %v1195 = vcvt.s32.f32 %v939
      %v1196 = vcvt.s32.f32 %v940
      %v1197 = vcvt.s32.f32 %v941
      %v1198 = vcvt.s32.f32 %v942
      %v1199 = vcvt.s32.f32 %v943
      %v1200 = vcvt.s32.f32 %v944
      %v1201 = vcvt.s32.f32 %v945
      %v1202 = vcvt.s32.f32 %v946
      %v1203 = vcvt.s32.f32 %v947
      %v1204 = vcvt.s32.f32 %v948
      %v1205 = vcvt.s32.f32 %v949
      %v1206 = vcvt.s32.f32 %v950
      %v1207 = vcvt.s32.f32 %v951
      %v1208 = vcvt.s32.f32 %v952
      %v1209 = vcvt.s32.f32 %v953
      %v1210 = vcvt.s32.f32 %v954
      %v1211 = vcvt.s32.f32 %v955
      %v1212 = vcvt.s32.f32 %v956
      %v1213 = vcvt.s32.f32 %v957
      %v1214 = vcvt.s32.f32 %v958
      %v1215 = vcvt.s32.f32 %v959
      %v1216 = vcvt.s32.f32 %v960
      %v1217 = vcvt.s32.f32 %v961
      %v1218 = vcvt.s32.f32 %v962
      %v1219 = vcvt.s32.f32 %v963
      %v1220 = vcvt.s32.f32 %v964
      %v1221 = vcvt.s32.f32 %v965
      %v1222 = vcvt.s32.f32 %v966
      %v1223 = vcvt.s32.f32 %v967
      %v1224 = vcvt.s32.f32 %v968
      %v1225 = vcvt.s32.f32 %v969
      %v1226 = vcvt.s32.f32 %v970
      %v1227 = vcvt.s32.f32 %v971
      %v1228 = vcvt.s32.f32 %v972
      %v1229 = vcvt.s32.f32 %v973
      %v1230 = vcvt.s32.f32 %v974
      %v1231 = vcvt.s32.f32 %v975
      %v1232 = vcvt.s32.f32 %v976
      %v1233 = vcvt.s32.f32 %v977
      %v1234 = vcvt.s32.f32 %v978
      %v1235 = vcvt.s32.f32 %v979
      %v1236 = vcvt.s32.f32 %v980
      %v1237 = vcvt.s32.f32 %v981
      %v1238 = vcvt.s32.f32 %v982
      %v1239 = vcvt.s32.f32 %v983
      %v1240 = vcvt.s32.f32 %v984
      %v1241 = vcvt.s32.f32 %v985
      %v1242 = vcvt.s32.f32 %v986
      %v1243 = vcvt.s32.f32 %v987
      %v1244 = vcvt.s32.f32 %v988
      %v1245 = vcvt.s32.f32 %v989
      %v1246 = vcvt.s32.f32 %v990
      %v1247 = vcvt.s32.f32 %v991
      %v1248 = vcvt.s32.f32 %v992
      %v1249 = vcvt.s32.f32 %v993
      %v1250 = vcvt.s32.f32 %v994
      %v1251 = vcvt.s32.f32 %v995
      %v1252 = vcvt.s32.f32 %v996
      %v1253 = vcvt.s32.f32 %v997
      %v1254 = vcvt.s32.f32 %v998
      %v1255 = vcvt.s32.f32 %v999
      %v1256 = vcvt.s32.f32 %v1000
      %v1257 = vcvt.s32.f32 %v1001
      %v1258 = vcvt.s32.f32 %v1002
      %v1259 = vcvt.s32.f32 %v1003
      %v1260 = vcvt.s32.f32 %v1004
      %v1261 = vcvt.s32.f32 %v1005
      %v1262 = vcvt.s32.f32 %v1006
      %v1263 = vcvt.s32.f32 %v1007
      %v1264 = vcvt.s32.f32 %v1008
      %v1265 = vcvt.s32.f32 %v1009
      %v1266 = vcvt.s32.f32 %v1010
      %v1267 = vcvt.s32.f32 %v1011
      %v1268 = vcvt.s32.f32 %v1012
      %v1269 = vcvt.s32.f32 %v1013
      %v1270 = vcvt.s32.f32 %v1014
      %v1271 = vcvt.s32.f32 %v1015
      %v1272 = vcvt.s32.f32 %v1016
      %v1273 = vcvt.s32.f32 %v1017
      %v1274 = vcvt.s32.f32 %v1018
      %v1275 = vcvt.s32.f32 %v1019
      %v1276 = vcvt.s32.f32 %v1020
      %v1277 = vcvt.s32.f32 %v1021
      %v1278 = vcvt.s32.f32 %v1022
      %v1279 = vcvt.s32.f32 %v1023
      %v1280 = vcvt.s32.f32 %v1024
      %v1281 = vcvt.s32.f32 %v1025
      %v1282 = vcvt.s32.f32 %v1026
      %v1283 = vcvt.s32.f32 %v1027
      %v1284 = vcvt.s32.f32 %v1028
      %v1285 = vcvt.s32.f32 %v1029
      %v1286 = vcvt.s32.f32 %v1030
      %v1287 = vcvt.s32.f32 %v1031
      %v1288 = vcvt.s32.f32 %v1032
      %v1289 = vcvt.s32.f32 %v1033
      %v1290 = vcvt.s32.f32 %v1034
      %v1291 = vcvt.s32.f32 %v1035
      %v1292 = vcvt.s32.f32 %v1036
      %v1293 = vcvt.s32.f32 %v1037
      %v1294 = vcvt.s32.f32 %v1038
      %v1295 = vcvt.s32.f32 %v1039
      %v1296 = vcvt.s32.f32 %v1040
      %v1297 = vcvt.s32.f32 %v1041
      %v1298 = vcvt.s32.f32 %v1042
      %v1299 = vcvt.s32.f32 %v1043
      %v1300 = vcvt.s32.f32 %v1044
      %v1301 = vcvt.s32.f32 %v1045
      %v1302 = vcvt.s32.f32 %v1046
      %v1303 = vcvt.s32.f32 %v1047
      %v1304 = vcvt.s32.f32 %v1048
      %v1305 = vcvt.s32.f32 %v1049
      %v1306 = vcvt.s32.f32 %v1050
      %v1307 = vcvt.s32.f32 %v1051
      %v1308 = vcvt.s32.f32 %v1052
      %v1309 = vcvt.s32.f32 %v1053
      %v1310 = vcvt.s32.f32 %v1054
      %v1311 = vcvt.s32.f32 %v1055
      %v1312 = vcvt.s32.f32 %v1056
      %v1313 = vcvt.s32.f32 %v1057
      %v1314 = vcvt.s32.f32 %v1058
      %v1315 = vcvt.s32.f32 %v1059
      %v1316 = vcvt.s32.f32 %v1060
      %v1317 = vcvt.s32.f32 %v1061
      %v1318 = vcvt.s32.f32 %v1062
      %v1319 = vcvt.s32.f32 %v1063
      %v1320 = vcvt.s32.f32 %v1064
      %v1321 = vcvt.s32.f32 %v1065
      %v1322 = vcvt.s32.f32 %v1066
      %v1323 = vcvt.s32.f32 %v1067
      %v1324 = vcvt.s32.f32 %v1068
      %v1325 = vcvt.s32.f32 %v1069
      %v1326 = vcvt.s32.f32 %v1070
      %v1327 = vcvt.s32.f32 %v1071
      %v1328 = vcvt.s32.f32 %v1072
      %v1329 = vcvt.s32.f32 %v1073
      %v1330 = vcvt.s32.f32 %v1074
      %v1331 = vcvt.s32.f32 %v1075
      %v1332 = vcvt.s32.f32 %v1076
      %v1333 = vcvt.s32.f32 %v1077
      %v1334 = vcvt.s32.f32 %v1078
      %v1335 = vcvt.s32.f32 %v1079
      %v1336 = vcvt.s32.f32 %v1080
      %v1337 = vcvt.s32.f32 %v1081
      %v1338 = vcvt.s32.f32 %v1082
      %v1339 = vcvt.s32.f32 %v1083
      %v1340 = vcvt.s32.f32 %v1084
      %v1341 = vcvt.s32.f32 %v1085
      %v1342 = vcvt.s32.f32 %v1086
      %v1343 = vcvt.s32.f32 %v1087
      %v1344 = vcvt.s32.f32 %v1088
      %v1345 = vcvt.s32.f32 %v1089
      %v1346 = vcvt.s32.f32 %v1090
      %v1347 = vcvt.s32.f32 %v1091
      %v1348 = vcvt.s32.f32 %v1092
      %v1349 = vcvt.s32.f32 %v1093
      %v1350 = vcvt.s32.f32 %v1094
      %v1351 = vcvt.s32.f32 %v1095
      %v1352 = vcvt.s32.f32 %v1096
      %v1353 = vcvt.s32.f32 %v1097
      %v1354 = vcvt.s32.f32 %v1098
      %v1355 = vcvt.s32.f32 %v1099
      %v1356 = vcvt.s32.f32 %v1100
      %v1357 = vcvt.s32.f32 %v1101
      %v1358 = vcvt.s32.f32 %v1102
      %v1359 = vcvt.s32.f32 %v1103
      %v1360 = vcvt.s32.f32 %v1104
      %v1361 = vcvt.s32.f32 %v1105
      %v1362 = vcvt.s32.f32 %v1106
      %v1363 = vcvt.s32.f32 %v1107
      %v1364 = vcvt.s32.f32 %v1108
      %v1365 = vcvt.s32.f32 %v1109
      %v1366 = vcvt.s32.f32 %v1110
      %v1367 = vcvt.s32.f32 %v1111
      %v1368 = vcvt.s32.f32 %v1112
      %v1369 = vcvt.s32.f32 %v1113
      %v1370 = vcvt.s32.f32 %v1114
      %v1371 = vcvt.s32.f32 %v1115
      %v1372 = vcvt.s32.f32 %v1116
      %v1373 = vcvt.s32.f32 %v1117
      %v1374 = vcvt.s32.f32 %v1118
      %v1375 = vcvt.s32.f32 %v1119
      %v1376 = vcvt.s32.f32 %v1120
      %v1377 = vcvt.s32.f32 %v1121
      %v1378 = vcvt.s32.f32 %v1122
      %v1379 = vcvt.s32.f32 %v1123
      %v1380 = vcvt.s32.f32 %v1124
      %v1381 = vcvt.s32.f32 %v1125
      %v1382 = vcvt.s32.f32 %v1126
      %v1383 = vcvt.s32.f32 %v1127
      %v1384 = vcvt.s32.f32 %v1128
      %v1385 = vcvt.s32.f32 %v1129
      %v1386 = vcvt.s32.f32 %v1130
      %v1387 = vcvt.s32.f32 %v1131
      %v1388 = vcvt.s32.f32 %v1132
      %v1389 = vcvt.s32.f32 %v1133
      %v1390 = vcvt.s32.f32 %v1134
      %v1391 = vcvt.s32.f32 %v1135
      %v1392 = vcvt.s32.f32 %v1136
      %v1393 = vcvt.s32.f32 %v1137
      %v1394 = vcvt.s32.f32 %v1138
      %v1395 = vcvt.s32.f32 %v1139
      %v1396 = vcvt.s32.f32 %v1140
      %v1397 = vcvt.s32.f32 %v1141
      %v1398 = vcvt.s32.f32 %v1142
      %v1399 = vcvt.s32.f32 %v1143
      %v1400 = vcvt.s32.f32 %v1144
      %v1401 = vcvt.s32.f32 %v1145
      %v1402 = vcvt.s32.f32 %v1146
      %v1403 = vcvt.s32.f32 %v1147
      %v1404 = vcvt.s32.f32 %v1148
      %v1405 = vcvt.s32.f32 %v1149
      %v1406 = vcvt.s32.f32 %v1150
      %v1407 = vcvt.s32.f32 %v1151
      %v1408 = vcvt.s32.f32 %v1152
      %v1409 = vcvt.s32.f32 %v1153
      %v1410 = vcvt.s32.f32 %v1154
      %v1411 = vcvt.s32.f32 %v1155
      %v1412 = vcvt.s32.f32 %v1156
      %v1413 = vcvt.s32.f32 %v1157
      %v1414 = vcvt.s32.f32 %v1158
      %v1415 = vcvt.s32.f32 %v1159
      %v1416 = vcvt.s32.f32 %v1160
      %v1417 = vcvt.s32.f32 %v1161
      %v1418 = vcvt.s32.f32 %v1162
      %v1419 = vcvt.s32.f32 %v1163
      %v1420 = vcvt.s32.f32 %v1164
      %v1421 = vcvt.s32.f32 %v1165
      %v1422 = vcvt.s32.f32 %v1166
      %v1423 = vcvt.s32.f32 %v1167
      %v1424 = vcvt.s32.f32 %v1168
      %v1425 = vcvt.s32.f32 %v1169
      %v1426 = vcvt.s32.f32 %v1170
      %v1427 = vcvt.s32.f32 %v1171
      %v1428 = vcvt.s32.f32 %v1172
      %v1429 = vcvt.s32.f32 %v1173
      %v1430 = vcvt.s32.f32 %v1174
      %v1431 = vcvt.s32.f32 %v1175
      %v1432 = vcvt.s32.f32 %v1176
      %v1433 = vcvt.s32.f32 %v1177
      %v1434 = vcvt.s32.f32 %v1178
      %v1435 = vcvt.s32.f32 %v1179
      %v1436 = vcvt.s32.f32 %v1180
      %v1437 = vcvt.s32.f32 %v1181
      %v1438 = vcvt.s32.f32 %v1182
      %v1439 = vcvt.s32.f32 %v1183
      %v1440 = vcvt.s32.f32 %v1184
      %v1441 = vcvt.s32.f32 %v1185
      %v1442 = vpack.c.bf16 %v1194, %v1186
      %v1443 = vpack.c.bf16 %v1195, %v1187
      %v1444 = vpack.c.bf16 %v1196, %v1188
      %v1445 = vpack.c.bf16 %v1197, %v1189
      %v1446 = vpack.c.bf16 %v1198, %v1190
      %v1447 = vpack.c.bf16 %v1199, %v1191
      %v1448 = vpack.c.bf16 %v1200, %v1192
      %v1449 = vpack.c.bf16 %v1201, %v1193
      %v1450 = vpack.c.bf16 %v1210, %v1202
      %v1451 = vpack.c.bf16 %v1211, %v1203
      %v1452 = vpack.c.bf16 %v1212, %v1204
      %v1453 = vpack.c.bf16 %v1213, %v1205
      %v1454 = vpack.c.bf16 %v1214, %v1206
      %v1455 = vpack.c.bf16 %v1215, %v1207
      %v1456 = vpack.c.bf16 %v1216, %v1208
      %v1457 = vpack.c.bf16 %v1217, %v1209
      %v1458 = vpack.c.bf16 %v1226, %v1218
      %v1459 = vpack.c.bf16 %v1227, %v1219
      %v1460 = vpack.c.bf16 %v1228, %v1220
      %v1461 = vpack.c.bf16 %v1229, %v1221
      %v1462 = vpack.c.bf16 %v1230, %v1222
      %v1463 = vpack.c.bf16 %v1231, %v1223
      %v1464 = vpack.c.bf16 %v1232, %v1224
      %v1465 = vpack.c.bf16 %v1233, %v1225
      %v1466 = vpack.c.bf16 %v1242, %v1234
      %v1467 = vpack.c.bf16 %v1243, %v1235
      %v1468 = vpack.c.bf16 %v1244, %v1236
      %v1469 = vpack.c.bf16 %v1245, %v1237
      %v1470 = vpack.c.bf16 %v1246, %v1238
      %v1471 = vpack.c.bf16 %v1247, %v1239
      %v1472 = vpack.c.bf16 %v1248, %v1240
      %v1473 = vpack.c.bf16 %v1249, %v1241
      %v1474 = vpack.c.bf16 %v1258, %v1250
      %v1475 = vpack.c.bf16 %v1259, %v1251
      %v1476 = vpack.c.bf16 %v1260, %v1252
      %v1477 = vpack.c.bf16 %v1261, %v1253
      %v1478 = vpack.c.bf16 %v1262, %v1254
      %v1479 = vpack.c.bf16 %v1263, %v1255
      %v1480 = vpack.c.bf16 %v1264, %v1256
      %v1481 = vpack.c.bf16 %v1265, %v1257
      %v1482 = vpack.c.bf16 %v1274, %v1266
      %v1483 = vpack.c.bf16 %v1275, %v1267
      %v1484 = vpack.c.bf16 %v1276, %v1268
      %v1485 = vpack.c.bf16 %v1277, %v1269
      %v1486 = vpack.c.bf16 %v1278, %v1270
      %v1487 = vpack.c.bf16 %v1279, %v1271
      %v1488 = vpack.c.bf16 %v1280, %v1272
      %v1489 = vpack.c.bf16 %v1281, %v1273
      %v1490 = vpack.c.bf16 %v1290, %v1282
      %v1491 = vpack.c.bf16 %v1291, %v1283
      %v1492 = vpack.c.bf16 %v1292, %v1284
      %v1493 = vpack.c.bf16 %v1293, %v1285
      %v1494 = vpack.c.bf16 %v1294, %v1286
      %v1495 = vpack.c.bf16 %v1295, %v1287
      %v1496 = vpack.c.bf16 %v1296, %v1288
      %v1497 = vpack.c.bf16 %v1297, %v1289
      %v1498 = vpack.c.bf16 %v1306, %v1298
      %v1499 = vpack.c.bf16 %v1307, %v1299
      %v1500 = vpack.c.bf16 %v1308, %v1300
      %v1501 = vpack.c.bf16 %v1309, %v1301
      %v1502 = vpack.c.bf16 %v1310, %v1302
      %v1503 = vpack.c.bf16 %v1311, %v1303
      %v1504 = vpack.c.bf16 %v1312, %v1304
      %v1505 = vpack.c.bf16 %v1313, %v1305
      %v1506 = vpack.c.bf16 %v1322, %v1314
      %v1507 = vpack.c.bf16 %v1323, %v1315
      %v1508 = vpack.c.bf16 %v1324, %v1316
      %v1509 = vpack.c.bf16 %v1325, %v1317
      %v1510 = vpack.c.bf16 %v1326, %v1318
      %v1511 = vpack.c.bf16 %v1327, %v1319
      %v1512 = vpack.c.bf16 %v1328, %v1320
      %v1513 = vpack.c.bf16 %v1329, %v1321
      %v1514 = vpack.c.bf16 %v1338, %v1330
      %v1515 = vpack.c.bf16 %v1339, %v1331
      %v1516 = vpack.c.bf16 %v1340, %v1332
      %v1517 = vpack.c.bf16 %v1341, %v1333
      %v1518 = vpack.c.bf16 %v1342, %v1334
      %v1519 = vpack.c.bf16 %v1343, %v1335
      %v1520 = vpack.c.bf16 %v1344, %v1336
      %v1521 = vpack.c.bf16 %v1345, %v1337
      %v1522 = vpack.c.bf16 %v1354, %v1346
      %v1523 = vpack.c.bf16 %v1355, %v1347
      %v1524 = vpack.c.bf16 %v1356, %v1348
      %v1525 = vpack.c.bf16 %v1357, %v1349
      %v1526 = vpack.c.bf16 %v1358, %v1350
      %v1527 = vpack.c.bf16 %v1359, %v1351
      %v1528 = vpack.c.bf16 %v1360, %v1352
      %v1529 = vpack.c.bf16 %v1361, %v1353
      %v1530 = vpack.c.bf16 %v1370, %v1362
      %v1531 = vpack.c.bf16 %v1371, %v1363
      %v1532 = vpack.c.bf16 %v1372, %v1364
      %v1533 = vpack.c.bf16 %v1373, %v1365
      %v1534 = vpack.c.bf16 %v1374, %v1366
      %v1535 = vpack.c.bf16 %v1375, %v1367
      %v1536 = vpack.c.bf16 %v1376, %v1368
      %v1537 = vpack.c.bf16 %v1377, %v1369
      %v1538 = vpack.c.bf16 %v1386, %v1378
      %v1539 = vpack.c.bf16 %v1387, %v1379
      %v1540 = vpack.c.bf16 %v1388, %v1380
      %v1541 = vpack.c.bf16 %v1389, %v1381
      %v1542 = vpack.c.bf16 %v1390, %v1382
      %v1543 = vpack.c.bf16 %v1391, %v1383
      %v1544 = vpack.c.bf16 %v1392, %v1384
      %v1545 = vpack.c.bf16 %v1393, %v1385
      %v1546 = vpack.c.bf16 %v1402, %v1394
      %v1547 = vpack.c.bf16 %v1403, %v1395
      %v1548 = vpack.c.bf16 %v1404, %v1396
      %v1549 = vpack.c.bf16 %v1405, %v1397
      %v1550 = vpack.c.bf16 %v1406, %v1398
      %v1551 = vpack.c.bf16 %v1407, %v1399
      %v1552 = vpack.c.bf16 %v1408, %v1400
      %v1553 = vpack.c.bf16 %v1409, %v1401
      %v1554 = vpack.c.bf16 %v1418, %v1410
      %v1555 = vpack.c.bf16 %v1419, %v1411
      %v1556 = vpack.c.bf16 %v1420, %v1412
      %v1557 = vpack.c.bf16 %v1421, %v1413
      %v1558 = vpack.c.bf16 %v1422, %v1414
      %v1559 = vpack.c.bf16 %v1423, %v1415
      %v1560 = vpack.c.bf16 %v1424, %v1416
      %v1561 = vpack.c.bf16 %v1425, %v1417
      %v1562 = vpack.c.bf16 %v1434, %v1426
      %v1563 = vpack.c.bf16 %v1435, %v1427
      %v1564 = vpack.c.bf16 %v1436, %v1428
      %v1565 = vpack.c.bf16 %v1437, %v1429
      %v1566 = vpack.c.bf16 %v1438, %v1430
      %v1567 = vpack.c.bf16 %v1439, %v1431
      %v1568 = vpack.c.bf16 %v1440, %v1432
      %v1569 = vpack.c.bf16 %v1441, %v1433
      %v1570 = vld [vmem:[%s441] sm:$0xff]
      %v1571 = vld [vmem:[%s441 + $0x8] sm:$0xff]
      %v1572 = vld [vmem:[%s441 + $0x10] sm:$0xff]
      %v1573 = vld [vmem:[%s441 + $0x18] sm:$0xff]
      %v1574 = vld [vmem:[%s441 + $0x20] sm:$0xff]
      %v1575 = vld [vmem:[%s441 + $0x28] sm:$0xff]
      %v1576 = vld [vmem:[%s441 + $0x30] sm:$0xff]
      %v1577 = vld [vmem:[%s441 + $0x38] sm:$0xff]
      %v1578 = vld [vmem:[%s441 + $0x40] sm:$0xff]
      %v1579 = vld [vmem:[%s441 + $0x48] sm:$0xff]
      %v1580 = vld [vmem:[%s441 + $0x50] sm:$0xff]
      %v1581 = vld [vmem:[%s441 + $0x58] sm:$0xff]
      %v1582 = vld [vmem:[%s441 + $0x60] sm:$0xff]
      %v1583 = vld [vmem:[%s441 + $0x68] sm:$0xff]
      %v1584 = vld [vmem:[%s441 + $0x70] sm:$0xff]
      %v1585 = vld [vmem:[%s441 + $0x78] sm:$0xff]
      %v1586 = vld [vmem:[%s441 + $0x80] sm:$0xff]
      %v1587 = vld [vmem:[%s441 + $0x88] sm:$0xff]
      %v1588 = vld [vmem:[%s441 + $0x90] sm:$0xff]
      %v1589 = vld [vmem:[%s441 + $0x98] sm:$0xff]
      %v1590 = vld [vmem:[%s441 + $0xa0] sm:$0xff]
      %v1591 = vld [vmem:[%s441 + $0xa8] sm:$0xff]
      %v1592 = vld [vmem:[%s441 + $0xb0] sm:$0xff]
      %v1593 = vld [vmem:[%s441 + $0xb8] sm:$0xff]
      %v1594 = vld [vmem:[%s441 + $0xc0] sm:$0xff]
      %v1595 = vld [vmem:[%s441 + $0xc8] sm:$0xff]
      %v1596 = vld [vmem:[%s441 + $0xd0] sm:$0xff]
      %v1597 = vld [vmem:[%s441 + $0xd8] sm:$0xff]
      %v1598 = vld [vmem:[%s441 + $0xe0] sm:$0xff]
      %v1599 = vld [vmem:[%s441 + $0xe8] sm:$0xff]
      %v1600 = vld [vmem:[%s441 + $0xf0] sm:$0xff]
      %v1601 = vld [vmem:[%s441 + $0xf8] sm:$0xff]
      %v1602 = vld [vmem:[%s435] sm:$0xf]
      %v1603 = vld [vmem:[%s435 + $0x4] sm:$0xf]
      %v1604 = vld [vmem:[%s435 + $0x8] sm:$0xf]
      %v1605 = vld [vmem:[%s435 + $0xc] sm:$0xf]
      %v1606 = vld [vmem:[%s435 + $0x10] sm:$0xf]
      %v1607 = vld [vmem:[%s435 + $0x14] sm:$0xf]
      %v1608 = vld [vmem:[%s435 + $0x18] sm:$0xf]
      %v1609 = vld [vmem:[%s435 + $0x1c] sm:$0xf]
      %v1610 = vld [vmem:[%s435 + $0x20] sm:$0xf]
      %v1611 = vld [vmem:[%s435 + $0x24] sm:$0xf]
      %v1612 = vld [vmem:[%s435 + $0x28] sm:$0xf]
      %v1613 = vld [vmem:[%s435 + $0x2c] sm:$0xf]
      %v1614 = vld [vmem:[%s435 + $0x30] sm:$0xf]
      %v1615 = vld [vmem:[%s435 + $0x34] sm:$0xf]
      %v1616 = vld [vmem:[%s435 + $0x38] sm:$0xf]
      %v1617 = vld [vmem:[%s435 + $0x3c] sm:$0xf]
      %v1618 = vld [vmem:[%s435 + $0x40] sm:$0xf]
      %v1619 = vld [vmem:[%s435 + $0x44] sm:$0xf]
      %v1620 = vld [vmem:[%s435 + $0x48] sm:$0xf]
      %v1621 = vld [vmem:[%s435 + $0x4c] sm:$0xf]
      %v1622 = vld [vmem:[%s435 + $0x50] sm:$0xf]
      %v1623 = vld [vmem:[%s435 + $0x54] sm:$0xf]
      %v1624 = vld [vmem:[%s435 + $0x58] sm:$0xf]
      %v1625 = vld [vmem:[%s435 + $0x5c] sm:$0xf]
      %v1626 = vld [vmem:[%s435 + $0x60] sm:$0xf]
      %v1627 = vld [vmem:[%s435 + $0x64] sm:$0xf]
      %v1628 = vld [vmem:[%s435 + $0x68] sm:$0xf]
      %v1629 = vld [vmem:[%s435 + $0x6c] sm:$0xf]
      %v1630 = vld [vmem:[%s435 + $0x70] sm:$0xf]
      %v1631 = vld [vmem:[%s435 + $0x74] sm:$0xf]
      %v1632 = vld [vmem:[%s435 + $0x78] sm:$0xf]
      %v1633 = vld [vmem:[%s435 + $0x7c] sm:$0xf]
      %v1634 = vld [vmem:[%s435 + $0x80] sm:$0xf]
      %v1635 = vld [vmem:[%s435 + $0x84] sm:$0xf]
      %v1636 = vld [vmem:[%s435 + $0x88] sm:$0xf]
      %v1637 = vld [vmem:[%s435 + $0x8c] sm:$0xf]
      %v1638 = vld [vmem:[%s435 + $0x90] sm:$0xf]
      %v1639 = vld [vmem:[%s435 + $0x94] sm:$0xf]
      %v1640 = vld [vmem:[%s435 + $0x98] sm:$0xf]
      %v1641 = vld [vmem:[%s435 + $0x9c] sm:$0xf]
      %v1642 = vld [vmem:[%s435 + $0xa0] sm:$0xf]
      %v1643 = vld [vmem:[%s435 + $0xa4] sm:$0xf]
      %v1644 = vld [vmem:[%s435 + $0xa8] sm:$0xf]
      %v1645 = vld [vmem:[%s435 + $0xac] sm:$0xf]
      %v1646 = vld [vmem:[%s435 + $0xb0] sm:$0xf]
      %v1647 = vld [vmem:[%s435 + $0xb4] sm:$0xf]
      %v1648 = vld [vmem:[%s435 + $0xb8] sm:$0xf]
      %v1649 = vld [vmem:[%s435 + $0xbc] sm:$0xf]
      %v1650 = vld [vmem:[%s435 + $0xc0] sm:$0xf]
      %v1651 = vld [vmem:[%s435 + $0xc4] sm:$0xf]
      %v1652 = vld [vmem:[%s435 + $0xc8] sm:$0xf]
      %v1653 = vld [vmem:[%s435 + $0xcc] sm:$0xf]
      %v1654 = vld [vmem:[%s435 + $0xd0] sm:$0xf]
      %v1655 = vld [vmem:[%s435 + $0xd4] sm:$0xf]
      %v1656 = vld [vmem:[%s435 + $0xd8] sm:$0xf]
      %v1657 = vld [vmem:[%s435 + $0xdc] sm:$0xf]
      %v1658 = vld [vmem:[%s435 + $0xe0] sm:$0xf]
      %v1659 = vld [vmem:[%s435 + $0xe4] sm:$0xf]
      %v1660 = vld [vmem:[%s435 + $0xe8] sm:$0xf]
      %v1661 = vld [vmem:[%s435 + $0xec] sm:$0xf]
      %v1662 = vld [vmem:[%s435 + $0xf0] sm:$0xf]
      %v1663 = vld [vmem:[%s435 + $0xf4] sm:$0xf]
      %v1664 = vld [vmem:[%s435 + $0xf8] sm:$0xf]
      %v1665 = vld [vmem:[%s435 + $0xfc] sm:$0xf]
      %v1666 = vld [vmem:[%s435 + $0x100] sm:$0xf]
      %v1667 = vld [vmem:[%s435 + $0x104] sm:$0xf]
      %v1668 = vld [vmem:[%s435 + $0x108] sm:$0xf]
      %v1669 = vld [vmem:[%s435 + $0x10c] sm:$0xf]
      %v1670 = vld [vmem:[%s435 + $0x110] sm:$0xf]
      %v1671 = vld [vmem:[%s435 + $0x114] sm:$0xf]
      %v1672 = vld [vmem:[%s435 + $0x118] sm:$0xf]
      %v1673 = vld [vmem:[%s435 + $0x11c] sm:$0xf]
      %v1674 = vld [vmem:[%s435 + $0x120] sm:$0xf]
      %v1675 = vld [vmem:[%s435 + $0x124] sm:$0xf]
      %v1676 = vld [vmem:[%s435 + $0x128] sm:$0xf]
      %v1677 = vld [vmem:[%s435 + $0x12c] sm:$0xf]
      %v1678 = vld [vmem:[%s435 + $0x130] sm:$0xf]
      %v1679 = vld [vmem:[%s435 + $0x134] sm:$0xf]
      %v1680 = vld [vmem:[%s435 + $0x138] sm:$0xf]
      %v1681 = vld [vmem:[%s435 + $0x13c] sm:$0xf]
      %v1682 = vld [vmem:[%s435 + $0x140] sm:$0xf]
      %v1683 = vld [vmem:[%s435 + $0x144] sm:$0xf]
      %v1684 = vld [vmem:[%s435 + $0x148] sm:$0xf]
      %v1685 = vld [vmem:[%s435 + $0x14c] sm:$0xf]
      %v1686 = vld [vmem:[%s435 + $0x150] sm:$0xf]
      %v1687 = vld [vmem:[%s435 + $0x154] sm:$0xf]
      %v1688 = vld [vmem:[%s435 + $0x158] sm:$0xf]
      %v1689 = vld [vmem:[%s435 + $0x15c] sm:$0xf]
      %v1690 = vld [vmem:[%s435 + $0x160] sm:$0xf]
      %v1691 = vld [vmem:[%s435 + $0x164] sm:$0xf]
      %v1692 = vld [vmem:[%s435 + $0x168] sm:$0xf]
      %v1693 = vld [vmem:[%s435 + $0x16c] sm:$0xf]
      %v1694 = vld [vmem:[%s435 + $0x170] sm:$0xf]
      %v1695 = vld [vmem:[%s435 + $0x174] sm:$0xf]
      %v1696 = vld [vmem:[%s435 + $0x178] sm:$0xf]
      %v1697 = vld [vmem:[%s435 + $0x17c] sm:$0xf]
      %v1698 = vld [vmem:[%s435 + $0x180] sm:$0xf]
      %v1699 = vld [vmem:[%s435 + $0x184] sm:$0xf]
      %v1700 = vld [vmem:[%s435 + $0x188] sm:$0xf]
      %v1701 = vld [vmem:[%s435 + $0x18c] sm:$0xf]
      %v1702 = vld [vmem:[%s435 + $0x190] sm:$0xf]
      %v1703 = vld [vmem:[%s435 + $0x194] sm:$0xf]
      %v1704 = vld [vmem:[%s435 + $0x198] sm:$0xf]
      %v1705 = vld [vmem:[%s435 + $0x19c] sm:$0xf]
      %v1706 = vld [vmem:[%s435 + $0x1a0] sm:$0xf]
      %v1707 = vld [vmem:[%s435 + $0x1a4] sm:$0xf]
      %v1708 = vld [vmem:[%s435 + $0x1a8] sm:$0xf]
      %v1709 = vld [vmem:[%s435 + $0x1ac] sm:$0xf]
      %v1710 = vld [vmem:[%s435 + $0x1b0] sm:$0xf]
      %v1711 = vld [vmem:[%s435 + $0x1b4] sm:$0xf]
      %v1712 = vld [vmem:[%s435 + $0x1b8] sm:$0xf]
      %v1713 = vld [vmem:[%s435 + $0x1bc] sm:$0xf]
      %v1714 = vld [vmem:[%s435 + $0x1c0] sm:$0xf]
      %v1715 = vld [vmem:[%s435 + $0x1c4] sm:$0xf]
      %v1716 = vld [vmem:[%s435 + $0x1c8] sm:$0xf]
      %v1717 = vld [vmem:[%s435 + $0x1cc] sm:$0xf]
      %v1718 = vld [vmem:[%s435 + $0x1d0] sm:$0xf]
      %v1719 = vld [vmem:[%s435 + $0x1d4] sm:$0xf]
      %v1720 = vld [vmem:[%s435 + $0x1d8] sm:$0xf]
      %v1721 = vld [vmem:[%s435 + $0x1dc] sm:$0xf]
      %v1722 = vld [vmem:[%s435 + $0x1e0] sm:$0xf]
      %v1723 = vld [vmem:[%s435 + $0x1e4] sm:$0xf]
      %v1724 = vld [vmem:[%s435 + $0x1e8] sm:$0xf]
      %v1725 = vld [vmem:[%s435 + $0x1ec] sm:$0xf]
      %v1726 = vld [vmem:[%s435 + $0x1f0] sm:$0xf]
      %v1727 = vld [vmem:[%s435 + $0x1f4] sm:$0xf]
      %v1728 = vld [vmem:[%s435 + $0x1f8] sm:$0xf]
      %v1729 = vld [vmem:[%s435 + $0x1fc] sm:$0xf]
      %v1858 = vunpack.c.l.b16 %v1602
      %v1859 = vunpack.c.l.b16 %v1603
      %v1860 = vunpack.c.l.b16 %v1604
      %v1861 = vunpack.c.l.b16 %v1605
      %v1862 = vunpack.c.l.b16 %v1606
      %v1863 = vunpack.c.l.b16 %v1607
      %v1864 = vunpack.c.l.b16 %v1608
      %v1865 = vunpack.c.l.b16 %v1609
      %v1866 = vunpack.c.l.b16 %v1610
      %v1867 = vunpack.c.l.b16 %v1611
      %v1868 = vunpack.c.l.b16 %v1612
      %v1869 = vunpack.c.l.b16 %v1613
      %v1870 = vunpack.c.l.b16 %v1614
      %v1871 = vunpack.c.l.b16 %v1615
      %v1872 = vunpack.c.l.b16 %v1616
      %v1873 = vunpack.c.l.b16 %v1617
      %v1874 = vunpack.c.l.b16 %v1618
      %v1875 = vunpack.c.l.b16 %v1619
      %v1876 = vunpack.c.l.b16 %v1620
      %v1877 = vunpack.c.l.b16 %v1621
      %v1878 = vunpack.c.l.b16 %v1622
      %v1879 = vunpack.c.l.b16 %v1623
      %v1880 = vunpack.c.l.b16 %v1624
      %v1881 = vunpack.c.l.b16 %v1625
      %v1882 = vunpack.c.l.b16 %v1626
      %v1883 = vunpack.c.l.b16 %v1627
      %v1884 = vunpack.c.l.b16 %v1628
      %v1885 = vunpack.c.l.b16 %v1629
      %v1886 = vunpack.c.l.b16 %v1630
      %v1887 = vunpack.c.l.b16 %v1631
      %v1888 = vunpack.c.l.b16 %v1632
      %v1889 = vunpack.c.l.b16 %v1633
      %v1890 = vunpack.c.l.b16 %v1634
      %v1891 = vunpack.c.l.b16 %v1635
      %v1892 = vunpack.c.l.b16 %v1636
      %v1893 = vunpack.c.l.b16 %v1637
      %v1894 = vunpack.c.l.b16 %v1638
      %v1895 = vunpack.c.l.b16 %v1639
      %v1896 = vunpack.c.l.b16 %v1640
      %v1897 = vunpack.c.l.b16 %v1641
      %v1898 = vunpack.c.l.b16 %v1642
      %v1899 = vunpack.c.l.b16 %v1643
      %v1900 = vunpack.c.l.b16 %v1644
      %v1901 = vunpack.c.l.b16 %v1645
      %v1902 = vunpack.c.l.b16 %v1646
      %v1903 = vunpack.c.l.b16 %v1647
      %v1904 = vunpack.c.l.b16 %v1648
      %v1905 = vunpack.c.l.b16 %v1649
      %v1906 = vunpack.c.l.b16 %v1650
      %v1907 = vunpack.c.l.b16 %v1651
      %v1908 = vunpack.c.l.b16 %v1652
      %v1909 = vunpack.c.l.b16 %v1653
      %v1910 = vunpack.c.l.b16 %v1654
      %v1911 = vunpack.c.l.b16 %v1655
      %v1912 = vunpack.c.l.b16 %v1656
      %v1913 = vunpack.c.l.b16 %v1657
      %v1914 = vunpack.c.l.b16 %v1658
      %v1915 = vunpack.c.l.b16 %v1659
      %v1916 = vunpack.c.l.b16 %v1660
      %v1917 = vunpack.c.l.b16 %v1661
      %v1918 = vunpack.c.l.b16 %v1662
      %v1919 = vunpack.c.l.b16 %v1663
      %v1920 = vunpack.c.l.b16 %v1664
      %v1921 = vunpack.c.l.b16 %v1665
      %v1922 = vunpack.c.l.b16 %v1666
      %v1923 = vunpack.c.l.b16 %v1667
      %v1924 = vunpack.c.l.b16 %v1668
      %v1925 = vunpack.c.l.b16 %v1669
      %v1926 = vunpack.c.l.b16 %v1670
      %v1927 = vunpack.c.l.b16 %v1671
      %v1928 = vunpack.c.l.b16 %v1672
      %v1929 = vunpack.c.l.b16 %v1673
      %v1930 = vunpack.c.l.b16 %v1674
      %v1931 = vunpack.c.l.b16 %v1675
      %v1932 = vunpack.c.l.b16 %v1676
      %v1933 = vunpack.c.l.b16 %v1677
      %v1934 = vunpack.c.l.b16 %v1678
      %v1935 = vunpack.c.l.b16 %v1679
      %v1936 = vunpack.c.l.b16 %v1680
      %v1937 = vunpack.c.l.b16 %v1681
      %v1938 = vunpack.c.l.b16 %v1682
      %v1939 = vunpack.c.l.b16 %v1683
      %v1940 = vunpack.c.l.b16 %v1684
      %v1941 = vunpack.c.l.b16 %v1685
      %v1942 = vunpack.c.l.b16 %v1686
      %v1943 = vunpack.c.l.b16 %v1687
      %v1944 = vunpack.c.l.b16 %v1688
      %v1945 = vunpack.c.l.b16 %v1689
      %v1946 = vunpack.c.l.b16 %v1690
      %v1947 = vunpack.c.l.b16 %v1691
      %v1948 = vunpack.c.l.b16 %v1692
      %v1949 = vunpack.c.l.b16 %v1693
      %v1950 = vunpack.c.l.b16 %v1694
      %v1951 = vunpack.c.l.b16 %v1695
      %v1952 = vunpack.c.l.b16 %v1696
      %v1953 = vunpack.c.l.b16 %v1697
      %v1954 = vunpack.c.l.b16 %v1698
      %v1955 = vunpack.c.l.b16 %v1699
      %v1956 = vunpack.c.l.b16 %v1700
      %v1957 = vunpack.c.l.b16 %v1701
      %v1958 = vunpack.c.l.b16 %v1702
      %v1959 = vunpack.c.l.b16 %v1703
      %v1960 = vunpack.c.l.b16 %v1704
      %v1961 = vunpack.c.l.b16 %v1705
      %v1962 = vunpack.c.l.b16 %v1706
      %v1963 = vunpack.c.l.b16 %v1707
      %v1964 = vunpack.c.l.b16 %v1708
      %v1965 = vunpack.c.l.b16 %v1709
      %v1966 = vunpack.c.l.b16 %v1710
      %v1967 = vunpack.c.l.b16 %v1711
      %v1968 = vunpack.c.l.b16 %v1712
      %v1969 = vunpack.c.l.b16 %v1713
      %v1970 = vunpack.c.l.b16 %v1714
      %v1971 = vunpack.c.l.b16 %v1715
      %v1972 = vunpack.c.l.b16 %v1716
      %v1973 = vunpack.c.l.b16 %v1717
      %v1974 = vunpack.c.l.b16 %v1718
      %v1975 = vunpack.c.l.b16 %v1719
      %v1976 = vunpack.c.l.b16 %v1720
      %v1977 = vunpack.c.l.b16 %v1721
      %v1978 = vunpack.c.l.b16 %v1722
      %v1979 = vunpack.c.l.b16 %v1723
      %v1980 = vunpack.c.l.b16 %v1724
      %v1981 = vunpack.c.l.b16 %v1725
      %v1982 = vunpack.c.l.b16 %v1726
      %v1983 = vunpack.c.l.b16 %v1727
      %v1984 = vunpack.c.l.b16 %v1728
      %v1985 = vunpack.c.l.b16 %v1729
      %v1986 = vpack.c.b16 %v1859, %v1858
      %v1987 = vpack.c.b16 %v1861, %v1860
      %v1988 = vpack.c.b16 %v1863, %v1862
      %v1989 = vpack.c.b16 %v1865, %v1864
      %v1990 = vpack.c.b16 %v1867, %v1866
      %v1991 = vpack.c.b16 %v1869, %v1868
      %v1992 = vpack.c.b16 %v1871, %v1870
      %v1993 = vpack.c.b16 %v1873, %v1872
      %v1994 = vpack.c.b16 %v1875, %v1874
      %v1995 = vpack.c.b16 %v1877, %v1876
      %v1996 = vpack.c.b16 %v1879, %v1878
      %v1997 = vpack.c.b16 %v1881, %v1880
      %v1998 = vpack.c.b16 %v1883, %v1882
      %v1999 = vpack.c.b16 %v1885, %v1884
      %v2000 = vpack.c.b16 %v1887, %v1886
      %v2001 = vpack.c.b16 %v1889, %v1888
      %v2002 = vpack.c.b16 %v1891, %v1890
      %v2003 = vpack.c.b16 %v1893, %v1892
      %v2004 = vpack.c.b16 %v1895, %v1894
      %v2005 = vpack.c.b16 %v1897, %v1896
      %v2006 = vpack.c.b16 %v1899, %v1898
      %v2007 = vpack.c.b16 %v1901, %v1900
      %v2008 = vpack.c.b16 %v1903, %v1902
      %v2009 = vpack.c.b16 %v1905, %v1904
      %v2010 = vpack.c.b16 %v1907, %v1906
      %v2011 = vpack.c.b16 %v1909, %v1908
      %v2012 = vpack.c.b16 %v1911, %v1910
      %v2013 = vpack.c.b16 %v1913, %v1912
      %v2014 = vpack.c.b16 %v1915, %v1914
      %v2015 = vpack.c.b16 %v1917, %v1916
      %v2016 = vpack.c.b16 %v1919, %v1918
      %v2017 = vpack.c.b16 %v1921, %v1920
      %v2018 = vpack.c.b16 %v1923, %v1922
      %v2019 = vpack.c.b16 %v1925, %v1924
      %v2020 = vpack.c.b16 %v1927, %v1926
      %v2021 = vpack.c.b16 %v1929, %v1928
      %v2022 = vpack.c.b16 %v1931, %v1930
      %v2023 = vpack.c.b16 %v1933, %v1932
      %v2024 = vpack.c.b16 %v1935, %v1934
      %v2025 = vpack.c.b16 %v1937, %v1936
      %v2026 = vpack.c.b16 %v1939, %v1938
      %v2027 = vpack.c.b16 %v1941, %v1940
      %v2028 = vpack.c.b16 %v1943, %v1942
      %v2029 = vpack.c.b16 %v1945, %v1944
      %v2030 = vpack.c.b16 %v1947, %v1946
      %v2031 = vpack.c.b16 %v1949, %v1948
      %v2032 = vpack.c.b16 %v1951, %v1950
      %v2033 = vpack.c.b16 %v1953, %v1952
      %v2034 = vpack.c.b16 %v1955, %v1954
      %v2035 = vpack.c.b16 %v1957, %v1956
      %v2036 = vpack.c.b16 %v1959, %v1958
      %v2037 = vpack.c.b16 %v1961, %v1960
      %v2038 = vpack.c.b16 %v1963, %v1962
      %v2039 = vpack.c.b16 %v1965, %v1964
      %v2040 = vpack.c.b16 %v1967, %v1966
      %v2041 = vpack.c.b16 %v1969, %v1968
      %v2042 = vpack.c.b16 %v1971, %v1970
      %v2043 = vpack.c.b16 %v1973, %v1972
      %v2044 = vpack.c.b16 %v1975, %v1974
      %v2045 = vpack.c.b16 %v1977, %v1976
      %v2046 = vpack.c.b16 %v1979, %v1978
      %v2047 = vpack.c.b16 %v1981, %v1980
      %v2048 = vpack.c.b16 %v1983, %v1982
      %v2049 = vpack.c.b16 %v1985, %v1984
      %2114 = vmatprep.subr.bf16.mxu0 0
      %2115 = vmatpush1.bf16.msra.mxu0 %v1993
      %2116 = vmatprep.subr.bf16.mxu0 0
      %2117 = vmatpush1.bf16.msra.mxu0 %v1992
      %2118 = vmatprep.subr.bf16.mxu0 0
      %2119 = vmatpush1.bf16.msra.mxu0 %v1991
      %2120 = vmatprep.subr.bf16.mxu0 0
      %2121 = vmatpush1.bf16.msra.mxu0 %v1990
      %2122 = vmatprep.subr.bf16.mxu0 0
      %2123 = vmatpush1.bf16.msra.mxu0 %v1989
      %2124 = vmatprep.subr.bf16.mxu0 0
      %2125 = vmatpush1.bf16.msra.mxu0 %v1988
      %2126 = vmatprep.subr.bf16.mxu0 0
      %2127 = vmatpush1.bf16.msra.mxu0 %v1987
      %2128 = vmatprep.subr.bf16.mxu0 0
      %2129 = vmatpush1.bf16.msra.mxu0 %v1986
      %2130 = vmatprep.subr.bf16.mxu0 0
      %2131 = vmatpush2.bf16.msra.mxu0 %v2001
      %2132 = vmatprep.subr.bf16.mxu0 0
      %2133 = vmatpush2.bf16.msra.mxu0 %v2000
      %2134 = vmatprep.subr.bf16.mxu0 0
      %2135 = vmatpush2.bf16.msra.mxu0 %v1999
      %2136 = vmatprep.subr.bf16.mxu0 0
      %2137 = vmatpush2.bf16.msra.mxu0 %v1998
      %2138 = vmatprep.subr.bf16.mxu0 0
      %2139 = vmatpush2.bf16.msra.mxu0 %v1997
      %2140 = vmatprep.subr.bf16.mxu0 0
      %2141 = vmatpush2.bf16.msra.mxu0 %v1996
      %2142 = vmatprep.subr.bf16.mxu0 0
      %2143 = vmatpush2.bf16.msra.mxu0 %v1995
      %2144 = vmatprep.subr.bf16.mxu0 0
      %2145 = vmatpush2.bf16.msra.mxu0 %v1994
      %2146 = vmatprep.mubr.bf16.mxu0 %v1443
      %2147 = vmatmul.mubr.bf16.gmra.mxu0 %v1442
      %v2148 = vpop.f32.mrf.mxu0
      %v2149 = vadd.f32 0.0, %v2148
      %v2150 = vpop.f32.mrf.mxu0
      %v2151 = vpop.f32.mrf.mxu0
      %v2152 = vadd.f32 0.0, %v2151
      %v2153 = vpop.f32.mrf.mxu0
      %2154 = vmatprep.mubr.bf16.mxu0 %v1451
      %2155 = vmatmul.mubr.bf16.gmra.mxu0 %v1450
      %v2156 = vpop.f32.mrf.mxu0
      %v2157 = vadd.f32 0.0, %v2156
      %v2158 = vpop.f32.mrf.mxu0
      %v2159 = vpop.f32.mrf.mxu0
      %v2160 = vadd.f32 0.0, %v2159
      %v2161 = vpop.f32.mrf.mxu0
      %2162 = vmatprep.mubr.bf16.mxu0 %v1459
      %2163 = vmatmul.mubr.bf16.gmra.mxu0 %v1458
      %v2164 = vpop.f32.mrf.mxu0
      %v2165 = vadd.f32 0.0, %v2164
      %v2166 = vpop.f32.mrf.mxu0
      %v2167 = vpop.f32.mrf.mxu0
      %v2168 = vadd.f32 0.0, %v2167
      %v2169 = vpop.f32.mrf.mxu0
      %2170 = vmatprep.mubr.bf16.mxu0 %v1467
      %2171 = vmatmul.mubr.bf16.gmra.mxu0 %v1466
      %v2172 = vpop.f32.mrf.mxu0
      %v2173 = vadd.f32 0.0, %v2172
      %v2174 = vpop.f32.mrf.mxu0
      %v2175 = vpop.f32.mrf.mxu0
      %v2176 = vadd.f32 0.0, %v2175
      %v2177 = vpop.f32.mrf.mxu0
      %2178 = vmatprep.mubr.bf16.mxu0 %v1475
      %2179 = vmatmul.mubr.bf16.gmra.mxu0 %v1474
      %v2180 = vpop.f32.mrf.mxu0
      %v2181 = vadd.f32 0.0, %v2180
      %v2182 = vpop.f32.mrf.mxu0
      %v2183 = vpop.f32.mrf.mxu0
      %v2184 = vadd.f32 0.0, %v2183
      %v2185 = vpop.f32.mrf.mxu0
      %2186 = vmatprep.mubr.bf16.mxu0 %v1483
      %2187 = vmatmul.mubr.bf16.gmra.mxu0 %v1482
      %v2188 = vpop.f32.mrf.mxu0
      %v2189 = vadd.f32 0.0, %v2188
      %v2190 = vpop.f32.mrf.mxu0
      %v2191 = vpop.f32.mrf.mxu0
      %v2192 = vadd.f32 0.0, %v2191
      %v2193 = vpop.f32.mrf.mxu0
      %2194 = vmatprep.mubr.bf16.mxu0 %v1491
      %2195 = vmatmul.mubr.bf16.gmra.mxu0 %v1490
      %v2196 = vpop.f32.mrf.mxu0
      %v2197 = vadd.f32 0.0, %v2196
      %v2198 = vpop.f32.mrf.mxu0
      %v2199 = vpop.f32.mrf.mxu0
      %v2200 = vadd.f32 0.0, %v2199
      %v2201 = vpop.f32.mrf.mxu0
      %2202 = vmatprep.mubr.bf16.mxu0 %v1499
      %2203 = vmatmul.mubr.bf16.gmra.mxu0 %v1498
      %v2204 = vpop.f32.mrf.mxu0
      %v2205 = vadd.f32 0.0, %v2204
      %v2206 = vpop.f32.mrf.mxu0
      %v2207 = vpop.f32.mrf.mxu0
      %v2208 = vadd.f32 0.0, %v2207
      %v2209 = vpop.f32.mrf.mxu0
      %2210 = vmatprep.mubr.bf16.mxu0 %v1507
      %2211 = vmatmul.mubr.bf16.gmra.mxu0 %v1506
      %v2212 = vpop.f32.mrf.mxu0
      %v2213 = vadd.f32 0.0, %v2212
      %v2214 = vpop.f32.mrf.mxu0
      %v2215 = vpop.f32.mrf.mxu0
      %v2216 = vadd.f32 0.0, %v2215
      %v2217 = vpop.f32.mrf.mxu0
      %2218 = vmatprep.mubr.bf16.mxu0 %v1515
      %2219 = vmatmul.mubr.bf16.gmra.mxu0 %v1514
      %v2220 = vpop.f32.mrf.mxu0
      %v2221 = vadd.f32 0.0, %v2220
      %v2222 = vpop.f32.mrf.mxu0
      %v2223 = vpop.f32.mrf.mxu0
      %v2224 = vadd.f32 0.0, %v2223
      %v2225 = vpop.f32.mrf.mxu0
      %2226 = vmatprep.mubr.bf16.mxu0 %v1523
      %2227 = vmatmul.mubr.bf16.gmra.mxu0 %v1522
      %v2228 = vpop.f32.mrf.mxu0
      %v2229 = vadd.f32 0.0, %v2228
      %v2230 = vpop.f32.mrf.mxu0
      %v2231 = vpop.f32.mrf.mxu0
      %v2232 = vadd.f32 0.0, %v2231
      %v2233 = vpop.f32.mrf.mxu0
      %2234 = vmatprep.mubr.bf16.mxu0 %v1531
      %2235 = vmatmul.mubr.bf16.gmra.mxu0 %v1530
      %v2236 = vpop.f32.mrf.mxu0
      %v2237 = vadd.f32 0.0, %v2236
      %v2238 = vpop.f32.mrf.mxu0
      %v2239 = vpop.f32.mrf.mxu0
      %v2240 = vadd.f32 0.0, %v2239
      %v2241 = vpop.f32.mrf.mxu0
      %2242 = vmatprep.mubr.bf16.mxu0 %v1539
      %2243 = vmatmul.mubr.bf16.gmra.mxu0 %v1538
      %v2244 = vpop.f32.mrf.mxu0
      %v2245 = vadd.f32 0.0, %v2244
      %v2246 = vpop.f32.mrf.mxu0
      %v2247 = vpop.f32.mrf.mxu0
      %v2248 = vadd.f32 0.0, %v2247
      %v2249 = vpop.f32.mrf.mxu0
      %2250 = vmatprep.mubr.bf16.mxu0 %v1547
      %2251 = vmatmul.mubr.bf16.gmra.mxu0 %v1546
      %v2252 = vpop.f32.mrf.mxu0
      %v2253 = vadd.f32 0.0, %v2252
      %v2254 = vpop.f32.mrf.mxu0
      %v2255 = vpop.f32.mrf.mxu0
      %v2256 = vadd.f32 0.0, %v2255
      %v2257 = vpop.f32.mrf.mxu0
      %2258 = vmatprep.mubr.bf16.mxu0 %v1555
      %2259 = vmatmul.mubr.bf16.gmra.mxu0 %v1554
      %v2260 = vpop.f32.mrf.mxu0
      %v2261 = vadd.f32 0.0, %v2260
      %v2262 = vpop.f32.mrf.mxu0
      %v2263 = vpop.f32.mrf.mxu0
      %v2264 = vadd.f32 0.0, %v2263
      %v2265 = vpop.f32.mrf.mxu0
      %2266 = vmatprep.mubr.bf16.mxu0 %v1563
      %2267 = vmatmul.mubr.bf16.gmra.mxu0 %v1562
      %v2268 = vpop.f32.mrf.mxu0
      %v2269 = vadd.f32 0.0, %v2268
      %v2270 = vpop.f32.mrf.mxu0
      %v2271 = vpop.f32.mrf.mxu0
      %v2272 = vadd.f32 0.0, %v2271
      %v2273 = vpop.f32.mrf.mxu0
      %2274 = vdwg.mxu0
      %2275 = vmatprep.subr.bf16.mxu0 0
      %2276 = vmatpush1.bf16.msra.mxu0 %v2009
      %2277 = vmatprep.subr.bf16.mxu0 0
      %2278 = vmatpush1.bf16.msra.mxu0 %v2008
      %2279 = vmatprep.subr.bf16.mxu0 0
      %2280 = vmatpush1.bf16.msra.mxu0 %v2007
      %2281 = vmatprep.subr.bf16.mxu0 0
      %2282 = vmatpush1.bf16.msra.mxu0 %v2006
      %2283 = vmatprep.subr.bf16.mxu0 0
      %2284 = vmatpush1.bf16.msra.mxu0 %v2005
      %2285 = vmatprep.subr.bf16.mxu0 0
      %2286 = vmatpush1.bf16.msra.mxu0 %v2004
      %2287 = vmatprep.subr.bf16.mxu0 0
      %2288 = vmatpush1.bf16.msra.mxu0 %v2003
      %2289 = vmatprep.subr.bf16.mxu0 0
      %2290 = vmatpush1.bf16.msra.mxu0 %v2002
      %2291 = vmatprep.subr.bf16.mxu0 0
      %2292 = vmatpush2.bf16.msra.mxu0 %v2017
      %2293 = vmatprep.subr.bf16.mxu0 0
      %2294 = vmatpush2.bf16.msra.mxu0 %v2016
      %2295 = vmatprep.subr.bf16.mxu0 0
      %2296 = vmatpush2.bf16.msra.mxu0 %v2015
      %2297 = vmatprep.subr.bf16.mxu0 0
      %2298 = vmatpush2.bf16.msra.mxu0 %v2014
      %2299 = vmatprep.subr.bf16.mxu0 0
      %2300 = vmatpush2.bf16.msra.mxu0 %v2013
      %2301 = vmatprep.subr.bf16.mxu0 0
      %2302 = vmatpush2.bf16.msra.mxu0 %v2012
      %2303 = vmatprep.subr.bf16.mxu0 0
      %2304 = vmatpush2.bf16.msra.mxu0 %v2011
      %2305 = vmatprep.subr.bf16.mxu0 0
      %2306 = vmatpush2.bf16.msra.mxu0 %v2010
      %2307 = vmatprep.mubr.bf16.mxu0 %v1445
      %2308 = vmatmul.mubr.bf16.gmra.mxu0 %v1444
      %v2309 = vpop.f32.mrf.mxu0
      %v2310 = vadd.f32 %v2149, %v2309
      %v2311 = vpop.f32.mrf.mxu0
      %v2312 = vpop.f32.mrf.mxu0
      %v2313 = vadd.f32 %v2152, %v2312
      %v2314 = vpop.f32.mrf.mxu0
      %2315 = vmatprep.mubr.bf16.mxu0 %v1453
      %2316 = vmatmul.mubr.bf16.gmra.mxu0 %v1452
      %v2317 = vpop.f32.mrf.mxu0
      %v2318 = vadd.f32 %v2157, %v2317
      %v2319 = vpop.f32.mrf.mxu0
      %v2320 = vpop.f32.mrf.mxu0
      %v2321 = vadd.f32 %v2160, %v2320
      %v2322 = vpop.f32.mrf.mxu0
      %2323 = vmatprep.mubr.bf16.mxu0 %v1461
      %2324 = vmatmul.mubr.bf16.gmra.mxu0 %v1460
      %v2325 = vpop.f32.mrf.mxu0
      %v2326 = vadd.f32 %v2165, %v2325
      %v2327 = vpop.f32.mrf.mxu0
      %v2328 = vpop.f32.mrf.mxu0
      %v2329 = vadd.f32 %v2168, %v2328
      %v2330 = vpop.f32.mrf.mxu0
      %2331 = vmatprep.mubr.bf16.mxu0 %v1469
      %2332 = vmatmul.mubr.bf16.gmra.mxu0 %v1468
      %v2333 = vpop.f32.mrf.mxu0
      %v2334 = vadd.f32 %v2173, %v2333
      %v2335 = vpop.f32.mrf.mxu0
      %v2336 = vpop.f32.mrf.mxu0
      %v2337 = vadd.f32 %v2176, %v2336
      %v2338 = vpop.f32.mrf.mxu0
      %2339 = vmatprep.mubr.bf16.mxu0 %v1477
      %2340 = vmatmul.mubr.bf16.gmra.mxu0 %v1476
      %v2341 = vpop.f32.mrf.mxu0
      %v2342 = vadd.f32 %v2181, %v2341
      %v2343 = vpop.f32.mrf.mxu0
      %v2344 = vpop.f32.mrf.mxu0
      %v2345 = vadd.f32 %v2184, %v2344
      %v2346 = vpop.f32.mrf.mxu0
      %2347 = vmatprep.mubr.bf16.mxu0 %v1485
      %2348 = vmatmul.mubr.bf16.gmra.mxu0 %v1484
      %v2349 = vpop.f32.mrf.mxu0
      %v2350 = vadd.f32 %v2189, %v2349
      %v2351 = vpop.f32.mrf.mxu0
      %v2352 = vpop.f32.mrf.mxu0
      %v2353 = vadd.f32 %v2192, %v2352
      %v2354 = vpop.f32.mrf.mxu0
      %2355 = vmatprep.mubr.bf16.mxu0 %v1493
      %2356 = vmatmul.mubr.bf16.gmra.mxu0 %v1492
      %v2357 = vpop.f32.mrf.mxu0
      %v2358 = vadd.f32 %v2197, %v2357
      %v2359 = vpop.f32.mrf.mxu0
      %v2360 = vpop.f32.mrf.mxu0
      %v2361 = vadd.f32 %v2200, %v2360
      %v2362 = vpop.f32.mrf.mxu0
      %2363 = vmatprep.mubr.bf16.mxu0 %v1501
      %2364 = vmatmul.mubr.bf16.gmra.mxu0 %v1500
      %v2365 = vpop.f32.mrf.mxu0
      %v2366 = vadd.f32 %v2205, %v2365
      %v2367 = vpop.f32.mrf.mxu0
      %v2368 = vpop.f32.mrf.mxu0
      %v2369 = vadd.f32 %v2208, %v2368
      %v2370 = vpop.f32.mrf.mxu0
      %2371 = vmatprep.mubr.bf16.mxu0 %v1509
      %2372 = vmatmul.mubr.bf16.gmra.mxu0 %v1508
      %v2373 = vpop.f32.mrf.mxu0
      %v2374 = vadd.f32 %v2213, %v2373
      %v2375 = vpop.f32.mrf.mxu0
      %v2376 = vpop.f32.mrf.mxu0
      %v2377 = vadd.f32 %v2216, %v2376
      %v2378 = vpop.f32.mrf.mxu0
      %2379 = vmatprep.mubr.bf16.mxu0 %v1517
      %2380 = vmatmul.mubr.bf16.gmra.mxu0 %v1516
      %v2381 = vpop.f32.mrf.mxu0
      %v2382 = vadd.f32 %v2221, %v2381
      %v2383 = vpop.f32.mrf.mxu0
      %v2384 = vpop.f32.mrf.mxu0
      %v2385 = vadd.f32 %v2224, %v2384
      %v2386 = vpop.f32.mrf.mxu0
      %2387 = vmatprep.mubr.bf16.mxu0 %v1525
      %2388 = vmatmul.mubr.bf16.gmra.mxu0 %v1524
      %v2389 = vpop.f32.mrf.mxu0
      %v2390 = vadd.f32 %v2229, %v2389
      %v2391 = vpop.f32.mrf.mxu0
      %v2392 = vpop.f32.mrf.mxu0
      %v2393 = vadd.f32 %v2232, %v2392
      %v2394 = vpop.f32.mrf.mxu0
      %2395 = vmatprep.mubr.bf16.mxu0 %v1533
      %2396 = vmatmul.mubr.bf16.gmra.mxu0 %v1532
      %v2397 = vpop.f32.mrf.mxu0
      %v2398 = vadd.f32 %v2237, %v2397
      %v2399 = vpop.f32.mrf.mxu0
      %v2400 = vpop.f32.mrf.mxu0
      %v2401 = vadd.f32 %v2240, %v2400
      %v2402 = vpop.f32.mrf.mxu0
      %2403 = vmatprep.mubr.bf16.mxu0 %v1541
      %2404 = vmatmul.mubr.bf16.gmra.mxu0 %v1540
      %v2405 = vpop.f32.mrf.mxu0
      %v2406 = vadd.f32 %v2245, %v2405
      %v2407 = vpop.f32.mrf.mxu0
      %v2408 = vpop.f32.mrf.mxu0
      %v2409 = vadd.f32 %v2248, %v2408
      %v2410 = vpop.f32.mrf.mxu0
      %2411 = vmatprep.mubr.bf16.mxu0 %v1549
      %2412 = vmatmul.mubr.bf16.gmra.mxu0 %v1548
      %v2413 = vpop.f32.mrf.mxu0
      %v2414 = vadd.f32 %v2253, %v2413
      %v2415 = vpop.f32.mrf.mxu0
      %v2416 = vpop.f32.mrf.mxu0
      %v2417 = vadd.f32 %v2256, %v2416
      %v2418 = vpop.f32.mrf.mxu0
      %2419 = vmatprep.mubr.bf16.mxu0 %v1557
      %2420 = vmatmul.mubr.bf16.gmra.mxu0 %v1556
      %v2421 = vpop.f32.mrf.mxu0
      %v2422 = vadd.f32 %v2261, %v2421
      %v2423 = vpop.f32.mrf.mxu0
      %v2424 = vpop.f32.mrf.mxu0
      %v2425 = vadd.f32 %v2264, %v2424
      %v2426 = vpop.f32.mrf.mxu0
      %2427 = vmatprep.mubr.bf16.mxu0 %v1565
      %2428 = vmatmul.mubr.bf16.gmra.mxu0 %v1564
      %v2429 = vpop.f32.mrf.mxu0
      %v2430 = vadd.f32 %v2269, %v2429
      %v2431 = vpop.f32.mrf.mxu0
      %v2432 = vpop.f32.mrf.mxu0
      %v2433 = vadd.f32 %v2272, %v2432
      %v2434 = vpop.f32.mrf.mxu0
      %2435 = vdwg.mxu0
      %2436 = vmatprep.subr.bf16.mxu0 0
      %2437 = vmatpush1.bf16.msra.mxu0 %v2025
      %2438 = vmatprep.subr.bf16.mxu0 0
      %2439 = vmatpush1.bf16.msra.mxu0 %v2024
      %2440 = vmatprep.subr.bf16.mxu0 0
      %2441 = vmatpush1.bf16.msra.mxu0 %v2023
      %2442 = vmatprep.subr.bf16.mxu0 0
      %2443 = vmatpush1.bf16.msra.mxu0 %v2022
      %2444 = vmatprep.subr.bf16.mxu0 0
      %2445 = vmatpush1.bf16.msra.mxu0 %v2021
      %2446 = vmatprep.subr.bf16.mxu0 0
      %2447 = vmatpush1.bf16.msra.mxu0 %v2020
      %2448 = vmatprep.subr.bf16.mxu0 0
      %2449 = vmatpush1.bf16.msra.mxu0 %v2019
      %2450 = vmatprep.subr.bf16.mxu0 0
      %2451 = vmatpush1.bf16.msra.mxu0 %v2018
      %2452 = vmatprep.subr.bf16.mxu0 0
      %2453 = vmatpush2.bf16.msra.mxu0 %v2033
      %2454 = vmatprep.subr.bf16.mxu0 0
      %2455 = vmatpush2.bf16.msra.mxu0 %v2032
      %2456 = vmatprep.subr.bf16.mxu0 0
      %2457 = vmatpush2.bf16.msra.mxu0 %v2031
      %2458 = vmatprep.subr.bf16.mxu0 0
      %2459 = vmatpush2.bf16.msra.mxu0 %v2030
      %2460 = vmatprep.subr.bf16.mxu0 0
      %2461 = vmatpush2.bf16.msra.mxu0 %v2029
      %2462 = vmatprep.subr.bf16.mxu0 0
      %2463 = vmatpush2.bf16.msra.mxu0 %v2028
      %2464 = vmatprep.subr.bf16.mxu0 0
      %2465 = vmatpush2.bf16.msra.mxu0 %v2027
      %2466 = vmatprep.subr.bf16.mxu0 0
      %2467 = vmatpush2.bf16.msra.mxu0 %v2026
      %2468 = vmatprep.mubr.bf16.mxu0 %v1447
      %2469 = vmatmul.mubr.bf16.gmra.mxu0 %v1446
      %v2470 = vpop.f32.mrf.mxu0
      %v2471 = vadd.f32 %v2310, %v2470
      %v2472 = vpop.f32.mrf.mxu0
      %v2473 = vpop.f32.mrf.mxu0
      %v2474 = vadd.f32 %v2313, %v2473
      %v2475 = vpop.f32.mrf.mxu0
      %2476 = vmatprep.mubr.bf16.mxu0 %v1455
      %2477 = vmatmul.mubr.bf16.gmra.mxu0 %v1454
      %v2478 = vpop.f32.mrf.mxu0
      %v2479 = vadd.f32 %v2318, %v2478
      %v2480 = vpop.f32.mrf.mxu0
      %v2481 = vpop.f32.mrf.mxu0
      %v2482 = vadd.f32 %v2321, %v2481
      %v2483 = vpop.f32.mrf.mxu0
      %2484 = vmatprep.mubr.bf16.mxu0 %v1463
      %2485 = vmatmul.mubr.bf16.gmra.mxu0 %v1462
      %v2486 = vpop.f32.mrf.mxu0
      %v2487 = vadd.f32 %v2326, %v2486
      %v2488 = vpop.f32.mrf.mxu0
      %v2489 = vpop.f32.mrf.mxu0
      %v2490 = vadd.f32 %v2329, %v2489
      %v2491 = vpop.f32.mrf.mxu0
      %2492 = vmatprep.mubr.bf16.mxu0 %v1471
      %2493 = vmatmul.mubr.bf16.gmra.mxu0 %v1470
      %v2494 = vpop.f32.mrf.mxu0
      %v2495 = vadd.f32 %v2334, %v2494
      %v2496 = vpop.f32.mrf.mxu0
      %v2497 = vpop.f32.mrf.mxu0
      %v2498 = vadd.f32 %v2337, %v2497
      %v2499 = vpop.f32.mrf.mxu0
      %2500 = vmatprep.mubr.bf16.mxu0 %v1479
      %2501 = vmatmul.mubr.bf16.gmra.mxu0 %v1478
      %v2502 = vpop.f32.mrf.mxu0
      %v2503 = vadd.f32 %v2342, %v2502
      %v2504 = vpop.f32.mrf.mxu0
      %v2505 = vpop.f32.mrf.mxu0
      %v2506 = vadd.f32 %v2345, %v2505
      %v2507 = vpop.f32.mrf.mxu0
      %2508 = vmatprep.mubr.bf16.mxu0 %v1487
      %2509 = vmatmul.mubr.bf16.gmra.mxu0 %v1486
      %v2510 = vpop.f32.mrf.mxu0
      %v2511 = vadd.f32 %v2350, %v2510
      %v2512 = vpop.f32.mrf.mxu0
      %v2513 = vpop.f32.mrf.mxu0
      %v2514 = vadd.f32 %v2353, %v2513
      %v2515 = vpop.f32.mrf.mxu0
      %2516 = vmatprep.mubr.bf16.mxu0 %v1495
      %2517 = vmatmul.mubr.bf16.gmra.mxu0 %v1494
      %v2518 = vpop.f32.mrf.mxu0
      %v2519 = vadd.f32 %v2358, %v2518
      %v2520 = vpop.f32.mrf.mxu0
      %v2521 = vpop.f32.mrf.mxu0
      %v2522 = vadd.f32 %v2361, %v2521
      %v2523 = vpop.f32.mrf.mxu0
      %2524 = vmatprep.mubr.bf16.mxu0 %v1503
      %2525 = vmatmul.mubr.bf16.gmra.mxu0 %v1502
      %v2526 = vpop.f32.mrf.mxu0
      %v2527 = vadd.f32 %v2366, %v2526
      %v2528 = vpop.f32.mrf.mxu0
      %v2529 = vpop.f32.mrf.mxu0
      %v2530 = vadd.f32 %v2369, %v2529
      %v2531 = vpop.f32.mrf.mxu0
      %2532 = vmatprep.mubr.bf16.mxu0 %v1511
      %2533 = vmatmul.mubr.bf16.gmra.mxu0 %v1510
      %v2534 = vpop.f32.mrf.mxu0
      %v2535 = vadd.f32 %v2374, %v2534
      %v2536 = vpop.f32.mrf.mxu0
      %v2537 = vpop.f32.mrf.mxu0
      %v2538 = vadd.f32 %v2377, %v2537
      %v2539 = vpop.f32.mrf.mxu0
      %2540 = vmatprep.mubr.bf16.mxu0 %v1519
      %2541 = vmatmul.mubr.bf16.gmra.mxu0 %v1518
      %v2542 = vpop.f32.mrf.mxu0
      %v2543 = vadd.f32 %v2382, %v2542
      %v2544 = vpop.f32.mrf.mxu0
      %v2545 = vpop.f32.mrf.mxu0
      %v2546 = vadd.f32 %v2385, %v2545
      %v2547 = vpop.f32.mrf.mxu0
      %2548 = vmatprep.mubr.bf16.mxu0 %v1527
      %2549 = vmatmul.mubr.bf16.gmra.mxu0 %v1526
      %v2550 = vpop.f32.mrf.mxu0
      %v2551 = vadd.f32 %v2390, %v2550
      %v2552 = vpop.f32.mrf.mxu0
      %v2553 = vpop.f32.mrf.mxu0
      %v2554 = vadd.f32 %v2393, %v2553
      %v2555 = vpop.f32.mrf.mxu0
      %2556 = vmatprep.mubr.bf16.mxu0 %v1535
      %2557 = vmatmul.mubr.bf16.gmra.mxu0 %v1534
      %v2558 = vpop.f32.mrf.mxu0
      %v2559 = vadd.f32 %v2398, %v2558
      %v2560 = vpop.f32.mrf.mxu0
      %v2561 = vpop.f32.mrf.mxu0
      %v2562 = vadd.f32 %v2401, %v2561
      %v2563 = vpop.f32.mrf.mxu0
      %2564 = vmatprep.mubr.bf16.mxu0 %v1543
      %2565 = vmatmul.mubr.bf16.gmra.mxu0 %v1542
      %v2566 = vpop.f32.mrf.mxu0
      %v2567 = vadd.f32 %v2406, %v2566
      %v2568 = vpop.f32.mrf.mxu0
      %v2569 = vpop.f32.mrf.mxu0
      %v2570 = vadd.f32 %v2409, %v2569
      %v2571 = vpop.f32.mrf.mxu0
      %2572 = vmatprep.mubr.bf16.mxu0 %v1551
      %2573 = vmatmul.mubr.bf16.gmra.mxu0 %v1550
      %v2574 = vpop.f32.mrf.mxu0
      %v2575 = vadd.f32 %v2414, %v2574
      %v2576 = vpop.f32.mrf.mxu0
      %v2577 = vpop.f32.mrf.mxu0
      %v2578 = vadd.f32 %v2417, %v2577
      %v2579 = vpop.f32.mrf.mxu0
      %2580 = vmatprep.mubr.bf16.mxu0 %v1559
      %2581 = vmatmul.mubr.bf16.gmra.mxu0 %v1558
      %v2582 = vpop.f32.mrf.mxu0
      %v2583 = vadd.f32 %v2422, %v2582
      %v2584 = vpop.f32.mrf.mxu0
      %v2585 = vpop.f32.mrf.mxu0
      %v2586 = vadd.f32 %v2425, %v2585
      %v2587 = vpop.f32.mrf.mxu0
      %2588 = vmatprep.mubr.bf16.mxu0 %v1567
      %2589 = vmatmul.mubr.bf16.gmra.mxu0 %v1566
      %v2590 = vpop.f32.mrf.mxu0
      %v2591 = vadd.f32 %v2430, %v2590
      %v2592 = vpop.f32.mrf.mxu0
      %v2593 = vpop.f32.mrf.mxu0
      %v2594 = vadd.f32 %v2433, %v2593
      %v2595 = vpop.f32.mrf.mxu0
      %2596 = vdwg.mxu0
      %2597 = vmatprep.subr.bf16.mxu0 0
      %2598 = vmatpush1.bf16.msra.mxu0 %v2041
      %2599 = vmatprep.subr.bf16.mxu0 0
      %2600 = vmatpush1.bf16.msra.mxu0 %v2040
      %2601 = vmatprep.subr.bf16.mxu0 0
      %2602 = vmatpush1.bf16.msra.mxu0 %v2039
      %2603 = vmatprep.subr.bf16.mxu0 0
      %2604 = vmatpush1.bf16.msra.mxu0 %v2038
      %2605 = vmatprep.subr.bf16.mxu0 0
      %2606 = vmatpush1.bf16.msra.mxu0 %v2037
      %2607 = vmatprep.subr.bf16.mxu0 0
      %2608 = vmatpush1.bf16.msra.mxu0 %v2036
      %2609 = vmatprep.subr.bf16.mxu0 0
      %2610 = vmatpush1.bf16.msra.mxu0 %v2035
      %2611 = vmatprep.subr.bf16.mxu0 0
      %2612 = vmatpush1.bf16.msra.mxu0 %v2034
      %2613 = vmatprep.subr.bf16.mxu0 0
      %2614 = vmatpush2.bf16.msra.mxu0 %v2049
      %2615 = vmatprep.subr.bf16.mxu0 0
      %2616 = vmatpush2.bf16.msra.mxu0 %v2048
      %2617 = vmatprep.subr.bf16.mxu0 0
      %2618 = vmatpush2.bf16.msra.mxu0 %v2047
      %2619 = vmatprep.subr.bf16.mxu0 0
      %2620 = vmatpush2.bf16.msra.mxu0 %v2046
      %2621 = vmatprep.subr.bf16.mxu0 0
      %2622 = vmatpush2.bf16.msra.mxu0 %v2045
      %2623 = vmatprep.subr.bf16.mxu0 0
      %2624 = vmatpush2.bf16.msra.mxu0 %v2044
      %2625 = vmatprep.subr.bf16.mxu0 0
      %2626 = vmatpush2.bf16.msra.mxu0 %v2043
      %2627 = vmatprep.subr.bf16.mxu0 0
      %2628 = vmatpush2.bf16.msra.mxu0 %v2042
      %2629 = vmatprep.mubr.bf16.mxu0 %v1449
      %2630 = vmatmul.mubr.bf16.gmra.mxu0 %v1448
      %v2631 = vpop.f32.mrf.mxu0
      %v2632 = vadd.f32 %v2471, %v2631
      %v2633 = vpop.f32.mrf.mxu0
      %v2634 = vpop.f32.mrf.mxu0
      %v2635 = vadd.f32 %v2474, %v2634
      %v2636 = vpop.f32.mrf.mxu0
      %2637 = vmatprep.mubr.bf16.mxu0 %v1457
      %2638 = vmatmul.mubr.bf16.gmra.mxu0 %v1456
      %v2639 = vpop.f32.mrf.mxu0
      %v2640 = vadd.f32 %v2479, %v2639
      %v2641 = vpop.f32.mrf.mxu0
      %v2642 = vpop.f32.mrf.mxu0
      %v2643 = vadd.f32 %v2482, %v2642
      %v2644 = vpop.f32.mrf.mxu0
      %2645 = vmatprep.mubr.bf16.mxu0 %v1465
      %2646 = vmatmul.mubr.bf16.gmra.mxu0 %v1464
      %v2647 = vpop.f32.mrf.mxu0
      %v2648 = vadd.f32 %v2487, %v2647
      %v2649 = vpop.f32.mrf.mxu0
      %v2650 = vpop.f32.mrf.mxu0
      %v2651 = vadd.f32 %v2490, %v2650
      %v2652 = vpop.f32.mrf.mxu0
      %2653 = vmatprep.mubr.bf16.mxu0 %v1473
      %2654 = vmatmul.mubr.bf16.gmra.mxu0 %v1472
      %v2655 = vpop.f32.mrf.mxu0
      %v2656 = vadd.f32 %v2495, %v2655
      %v2657 = vpop.f32.mrf.mxu0
      %v2658 = vpop.f32.mrf.mxu0
      %v2659 = vadd.f32 %v2498, %v2658
      %v2660 = vpop.f32.mrf.mxu0
      %2661 = vmatprep.mubr.bf16.mxu0 %v1481
      %2662 = vmatmul.mubr.bf16.gmra.mxu0 %v1480
      %v2663 = vpop.f32.mrf.mxu0
      %v2664 = vadd.f32 %v2503, %v2663
      %v2665 = vpop.f32.mrf.mxu0
      %v2666 = vpop.f32.mrf.mxu0
      %v2667 = vadd.f32 %v2506, %v2666
      %v2668 = vpop.f32.mrf.mxu0
      %2669 = vmatprep.mubr.bf16.mxu0 %v1489
      %2670 = vmatmul.mubr.bf16.gmra.mxu0 %v1488
      %v2671 = vpop.f32.mrf.mxu0
      %v2672 = vadd.f32 %v2511, %v2671
      %v2673 = vpop.f32.mrf.mxu0
      %v2674 = vpop.f32.mrf.mxu0
      %v2675 = vadd.f32 %v2514, %v2674
      %v2676 = vpop.f32.mrf.mxu0
      %2677 = vmatprep.mubr.bf16.mxu0 %v1497
      %2678 = vmatmul.mubr.bf16.gmra.mxu0 %v1496
      %v2679 = vpop.f32.mrf.mxu0
      %v2680 = vadd.f32 %v2519, %v2679
      %v2681 = vpop.f32.mrf.mxu0
      %v2682 = vpop.f32.mrf.mxu0
      %v2683 = vadd.f32 %v2522, %v2682
      %v2684 = vpop.f32.mrf.mxu0
      %2685 = vmatprep.mubr.bf16.mxu0 %v1505
      %2686 = vmatmul.mubr.bf16.gmra.mxu0 %v1504
      %v2687 = vpop.f32.mrf.mxu0
      %v2688 = vadd.f32 %v2527, %v2687
      %v2689 = vpop.f32.mrf.mxu0
      %v2690 = vpop.f32.mrf.mxu0
      %v2691 = vadd.f32 %v2530, %v2690
      %v2692 = vpop.f32.mrf.mxu0
      %2693 = vmatprep.mubr.bf16.mxu0 %v1513
      %2694 = vmatmul.mubr.bf16.gmra.mxu0 %v1512
      %v2695 = vpop.f32.mrf.mxu0
      %v2696 = vadd.f32 %v2535, %v2695
      %v2697 = vpop.f32.mrf.mxu0
      %v2698 = vpop.f32.mrf.mxu0
      %v2699 = vadd.f32 %v2538, %v2698
      %v2700 = vpop.f32.mrf.mxu0
      %2701 = vmatprep.mubr.bf16.mxu0 %v1521
      %2702 = vmatmul.mubr.bf16.gmra.mxu0 %v1520
      %v2703 = vpop.f32.mrf.mxu0
      %v2704 = vadd.f32 %v2543, %v2703
      %v2705 = vpop.f32.mrf.mxu0
      %v2706 = vpop.f32.mrf.mxu0
      %v2707 = vadd.f32 %v2546, %v2706
      %v2708 = vpop.f32.mrf.mxu0
      %2709 = vmatprep.mubr.bf16.mxu0 %v1529
      %2710 = vmatmul.mubr.bf16.gmra.mxu0 %v1528
      %v2711 = vpop.f32.mrf.mxu0
      %v2712 = vadd.f32 %v2551, %v2711
      %v2713 = vpop.f32.mrf.mxu0
      %v2714 = vpop.f32.mrf.mxu0
      %v2715 = vadd.f32 %v2554, %v2714
      %v2716 = vpop.f32.mrf.mxu0
      %2717 = vmatprep.mubr.bf16.mxu0 %v1537
      %2718 = vmatmul.mubr.bf16.gmra.mxu0 %v1536
      %v2719 = vpop.f32.mrf.mxu0
      %v2720 = vadd.f32 %v2559, %v2719
      %v2721 = vpop.f32.mrf.mxu0
      %v2722 = vpop.f32.mrf.mxu0
      %v2723 = vadd.f32 %v2562, %v2722
      %v2724 = vpop.f32.mrf.mxu0
      %2725 = vmatprep.mubr.bf16.mxu0 %v1545
      %2726 = vmatmul.mubr.bf16.gmra.mxu0 %v1544
      %v2727 = vpop.f32.mrf.mxu0
      %v2728 = vadd.f32 %v2567, %v2727
      %v2729 = vpop.f32.mrf.mxu0
      %v2730 = vpop.f32.mrf.mxu0
      %v2731 = vadd.f32 %v2570, %v2730
      %v2732 = vpop.f32.mrf.mxu0
      %2733 = vmatprep.mubr.bf16.mxu0 %v1553
      %2734 = vmatmul.mubr.bf16.gmra.mxu0 %v1552
      %v2735 = vpop.f32.mrf.mxu0
      %v2736 = vadd.f32 %v2575, %v2735
      %v2737 = vpop.f32.mrf.mxu0
      %v2738 = vpop.f32.mrf.mxu0
      %v2739 = vadd.f32 %v2578, %v2738
      %v2740 = vpop.f32.mrf.mxu0
      %2741 = vmatprep.mubr.bf16.mxu0 %v1561
      %2742 = vmatmul.mubr.bf16.gmra.mxu0 %v1560
      %v2743 = vpop.f32.mrf.mxu0
      %v2744 = vadd.f32 %v2583, %v2743
      %v2745 = vpop.f32.mrf.mxu0
      %v2746 = vpop.f32.mrf.mxu0
      %v2747 = vadd.f32 %v2586, %v2746
      %v2748 = vpop.f32.mrf.mxu0
      %2749 = vmatprep.mubr.bf16.mxu0 %v1569
      %2750 = vmatmul.mubr.bf16.gmra.mxu0 %v1568
      %v2751 = vpop.f32.mrf.mxu0
      %v2752 = vadd.f32 %v2591, %v2751
      %v2753 = vpop.f32.mrf.mxu0
      %v2754 = vpop.f32.mrf.mxu0
      %v2755 = vadd.f32 %v2594, %v2754
      %v2756 = vpop.f32.mrf.mxu0
      %2757 = vdwg.mxu0
      %v2758 = vadd.f32 %v1570, %v2632
      %v2759 = vadd.f32 %v1571, %v2635
      %v2760 = vadd.f32 %v1572, %v2640
      %v2761 = vadd.f32 %v1573, %v2643
      %v2762 = vadd.f32 %v1574, %v2648
      %v2763 = vadd.f32 %v1575, %v2651
      %v2764 = vadd.f32 %v1576, %v2656
      %v2765 = vadd.f32 %v1577, %v2659
      %v2766 = vadd.f32 %v1578, %v2664
      %v2767 = vadd.f32 %v1579, %v2667
      %v2768 = vadd.f32 %v1580, %v2672
      %v2769 = vadd.f32 %v1581, %v2675
      %v2770 = vadd.f32 %v1582, %v2680
      %v2771 = vadd.f32 %v1583, %v2683
      %v2772 = vadd.f32 %v1584, %v2688
      %v2773 = vadd.f32 %v1585, %v2691
      %v2774 = vadd.f32 %v1586, %v2696
      %v2775 = vadd.f32 %v1587, %v2699
      %v2776 = vadd.f32 %v1588, %v2704
      %v2777 = vadd.f32 %v1589, %v2707
      %v2778 = vadd.f32 %v1590, %v2712
      %v2779 = vadd.f32 %v1591, %v2715
      %v2780 = vadd.f32 %v1592, %v2720
      %v2781 = vadd.f32 %v1593, %v2723
      %v2782 = vadd.f32 %v1594, %v2728
      %v2783 = vadd.f32 %v1595, %v2731
      %v2784 = vadd.f32 %v1596, %v2736
      %v2785 = vadd.f32 %v1597, %v2739
      %v2786 = vadd.f32 %v1598, %v2744
      %v2787 = vadd.f32 %v1599, %v2747
      %v2788 = vadd.f32 %v1600, %v2752
      %v2789 = vadd.f32 %v1601, %v2755
      %2790 = vst [vmem:[%s441] sm:$0xff] %v2758
      %2791 = vst [vmem:[%s441 + $0x8] sm:$0xff] %v2759
      %2792 = vst [vmem:[%s441 + $0x10] sm:$0xff] %v2760
      %2793 = vst [vmem:[%s441 + $0x18] sm:$0xff] %v2761
      %2794 = vst [vmem:[%s441 + $0x20] sm:$0xff] %v2762
      %2795 = vst [vmem:[%s441 + $0x28] sm:$0xff] %v2763
      %2796 = vst [vmem:[%s441 + $0x30] sm:$0xff] %v2764
      %2797 = vst [vmem:[%s441 + $0x38] sm:$0xff] %v2765
      %2798 = vst [vmem:[%s441 + $0x40] sm:$0xff] %v2766
      %2799 = vst [vmem:[%s441 + $0x48] sm:$0xff] %v2767
      %2800 = vst [vmem:[%s441 + $0x50] sm:$0xff] %v2768
      %2801 = vst [vmem:[%s441 + $0x58] sm:$0xff] %v2769
      %2802 = vst [vmem:[%s441 + $0x60] sm:$0xff] %v2770
      %2803 = vst [vmem:[%s441 + $0x68] sm:$0xff] %v2771
      %2804 = vst [vmem:[%s441 + $0x70] sm:$0xff] %v2772
      %2805 = vst [vmem:[%s441 + $0x78] sm:$0xff] %v2773
      %2806 = vst [vmem:[%s441 + $0x80] sm:$0xff] %v2774
      %2807 = vst [vmem:[%s441 + $0x88] sm:$0xff] %v2775
      %2808 = vst [vmem:[%s441 + $0x90] sm:$0xff] %v2776
      %2809 = vst [vmem:[%s441 + $0x98] sm:$0xff] %v2777
      %2810 = vst [vmem:[%s441 + $0xa0] sm:$0xff] %v2778
      %2811 = vst [vmem:[%s441 + $0xa8] sm:$0xff] %v2779
      %2812 = vst [vmem:[%s441 + $0xb0] sm:$0xff] %v2780
      %2813 = vst [vmem:[%s441 + $0xb8] sm:$0xff] %v2781
      %2814 = vst [vmem:[%s441 + $0xc0] sm:$0xff] %v2782
      %2815 = vst [vmem:[%s441 + $0xc8] sm:$0xff] %v2783
      %2816 = vst [vmem:[%s441 + $0xd0] sm:$0xff] %v2784
      %2817 = vst [vmem:[%s441 + $0xd8] sm:$0xff] %v2785
      %2818 = vst [vmem:[%s441 + $0xe0] sm:$0xff] %v2786
      %2819 = vst [vmem:[%s441 + $0xe8] sm:$0xff] %v2787
      %2820 = vst [vmem:[%s441 + $0xf0] sm:$0xff] %v2788
      %2821 = vst [vmem:[%s441 + $0xf8] sm:$0xff] %v2789
      %v2822 = vld [vmem:[#allocation2] sm:$0xff]
      %v2823 = vld [vmem:[#allocation2 + $0x8] sm:$0xff]
      %v2824 = vld [vmem:[#allocation2 + $0x10] sm:$0xff]
      %v2825 = vld [vmem:[#allocation2 + $0x18] sm:$0xff]
      %v2826 = vld [vmem:[#allocation2 + $0x20] sm:$0xff]
      %v2827 = vld [vmem:[#allocation2 + $0x28] sm:$0xff]
      %v2828 = vld [vmem:[#allocation2 + $0x30] sm:$0xff]
      %v2829 = vld [vmem:[#allocation2 + $0x38] sm:$0xff]
      %v2830 = vld [vmem:[#allocation2 + $0x40] sm:$0xff]
      %v2831 = vld [vmem:[#allocation2 + $0x48] sm:$0xff]
      %v2832 = vld [vmem:[#allocation2 + $0x50] sm:$0xff]
      %v2833 = vld [vmem:[#allocation2 + $0x58] sm:$0xff]
      %v2834 = vld [vmem:[#allocation2 + $0x60] sm:$0xff]
      %v2835 = vld [vmem:[#allocation2 + $0x68] sm:$0xff]
      %v2836 = vld [vmem:[#allocation2 + $0x70] sm:$0xff]
      %v2837 = vld [vmem:[#allocation2 + $0x78] sm:$0xff]
      %v2838 = vld [vmem:[#allocation2 + $0x80] sm:$0xff]
      %v2839 = vld [vmem:[#allocation2 + $0x88] sm:$0xff]
      %v2840 = vld [vmem:[#allocation2 + $0x90] sm:$0xff]
      %v2841 = vld [vmem:[#allocation2 + $0x98] sm:$0xff]
      %v2842 = vld [vmem:[#allocation2 + $0xa0] sm:$0xff]
      %v2843 = vld [vmem:[#allocation2 + $0xa8] sm:$0xff]
      %v2844 = vld [vmem:[#allocation2 + $0xb0] sm:$0xff]
      %v2845 = vld [vmem:[#allocation2 + $0xb8] sm:$0xff]
      %v2846 = vld [vmem:[#allocation2 + $0xc0] sm:$0xff]
      %v2847 = vld [vmem:[#allocation2 + $0xc8] sm:$0xff]
      %v2848 = vld [vmem:[#allocation2 + $0xd0] sm:$0xff]
      %v2849 = vld [vmem:[#allocation2 + $0xd8] sm:$0xff]
      %v2850 = vld [vmem:[#allocation2 + $0xe0] sm:$0xff]
      %v2851 = vld [vmem:[#allocation2 + $0xe8] sm:$0xff]
      %v2852 = vld [vmem:[#allocation2 + $0xf0] sm:$0xff]
      %v2853 = vld [vmem:[#allocation2 + $0xf8] sm:$0xff]
      %v2854 = vunpack.c.l.bf16 %v1442
      %v2855 = vunpack.c.l.bf16 %v1443
      %v2856 = vunpack.c.l.bf16 %v1444
      %v2857 = vunpack.c.l.bf16 %v1445
      %v2858 = vunpack.c.l.bf16 %v1446
      %v2859 = vunpack.c.l.bf16 %v1447
      %v2860 = vunpack.c.l.bf16 %v1448
      %v2861 = vunpack.c.l.bf16 %v1449
      %v2862 = vunpack.c.h.bf16 %v1442
      %v2863 = vunpack.c.h.bf16 %v1443
      %v2864 = vunpack.c.h.bf16 %v1444
      %v2865 = vunpack.c.h.bf16 %v1445
      %v2866 = vunpack.c.h.bf16 %v1446
      %v2867 = vunpack.c.h.bf16 %v1447
      %v2868 = vunpack.c.h.bf16 %v1448
      %v2869 = vunpack.c.h.bf16 %v1449
      %v2870 = vunpack.c.l.bf16 %v1450
      %v2871 = vunpack.c.l.bf16 %v1451
      %v2872 = vunpack.c.l.bf16 %v1452
      %v2873 = vunpack.c.l.bf16 %v1453
      %v2874 = vunpack.c.l.bf16 %v1454
      %v2875 = vunpack.c.l.bf16 %v1455
      %v2876 = vunpack.c.l.bf16 %v1456
      %v2877 = vunpack.c.l.bf16 %v1457
      %v2878 = vunpack.c.h.bf16 %v1450
      %v2879 = vunpack.c.h.bf16 %v1451
      %v2880 = vunpack.c.h.bf16 %v1452
      %v2881 = vunpack.c.h.bf16 %v1453
      %v2882 = vunpack.c.h.bf16 %v1454
      %v2883 = vunpack.c.h.bf16 %v1455
      %v2884 = vunpack.c.h.bf16 %v1456
      %v2885 = vunpack.c.h.bf16 %v1457
      %v2886 = vunpack.c.l.bf16 %v1458
      %v2887 = vunpack.c.l.bf16 %v1459
      %v2888 = vunpack.c.l.bf16 %v1460
      %v2889 = vunpack.c.l.bf16 %v1461
      %v2890 = vunpack.c.l.bf16 %v1462
      %v2891 = vunpack.c.l.bf16 %v1463
      %v2892 = vunpack.c.l.bf16 %v1464
      %v2893 = vunpack.c.l.bf16 %v1465
      %v2894 = vunpack.c.h.bf16 %v1458
      %v2895 = vunpack.c.h.bf16 %v1459
      %v2896 = vunpack.c.h.bf16 %v1460
      %v2897 = vunpack.c.h.bf16 %v1461
      %v2898 = vunpack.c.h.bf16 %v1462
      %v2899 = vunpack.c.h.bf16 %v1463
      %v2900 = vunpack.c.h.bf16 %v1464
      %v2901 = vunpack.c.h.bf16 %v1465
      %v2902 = vunpack.c.l.bf16 %v1466
      %v2903 = vunpack.c.l.bf16 %v1467
      %v2904 = vunpack.c.l.bf16 %v1468
      %v2905 = vunpack.c.l.bf16 %v1469
      %v2906 = vunpack.c.l.bf16 %v1470
      %v2907 = vunpack.c.l.bf16 %v1471
      %v2908 = vunpack.c.l.bf16 %v1472
      %v2909 = vunpack.c.l.bf16 %v1473
      %v2910 = vunpack.c.h.bf16 %v1466
      %v2911 = vunpack.c.h.bf16 %v1467
      %v2912 = vunpack.c.h.bf16 %v1468
      %v2913 = vunpack.c.h.bf16 %v1469
      %v2914 = vunpack.c.h.bf16 %v1470
      %v2915 = vunpack.c.h.bf16 %v1471
      %v2916 = vunpack.c.h.bf16 %v1472
      %v2917 = vunpack.c.h.bf16 %v1473
      %v2918 = vunpack.c.l.bf16 %v1474
      %v2919 = vunpack.c.l.bf16 %v1475
      %v2920 = vunpack.c.l.bf16 %v1476
      %v2921 = vunpack.c.l.bf16 %v1477
      %v2922 = vunpack.c.l.bf16 %v1478
      %v2923 = vunpack.c.l.bf16 %v1479
      %v2924 = vunpack.c.l.bf16 %v1480
      %v2925 = vunpack.c.l.bf16 %v1481
      %v2926 = vunpack.c.h.bf16 %v1474
      %v2927 = vunpack.c.h.bf16 %v1475
      %v2928 = vunpack.c.h.bf16 %v1476
      %v2929 = vunpack.c.h.bf16 %v1477
      %v2930 = vunpack.c.h.bf16 %v1478
      %v2931 = vunpack.c.h.bf16 %v1479
      %v2932 = vunpack.c.h.bf16 %v1480
      %v2933 = vunpack.c.h.bf16 %v1481
      %v2934 = vunpack.c.l.bf16 %v1482
      %v2935 = vunpack.c.l.bf16 %v1483
      %v2936 = vunpack.c.l.bf16 %v1484
      %v2937 = vunpack.c.l.bf16 %v1485
      %v2938 = vunpack.c.l.bf16 %v1486
      %v2939 = vunpack.c.l.bf16 %v1487
      %v2940 = vunpack.c.l.bf16 %v1488
      %v2941 = vunpack.c.l.bf16 %v1489
      %v2942 = vunpack.c.h.bf16 %v1482
      %v2943 = vunpack.c.h.bf16 %v1483
      %v2944 = vunpack.c.h.bf16 %v1484
      %v2945 = vunpack.c.h.bf16 %v1485
      %v2946 = vunpack.c.h.bf16 %v1486
      %v2947 = vunpack.c.h.bf16 %v1487
      %v2948 = vunpack.c.h.bf16 %v1488
      %v2949 = vunpack.c.h.bf16 %v1489
      %v2950 = vunpack.c.l.bf16 %v1490
      %v2951 = vunpack.c.l.bf16 %v1491
      %v2952 = vunpack.c.l.bf16 %v1492
      %v2953 = vunpack.c.l.bf16 %v1493
      %v2954 = vunpack.c.l.bf16 %v1494
      %v2955 = vunpack.c.l.bf16 %v1495
      %v2956 = vunpack.c.l.bf16 %v1496
      %v2957 = vunpack.c.l.bf16 %v1497
      %v2958 = vunpack.c.h.bf16 %v1490
      %v2959 = vunpack.c.h.bf16 %v1491
      %v2960 = vunpack.c.h.bf16 %v1492
      %v2961 = vunpack.c.h.bf16 %v1493
      %v2962 = vunpack.c.h.bf16 %v1494
      %v2963 = vunpack.c.h.bf16 %v1495
      %v2964 = vunpack.c.h.bf16 %v1496
      %v2965 = vunpack.c.h.bf16 %v1497
      %v2966 = vunpack.c.l.bf16 %v1498
      %v2967 = vunpack.c.l.bf16 %v1499
      %v2968 = vunpack.c.l.bf16 %v1500
      %v2969 = vunpack.c.l.bf16 %v1501
      %v2970 = vunpack.c.l.bf16 %v1502
      %v2971 = vunpack.c.l.bf16 %v1503
      %v2972 = vunpack.c.l.bf16 %v1504
      %v2973 = vunpack.c.l.bf16 %v1505
      %v2974 = vunpack.c.h.bf16 %v1498
      %v2975 = vunpack.c.h.bf16 %v1499
      %v2976 = vunpack.c.h.bf16 %v1500
      %v2977 = vunpack.c.h.bf16 %v1501
      %v2978 = vunpack.c.h.bf16 %v1502
      %v2979 = vunpack.c.h.bf16 %v1503
      %v2980 = vunpack.c.h.bf16 %v1504
      %v2981 = vunpack.c.h.bf16 %v1505
      %v2982 = vunpack.c.l.bf16 %v1506
      %v2983 = vunpack.c.l.bf16 %v1507
      %v2984 = vunpack.c.l.bf16 %v1508
      %v2985 = vunpack.c.l.bf16 %v1509
      %v2986 = vunpack.c.l.bf16 %v1510
      %v2987 = vunpack.c.l.bf16 %v1511
      %v2988 = vunpack.c.l.bf16 %v1512
      %v2989 = vunpack.c.l.bf16 %v1513
      %v2990 = vunpack.c.h.bf16 %v1506
      %v2991 = vunpack.c.h.bf16 %v1507
      %v2992 = vunpack.c.h.bf16 %v1508
      %v2993 = vunpack.c.h.bf16 %v1509
      %v2994 = vunpack.c.h.bf16 %v1510
      %v2995 = vunpack.c.h.bf16 %v1511
      %v2996 = vunpack.c.h.bf16 %v1512
      %v2997 = vunpack.c.h.bf16 %v1513
      %v2998 = vunpack.c.l.bf16 %v1514
      %v2999 = vunpack.c.l.bf16 %v1515
      %v3000 = vunpack.c.l.bf16 %v1516
      %v3001 = vunpack.c.l.bf16 %v1517
      %v3002 = vunpack.c.l.bf16 %v1518
      %v3003 = vunpack.c.l.bf16 %v1519
      %v3004 = vunpack.c.l.bf16 %v1520
      %v3005 = vunpack.c.l.bf16 %v1521
      %v3006 = vunpack.c.h.bf16 %v1514
      %v3007 = vunpack.c.h.bf16 %v1515
      %v3008 = vunpack.c.h.bf16 %v1516
      %v3009 = vunpack.c.h.bf16 %v1517
      %v3010 = vunpack.c.h.bf16 %v1518
      %v3011 = vunpack.c.h.bf16 %v1519
      %v3012 = vunpack.c.h.bf16 %v1520
      %v3013 = vunpack.c.h.bf16 %v1521
      %v3014 = vunpack.c.l.bf16 %v1522
      %v3015 = vunpack.c.l.bf16 %v1523
      %v3016 = vunpack.c.l.bf16 %v1524
      %v3017 = vunpack.c.l.bf16 %v1525
      %v3018 = vunpack.c.l.bf16 %v1526
      %v3019 = vunpack.c.l.bf16 %v1527
      %v3020 = vunpack.c.l.bf16 %v1528
      %v3021 = vunpack.c.l.bf16 %v1529
      %v3022 = vunpack.c.h.bf16 %v1522
      %v3023 = vunpack.c.h.bf16 %v1523
      %v3024 = vunpack.c.h.bf16 %v1524
      %v3025 = vunpack.c.h.bf16 %v1525
      %v3026 = vunpack.c.h.bf16 %v1526
      %v3027 = vunpack.c.h.bf16 %v1527
      %v3028 = vunpack.c.h.bf16 %v1528
      %v3029 = vunpack.c.h.bf16 %v1529
      %v3030 = vunpack.c.l.bf16 %v1530
      %v3031 = vunpack.c.l.bf16 %v1531
      %v3032 = vunpack.c.l.bf16 %v1532
      %v3033 = vunpack.c.l.bf16 %v1533
      %v3034 = vunpack.c.l.bf16 %v1534
      %v3035 = vunpack.c.l.bf16 %v1535
      %v3036 = vunpack.c.l.bf16 %v1536
      %v3037 = vunpack.c.l.bf16 %v1537
      %v3038 = vunpack.c.h.bf16 %v1530
      %v3039 = vunpack.c.h.bf16 %v1531
      %v3040 = vunpack.c.h.bf16 %v1532
      %v3041 = vunpack.c.h.bf16 %v1533
      %v3042 = vunpack.c.h.bf16 %v1534
      %v3043 = vunpack.c.h.bf16 %v1535
      %v3044 = vunpack.c.h.bf16 %v1536
      %v3045 = vunpack.c.h.bf16 %v1537
      %v3046 = vunpack.c.l.bf16 %v1538
      %v3047 = vunpack.c.l.bf16 %v1539
      %v3048 = vunpack.c.l.bf16 %v1540
      %v3049 = vunpack.c.l.bf16 %v1541
      %v3050 = vunpack.c.l.bf16 %v1542
      %v3051 = vunpack.c.l.bf16 %v1543
      %v3052 = vunpack.c.l.bf16 %v1544
      %v3053 = vunpack.c.l.bf16 %v1545
      %v3054 = vunpack.c.h.bf16 %v1538
      %v3055 = vunpack.c.h.bf16 %v1539
      %v3056 = vunpack.c.h.bf16 %v1540
      %v3057 = vunpack.c.h.bf16 %v1541
      %v3058 = vunpack.c.h.bf16 %v1542
      %v3059 = vunpack.c.h.bf16 %v1543
      %v3060 = vunpack.c.h.bf16 %v1544
      %v3061 = vunpack.c.h.bf16 %v1545
      %v3062 = vunpack.c.l.bf16 %v1546
      %v3063 = vunpack.c.l.bf16 %v1547
      %v3064 = vunpack.c.l.bf16 %v1548
      %v3065 = vunpack.c.l.bf16 %v1549
      %v3066 = vunpack.c.l.bf16 %v1550
      %v3067 = vunpack.c.l.bf16 %v1551
      %v3068 = vunpack.c.l.bf16 %v1552
      %v3069 = vunpack.c.l.bf16 %v1553
      %v3070 = vunpack.c.h.bf16 %v1546
      %v3071 = vunpack.c.h.bf16 %v1547
      %v3072 = vunpack.c.h.bf16 %v1548
      %v3073 = vunpack.c.h.bf16 %v1549
      %v3074 = vunpack.c.h.bf16 %v1550
      %v3075 = vunpack.c.h.bf16 %v1551
      %v3076 = vunpack.c.h.bf16 %v1552
      %v3077 = vunpack.c.h.bf16 %v1553
      %v3078 = vunpack.c.l.bf16 %v1554
      %v3079 = vunpack.c.l.bf16 %v1555
      %v3080 = vunpack.c.l.bf16 %v1556
      %v3081 = vunpack.c.l.bf16 %v1557
      %v3082 = vunpack.c.l.bf16 %v1558
      %v3083 = vunpack.c.l.bf16 %v1559
      %v3084 = vunpack.c.l.bf16 %v1560
      %v3085 = vunpack.c.l.bf16 %v1561
      %v3086 = vunpack.c.h.bf16 %v1554
      %v3087 = vunpack.c.h.bf16 %v1555
      %v3088 = vunpack.c.h.bf16 %v1556
      %v3089 = vunpack.c.h.bf16 %v1557
      %v3090 = vunpack.c.h.bf16 %v1558
      %v3091 = vunpack.c.h.bf16 %v1559
      %v3092 = vunpack.c.h.bf16 %v1560
      %v3093 = vunpack.c.h.bf16 %v1561
      %v3094 = vunpack.c.l.bf16 %v1562
      %v3095 = vunpack.c.l.bf16 %v1563
      %v3096 = vunpack.c.l.bf16 %v1564
      %v3097 = vunpack.c.l.bf16 %v1565
      %v3098 = vunpack.c.l.bf16 %v1566
      %v3099 = vunpack.c.l.bf16 %v1567
      %v3100 = vunpack.c.l.bf16 %v1568
      %v3101 = vunpack.c.l.bf16 %v1569
      %v3102 = vunpack.c.h.bf16 %v1562
      %v3103 = vunpack.c.h.bf16 %v1563
      %v3104 = vunpack.c.h.bf16 %v1564
      %v3105 = vunpack.c.h.bf16 %v1565
      %v3106 = vunpack.c.h.bf16 %v1566
      %v3107 = vunpack.c.h.bf16 %v1567
      %v3108 = vunpack.c.h.bf16 %v1568
      %v3109 = vunpack.c.h.bf16 %v1569
      %v3110 = vadd.f32 %v2854, %v2855
      %v3111 = vadd.f32 %v3110, %v2856
      %v3112 = vadd.f32 %v3111, %v2857
      %v3113 = vadd.f32 %v3112, %v2858
      %v3114 = vadd.f32 %v3113, %v2859
      %v3115 = vadd.f32 %v3114, %v2860
      %v3116 = vadd.f32 %v3115, %v2861
      %3117 = vadd.xlane.f32.xlu0 %v3116
      %v3118 = vpop.xlane.xlu0 %3117
      %v3119 = vadd.f32 %v2862, %v2863
      %v3120 = vadd.f32 %v3119, %v2864
      %v3121 = vadd.f32 %v3120, %v2865
      %v3122 = vadd.f32 %v3121, %v2866
      %v3123 = vadd.f32 %v3122, %v2867
      %v3124 = vadd.f32 %v3123, %v2868
      %v3125 = vadd.f32 %v3124, %v2869
      %3126 = vadd.xlane.f32.xlu0 %v3125
      %v3127 = vpop.xlane.xlu0 %3126
      %v3128 = vadd.f32 %v2870, %v2871
      %v3129 = vadd.f32 %v3128, %v2872
      %v3130 = vadd.f32 %v3129, %v2873
      %v3131 = vadd.f32 %v3130, %v2874
      %v3132 = vadd.f32 %v3131, %v2875
      %v3133 = vadd.f32 %v3132, %v2876
      %v3134 = vadd.f32 %v3133, %v2877
      %3135 = vadd.xlane.f32.xlu0 %v3134
      %v3136 = vpop.xlane.xlu0 %3135
      %v3137 = vadd.f32 %v2878, %v2879
      %v3138 = vadd.f32 %v3137, %v2880
      %v3139 = vadd.f32 %v3138, %v2881
      %v3140 = vadd.f32 %v3139, %v2882
      %v3141 = vadd.f32 %v3140, %v2883
      %v3142 = vadd.f32 %v3141, %v2884
      %v3143 = vadd.f32 %v3142, %v2885
      %3144 = vadd.xlane.f32.xlu0 %v3143
      %v3145 = vpop.xlane.xlu0 %3144
      %v3146 = vadd.f32 %v2886, %v2887
      %v3147 = vadd.f32 %v3146, %v2888
      %v3148 = vadd.f32 %v3147, %v2889
      %v3149 = vadd.f32 %v3148, %v2890
      %v3150 = vadd.f32 %v3149, %v2891
      %v3151 = vadd.f32 %v3150, %v2892
      %v3152 = vadd.f32 %v3151, %v2893
      %3153 = vadd.xlane.f32.xlu0 %v3152
      %v3154 = vpop.xlane.xlu0 %3153
      %v3155 = vadd.f32 %v2894, %v2895
      %v3156 = vadd.f32 %v3155, %v2896
      %v3157 = vadd.f32 %v3156, %v2897
      %v3158 = vadd.f32 %v3157, %v2898
      %v3159 = vadd.f32 %v3158, %v2899
      %v3160 = vadd.f32 %v3159, %v2900
      %v3161 = vadd.f32 %v3160, %v2901
      %3162 = vadd.xlane.f32.xlu0 %v3161
      %v3163 = vpop.xlane.xlu0 %3162
      %v3164 = vadd.f32 %v2902, %v2903
      %v3165 = vadd.f32 %v3164, %v2904
      %v3166 = vadd.f32 %v3165, %v2905
      %v3167 = vadd.f32 %v3166, %v2906
      %v3168 = vadd.f32 %v3167, %v2907
      %v3169 = vadd.f32 %v3168, %v2908
      %v3170 = vadd.f32 %v3169, %v2909
      %3171 = vadd.xlane.f32.xlu0 %v3170
      %v3172 = vpop.xlane.xlu0 %3171
      %v3173 = vadd.f32 %v2910, %v2911
      %v3174 = vadd.f32 %v3173, %v2912
      %v3175 = vadd.f32 %v3174, %v2913
      %v3176 = vadd.f32 %v3175, %v2914
      %v3177 = vadd.f32 %v3176, %v2915
      %v3178 = vadd.f32 %v3177, %v2916
      %v3179 = vadd.f32 %v3178, %v2917
      %3180 = vadd.xlane.f32.xlu0 %v3179
      %v3181 = vpop.xlane.xlu0 %3180
      %v3182 = vadd.f32 %v2918, %v2919
      %v3183 = vadd.f32 %v3182, %v2920
      %v3184 = vadd.f32 %v3183, %v2921
      %v3185 = vadd.f32 %v3184, %v2922
      %v3186 = vadd.f32 %v3185, %v2923
      %v3187 = vadd.f32 %v3186, %v2924
      %v3188 = vadd.f32 %v3187, %v2925
      %3189 = vadd.xlane.f32.xlu0 %v3188
      %v3190 = vpop.xlane.xlu0 %3189
      %v3191 = vadd.f32 %v2926, %v2927
      %v3192 = vadd.f32 %v3191, %v2928
      %v3193 = vadd.f32 %v3192, %v2929
      %v3194 = vadd.f32 %v3193, %v2930
      %v3195 = vadd.f32 %v3194, %v2931
      %v3196 = vadd.f32 %v3195, %v2932
      %v3197 = vadd.f32 %v3196, %v2933
      %3198 = vadd.xlane.f32.xlu0 %v3197
      %v3199 = vpop.xlane.xlu0 %3198
      %v3200 = vadd.f32 %v2934, %v2935
      %v3201 = vadd.f32 %v3200, %v2936
      %v3202 = vadd.f32 %v3201, %v2937
      %v3203 = vadd.f32 %v3202, %v2938
      %v3204 = vadd.f32 %v3203, %v2939
      %v3205 = vadd.f32 %v3204, %v2940
      %v3206 = vadd.f32 %v3205, %v2941
      %3207 = vadd.xlane.f32.xlu0 %v3206
      %v3208 = vpop.xlane.xlu0 %3207
      %v3209 = vadd.f32 %v2942, %v2943
      %v3210 = vadd.f32 %v3209, %v2944
      %v3211 = vadd.f32 %v3210, %v2945
      %v3212 = vadd.f32 %v3211, %v2946
      %v3213 = vadd.f32 %v3212, %v2947
      %v3214 = vadd.f32 %v3213, %v2948
      %v3215 = vadd.f32 %v3214, %v2949
      %3216 = vadd.xlane.f32.xlu0 %v3215
      %v3217 = vpop.xlane.xlu0 %3216
      %v3218 = vadd.f32 %v2950, %v2951
      %v3219 = vadd.f32 %v3218, %v2952
      %v3220 = vadd.f32 %v3219, %v2953
      %v3221 = vadd.f32 %v3220, %v2954
      %v3222 = vadd.f32 %v3221, %v2955
      %v3223 = vadd.f32 %v3222, %v2956
      %v3224 = vadd.f32 %v3223, %v2957
      %3225 = vadd.xlane.f32.xlu0 %v3224
      %v3226 = vpop.xlane.xlu0 %3225
      %v3227 = vadd.f32 %v2958, %v2959
      %v3228 = vadd.f32 %v3227, %v2960
      %v3229 = vadd.f32 %v3228, %v2961
      %v3230 = vadd.f32 %v3229, %v2962
      %v3231 = vadd.f32 %v3230, %v2963
      %v3232 = vadd.f32 %v3231, %v2964
      %v3233 = vadd.f32 %v3232, %v2965
      %3234 = vadd.xlane.f32.xlu0 %v3233
      %v3235 = vpop.xlane.xlu0 %3234
      %v3236 = vadd.f32 %v2966, %v2967
      %v3237 = vadd.f32 %v3236, %v2968
      %v3238 = vadd.f32 %v3237, %v2969
      %v3239 = vadd.f32 %v3238, %v2970
      %v3240 = vadd.f32 %v3239, %v2971
      %v3241 = vadd.f32 %v3240, %v2972
      %v3242 = vadd.f32 %v3241, %v2973
      %3243 = vadd.xlane.f32.xlu0 %v3242
      %v3244 = vpop.xlane.xlu0 %3243
      %v3245 = vadd.f32 %v2974, %v2975
      %v3246 = vadd.f32 %v3245, %v2976
      %v3247 = vadd.f32 %v3246, %v2977
      %v3248 = vadd.f32 %v3247, %v2978
      %v3249 = vadd.f32 %v3248, %v2979
      %v3250 = vadd.f32 %v3249, %v2980
      %v3251 = vadd.f32 %v3250, %v2981
      %3252 = vadd.xlane.f32.xlu0 %v3251
      %v3253 = vpop.xlane.xlu0 %3252
      %v3254 = vadd.f32 %v2982, %v2983
      %v3255 = vadd.f32 %v3254, %v2984
      %v3256 = vadd.f32 %v3255, %v2985
      %v3257 = vadd.f32 %v3256, %v2986
      %v3258 = vadd.f32 %v3257, %v2987
      %v3259 = vadd.f32 %v3258, %v2988
      %v3260 = vadd.f32 %v3259, %v2989
      %3261 = vadd.xlane.f32.xlu0 %v3260
      %v3262 = vpop.xlane.xlu0 %3261
      %v3263 = vadd.f32 %v2990, %v2991
      %v3264 = vadd.f32 %v3263, %v2992
      %v3265 = vadd.f32 %v3264, %v2993
      %v3266 = vadd.f32 %v3265, %v2994
      %v3267 = vadd.f32 %v3266, %v2995
      %v3268 = vadd.f32 %v3267, %v2996
      %v3269 = vadd.f32 %v3268, %v2997
      %3270 = vadd.xlane.f32.xlu0 %v3269
      %v3271 = vpop.xlane.xlu0 %3270
      %v3272 = vadd.f32 %v2998, %v2999
      %v3273 = vadd.f32 %v3272, %v3000
      %v3274 = vadd.f32 %v3273, %v3001
      %v3275 = vadd.f32 %v3274, %v3002
      %v3276 = vadd.f32 %v3275, %v3003
      %v3277 = vadd.f32 %v3276, %v3004
      %v3278 = vadd.f32 %v3277, %v3005
      %3279 = vadd.xlane.f32.xlu0 %v3278
      %v3280 = vpop.xlane.xlu0 %3279
      %v3281 = vadd.f32 %v3006, %v3007
      %v3282 = vadd.f32 %v3281, %v3008
      %v3283 = vadd.f32 %v3282, %v3009
      %v3284 = vadd.f32 %v3283, %v3010
      %v3285 = vadd.f32 %v3284, %v3011
      %v3286 = vadd.f32 %v3285, %v3012
      %v3287 = vadd.f32 %v3286, %v3013
      %3288 = vadd.xlane.f32.xlu0 %v3287
      %v3289 = vpop.xlane.xlu0 %3288
      %v3290 = vadd.f32 %v3014, %v3015
      %v3291 = vadd.f32 %v3290, %v3016
      %v3292 = vadd.f32 %v3291, %v3017
      %v3293 = vadd.f32 %v3292, %v3018
      %v3294 = vadd.f32 %v3293, %v3019
      %v3295 = vadd.f32 %v3294, %v3020
      %v3296 = vadd.f32 %v3295, %v3021
      %3297 = vadd.xlane.f32.xlu0 %v3296
      %v3298 = vpop.xlane.xlu0 %3297
      %v3299 = vadd.f32 %v3022, %v3023
      %v3300 = vadd.f32 %v3299, %v3024
      %v3301 = vadd.f32 %v3300, %v3025
      %v3302 = vadd.f32 %v3301, %v3026
      %v3303 = vadd.f32 %v3302, %v3027
      %v3304 = vadd.f32 %v3303, %v3028
      %v3305 = vadd.f32 %v3304, %v3029
      %3306 = vadd.xlane.f32.xlu0 %v3305
      %v3307 = vpop.xlane.xlu0 %3306
      %v3308 = vadd.f32 %v3030, %v3031
      %v3309 = vadd.f32 %v3308, %v3032
      %v3310 = vadd.f32 %v3309, %v3033
      %v3311 = vadd.f32 %v3310, %v3034
      %v3312 = vadd.f32 %v3311, %v3035
      %v3313 = vadd.f32 %v3312, %v3036
      %v3314 = vadd.f32 %v3313, %v3037
      %3315 = vadd.xlane.f32.xlu0 %v3314
      %v3316 = vpop.xlane.xlu0 %3315
      %v3317 = vadd.f32 %v3038, %v3039
      %v3318 = vadd.f32 %v3317, %v3040
      %v3319 = vadd.f32 %v3318, %v3041
      %v3320 = vadd.f32 %v3319, %v3042
      %v3321 = vadd.f32 %v3320, %v3043
      %v3322 = vadd.f32 %v3321, %v3044
      %v3323 = vadd.f32 %v3322, %v3045
      %3324 = vadd.xlane.f32.xlu0 %v3323
      %v3325 = vpop.xlane.xlu0 %3324
      %v3326 = vadd.f32 %v3046, %v3047
      %v3327 = vadd.f32 %v3326, %v3048
      %v3328 = vadd.f32 %v3327, %v3049
      %v3329 = vadd.f32 %v3328, %v3050
      %v3330 = vadd.f32 %v3329, %v3051
      %v3331 = vadd.f32 %v3330, %v3052
      %v3332 = vadd.f32 %v3331, %v3053
      %3333 = vadd.xlane.f32.xlu0 %v3332
      %v3334 = vpop.xlane.xlu0 %3333
      %v3335 = vadd.f32 %v3054, %v3055
      %v3336 = vadd.f32 %v3335, %v3056
      %v3337 = vadd.f32 %v3336, %v3057
      %v3338 = vadd.f32 %v3337, %v3058
      %v3339 = vadd.f32 %v3338, %v3059
      %v3340 = vadd.f32 %v3339, %v3060
      %v3341 = vadd.f32 %v3340, %v3061
      %3342 = vadd.xlane.f32.xlu0 %v3341
      %v3343 = vpop.xlane.xlu0 %3342
      %v3344 = vadd.f32 %v3062, %v3063
      %v3345 = vadd.f32 %v3344, %v3064
      %v3346 = vadd.f32 %v3345, %v3065
      %v3347 = vadd.f32 %v3346, %v3066
      %v3348 = vadd.f32 %v3347, %v3067
      %v3349 = vadd.f32 %v3348, %v3068
      %v3350 = vadd.f32 %v3349, %v3069
      %3351 = vadd.xlane.f32.xlu0 %v3350
      %v3352 = vpop.xlane.xlu0 %3351
      %v3353 = vadd.f32 %v3070, %v3071
      %v3354 = vadd.f32 %v3353, %v3072
      %v3355 = vadd.f32 %v3354, %v3073
      %v3356 = vadd.f32 %v3355, %v3074
      %v3357 = vadd.f32 %v3356, %v3075
      %v3358 = vadd.f32 %v3357, %v3076
      %v3359 = vadd.f32 %v3358, %v3077
      %3360 = vadd.xlane.f32.xlu0 %v3359
      %v3361 = vpop.xlane.xlu0 %3360
      %v3362 = vadd.f32 %v3078, %v3079
      %v3363 = vadd.f32 %v3362, %v3080
      %v3364 = vadd.f32 %v3363, %v3081
      %v3365 = vadd.f32 %v3364, %v3082
      %v3366 = vadd.f32 %v3365, %v3083
      %v3367 = vadd.f32 %v3366, %v3084
      %v3368 = vadd.f32 %v3367, %v3085
      %3369 = vadd.xlane.f32.xlu0 %v3368
      %v3370 = vpop.xlane.xlu0 %3369
      %v3371 = vadd.f32 %v3086, %v3087
      %v3372 = vadd.f32 %v3371, %v3088
      %v3373 = vadd.f32 %v3372, %v3089
      %v3374 = vadd.f32 %v3373, %v3090
      %v3375 = vadd.f32 %v3374, %v3091
      %v3376 = vadd.f32 %v3375, %v3092
      %v3377 = vadd.f32 %v3376, %v3093
      %3378 = vadd.xlane.f32.xlu0 %v3377
      %v3379 = vpop.xlane.xlu0 %3378
      %v3380 = vadd.f32 %v3094, %v3095
      %v3381 = vadd.f32 %v3380, %v3096
      %v3382 = vadd.f32 %v3381, %v3097
      %v3383 = vadd.f32 %v3382, %v3098
      %v3384 = vadd.f32 %v3383, %v3099
      %v3385 = vadd.f32 %v3384, %v3100
      %v3386 = vadd.f32 %v3385, %v3101
      %3387 = vadd.xlane.f32.xlu0 %v3386
      %v3388 = vpop.xlane.xlu0 %3387
      %v3389 = vadd.f32 %v3102, %v3103
      %v3390 = vadd.f32 %v3389, %v3104
      %v3391 = vadd.f32 %v3390, %v3105
      %v3392 = vadd.f32 %v3391, %v3106
      %v3393 = vadd.f32 %v3392, %v3107
      %v3394 = vadd.f32 %v3393, %v3108
      %v3395 = vadd.f32 %v3394, %v3109
      %3396 = vadd.xlane.f32.xlu0 %v3395
      %v3397 = vpop.xlane.xlu0 %3396
      %v3398 = vadd.f32 %v2822, %v3118
      %v3399 = vadd.f32 %v2823, %v3127
      %v3400 = vadd.f32 %v2824, %v3136
      %v3401 = vadd.f32 %v2825, %v3145
      %v3402 = vadd.f32 %v2826, %v3154
      %v3403 = vadd.f32 %v2827, %v3163
      %v3404 = vadd.f32 %v2828, %v3172
      %v3405 = vadd.f32 %v2829, %v3181
      %v3406 = vadd.f32 %v2830, %v3190
      %v3407 = vadd.f32 %v2831, %v3199
      %v3408 = vadd.f32 %v2832, %v3208
      %v3409 = vadd.f32 %v2833, %v3217
      %v3410 = vadd.f32 %v2834, %v3226
      %v3411 = vadd.f32 %v2835, %v3235
      %v3412 = vadd.f32 %v2836, %v3244
      %v3413 = vadd.f32 %v2837, %v3253
      %v3414 = vadd.f32 %v2838, %v3262
      %v3415 = vadd.f32 %v2839, %v3271
      %v3416 = vadd.f32 %v2840, %v3280
      %v3417 = vadd.f32 %v2841, %v3289
      %v3418 = vadd.f32 %v2842, %v3298
      %v3419 = vadd.f32 %v2843, %v3307
      %v3420 = vadd.f32 %v2844, %v3316
      %v3421 = vadd.f32 %v2845, %v3325
      %v3422 = vadd.f32 %v2846, %v3334
      %v3423 = vadd.f32 %v2847, %v3343
      %v3424 = vadd.f32 %v2848, %v3352
      %v3425 = vadd.f32 %v2849, %v3361
      %v3426 = vadd.f32 %v2850, %v3370
      %v3427 = vadd.f32 %v2851, %v3379
      %v3428 = vadd.f32 %v2852, %v3388
      %v3429 = vadd.f32 %v2853, %v3397
      %vm3430 = vcmask 7168
      %3431 = vst.msk [vmem:[#allocation2] sm:$0xff] %vm3430, %v3398
      %3432 = vst.msk [vmem:[#allocation2 + $0x8] sm:$0xff] %vm3430, %v3399
      %3433 = vst.msk [vmem:[#allocation2 + $0x10] sm:$0xff] %vm3430, %v3400
      %3434 = vst.msk [vmem:[#allocation2 + $0x18] sm:$0xff] %vm3430, %v3401
      %3435 = vst.msk [vmem:[#allocation2 + $0x20] sm:$0xff] %vm3430, %v3402
      %3436 = vst.msk [vmem:[#allocation2 + $0x28] sm:$0xff] %vm3430, %v3403
      %3437 = vst.msk [vmem:[#allocation2 + $0x30] sm:$0xff] %vm3430, %v3404
      %3438 = vst.msk [vmem:[#allocation2 + $0x38] sm:$0xff] %vm3430, %v3405
      %3439 = vst.msk [vmem:[#allocation2 + $0x40] sm:$0xff] %vm3430, %v3406
      %3440 = vst.msk [vmem:[#allocation2 + $0x48] sm:$0xff] %vm3430, %v3407
      %3441 = vst.msk [vmem:[#allocation2 + $0x50] sm:$0xff] %vm3430, %v3408
      %3442 = vst.msk [vmem:[#allocation2 + $0x58] sm:$0xff] %vm3430, %v3409
      %3443 = vst.msk [vmem:[#allocation2 + $0x60] sm:$0xff] %vm3430, %v3410
      %3444 = vst.msk [vmem:[#allocation2 + $0x68] sm:$0xff] %vm3430, %v3411
      %3445 = vst.msk [vmem:[#allocation2 + $0x70] sm:$0xff] %vm3430, %v3412
      %3446 = vst.msk [vmem:[#allocation2 + $0x78] sm:$0xff] %vm3430, %v3413
      %3447 = vst.msk [vmem:[#allocation2 + $0x80] sm:$0xff] %vm3430, %v3414
      %3448 = vst.msk [vmem:[#allocation2 + $0x88] sm:$0xff] %vm3430, %v3415
      %3449 = vst.msk [vmem:[#allocation2 + $0x90] sm:$0xff] %vm3430, %v3416
      %3450 = vst.msk [vmem:[#allocation2 + $0x98] sm:$0xff] %vm3430, %v3417
      %3451 = vst.msk [vmem:[#allocation2 + $0xa0] sm:$0xff] %vm3430, %v3418
      %3452 = vst.msk [vmem:[#allocation2 + $0xa8] sm:$0xff] %vm3430, %v3419
      %3453 = vst.msk [vmem:[#allocation2 + $0xb0] sm:$0xff] %vm3430, %v3420
      %3454 = vst.msk [vmem:[#allocation2 + $0xb8] sm:$0xff] %vm3430, %v3421
      %3455 = vst.msk [vmem:[#allocation2 + $0xc0] sm:$0xff] %vm3430, %v3422
      %3456 = vst.msk [vmem:[#allocation2 + $0xc8] sm:$0xff] %vm3430, %v3423
      %3457 = vst.msk [vmem:[#allocation2 + $0xd0] sm:$0xff] %vm3430, %v3424
      %3458 = vst.msk [vmem:[#allocation2 + $0xd8] sm:$0xff] %vm3430, %v3425
      %3459 = vst.msk [vmem:[#allocation2 + $0xe0] sm:$0xff] %vm3430, %v3426
      %3460 = vst.msk [vmem:[#allocation2 + $0xe8] sm:$0xff] %vm3430, %v3427
      %3461 = vst.msk [vmem:[#allocation2 + $0xf0] sm:$0xff] %vm3430, %v3428
      %3462 = vst.msk [vmem:[#allocation2 + $0xf8] sm:$0xff] %vm3430, %v3429
      %p3463 = scmp.eq.s32.totalorder %s27, 1
      // Predicated region
      $region69: #{triposf_vae_forward.3} parent=63 // pred_check
        %p3464 = pneg %p3463
      $region70: #{triposf_vae_forward.3} parent=63 // pred_check_branch
        %3466 = sbr.rel (%p3464) target = $region72
      $region71: #{triposf_vae_forward.3} parent=63 // pred_region
        %v3467 = vld [vmem:[%s441] sm:$0xff]
        %v3468 = vld [vmem:[%s441 + $0x8] sm:$0xff]
        %v3469 = vld [vmem:[%s441 + $0x10] sm:$0xff]
        %v3470 = vld [vmem:[%s441 + $0x18] sm:$0xff]
        %v3471 = vld [vmem:[%s441 + $0x20] sm:$0xff]
        %v3472 = vld [vmem:[%s441 + $0x28] sm:$0xff]
        %v3473 = vld [vmem:[%s441 + $0x30] sm:$0xff]
        %v3474 = vld [vmem:[%s441 + $0x38] sm:$0xff]
        %v3475 = vld [vmem:[%s441 + $0x40] sm:$0xff]
        %v3476 = vld [vmem:[%s441 + $0x48] sm:$0xff]
        %v3477 = vld [vmem:[%s441 + $0x50] sm:$0xff]
        %v3478 = vld [vmem:[%s441 + $0x58] sm:$0xff]
        %v3479 = vld [vmem:[%s441 + $0x60] sm:$0xff]
        %v3480 = vld [vmem:[%s441 + $0x68] sm:$0xff]
        %v3481 = vld [vmem:[%s441 + $0x70] sm:$0xff]
        %v3482 = vld [vmem:[%s441 + $0x78] sm:$0xff]
        %v3483 = vld [vmem:[%s441 + $0x80] sm:$0xff]
        %v3484 = vld [vmem:[%s441 + $0x88] sm:$0xff]
        %v3485 = vld [vmem:[%s441 + $0x90] sm:$0xff]
        %v3486 = vld [vmem:[%s441 + $0x98] sm:$0xff]
        %v3487 = vld [vmem:[%s441 + $0xa0] sm:$0xff]
        %v3488 = vld [vmem:[%s441 + $0xa8] sm:$0xff]
        %v3489 = vld [vmem:[%s441 + $0xb0] sm:$0xff]
        %v3490 = vld [vmem:[%s441 + $0xb8] sm:$0xff]
        %v3491 = vld [vmem:[%s441 + $0xc0] sm:$0xff]
        %v3492 = vld [vmem:[%s441 + $0xc8] sm:$0xff]
        %v3493 = vld [vmem:[%s441 + $0xd0] sm:$0xff]
        %v3494 = vld [vmem:[%s441 + $0xd8] sm:$0xff]
        %v3495 = vld [vmem:[%s441 + $0xe0] sm:$0xff]
        %v3496 = vld [vmem:[%s441 + $0xe8] sm:$0xff]
        %v3497 = vld [vmem:[%s441 + $0xf0] sm:$0xff]
        %v3498 = vld [vmem:[%s441 + $0xf8] sm:$0xff]
        %v3499 = vld [vmem:[#allocation2] sm:$0xff]
        %v3500 = vld [vmem:[#allocation2 + $0x8] sm:$0xff]
        %v3501 = vld [vmem:[#allocation2 + $0x10] sm:$0xff]
        %v3502 = vld [vmem:[#allocation2 + $0x18] sm:$0xff]
        %v3503 = vld [vmem:[#allocation2 + $0x20] sm:$0xff]
        %v3504 = vld [vmem:[#allocation2 + $0x28] sm:$0xff]
        %v3505 = vld [vmem:[#allocation2 + $0x30] sm:$0xff]
        %v3506 = vld [vmem:[#allocation2 + $0x38] sm:$0xff]
        %v3507 = vld [vmem:[#allocation2 + $0x40] sm:$0xff]
        %v3508 = vld [vmem:[#allocation2 + $0x48] sm:$0xff]
        %v3509 = vld [vmem:[#allocation2 + $0x50] sm:$0xff]
        %v3510 = vld [vmem:[#allocation2 + $0x58] sm:$0xff]
        %v3511 = vld [vmem:[#allocation2 + $0x60] sm:$0xff]
        %v3512 = vld [vmem:[#allocation2 + $0x68] sm:$0xff]
        %v3513 = vld [vmem:[#allocation2 + $0x70] sm:$0xff]
        %v3514 = vld [vmem:[#allocation2 + $0x78] sm:$0xff]
        %v3515 = vld [vmem:[#allocation2 + $0x80] sm:$0xff]
        %v3516 = vld [vmem:[#allocation2 + $0x88] sm:$0xff]
        %v3517 = vld [vmem:[#allocation2 + $0x90] sm:$0xff]
        %v3518 = vld [vmem:[#allocation2 + $0x98] sm:$0xff]
        %v3519 = vld [vmem:[#allocation2 + $0xa0] sm:$0xff]
        %v3520 = vld [vmem:[#allocation2 + $0xa8] sm:$0xff]
        %v3521 = vld [vmem:[#allocation2 + $0xb0] sm:$0xff]
        %v3522 = vld [vmem:[#allocation2 + $0xb8] sm:$0xff]
        %v3523 = vld [vmem:[#allocation2 + $0xc0] sm:$0xff]
        %v3524 = vld [vmem:[#allocation2 + $0xc8] sm:$0xff]
        %v3525 = vld [vmem:[#allocation2 + $0xd0] sm:$0xff]
        %v3526 = vld [vmem:[#allocation2 + $0xd8] sm:$0xff]
        %v3527 = vld [vmem:[#allocation2 + $0xe0] sm:$0xff]
        %v3528 = vld [vmem:[#allocation2 + $0xe8] sm:$0xff]
        %v3529 = vld [vmem:[#allocation2 + $0xf0] sm:$0xff]
        %v3530 = vld [vmem:[#allocation2 + $0xf8] sm:$0xff]
        %v3531 = vmax.f32 %v3499, 1.0
        %v3532 = vmax.f32 %v3500, 1.0
        %v3533 = vmax.f32 %v3501, 1.0
        %v3534 = vmax.f32 %v3502, 1.0
        %v3535 = vmax.f32 %v3503, 1.0
        %v3536 = vmax.f32 %v3504, 1.0
        %v3537 = vmax.f32 %v3505, 1.0
        %v3538 = vmax.f32 %v3506, 1.0
        %v3539 = vmax.f32 %v3507, 1.0
        %v3540 = vmax.f32 %v3508, 1.0
        %v3541 = vmax.f32 %v3509, 1.0
        %v3542 = vmax.f32 %v3510, 1.0
        %v3543 = vmax.f32 %v3511, 1.0
        %v3544 = vmax.f32 %v3512, 1.0
        %v3545 = vmax.f32 %v3513, 1.0
        %v3546 = vmax.f32 %v3514, 1.0
        %v3547 = vmax.f32 %v3515, 1.0
        %v3548 = vmax.f32 %v3516, 1.0
        %v3549 = vmax.f32 %v3517, 1.0
        %v3550 = vmax.f32 %v3518, 1.0
        %v3551 = vmax.f32 %v3519, 1.0
        %v3552 = vmax.f32 %v3520, 1.0
        %v3553 = vmax.f32 %v3521, 1.0
        %v3554 = vmax.f32 %v3522, 1.0
        %v3555 = vmax.f32 %v3523, 1.0
        %v3556 = vmax.f32 %v3524, 1.0
        %v3557 = vmax.f32 %v3525, 1.0
        %v3558 = vmax.f32 %v3526, 1.0
        %v3559 = vmax.f32 %v3527, 1.0
        %v3560 = vmax.f32 %v3528, 1.0
        %v3561 = vmax.f32 %v3529, 1.0
        %v3562 = vmax.f32 %v3530, 1.0
        %3564 = vset.pattern.permute.xlu0 0
        %3565 = vperm.xlu0 %3564, %v3531
        %v3566 = vpop.permute.xlu0 %3565
        %3569 = vset.pattern.permute.xlu0 0
        %3570 = vperm.xlu0 %3569, %v3532
        %v3571 = vpop.permute.xlu0 %3570
        %3574 = vset.pattern.permute.xlu0 0
        %3575 = vperm.xlu0 %3574, %v3533
        %v3576 = vpop.permute.xlu0 %3575
        %3579 = vset.pattern.permute.xlu0 0
        %3580 = vperm.xlu0 %3579, %v3534
        %v3581 = vpop.permute.xlu0 %3580
        %3584 = vset.pattern.permute.xlu0 0
        %3585 = vperm.xlu0 %3584, %v3535
        %v3586 = vpop.permute.xlu0 %3585
        %3589 = vset.pattern.permute.xlu0 0
        %3590 = vperm.xlu0 %3589, %v3536
        %v3591 = vpop.permute.xlu0 %3590
        %3594 = vset.pattern.permute.xlu0 0
        %3595 = vperm.xlu0 %3594, %v3537
        %v3596 = vpop.permute.xlu0 %3595
        %3599 = vset.pattern.permute.xlu0 0
        %3600 = vperm.xlu0 %3599, %v3538
        %v3601 = vpop.permute.xlu0 %3600
        %3604 = vset.pattern.permute.xlu0 0
        %3605 = vperm.xlu0 %3604, %v3539
        %v3606 = vpop.permute.xlu0 %3605
        %3609 = vset.pattern.permute.xlu0 0
        %3610 = vperm.xlu0 %3609, %v3540
        %v3611 = vpop.permute.xlu0 %3610
        %3614 = vset.pattern.permute.xlu0 0
        %3615 = vperm.xlu0 %3614, %v3541
        %v3616 = vpop.permute.xlu0 %3615
        %3619 = vset.pattern.permute.xlu0 0
        %3620 = vperm.xlu0 %3619, %v3542
        %v3621 = vpop.permute.xlu0 %3620
        %3624 = vset.pattern.permute.xlu0 0
        %3625 = vperm.xlu0 %3624, %v3543
        %v3626 = vpop.permute.xlu0 %3625
        %3629 = vset.pattern.permute.xlu0 0
        %3630 = vperm.xlu0 %3629, %v3544
        %v3631 = vpop.permute.xlu0 %3630
        %3634 = vset.pattern.permute.xlu0 0
        %3635 = vperm.xlu0 %3634, %v3545
        %v3636 = vpop.permute.xlu0 %3635
        %3639 = vset.pattern.permute.xlu0 0
        %3640 = vperm.xlu0 %3639, %v3546
        %v3641 = vpop.permute.xlu0 %3640
        %3644 = vset.pattern.permute.xlu0 0
        %3645 = vperm.xlu0 %3644, %v3547
        %v3646 = vpop.permute.xlu0 %3645
        %3649 = vset.pattern.permute.xlu0 0
        %3650 = vperm.xlu0 %3649, %v3548
        %v3651 = vpop.permute.xlu0 %3650
        %3654 = vset.pattern.permute.xlu0 0
        %3655 = vperm.xlu0 %3654, %v3549
        %v3656 = vpop.permute.xlu0 %3655
        %3659 = vset.pattern.permute.xlu0 0
        %3660 = vperm.xlu0 %3659, %v3550
        %v3661 = vpop.permute.xlu0 %3660
        %3664 = vset.pattern.permute.xlu0 0
        %3665 = vperm.xlu0 %3664, %v3551
        %v3666 = vpop.permute.xlu0 %3665
        %3669 = vset.pattern.permute.xlu0 0
        %3670 = vperm.xlu0 %3669, %v3552
        %v3671 = vpop.permute.xlu0 %3670
        %3674 = vset.pattern.permute.xlu0 0
        %3675 = vperm.xlu0 %3674, %v3553
        %v3676 = vpop.permute.xlu0 %3675
        %3679 = vset.pattern.permute.xlu0 0
        %3680 = vperm.xlu0 %3679, %v3554
        %v3681 = vpop.permute.xlu0 %3680
        %3684 = vset.pattern.permute.xlu0 0
        %3685 = vperm.xlu0 %3684, %v3555
        %v3686 = vpop.permute.xlu0 %3685
        %3689 = vset.pattern.permute.xlu0 0
        %3690 = vperm.xlu0 %3689, %v3556
        %v3691 = vpop.permute.xlu0 %3690
        %3694 = vset.pattern.permute.xlu0 0
        %3695 = vperm.xlu0 %3694, %v3557
        %v3696 = vpop.permute.xlu0 %3695
        %3699 = vset.pattern.permute.xlu0 0
        %3700 = vperm.xlu0 %3699, %v3558
        %v3701 = vpop.permute.xlu0 %3700
        %3704 = vset.pattern.permute.xlu0 0
        %3705 = vperm.xlu0 %3704, %v3559
        %v3706 = vpop.permute.xlu0 %3705
        %3709 = vset.pattern.permute.xlu0 0
        %3710 = vperm.xlu0 %3709, %v3560
        %v3711 = vpop.permute.xlu0 %3710
        %3714 = vset.pattern.permute.xlu0 0
        %3715 = vperm.xlu0 %3714, %v3561
        %v3716 = vpop.permute.xlu0 %3715
        %3719 = vset.pattern.permute.xlu0 0
        %3720 = vperm.xlu0 %3719, %v3562
        %v3721 = vpop.permute.xlu0 %3720
        %v3723 = vrcp.pop %v3566
        %v3724 = vmul.f32 %v3467, %v3723
        %v3725 = vrcp.pop %v3571
        %v3726 = vmul.f32 %v3468, %v3725
        %v3727 = vrcp.pop %v3576
        %v3728 = vmul.f32 %v3469, %v3727
        %v3729 = vrcp.pop %v3581
        %v3730 = vmul.f32 %v3470, %v3729
        %v3731 = vrcp.pop %v3586
        %v3732 = vmul.f32 %v3471, %v3731
        %v3733 = vrcp.pop %v3591
        %v3734 = vmul.f32 %v3472, %v3733
        %v3735 = vrcp.pop %v3596
        %v3736 = vmul.f32 %v3473, %v3735
        %v3737 = vrcp.pop %v3601
        %v3738 = vmul.f32 %v3474, %v3737
        %v3739 = vrcp.pop %v3606
        %v3740 = vmul.f32 %v3475, %v3739
        %v3741 = vrcp.pop %v3611
        %v3742 = vmul.f32 %v3476, %v3741
        %v3743 = vrcp.pop %v3616
        %v3744 = vmul.f32 %v3477, %v3743
        %v3745 = vrcp.pop %v3621
        %v3746 = vmul.f32 %v3478, %v3745
        %v3747 = vrcp.pop %v3626
        %v3748 = vmul.f32 %v3479, %v3747
        %v3749 = vrcp.pop %v3631
        %v3750 = vmul.f32 %v3480, %v3749
        %v3751 = vrcp.pop %v3636
        %v3752 = vmul.f32 %v3481, %v3751
        %v3753 = vrcp.pop %v3641
        %v3754 = vmul.f32 %v3482, %v3753
        %v3755 = vrcp.pop %v3646
        %v3756 = vmul.f32 %v3483, %v3755
        %v3757 = vrcp.pop %v3651
        %v3758 = vmul.f32 %v3484, %v3757
        %v3759 = vrcp.pop %v3656
        %v3760 = vmul.f32 %v3485, %v3759
        %v3761 = vrcp.pop %v3661
        %v3762 = vmul.f32 %v3486, %v3761
        %v3763 = vrcp.pop %v3666
        %v3764 = vmul.f32 %v3487, %v3763
        %v3765 = vrcp.pop %v3671
        %v3766 = vmul.f32 %v3488, %v3765
        %v3767 = vrcp.pop %v3676
        %v3768 = vmul.f32 %v3489, %v3767
        %v3769 = vrcp.pop %v3681
        %v3770 = vmul.f32 %v3490, %v3769
        %v3771 = vrcp.pop %v3686
        %v3772 = vmul.f32 %v3491, %v3771
        %v3773 = vrcp.pop %v3691
        %v3774 = vmul.f32 %v3492, %v3773
        %v3775 = vrcp.pop %v3696
        %v3776 = vmul.f32 %v3493, %v3775
        %v3777 = vrcp.pop %v3701
        %v3778 = vmul.f32 %v3494, %v3777
        %v3779 = vrcp.pop %v3706
        %v3780 = vmul.f32 %v3495, %v3779
        %v3781 = vrcp.pop %v3711
        %v3782 = vmul.f32 %v3496, %v3781
        %v3783 = vrcp.pop %v3716
        %v3784 = vmul.f32 %v3497, %v3783
        %v3785 = vrcp.pop %v3721
        %v3786 = vmul.f32 %v3498, %v3785
        %v3787 = vpack.c.bf16 %v3726, %v3724
        %v3788 = vpack.c.bf16 %v3730, %v3728
        %v3789 = vpack.c.bf16 %v3734, %v3732
        %v3790 = vpack.c.bf16 %v3738, %v3736
        %v3791 = vpack.c.bf16 %v3742, %v3740
        %v3792 = vpack.c.bf16 %v3746, %v3744
        %v3793 = vpack.c.bf16 %v3750, %v3748
        %v3794 = vpack.c.bf16 %v3754, %v3752
        %v3795 = vpack.c.bf16 %v3758, %v3756
        %v3796 = vpack.c.bf16 %v3762, %v3760
        %v3797 = vpack.c.bf16 %v3766, %v3764
        %v3798 = vpack.c.bf16 %v3770, %v3768
        %v3799 = vpack.c.bf16 %v3774, %v3772
        %v3800 = vpack.c.bf16 %v3778, %v3776
        %v3801 = vpack.c.bf16 %v3782, %v3780
        %v3802 = vpack.c.bf16 %v3786, %v3784
        %v3803 = vld [vmem:[%s3] sm:$0xf]
        %v3804 = vld [vmem:[%s3 + $0x4] sm:$0xf]
        %v3805 = vld [vmem:[%s3 + $0x8] sm:$0xf]
        %v3806 = vld [vmem:[%s3 + $0xc] sm:$0xf]
        %v3807 = vld [vmem:[%s3 + $0x10] sm:$0xf]
        %v3808 = vld [vmem:[%s3 + $0x14] sm:$0xf]
        %v3809 = vld [vmem:[%s3 + $0x18] sm:$0xf]
        %v3810 = vld [vmem:[%s3 + $0x1c] sm:$0xf]
        %v3811 = vld [vmem:[%s3 + $0x20] sm:$0xf]
        %v3812 = vld [vmem:[%s3 + $0x24] sm:$0xf]
        %v3813 = vld [vmem:[%s3 + $0x28] sm:$0xf]
        %v3814 = vld [vmem:[%s3 + $0x2c] sm:$0xf]
        %v3815 = vld [vmem:[%s3 + $0x30] sm:$0xf]
        %v3816 = vld [vmem:[%s3 + $0x34] sm:$0xf]
        %v3817 = vld [vmem:[%s3 + $0x38] sm:$0xf]
        %v3818 = vld [vmem:[%s3 + $0x3c] sm:$0xf]
        %v3819 = vld [vmem:[%s4] sm:$0x1]
        %v3821 = vlaneseq
        %v3822 = vshrl.u32 %v3821, 7
        %v3823 = vsub.s32 0, %v3822
        %v3824 = vrot.slane %v3819, %v3823
        %v3842 = vunpack.c.l.b16 %v3803
        %v3843 = vunpack.c.l.b16 %v3804
        %v3844 = vunpack.c.l.b16 %v3805
        %v3845 = vunpack.c.l.b16 %v3806
        %v3846 = vunpack.c.l.b16 %v3807
        %v3847 = vunpack.c.l.b16 %v3808
        %v3848 = vunpack.c.l.b16 %v3809
        %v3849 = vunpack.c.l.b16 %v3810
        %v3850 = vunpack.c.l.b16 %v3811
        %v3851 = vunpack.c.l.b16 %v3812
        %v3852 = vunpack.c.l.b16 %v3813
        %v3853 = vunpack.c.l.b16 %v3814
        %v3854 = vunpack.c.l.b16 %v3815
        %v3855 = vunpack.c.l.b16 %v3816
        %v3856 = vunpack.c.l.b16 %v3817
        %v3857 = vunpack.c.l.b16 %v3818
        %v3858 = vpack.c.b16 %v3843, %v3842
        %v3859 = vpack.c.b16 %v3845, %v3844
        %v3860 = vpack.c.b16 %v3847, %v3846
        %v3861 = vpack.c.b16 %v3849, %v3848
        %v3862 = vpack.c.b16 %v3851, %v3850
        %v3863 = vpack.c.b16 %v3853, %v3852
        %v3864 = vpack.c.b16 %v3855, %v3854
        %v3865 = vpack.c.b16 %v3857, %v3856
        %3874 = vmatprep.subr.bf16.mxu0 0
        %3875 = vmatpush1.bf16.msra.mxu0 %v3865
        %3876 = vmatprep.subr.bf16.mxu0 0
        %3877 = vmatpush1.bf16.msra.mxu0 %v3864
        %3878 = vmatprep.subr.bf16.mxu0 0
        %3879 = vmatpush1.bf16.msra.mxu0 %v3863
        %3880 = vmatprep.subr.bf16.mxu0 0
        %3881 = vmatpush1.bf16.msra.mxu0 %v3862
        %3882 = vmatprep.subr.bf16.mxu0 0
        %3883 = vmatpush1.bf16.msra.mxu0 %v3861
        %3884 = vmatprep.subr.bf16.mxu0 0
        %3885 = vmatpush1.bf16.msra.mxu0 %v3860
        %3886 = vmatprep.subr.bf16.mxu0 0
        %3887 = vmatpush1.bf16.msra.mxu0 %v3859
        %3888 = vmatprep.subr.bf16.mxu0 0
        %3889 = vmatpush1.bf16.msra.mxu0 %v3858
        %3890 = vmatprep.subr.bf16.mxu0 0
        %3891 = vmatpush2.bf16.msra.mxu0 0
        %3892 = vmatprep.subr.bf16.mxu0 0
        %3893 = vmatpush2.bf16.msra.mxu0 0
        %3894 = vmatprep.subr.bf16.mxu0 0
        %3895 = vmatpush2.bf16.msra.mxu0 0
        %3896 = vmatprep.subr.bf16.mxu0 0
        %3897 = vmatpush2.bf16.msra.mxu0 0
        %3898 = vmatprep.subr.bf16.mxu0 0
        %3899 = vmatpush2.bf16.msra.mxu0 0
        %3900 = vmatprep.subr.bf16.mxu0 0
        %3901 = vmatpush2.bf16.msra.mxu0 0
        %3902 = vmatprep.subr.bf16.mxu0 0
        %3903 = vmatpush2.bf16.msra.mxu0 0
        %3904 = vmatprep.subr.bf16.mxu0 0
        %3905 = vmatpush2.bf16.msra.mxu0 0
        %3906 = vmatprep.mubr.bf16.mxu0 0
        %3907 = vmatmul.mubr.bf16.gmra.mxu0 %v3787
        %v3908 = vpop.f32.mrf.mxu0
        %v3909 = vadd.f32 %v3824, %v3908
        %v3910 = vpop.f32.mrf.mxu0
        %v3911 = vpop.f32.mrf.mxu0
        %v3912 = vadd.f32 %v3824, %v3911
        %v3913 = vpop.f32.mrf.mxu0
        %3914 = vmatprep.mubr.bf16.mxu0 0
        %3915 = vmatmul.mubr.bf16.gmra.mxu0 %v3788
        %v3916 = vpop.f32.mrf.mxu0
        %v3917 = vadd.f32 %v3824, %v3916
        %v3918 = vpop.f32.mrf.mxu0
        %v3919 = vpop.f32.mrf.mxu0
        %v3920 = vadd.f32 %v3824, %v3919
        %v3921 = vpop.f32.mrf.mxu0
        %3922 = vmatprep.mubr.bf16.mxu0 0
        %3923 = vmatmul.mubr.bf16.gmra.mxu0 %v3789
        %v3924 = vpop.f32.mrf.mxu0
        %v3925 = vadd.f32 %v3824, %v3924
        %v3926 = vpop.f32.mrf.mxu0
        %v3927 = vpop.f32.mrf.mxu0
        %v3928 = vadd.f32 %v3824, %v3927
        %v3929 = vpop.f32.mrf.mxu0
        %3930 = vmatprep.mubr.bf16.mxu0 0
        %3931 = vmatmul.mubr.bf16.gmra.mxu0 %v3790
        %v3932 = vpop.f32.mrf.mxu0
        %v3933 = vadd.f32 %v3824, %v3932
        %v3934 = vpop.f32.mrf.mxu0
        %v3935 = vpop.f32.mrf.mxu0
        %v3936 = vadd.f32 %v3824, %v3935
        %v3937 = vpop.f32.mrf.mxu0
        %3938 = vmatprep.mubr.bf16.mxu0 0
        %3939 = vmatmul.mubr.bf16.gmra.mxu0 %v3791
        %v3940 = vpop.f32.mrf.mxu0
        %v3941 = vadd.f32 %v3824, %v3940
        %v3942 = vpop.f32.mrf.mxu0
        %v3943 = vpop.f32.mrf.mxu0
        %v3944 = vadd.f32 %v3824, %v3943
        %v3945 = vpop.f32.mrf.mxu0
        %3946 = vmatprep.mubr.bf16.mxu0 0
        %3947 = vmatmul.mubr.bf16.gmra.mxu0 %v3792
        %v3948 = vpop.f32.mrf.mxu0
        %v3949 = vadd.f32 %v3824, %v3948
        %v3950 = vpop.f32.mrf.mxu0
        %v3951 = vpop.f32.mrf.mxu0
        %v3952 = vadd.f32 %v3824, %v3951
        %v3953 = vpop.f32.mrf.mxu0
        %3954 = vmatprep.mubr.bf16.mxu0 0
        %3955 = vmatmul.mubr.bf16.gmra.mxu0 %v3793
        %v3956 = vpop.f32.mrf.mxu0
        %v3957 = vadd.f32 %v3824, %v3956
        %v3958 = vpop.f32.mrf.mxu0
        %v3959 = vpop.f32.mrf.mxu0
        %v3960 = vadd.f32 %v3824, %v3959
        %v3961 = vpop.f32.mrf.mxu0
        %3962 = vmatprep.mubr.bf16.mxu0 0
        %3963 = vmatmul.mubr.bf16.gmra.mxu0 %v3794
        %v3964 = vpop.f32.mrf.mxu0
        %v3965 = vadd.f32 %v3824, %v3964
        %v3966 = vpop.f32.mrf.mxu0
        %v3967 = vpop.f32.mrf.mxu0
        %v3968 = vadd.f32 %v3824, %v3967
        %v3969 = vpop.f32.mrf.mxu0
        %3970 = vmatprep.mubr.bf16.mxu0 0
        %3971 = vmatmul.mubr.bf16.gmra.mxu0 %v3795
        %v3972 = vpop.f32.mrf.mxu0
        %v3973 = vadd.f32 %v3824, %v3972
        %v3974 = vpop.f32.mrf.mxu0
        %v3975 = vpop.f32.mrf.mxu0
        %v3976 = vadd.f32 %v3824, %v3975
        %v3977 = vpop.f32.mrf.mxu0
        %3978 = vmatprep.mubr.bf16.mxu0 0
        %3979 = vmatmul.mubr.bf16.gmra.mxu0 %v3796
        %v3980 = vpop.f32.mrf.mxu0
        %v3981 = vadd.f32 %v3824, %v3980
        %v3982 = vpop.f32.mrf.mxu0
        %v3983 = vpop.f32.mrf.mxu0
        %v3984 = vadd.f32 %v3824, %v3983
        %v3985 = vpop.f32.mrf.mxu0
        %3986 = vmatprep.mubr.bf16.mxu0 0
        %3987 = vmatmul.mubr.bf16.gmra.mxu0 %v3797
        %v3988 = vpop.f32.mrf.mxu0
        %v3989 = vadd.f32 %v3824, %v3988
        %v3990 = vpop.f32.mrf.mxu0
        %v3991 = vpop.f32.mrf.mxu0
        %v3992 = vadd.f32 %v3824, %v3991
        %v3993 = vpop.f32.mrf.mxu0
        %3994 = vmatprep.mubr.bf16.mxu0 0
        %3995 = vmatmul.mubr.bf16.gmra.mxu0 %v3798
        %v3996 = vpop.f32.mrf.mxu0
        %v3997 = vadd.f32 %v3824, %v3996
        %v3998 = vpop.f32.mrf.mxu0
        %v3999 = vpop.f32.mrf.mxu0
        %v4000 = vadd.f32 %v3824, %v3999
        %v4001 = vpop.f32.mrf.mxu0
        %4002 = vmatprep.mubr.bf16.mxu0 0
        %4003 = vmatmul.mubr.bf16.gmra.mxu0 %v3799
        %v4004 = vpop.f32.mrf.mxu0
        %v4005 = vadd.f32 %v3824, %v4004
        %v4006 = vpop.f32.mrf.mxu0
        %v4007 = vpop.f32.mrf.mxu0
        %v4008 = vadd.f32 %v3824, %v4007
        %v4009 = vpop.f32.mrf.mxu0
        %4010 = vmatprep.mubr.bf16.mxu0 0
        %4011 = vmatmul.mubr.bf16.gmra.mxu0 %v3800
        %v4012 = vpop.f32.mrf.mxu0
        %v4013 = vadd.f32 %v3824, %v4012
        %v4014 = vpop.f32.mrf.mxu0
        %v4015 = vpop.f32.mrf.mxu0
        %v4016 = vadd.f32 %v3824, %v4015
        %v4017 = vpop.f32.mrf.mxu0
        %4018 = vmatprep.mubr.bf16.mxu0 0
        %4019 = vmatmul.mubr.bf16.gmra.mxu0 %v3801
        %v4020 = vpop.f32.mrf.mxu0
        %v4021 = vadd.f32 %v3824, %v4020
        %v4022 = vpop.f32.mrf.mxu0
        %v4023 = vpop.f32.mrf.mxu0
        %v4024 = vadd.f32 %v3824, %v4023
        %v4025 = vpop.f32.mrf.mxu0
        %4026 = vmatprep.mubr.bf16.mxu0 0
        %4027 = vmatmul.mubr.bf16.gmra.mxu0 %v3802
        %v4028 = vpop.f32.mrf.mxu0
        %v4029 = vadd.f32 %v3824, %v4028
        %v4030 = vpop.f32.mrf.mxu0
        %v4031 = vpop.f32.mrf.mxu0
        %v4032 = vadd.f32 %v3824, %v4031
        %v4033 = vpop.f32.mrf.mxu0
        %4034 = vdwg.mxu0
        %v4035 = vmax.f32 %v3909, 0.0
        %v4036 = vmax.f32 %v3912, 0.0
        %v4037 = vmax.f32 %v3917, 0.0
        %v4038 = vmax.f32 %v3920, 0.0
        %v4039 = vmax.f32 %v3925, 0.0
        %v4040 = vmax.f32 %v3928, 0.0
        %v4041 = vmax.f32 %v3933, 0.0
        %v4042 = vmax.f32 %v3936, 0.0
        %v4043 = vmax.f32 %v3941, 0.0
        %v4044 = vmax.f32 %v3944, 0.0
        %v4045 = vmax.f32 %v3949, 0.0
        %v4046 = vmax.f32 %v3952, 0.0
        %v4047 = vmax.f32 %v3957, 0.0
        %v4048 = vmax.f32 %v3960, 0.0
        %v4049 = vmax.f32 %v3965, 0.0
        %v4050 = vmax.f32 %v3968, 0.0
        %v4051 = vmax.f32 %v3973, 0.0
        %v4052 = vmax.f32 %v3976, 0.0
        %v4053 = vmax.f32 %v3981, 0.0
        %v4054 = vmax.f32 %v3984, 0.0
        %v4055 = vmax.f32 %v3989, 0.0
        %v4056 = vmax.f32 %v3992, 0.0
        %v4057 = vmax.f32 %v3997, 0.0
        %v4058 = vmax.f32 %v4000, 0.0
        %v4059 = vmax.f32 %v4005, 0.0
        %v4060 = vmax.f32 %v4008, 0.0
        %v4061 = vmax.f32 %v4013, 0.0
        %v4062 = vmax.f32 %v4016, 0.0
        %v4063 = vmax.f32 %v4021, 0.0
        %v4064 = vmax.f32 %v4024, 0.0
        %v4065 = vmax.f32 %v4029, 0.0
        %v4066 = vmax.f32 %v4032, 0.0
        %v4067 = vpack.c.bf16 %v4036, %v4035
        %v4068 = vpack.c.bf16 %v4038, %v4037
        %v4069 = vpack.c.bf16 %v4040, %v4039
        %v4070 = vpack.c.bf16 %v4042, %v4041
        %v4071 = vpack.c.bf16 %v4044, %v4043
        %v4072 = vpack.c.bf16 %v4046, %v4045
        %v4073 = vpack.c.bf16 %v4048, %v4047
        %v4074 = vpack.c.bf16 %v4050, %v4049
        %v4075 = vpack.c.bf16 %v4052, %v4051
        %v4076 = vpack.c.bf16 %v4054, %v4053
        %v4077 = vpack.c.bf16 %v4056, %v4055
        %v4078 = vpack.c.bf16 %v4058, %v4057
        %v4079 = vpack.c.bf16 %v4060, %v4059
        %v4080 = vpack.c.bf16 %v4062, %v4061
        %v4081 = vpack.c.bf16 %v4064, %v4063
        %v4082 = vpack.c.bf16 %v4066, %v4065
        %v4083 = vld [vmem:[%s5] sm:$0xf]
        %v4084 = vld [vmem:[%s5 + $0x4] sm:$0xf]
        %v4085 = vld [vmem:[%s5 + $0x8] sm:$0xf]
        %v4086 = vld [vmem:[%s5 + $0xc] sm:$0xf]
        %v4087 = vld [vmem:[%s5 + $0x10] sm:$0xf]
        %v4088 = vld [vmem:[%s5 + $0x14] sm:$0xf]
        %v4089 = vld [vmem:[%s5 + $0x18] sm:$0xf]
        %v4090 = vld [vmem:[%s5 + $0x1c] sm:$0xf]
        %v4091 = vld [vmem:[%s5 + $0x20] sm:$0xf]
        %v4092 = vld [vmem:[%s5 + $0x24] sm:$0xf]
        %v4093 = vld [vmem:[%s5 + $0x28] sm:$0xf]
        %v4094 = vld [vmem:[%s5 + $0x2c] sm:$0xf]
        %v4095 = vld [vmem:[%s5 + $0x30] sm:$0xf]
        %v4096 = vld [vmem:[%s5 + $0x34] sm:$0xf]
        %v4097 = vld [vmem:[%s5 + $0x38] sm:$0xf]
        %v4098 = vld [vmem:[%s5 + $0x3c] sm:$0xf]
        %v4099 = vld [vmem:[%s6] sm:$0x1]
        %v4101 = vlaneseq
        %v4102 = vshrl.u32 %v4101, 7
        %v4103 = vsub.s32 0, %v4102
        %v4104 = vrot.slane %v4099, %v4103
        %v4122 = vunpack.c.l.b16 %v4083
        %v4123 = vunpack.c.l.b16 %v4084
        %v4124 = vunpack.c.l.b16 %v4085
        %v4125 = vunpack.c.l.b16 %v4086
        %v4126 = vunpack.c.l.b16 %v4087
        %v4127 = vunpack.c.l.b16 %v4088
        %v4128 = vunpack.c.l.b16 %v4089
        %v4129 = vunpack.c.l.b16 %v4090
        %v4130 = vunpack.c.l.b16 %v4091
        %v4131 = vunpack.c.l.b16 %v4092
        %v4132 = vunpack.c.l.b16 %v4093
        %v4133 = vunpack.c.l.b16 %v4094
        %v4134 = vunpack.c.l.b16 %v4095
        %v4135 = vunpack.c.l.b16 %v4096
        %v4136 = vunpack.c.l.b16 %v4097
        %v4137 = vunpack.c.l.b16 %v4098
        %v4138 = vpack.c.b16 %v4123, %v4122
        %v4139 = vpack.c.b16 %v4125, %v4124
        %v4140 = vpack.c.b16 %v4127, %v4126
        %v4141 = vpack.c.b16 %v4129, %v4128
        %v4142 = vpack.c.b16 %v4131, %v4130
        %v4143 = vpack.c.b16 %v4133, %v4132
        %v4144 = vpack.c.b16 %v4135, %v4134
        %v4145 = vpack.c.b16 %v4137, %v4136
        %4154 = vmatprep.subr.bf16.mxu0 0
        %4155 = vmatpush1.bf16.msra.mxu0 %v4145
        %4156 = vmatprep.subr.bf16.mxu0 0
        %4157 = vmatpush1.bf16.msra.mxu0 %v4144
        %4158 = vmatprep.subr.bf16.mxu0 0
        %4159 = vmatpush1.bf16.msra.mxu0 %v4143
        %4160 = vmatprep.subr.bf16.mxu0 0
        %4161 = vmatpush1.bf16.msra.mxu0 %v4142
        %4162 = vmatprep.subr.bf16.mxu0 0
        %4163 = vmatpush1.bf16.msra.mxu0 %v4141
        %4164 = vmatprep.subr.bf16.mxu0 0
        %4165 = vmatpush1.bf16.msra.mxu0 %v4140
        %4166 = vmatprep.subr.bf16.mxu0 0
        %4167 = vmatpush1.bf16.msra.mxu0 %v4139
        %4168 = vmatprep.subr.bf16.mxu0 0
        %4169 = vmatpush1.bf16.msra.mxu0 %v4138
        %4170 = vmatprep.subr.bf16.mxu0 0
        %4171 = vmatpush2.bf16.msra.mxu0 0
        %4172 = vmatprep.subr.bf16.mxu0 0
        %4173 = vmatpush2.bf16.msra.mxu0 0
        %4174 = vmatprep.subr.bf16.mxu0 0
        %4175 = vmatpush2.bf16.msra.mxu0 0
        %4176 = vmatprep.subr.bf16.mxu0 0
        %4177 = vmatpush2.bf16.msra.mxu0 0
        %4178 = vmatprep.subr.bf16.mxu0 0
        %4179 = vmatpush2.bf16.msra.mxu0 0
        %4180 = vmatprep.subr.bf16.mxu0 0
        %4181 = vmatpush2.bf16.msra.mxu0 0
        %4182 = vmatprep.subr.bf16.mxu0 0
        %4183 = vmatpush2.bf16.msra.mxu0 0
        %4184 = vmatprep.subr.bf16.mxu0 0
        %4185 = vmatpush2.bf16.msra.mxu0 0
        %4186 = vmatprep.mubr.bf16.mxu0 0
        %4187 = vmatmul.mubr.bf16.gmra.mxu0 %v4067
        %v4188 = vpop.f32.mrf.mxu0
        %v4189 = vadd.f32 %v4104, %v4188
        %v4190 = vpop.f32.mrf.mxu0
        %v4191 = vpop.f32.mrf.mxu0
        %v4192 = vadd.f32 %v4104, %v4191
        %v4193 = vpop.f32.mrf.mxu0
        %4194 = vmatprep.mubr.bf16.mxu0 0
        %4195 = vmatmul.mubr.bf16.gmra.mxu0 %v4068
        %v4196 = vpop.f32.mrf.mxu0
        %v4197 = vadd.f32 %v4104, %v4196
        %v4198 = vpop.f32.mrf.mxu0
        %v4199 = vpop.f32.mrf.mxu0
        %v4200 = vadd.f32 %v4104, %v4199
        %v4201 = vpop.f32.mrf.mxu0
        %4202 = vmatprep.mubr.bf16.mxu0 0
        %4203 = vmatmul.mubr.bf16.gmra.mxu0 %v4069
        %v4204 = vpop.f32.mrf.mxu0
        %v4205 = vadd.f32 %v4104, %v4204
        %v4206 = vpop.f32.mrf.mxu0
        %v4207 = vpop.f32.mrf.mxu0
        %v4208 = vadd.f32 %v4104, %v4207
        %v4209 = vpop.f32.mrf.mxu0
        %4210 = vmatprep.mubr.bf16.mxu0 0
        %4211 = vmatmul.mubr.bf16.gmra.mxu0 %v4070
        %v4212 = vpop.f32.mrf.mxu0
        %v4213 = vadd.f32 %v4104, %v4212
        %v4214 = vpop.f32.mrf.mxu0
        %v4215 = vpop.f32.mrf.mxu0
        %v4216 = vadd.f32 %v4104, %v4215
        %v4217 = vpop.f32.mrf.mxu0
        %4218 = vmatprep.mubr.bf16.mxu0 0
        %4219 = vmatmul.mubr.bf16.gmra.mxu0 %v4071
        %v4220 = vpop.f32.mrf.mxu0
        %v4221 = vadd.f32 %v4104, %v4220
        %v4222 = vpop.f32.mrf.mxu0
        %v4223 = vpop.f32.mrf.mxu0
        %v4224 = vadd.f32 %v4104, %v4223
        %v4225 = vpop.f32.mrf.mxu0
        %4226 = vmatprep.mubr.bf16.mxu0 0
        %4227 = vmatmul.mubr.bf16.gmra.mxu0 %v4072
        %v4228 = vpop.f32.mrf.mxu0
        %v4229 = vadd.f32 %v4104, %v4228
        %v4230 = vpop.f32.mrf.mxu0
        %v4231 = vpop.f32.mrf.mxu0
        %v4232 = vadd.f32 %v4104, %v4231
        %v4233 = vpop.f32.mrf.mxu0
        %4234 = vmatprep.mubr.bf16.mxu0 0
        %4235 = vmatmul.mubr.bf16.gmra.mxu0 %v4073
        %v4236 = vpop.f32.mrf.mxu0
        %v4237 = vadd.f32 %v4104, %v4236
        %v4238 = vpop.f32.mrf.mxu0
        %v4239 = vpop.f32.mrf.mxu0
        %v4240 = vadd.f32 %v4104, %v4239
        %v4241 = vpop.f32.mrf.mxu0
        %4242 = vmatprep.mubr.bf16.mxu0 0
        %4243 = vmatmul.mubr.bf16.gmra.mxu0 %v4074
        %v4244 = vpop.f32.mrf.mxu0
        %v4245 = vadd.f32 %v4104, %v4244
        %v4246 = vpop.f32.mrf.mxu0
        %v4247 = vpop.f32.mrf.mxu0
        %v4248 = vadd.f32 %v4104, %v4247
        %v4249 = vpop.f32.mrf.mxu0
        %4250 = vmatprep.mubr.bf16.mxu0 0
        %4251 = vmatmul.mubr.bf16.gmra.mxu0 %v4075
        %v4252 = vpop.f32.mrf.mxu0
        %v4253 = vadd.f32 %v4104, %v4252
        %v4254 = vpop.f32.mrf.mxu0
        %v4255 = vpop.f32.mrf.mxu0
        %v4256 = vadd.f32 %v4104, %v4255
        %v4257 = vpop.f32.mrf.mxu0
        %4258 = vmatprep.mubr.bf16.mxu0 0
        %4259 = vmatmul.mubr.bf16.gmra.mxu0 %v4076
        %v4260 = vpop.f32.mrf.mxu0
        %v4261 = vadd.f32 %v4104, %v4260
        %v4262 = vpop.f32.mrf.mxu0
        %v4263 = vpop.f32.mrf.mxu0
        %v4264 = vadd.f32 %v4104, %v4263
        %v4265 = vpop.f32.mrf.mxu0
        %4266 = vmatprep.mubr.bf16.mxu0 0
        %4267 = vmatmul.mubr.bf16.gmra.mxu0 %v4077
        %v4268 = vpop.f32.mrf.mxu0
        %v4269 = vadd.f32 %v4104, %v4268
        %v4270 = vpop.f32.mrf.mxu0
        %v4271 = vpop.f32.mrf.mxu0
        %v4272 = vadd.f32 %v4104, %v4271
        %v4273 = vpop.f32.mrf.mxu0
        %4274 = vmatprep.mubr.bf16.mxu0 0
        %4275 = vmatmul.mubr.bf16.gmra.mxu0 %v4078
        %v4276 = vpop.f32.mrf.mxu0
        %v4277 = vadd.f32 %v4104, %v4276
        %v4278 = vpop.f32.mrf.mxu0
        %v4279 = vpop.f32.mrf.mxu0
        %v4280 = vadd.f32 %v4104, %v4279
        %v4281 = vpop.f32.mrf.mxu0
        %4282 = vmatprep.mubr.bf16.mxu0 0
        %4283 = vmatmul.mubr.bf16.gmra.mxu0 %v4079
        %v4284 = vpop.f32.mrf.mxu0
        %v4285 = vadd.f32 %v4104, %v4284
        %v4286 = vpop.f32.mrf.mxu0
        %v4287 = vpop.f32.mrf.mxu0
        %v4288 = vadd.f32 %v4104, %v4287
        %v4289 = vpop.f32.mrf.mxu0
        %4290 = vmatprep.mubr.bf16.mxu0 0
        %4291 = vmatmul.mubr.bf16.gmra.mxu0 %v4080
        %v4292 = vpop.f32.mrf.mxu0
        %v4293 = vadd.f32 %v4104, %v4292
        %v4294 = vpop.f32.mrf.mxu0
        %v4295 = vpop.f32.mrf.mxu0
        %v4296 = vadd.f32 %v4104, %v4295
        %v4297 = vpop.f32.mrf.mxu0
        %4298 = vmatprep.mubr.bf16.mxu0 0
        %4299 = vmatmul.mubr.bf16.gmra.mxu0 %v4081
        %v4300 = vpop.f32.mrf.mxu0
        %v4301 = vadd.f32 %v4104, %v4300
        %v4302 = vpop.f32.mrf.mxu0
        %v4303 = vpop.f32.mrf.mxu0
        %v4304 = vadd.f32 %v4104, %v4303
        %v4305 = vpop.f32.mrf.mxu0
        %4306 = vmatprep.mubr.bf16.mxu0 0
        %4307 = vmatmul.mubr.bf16.gmra.mxu0 %v4082
        %v4308 = vpop.f32.mrf.mxu0
        %v4309 = vadd.f32 %v4104, %v4308
        %v4310 = vpop.f32.mrf.mxu0
        %v4311 = vpop.f32.mrf.mxu0
        %v4312 = vadd.f32 %v4104, %v4311
        %v4313 = vpop.f32.mrf.mxu0
        %4314 = vdwg.mxu0
        %v4315 = vpack.c.bf16 %v4192, %v4189
        %v4316 = vpack.c.bf16 %v4200, %v4197
        %v4317 = vpack.c.bf16 %v4208, %v4205
        %v4318 = vpack.c.bf16 %v4216, %v4213
        %v4319 = vpack.c.bf16 %v4224, %v4221
        %v4320 = vpack.c.bf16 %v4232, %v4229
        %v4321 = vpack.c.bf16 %v4240, %v4237
        %v4322 = vpack.c.bf16 %v4248, %v4245
        %v4323 = vpack.c.bf16 %v4256, %v4253
        %v4324 = vpack.c.bf16 %v4264, %v4261
        %v4325 = vpack.c.bf16 %v4272, %v4269
        %v4326 = vpack.c.bf16 %v4280, %v4277
        %v4327 = vpack.c.bf16 %v4288, %v4285
        %v4328 = vpack.c.bf16 %v4296, %v4293
        %v4329 = vpack.c.bf16 %v4304, %v4301
        %v4330 = vpack.c.bf16 %v4312, %v4309
        %v4331 = vld [vmem:[%s7] sm:$0xf]
        %v4332 = vld [vmem:[%s7 + $0x4] sm:$0xf]
        %v4333 = vld [vmem:[%s7 + $0x8] sm:$0xf]
        %v4334 = vld [vmem:[%s7 + $0xc] sm:$0xf]
        %v4335 = vld [vmem:[%s7 + $0x10] sm:$0xf]
        %v4336 = vld [vmem:[%s7 + $0x14] sm:$0xf]
        %v4337 = vld [vmem:[%s7 + $0x18] sm:$0xf]
        %v4338 = vld [vmem:[%s7 + $0x1c] sm:$0xf]
        %v4339 = vld [vmem:[%s8] sm:$0x1]
        %v4341 = vlaneseq
        %v4342 = vshrl.u32 %v4341, 7
        %v4343 = vsub.s32 0, %v4342
        %v4344 = vrot.slane %v4339, %v4343
        %v4354 = vunpack.c.l.b16 %v4331
        %v4355 = vunpack.c.l.b16 %v4332
        %v4356 = vunpack.c.l.b16 %v4333
        %v4357 = vunpack.c.l.b16 %v4334
        %v4358 = vunpack.c.l.b16 %v4335
        %v4359 = vunpack.c.l.b16 %v4336
        %v4360 = vunpack.c.l.b16 %v4337
        %v4361 = vunpack.c.l.b16 %v4338
        %v4362 = vpack.c.b16 %v4355, %v4354
        %v4363 = vpack.c.b16 %v4357, %v4356
        %v4364 = vpack.c.b16 %v4359, %v4358
        %v4365 = vpack.c.b16 %v4361, %v4360
        %vm4370 = vcmask 523264
        %v4372 = vsel %vm4370, %v4315, 0
        %v4375 = vsel %vm4370, %v4316, 0
        %v4378 = vsel %vm4370, %v4317, 0
        %v4381 = vsel %vm4370, %v4318, 0
        %v4384 = vsel %vm4370, %v4319, 0
        %v4387 = vsel %vm4370, %v4320, 0
        %v4390 = vsel %vm4370, %v4321, 0
        %v4393 = vsel %vm4370, %v4322, 0
        %v4396 = vsel %vm4370, %v4323, 0
        %v4399 = vsel %vm4370, %v4324, 0
        %v4402 = vsel %vm4370, %v4325, 0
        %v4405 = vsel %vm4370, %v4326, 0
        %v4408 = vsel %vm4370, %v4327, 0
        %v4411 = vsel %vm4370, %v4328, 0
        %v4414 = vsel %vm4370, %v4329, 0
        %v4417 = vsel %vm4370, %v4330, 0
        %4419 = vmatprep.subr.bf16.mxu0 0
        %4420 = vmatpush1.bf16.msra.mxu0 0
        %4421 = vmatprep.subr.bf16.mxu0 0
        %4422 = vmatpush1.bf16.msra.mxu0 0
        %4423 = vmatprep.subr.bf16.mxu0 0
        %4424 = vmatpush1.bf16.msra.mxu0 0
        %4425 = vmatprep.subr.bf16.mxu0 0
        %4426 = vmatpush1.bf16.msra.mxu0 0
        %4427 = vmatprep.subr.bf16.mxu0 0
        %4428 = vmatpush1.bf16.msra.mxu0 %v4365
        %4429 = vmatprep.subr.bf16.mxu0 0
        %4430 = vmatpush1.bf16.msra.mxu0 %v4364
        %4431 = vmatprep.subr.bf16.mxu0 0
        %4432 = vmatpush1.bf16.msra.mxu0 %v4363
        %4433 = vmatprep.subr.bf16.mxu0 0
        %4434 = vmatpush1.bf16.msra.mxu0 %v4362
        %4435 = vmatprep.subr.bf16.mxu0 0
        %4436 = vmatpush2.bf16.msra.mxu0 0
        %4437 = vmatprep.subr.bf16.mxu0 0
        %4438 = vmatpush2.bf16.msra.mxu0 0
        %4439 = vmatprep.subr.bf16.mxu0 0
        %4440 = vmatpush2.bf16.msra.mxu0 0
        %4441 = vmatprep.subr.bf16.mxu0 0
        %4442 = vmatpush2.bf16.msra.mxu0 0
        %4443 = vmatprep.subr.bf16.mxu0 0
        %4444 = vmatpush2.bf16.msra.mxu0 0
        %4445 = vmatprep.subr.bf16.mxu0 0
        %4446 = vmatpush2.bf16.msra.mxu0 0
        %4447 = vmatprep.subr.bf16.mxu0 0
        %4448 = vmatpush2.bf16.msra.mxu0 0
        %4449 = vmatprep.subr.bf16.mxu0 0
        %4450 = vmatpush2.bf16.msra.mxu0 0
        %4451 = vmatprep.mubr.bf16.mxu0 0
        %4452 = vmatmul.mubr.bf16.gmra.mxu0 %v4372
        %v4453 = vpop.f32.mrf.mxu0
        %v4454 = vadd.f32 %v4344, %v4453
        %v4455 = vpop.f32.mrf.mxu0
        %v4456 = vpop.f32.mrf.mxu0
        %v4457 = vadd.f32 %v4344, %v4456
        %v4458 = vpop.f32.mrf.mxu0
        %4459 = vmatprep.mubr.bf16.mxu0 0
        %4460 = vmatmul.mubr.bf16.gmra.mxu0 %v4375
        %v4461 = vpop.f32.mrf.mxu0
        %v4462 = vadd.f32 %v4344, %v4461
        %v4463 = vpop.f32.mrf.mxu0
        %v4464 = vpop.f32.mrf.mxu0
        %v4465 = vadd.f32 %v4344, %v4464
        %v4466 = vpop.f32.mrf.mxu0
        %4467 = vmatprep.mubr.bf16.mxu0 0
        %4468 = vmatmul.mubr.bf16.gmra.mxu0 %v4378
        %v4469 = vpop.f32.mrf.mxu0
        %v4470 = vadd.f32 %v4344, %v4469
        %v4471 = vpop.f32.mrf.mxu0
        %v4472 = vpop.f32.mrf.mxu0
        %v4473 = vadd.f32 %v4344, %v4472
        %v4474 = vpop.f32.mrf.mxu0
        %4475 = vmatprep.mubr.bf16.mxu0 0
        %4476 = vmatmul.mubr.bf16.gmra.mxu0 %v4381
        %v4477 = vpop.f32.mrf.mxu0
        %v4478 = vadd.f32 %v4344, %v4477
        %v4479 = vpop.f32.mrf.mxu0
        %v4480 = vpop.f32.mrf.mxu0
        %v4481 = vadd.f32 %v4344, %v4480
        %v4482 = vpop.f32.mrf.mxu0
        %4483 = vmatprep.mubr.bf16.mxu0 0
        %4484 = vmatmul.mubr.bf16.gmra.mxu0 %v4384
        %v4485 = vpop.f32.mrf.mxu0
        %v4486 = vadd.f32 %v4344, %v4485
        %v4487 = vpop.f32.mrf.mxu0
        %v4488 = vpop.f32.mrf.mxu0
        %v4489 = vadd.f32 %v4344, %v4488
        %v4490 = vpop.f32.mrf.mxu0
        %4491 = vmatprep.mubr.bf16.mxu0 0
        %4492 = vmatmul.mubr.bf16.gmra.mxu0 %v4387
        %v4493 = vpop.f32.mrf.mxu0
        %v4494 = vadd.f32 %v4344, %v4493
        %v4495 = vpop.f32.mrf.mxu0
        %v4496 = vpop.f32.mrf.mxu0
        %v4497 = vadd.f32 %v4344, %v4496
        %v4498 = vpop.f32.mrf.mxu0
        %4499 = vmatprep.mubr.bf16.mxu0 0
        %4500 = vmatmul.mubr.bf16.gmra.mxu0 %v4390
        %v4501 = vpop.f32.mrf.mxu0
        %v4502 = vadd.f32 %v4344, %v4501
        %v4503 = vpop.f32.mrf.mxu0
        %v4504 = vpop.f32.mrf.mxu0
        %v4505 = vadd.f32 %v4344, %v4504
        %v4506 = vpop.f32.mrf.mxu0
        %4507 = vmatprep.mubr.bf16.mxu0 0
        %4508 = vmatmul.mubr.bf16.gmra.mxu0 %v4393
        %v4509 = vpop.f32.mrf.mxu0
        %v4510 = vadd.f32 %v4344, %v4509
        %v4511 = vpop.f32.mrf.mxu0
        %v4512 = vpop.f32.mrf.mxu0
        %v4513 = vadd.f32 %v4344, %v4512
        %v4514 = vpop.f32.mrf.mxu0
        %4515 = vmatprep.mubr.bf16.mxu0 0
        %4516 = vmatmul.mubr.bf16.gmra.mxu0 %v4396
        %v4517 = vpop.f32.mrf.mxu0
        %v4518 = vadd.f32 %v4344, %v4517
        %v4519 = vpop.f32.mrf.mxu0
        %v4520 = vpop.f32.mrf.mxu0
        %v4521 = vadd.f32 %v4344, %v4520
        %v4522 = vpop.f32.mrf.mxu0
        %4523 = vmatprep.mubr.bf16.mxu0 0
        %4524 = vmatmul.mubr.bf16.gmra.mxu0 %v4399
        %v4525 = vpop.f32.mrf.mxu0
        %v4526 = vadd.f32 %v4344, %v4525
        %v4527 = vpop.f32.mrf.mxu0
        %v4528 = vpop.f32.mrf.mxu0
        %v4529 = vadd.f32 %v4344, %v4528
        %v4530 = vpop.f32.mrf.mxu0
        %4531 = vmatprep.mubr.bf16.mxu0 0
        %4532 = vmatmul.mubr.bf16.gmra.mxu0 %v4402
        %v4533 = vpop.f32.mrf.mxu0
        %v4534 = vadd.f32 %v4344, %v4533
        %v4535 = vpop.f32.mrf.mxu0
        %v4536 = vpop.f32.mrf.mxu0
        %v4537 = vadd.f32 %v4344, %v4536
        %v4538 = vpop.f32.mrf.mxu0
        %4539 = vmatprep.mubr.bf16.mxu0 0
        %4540 = vmatmul.mubr.bf16.gmra.mxu0 %v4405
        %v4541 = vpop.f32.mrf.mxu0
        %v4542 = vadd.f32 %v4344, %v4541
        %v4543 = vpop.f32.mrf.mxu0
        %v4544 = vpop.f32.mrf.mxu0
        %v4545 = vadd.f32 %v4344, %v4544
        %v4546 = vpop.f32.mrf.mxu0
        %4547 = vmatprep.mubr.bf16.mxu0 0
        %4548 = vmatmul.mubr.bf16.gmra.mxu0 %v4408
        %v4549 = vpop.f32.mrf.mxu0
        %v4550 = vadd.f32 %v4344, %v4549
        %v4551 = vpop.f32.mrf.mxu0
        %v4552 = vpop.f32.mrf.mxu0
        %v4553 = vadd.f32 %v4344, %v4552
        %v4554 = vpop.f32.mrf.mxu0
        %4555 = vmatprep.mubr.bf16.mxu0 0
        %4556 = vmatmul.mubr.bf16.gmra.mxu0 %v4411
        %v4557 = vpop.f32.mrf.mxu0
        %v4558 = vadd.f32 %v4344, %v4557
        %v4559 = vpop.f32.mrf.mxu0
        %v4560 = vpop.f32.mrf.mxu0
        %v4561 = vadd.f32 %v4344, %v4560
        %v4562 = vpop.f32.mrf.mxu0
        %4563 = vmatprep.mubr.bf16.mxu0 0
        %4564 = vmatmul.mubr.bf16.gmra.mxu0 %v4414
        %v4565 = vpop.f32.mrf.mxu0
        %v4566 = vadd.f32 %v4344, %v4565
        %v4567 = vpop.f32.mrf.mxu0
        %v4568 = vpop.f32.mrf.mxu0
        %v4569 = vadd.f32 %v4344, %v4568
        %v4570 = vpop.f32.mrf.mxu0
        %4571 = vmatprep.mubr.bf16.mxu0 0
        %4572 = vmatmul.mubr.bf16.gmra.mxu0 %v4417
        %v4573 = vpop.f32.mrf.mxu0
        %v4574 = vadd.f32 %v4344, %v4573
        %v4575 = vpop.f32.mrf.mxu0
        %v4576 = vpop.f32.mrf.mxu0
        %v4577 = vadd.f32 %v4344, %v4576
        %v4578 = vpop.f32.mrf.mxu0
        %4579 = vdwg.mxu0
        %v4580 = vmax.f32 %v4454, 0.0
        %v4581 = vmax.f32 %v4457, 0.0
        %v4582 = vmax.f32 %v4462, 0.0
        %v4583 = vmax.f32 %v4465, 0.0
        %v4584 = vmax.f32 %v4470, 0.0
        %v4585 = vmax.f32 %v4473, 0.0
        %v4586 = vmax.f32 %v4478, 0.0
        %v4587 = vmax.f32 %v4481, 0.0
        %v4588 = vmax.f32 %v4486, 0.0
        %v4589 = vmax.f32 %v4489, 0.0
        %v4590 = vmax.f32 %v4494, 0.0
        %v4591 = vmax.f32 %v4497, 0.0
        %v4592 = vmax.f32 %v4502, 0.0
        %v4593 = vmax.f32 %v4505, 0.0
        %v4594 = vmax.f32 %v4510, 0.0
        %v4595 = vmax.f32 %v4513, 0.0
        %v4596 = vmax.f32 %v4518, 0.0
        %v4597 = vmax.f32 %v4521, 0.0
        %v4598 = vmax.f32 %v4526, 0.0
        %v4599 = vmax.f32 %v4529, 0.0
        %v4600 = vmax.f32 %v4534, 0.0
        %v4601 = vmax.f32 %v4537, 0.0
        %v4602 = vmax.f32 %v4542, 0.0
        %v4603 = vmax.f32 %v4545, 0.0
        %v4604 = vmax.f32 %v4550, 0.0
        %v4605 = vmax.f32 %v4553, 0.0
        %v4606 = vmax.f32 %v4558, 0.0
        %v4607 = vmax.f32 %v4561, 0.0
        %v4608 = vmax.f32 %v4566, 0.0
        %v4609 = vmax.f32 %v4569, 0.0
        %v4610 = vmax.f32 %v4574, 0.0
        %v4611 = vmax.f32 %v4577, 0.0
        %v4612 = vpack.c.bf16 %v4581, %v4580
        %v4613 = vpack.c.bf16 %v4583, %v4582
        %v4614 = vpack.c.bf16 %v4585, %v4584
        %v4615 = vpack.c.bf16 %v4587, %v4586
        %v4616 = vpack.c.bf16 %v4589, %v4588
        %v4617 = vpack.c.bf16 %v4591, %v4590
        %v4618 = vpack.c.bf16 %v4593, %v4592
        %v4619 = vpack.c.bf16 %v4595, %v4594
        %v4620 = vpack.c.bf16 %v4597, %v4596
        %v4621 = vpack.c.bf16 %v4599, %v4598
        %v4622 = vpack.c.bf16 %v4601, %v4600
        %v4623 = vpack.c.bf16 %v4603, %v4602
        %v4624 = vpack.c.bf16 %v4605, %v4604
        %v4625 = vpack.c.bf16 %v4607, %v4606
        %v4626 = vpack.c.bf16 %v4609, %v4608
        %v4627 = vpack.c.bf16 %v4611, %v4610
        %v4628 = vld [vmem:[%s9] sm:$0xf]
        %v4629 = vld [vmem:[%s9 + $0x4] sm:$0xf]
        %v4630 = vld [vmem:[%s9 + $0x8] sm:$0xf]
        %v4631 = vld [vmem:[%s9 + $0xc] sm:$0xf]
        %v4632 = vld [vmem:[%s9 + $0x10] sm:$0xf]
        %v4633 = vld [vmem:[%s9 + $0x14] sm:$0xf]
        %v4634 = vld [vmem:[%s9 + $0x18] sm:$0xf]
        %v4635 = vld [vmem:[%s9 + $0x1c] sm:$0xf]
        %v4636 = vld [vmem:[%s9 + $0x20] sm:$0xf]
        %v4637 = vld [vmem:[%s9 + $0x24] sm:$0xf]
        %v4638 = vld [vmem:[%s9 + $0x28] sm:$0xf]
        %v4639 = vld [vmem:[%s9 + $0x2c] sm:$0xf]
        %v4640 = vld [vmem:[%s9 + $0x30] sm:$0xf]
        %v4641 = vld [vmem:[%s9 + $0x34] sm:$0xf]
        %v4642 = vld [vmem:[%s9 + $0x38] sm:$0xf]
        %v4643 = vld [vmem:[%s9 + $0x3c] sm:$0xf]
        %v4644 = vld [vmem:[%s10] sm:$0x1]
        %v4646 = vlaneseq
        %v4647 = vshrl.u32 %v4646, 7
        %v4648 = vsub.s32 0, %v4647
        %v4649 = vrot.slane %v4644, %v4648
        %v4667 = vunpack.c.l.b16 %v4628
        %v4668 = vunpack.c.l.b16 %v4629
        %v4669 = vunpack.c.l.b16 %v4630
        %v4670 = vunpack.c.l.b16 %v4631
        %v4671 = vunpack.c.l.b16 %v4632
        %v4672 = vunpack.c.l.b16 %v4633
        %v4673 = vunpack.c.l.b16 %v4634
        %v4674 = vunpack.c.l.b16 %v4635
        %v4675 = vunpack.c.l.b16 %v4636
        %v4676 = vunpack.c.l.b16 %v4637
        %v4677 = vunpack.c.l.b16 %v4638
        %v4678 = vunpack.c.l.b16 %v4639
        %v4679 = vunpack.c.l.b16 %v4640
        %v4680 = vunpack.c.l.b16 %v4641
        %v4681 = vunpack.c.l.b16 %v4642
        %v4682 = vunpack.c.l.b16 %v4643
        %v4683 = vpack.c.b16 %v4668, %v4667
        %v4684 = vpack.c.b16 %v4670, %v4669
        %v4685 = vpack.c.b16 %v4672, %v4671
        %v4686 = vpack.c.b16 %v4674, %v4673
        %v4687 = vpack.c.b16 %v4676, %v4675
        %v4688 = vpack.c.b16 %v4678, %v4677
        %v4689 = vpack.c.b16 %v4680, %v4679
        %v4690 = vpack.c.b16 %v4682, %v4681
        %4699 = vmatprep.subr.bf16.mxu0 0
        %4700 = vmatpush1.bf16.msra.mxu0 %v4690
        %4701 = vmatprep.subr.bf16.mxu0 0
        %4702 = vmatpush1.bf16.msra.mxu0 %v4689
        %4703 = vmatprep.subr.bf16.mxu0 0
        %4704 = vmatpush1.bf16.msra.mxu0 %v4688
        %4705 = vmatprep.subr.bf16.mxu0 0
        %4706 = vmatpush1.bf16.msra.mxu0 %v4687
        %4707 = vmatprep.subr.bf16.mxu0 0
        %4708 = vmatpush1.bf16.msra.mxu0 %v4686
        %4709 = vmatprep.subr.bf16.mxu0 0
        %4710 = vmatpush1.bf16.msra.mxu0 %v4685
        %4711 = vmatprep.subr.bf16.mxu0 0
        %4712 = vmatpush1.bf16.msra.mxu0 %v4684
        %4713 = vmatprep.subr.bf16.mxu0 0
        %4714 = vmatpush1.bf16.msra.mxu0 %v4683
        %4715 = vmatprep.subr.bf16.mxu0 0
        %4716 = vmatpush2.bf16.msra.mxu0 0
        %4717 = vmatprep.subr.bf16.mxu0 0
        %4718 = vmatpush2.bf16.msra.mxu0 0
        %4719 = vmatprep.subr.bf16.mxu0 0
        %4720 = vmatpush2.bf16.msra.mxu0 0
        %4721 = vmatprep.subr.bf16.mxu0 0
        %4722 = vmatpush2.bf16.msra.mxu0 0
        %4723 = vmatprep.subr.bf16.mxu0 0
        %4724 = vmatpush2.bf16.msra.mxu0 0
        %4725 = vmatprep.subr.bf16.mxu0 0
        %4726 = vmatpush2.bf16.msra.mxu0 0
        %4727 = vmatprep.subr.bf16.mxu0 0
        %4728 = vmatpush2.bf16.msra.mxu0 0
        %4729 = vmatprep.subr.bf16.mxu0 0
        %4730 = vmatpush2.bf16.msra.mxu0 0
        %4731 = vmatprep.mubr.bf16.mxu0 0
        %4732 = vmatmul.mubr.bf16.gmra.mxu0 %v4612
        %v4733 = vpop.f32.mrf.mxu0
        %v4734 = vadd.f32 %v4649, %v4733
        %v4735 = vpop.f32.mrf.mxu0
        %v4736 = vpop.f32.mrf.mxu0
        %v4737 = vadd.f32 %v4649, %v4736
        %v4738 = vpop.f32.mrf.mxu0
        %4739 = vmatprep.mubr.bf16.mxu0 0
        %4740 = vmatmul.mubr.bf16.gmra.mxu0 %v4613
        %v4741 = vpop.f32.mrf.mxu0
        %v4742 = vadd.f32 %v4649, %v4741
        %v4743 = vpop.f32.mrf.mxu0
        %v4744 = vpop.f32.mrf.mxu0
        %v4745 = vadd.f32 %v4649, %v4744
        %v4746 = vpop.f32.mrf.mxu0
        %4747 = vmatprep.mubr.bf16.mxu0 0
        %4748 = vmatmul.mubr.bf16.gmra.mxu0 %v4614
        %v4749 = vpop.f32.mrf.mxu0
        %v4750 = vadd.f32 %v4649, %v4749
        %v4751 = vpop.f32.mrf.mxu0
        %v4752 = vpop.f32.mrf.mxu0
        %v4753 = vadd.f32 %v4649, %v4752
        %v4754 = vpop.f32.mrf.mxu0
        %4755 = vmatprep.mubr.bf16.mxu0 0
        %4756 = vmatmul.mubr.bf16.gmra.mxu0 %v4615
        %v4757 = vpop.f32.mrf.mxu0
        %v4758 = vadd.f32 %v4649, %v4757
        %v4759 = vpop.f32.mrf.mxu0
        %v4760 = vpop.f32.mrf.mxu0
        %v4761 = vadd.f32 %v4649, %v4760
        %v4762 = vpop.f32.mrf.mxu0
        %4763 = vmatprep.mubr.bf16.mxu0 0
        %4764 = vmatmul.mubr.bf16.gmra.mxu0 %v4616
        %v4765 = vpop.f32.mrf.mxu0
        %v4766 = vadd.f32 %v4649, %v4765
        %v4767 = vpop.f32.mrf.mxu0
        %v4768 = vpop.f32.mrf.mxu0
        %v4769 = vadd.f32 %v4649, %v4768
        %v4770 = vpop.f32.mrf.mxu0
        %4771 = vmatprep.mubr.bf16.mxu0 0
        %4772 = vmatmul.mubr.bf16.gmra.mxu0 %v4617
        %v4773 = vpop.f32.mrf.mxu0
        %v4774 = vadd.f32 %v4649, %v4773
        %v4775 = vpop.f32.mrf.mxu0
        %v4776 = vpop.f32.mrf.mxu0
        %v4777 = vadd.f32 %v4649, %v4776
        %v4778 = vpop.f32.mrf.mxu0
        %4779 = vmatprep.mubr.bf16.mxu0 0
        %4780 = vmatmul.mubr.bf16.gmra.mxu0 %v4618
        %v4781 = vpop.f32.mrf.mxu0
        %v4782 = vadd.f32 %v4649, %v4781
        %v4783 = vpop.f32.mrf.mxu0
        %v4784 = vpop.f32.mrf.mxu0
        %v4785 = vadd.f32 %v4649, %v4784
        %v4786 = vpop.f32.mrf.mxu0
        %4787 = vmatprep.mubr.bf16.mxu0 0
        %4788 = vmatmul.mubr.bf16.gmra.mxu0 %v4619
        %v4789 = vpop.f32.mrf.mxu0
        %v4790 = vadd.f32 %v4649, %v4789
        %v4791 = vpop.f32.mrf.mxu0
        %v4792 = vpop.f32.mrf.mxu0
        %v4793 = vadd.f32 %v4649, %v4792
        %v4794 = vpop.f32.mrf.mxu0
        %4795 = vmatprep.mubr.bf16.mxu0 0
        %4796 = vmatmul.mubr.bf16.gmra.mxu0 %v4620
        %v4797 = vpop.f32.mrf.mxu0
        %v4798 = vadd.f32 %v4649, %v4797
        %v4799 = vpop.f32.mrf.mxu0
        %v4800 = vpop.f32.mrf.mxu0
        %v4801 = vadd.f32 %v4649, %v4800
        %v4802 = vpop.f32.mrf.mxu0
        %4803 = vmatprep.mubr.bf16.mxu0 0
        %4804 = vmatmul.mubr.bf16.gmra.mxu0 %v4621
        %v4805 = vpop.f32.mrf.mxu0
        %v4806 = vadd.f32 %v4649, %v4805
        %v4807 = vpop.f32.mrf.mxu0
        %v4808 = vpop.f32.mrf.mxu0
        %v4809 = vadd.f32 %v4649, %v4808
        %v4810 = vpop.f32.mrf.mxu0
        %4811 = vmatprep.mubr.bf16.mxu0 0
        %4812 = vmatmul.mubr.bf16.gmra.mxu0 %v4622
        %v4813 = vpop.f32.mrf.mxu0
        %v4814 = vadd.f32 %v4649, %v4813
        %v4815 = vpop.f32.mrf.mxu0
        %v4816 = vpop.f32.mrf.mxu0
        %v4817 = vadd.f32 %v4649, %v4816
        %v4818 = vpop.f32.mrf.mxu0
        %4819 = vmatprep.mubr.bf16.mxu0 0
        %4820 = vmatmul.mubr.bf16.gmra.mxu0 %v4623
        %v4821 = vpop.f32.mrf.mxu0
        %v4822 = vadd.f32 %v4649, %v4821
        %v4823 = vpop.f32.mrf.mxu0
        %v4824 = vpop.f32.mrf.mxu0
        %v4825 = vadd.f32 %v4649, %v4824
        %v4826 = vpop.f32.mrf.mxu0
        %4827 = vmatprep.mubr.bf16.mxu0 0
        %4828 = vmatmul.mubr.bf16.gmra.mxu0 %v4624
        %v4829 = vpop.f32.mrf.mxu0
        %v4830 = vadd.f32 %v4649, %v4829
        %v4831 = vpop.f32.mrf.mxu0
        %v4832 = vpop.f32.mrf.mxu0
        %v4833 = vadd.f32 %v4649, %v4832
        %v4834 = vpop.f32.mrf.mxu0
        %4835 = vmatprep.mubr.bf16.mxu0 0
        %4836 = vmatmul.mubr.bf16.gmra.mxu0 %v4625
        %v4837 = vpop.f32.mrf.mxu0
        %v4838 = vadd.f32 %v4649, %v4837
        %v4839 = vpop.f32.mrf.mxu0
        %v4840 = vpop.f32.mrf.mxu0
        %v4841 = vadd.f32 %v4649, %v4840
        %v4842 = vpop.f32.mrf.mxu0
        %4843 = vmatprep.mubr.bf16.mxu0 0
        %4844 = vmatmul.mubr.bf16.gmra.mxu0 %v4626
        %v4845 = vpop.f32.mrf.mxu0
        %v4846 = vadd.f32 %v4649, %v4845
        %v4847 = vpop.f32.mrf.mxu0
        %v4848 = vpop.f32.mrf.mxu0
        %v4849 = vadd.f32 %v4649, %v4848
        %v4850 = vpop.f32.mrf.mxu0
        %4851 = vmatprep.mubr.bf16.mxu0 0
        %4852 = vmatmul.mubr.bf16.gmra.mxu0 %v4627
        %v4853 = vpop.f32.mrf.mxu0
        %v4854 = vadd.f32 %v4649, %v4853
        %v4855 = vpop.f32.mrf.mxu0
        %v4856 = vpop.f32.mrf.mxu0
        %v4857 = vadd.f32 %v4649, %v4856
        %v4858 = vpop.f32.mrf.mxu0
        %4859 = vdwg.mxu0
        %4860 = vst [vmem:[%s441] sm:$0xff] %v4734
        %4861 = vst [vmem:[%s441 + $0x8] sm:$0xff] %v4737
        %4862 = vst [vmem:[%s441 + $0x10] sm:$0xff] %v4742
        %4863 = vst [vmem:[%s441 + $0x18] sm:$0xff] %v4745
        %4864 = vst [vmem:[%s441 + $0x20] sm:$0xff] %v4750
        %4865 = vst [vmem:[%s441 + $0x28] sm:$0xff] %v4753
        %4866 = vst [vmem:[%s441 + $0x30] sm:$0xff] %v4758
        %4867 = vst [vmem:[%s441 + $0x38] sm:$0xff] %v4761
        %4868 = vst [vmem:[%s441 + $0x40] sm:$0xff] %v4766
        %4869 = vst [vmem:[%s441 + $0x48] sm:$0xff] %v4769
        %4870 = vst [vmem:[%s441 + $0x50] sm:$0xff] %v4774
        %4871 = vst [vmem:[%s441 + $0x58] sm:$0xff] %v4777
        %4872 = vst [vmem:[%s441 + $0x60] sm:$0xff] %v4782
        %4873 = vst [vmem:[%s441 + $0x68] sm:$0xff] %v4785
        %4874 = vst [vmem:[%s441 + $0x70] sm:$0xff] %v4790
        %4875 = vst [vmem:[%s441 + $0x78] sm:$0xff] %v4793
        %4876 = vst [vmem:[%s441 + $0x80] sm:$0xff] %v4798
        %4877 = vst [vmem:[%s441 + $0x88] sm:$0xff] %v4801
        %4878 = vst [vmem:[%s441 + $0x90] sm:$0xff] %v4806
        %4879 = vst [vmem:[%s441 + $0x98] sm:$0xff] %v4809
        %4880 = vst [vmem:[%s441 + $0xa0] sm:$0xff] %v4814
        %4881 = vst [vmem:[%s441 + $0xa8] sm:$0xff] %v4817
        %4882 = vst [vmem:[%s441 + $0xb0] sm:$0xff] %v4822
        %4883 = vst [vmem:[%s441 + $0xb8] sm:$0xff] %v4825
        %4884 = vst [vmem:[%s441 + $0xc0] sm:$0xff] %v4830
        %4885 = vst [vmem:[%s441 + $0xc8] sm:$0xff] %v4833
        %4886 = vst [vmem:[%s441 + $0xd0] sm:$0xff] %v4838
        %4887 = vst [vmem:[%s441 + $0xd8] sm:$0xff] %v4841
        %4888 = vst [vmem:[%s441 + $0xe0] sm:$0xff] %v4846
        %4889 = vst [vmem:[%s441 + $0xe8] sm:$0xff] %v4849
        %4890 = vst [vmem:[%s441 + $0xf0] sm:$0xff] %v4854
        %4891 = vst [vmem:[%s441 + $0xf8] sm:$0xff] %v4857
      $region72: #{triposf_vae_forward.3} parent=63 // pred_fallthru
        _
      %s4892 = smul.u32 32, %s26
      %p4893 = scmp.lt.s32.totalorder %s4892, 63
      %s4894 = scalar_select %p4893, %s4892, 63
      %s4895 = smul.addr %s4894, 8
      %s4896 = scalar_lea.vmem %s11, %s4895
      // Predicated region
      $region73: #{triposf_vae_forward.3} parent=63 // pred_check
        %p4897 = pneg %p298
      $region74: #{triposf_vae_forward.3} parent=63 // pred_check_branch
        %4899 = sbr.rel (%p4897) target = $region76
      $region75: #{triposf_vae_forward.3} parent=63 // pred_region
        %s4900 = smul.u32 32, %s26
      $region76: #{triposf_vae_forward.3} parent=63 // pred_fallthru
        _
    $region64: #{triposf_vae_forward.3} parent=5 // pred_fallthru
      _
    %p4901 = scmp.le.s32.totalorder 2, %s17
    // Predicated region
    $region77: #{triposf_vae_forward.3} parent=5 // pred_check
      %p4902 = pneg %p4901
    $region78: #{triposf_vae_forward.3} parent=5 // pred_check_branch
      %4904 = sbr.rel (%p4902) target = $region80
    $region79: #{triposf_vae_forward.3} parent=5 // pred_region
      %s4905 = ssub.s32 %s17, 2
      // Predicated region
      $region81: #{triposf_vae_forward.3} parent=79 // pred_check
        %p4906 = pneg %p304
      $region82: #{triposf_vae_forward.3} parent=79 // pred_check_branch
        %4908 = sbr.rel (%p4906) target = $region84
      $region83: #{triposf_vae_forward.3} parent=79 // pred_region
        %s4909 = smul.u32 32, %s28
        %p4910 = scmp.lt.s32.totalorder %s4909, 63
        %s4911 = scalar_select %p4910, %s4909, 63
        %s4912 = smul.addr %s4911, 8
        %s4913 = scalar_lea.vmem %s11, %s4912
      $region84: #{triposf_vae_forward.3} parent=79 // pred_fallthru
        _
    $region80: #{triposf_vae_forward.3} parent=5 // pred_fallthru
      _
  $region6: #{triposf_vae_forward.3} parent=0 // loop_footer
    %s21 = sadd.s32 1, %s17
  $region7: #{triposf_vae_forward.3} parent=0 // loop_footer_branch
    %16 = sbr.rel target = $region3
  $region8: #{triposf_vae_forward.3} parent=0 // loop_exit
    _

</llo_original>
